<compile_context>
chip_gen: v5e
topology: v5e:2x2
jax: 0.10.0
libtpu: 0.0.40
codegen_flags: <defaults>
</compile_context>

<pallas_src>
import jax
import jax.numpy as jnp
from jax import lax
from jax.experimental import pallas as pl
from jax.experimental.pallas import tpu as pltpu

# ---- model hyper-parameters (from GNNLSTM.__init__) ----
T = 8            # sequence length (small, static)
N_CODES = 5      # n_diagnosis_codes
H = 20           # emb_size == input_size == hidden_size
N_LAYERS = 4
ATT_H = 64       # SelfAttention projection hidden
N_LABELS = 3

BT = 8           # per-grid-tile batch (sublane-aligned for f32)
LG = 128         # lane-group width (gate / state padding)


def gnn_lstm_kernel(x_ref, emb_ref, w_ref, b_ref, w1_ref, b1_ref, w2_ref, b2_ref,
                    wf_ref, bf_ref, o_ref):
    # ---------- embedding mix: relu((x[...,None]*emb).sum(codes)) == relu(x @ emb) ----------
    # emb is zero-padded to 128 lanes, so lanes H..127 of xe are exact zeros.
    xe = jnp.maximum(
        jnp.dot(x_ref[...], emb_ref[...], preferred_element_type=jnp.float32), 0.0)  # (T*BT, 128)
    xs = [xe[t * BT:(t + 1) * BT, :] for t in range(T)]        # per-step (BT, 128), sublane-aligned

    # ---------- stacked LSTM, zero initial state, wavefront (diagonal) schedule ----------
    # h/c kept 128 lanes wide; padding lanes stay exactly 0 through the recurrence
    # because the padded weight columns / bias lanes are 0 (sigmoid(0)*0 terms vanish).
    h_state = [jnp.zeros((BT, LG), jnp.float32) for _ in range(N_LAYERS)]
    c_state = [jnp.zeros((BT, LG), jnp.float32) for _ in range(N_LAYERS)]
    h_out = [[None] * T for _ in range(N_LAYERS)]

    for d in range(T + N_LAYERS - 1):                           # diagonals: cell (l,t), l+t == d
        for l in range(max(0, d - T + 1), min(N_LAYERS - 1, d) + 1):
            t = d - l
            x_in = xs[t] if l == 0 else h_out[l - 1][t]         # (BT, 128)
            # Fused input+recurrent matmul: LHS lane-group 0 = x_in, group 1 = h_{t-1}.
            lhs = jnp.concatenate([x_in, h_state[l]], axis=1)   # (BT, 256), built at 128-lane bounds
            g = jnp.dot(lhs, w_ref[l],
                        preferred_element_type=jnp.float32) + b_ref[l]      # (BT, 4*128)
            # Gate lane groups: [0:128)=i, [128:256)=f, [256:384)=o, [384:512)=g.
            s = jax.nn.sigmoid(g[:, :3 * LG])                   # one sigmoid over i|f|o
            i_g = s[:, 0:LG]
            f_g = s[:, LG:2 * LG]
            o_g = s[:, 2 * LG:3 * LG]
            g_g = jnp.tanh(g[:, 3 * LG:])                       # one tanh for the g gate
            c_new = f_g * c_state[l] + i_g * g_g
            h_new = o_g * jnp.tanh(c_new)
            c_state[l] = c_new
            h_state[l] = h_new
            h_out[l][t] = h_new

    hs_last = h_out[N_LAYERS - 1]                               # T x (BT, 128), last-layer outputs

    # ---------- SelfAttention: batched projection over the (T*BT, 128) slab ----------
    seq = jnp.concatenate(hs_last, axis=0)                      # (T*BT, 128)
    e1 = jnp.maximum(
        jnp.dot(seq, w1_ref[...], preferred_element_type=jnp.float32) + b1_ref[...], 0.0)  # (T*BT, 64)
    e2 = jnp.dot(e1, w2_ref[...], preferred_element_type=jnp.float32) + b2_ref[...]        # (T*BT, 1)

    # Softmax over T per batch element (sublane-aligned (BT,1) slices, no relayouts).
    es = [e2[t * BT:(t + 1) * BT, :] for t in range(T)]
    m = es[0]
    for t in range(1, T):
        m = jnp.maximum(m, es[t])
    ws = [jnp.exp(es[t] - m) for t in range(T)]
    denom = ws[0]
    for t in range(1, T):
        denom = denom + ws[t]
    inv = pl.reciprocal(denom, approx=True)                     # EUP slot; renorm error ~1e-4
    ctx = hs_last[0] * (ws[0] * inv)
    for t in range(1, T):
        ctx = ctx + hs_last[t] * (ws[t] * inv)                  # (BT, 128), pad lanes stay 0

    # TODO(synk): SAGEConv graph branch (pickle x_0/edge_0, top-k edge build, conv1/conv2)
    # omitted; nn.Dropout(0.5) is identity in eval mode.

    # ---------- linear + EXACT softmax(dim=1) (review correctness concern) ----------
    logit = jnp.dot(ctx, wf_ref[...], preferred_element_type=jnp.float32) + bf_ref[...]    # (BT, 3)
    lm = jnp.max(logit, axis=1, keepdims=True)
    le = jnp.exp(logit - lm)
    o_ref[...] = le / jnp.sum(le, axis=1, keepdims=True)


def gnn_lstm_forward(x, kparams):
    """x: (T, B, N_CODES) time-major (batch_first=False). Returns (B, N_LABELS) probs."""
    Tdim, Bdim, C = x.shape
    assert Tdim == T and C == N_CODES and Bdim % BT == 0
    NT = Bdim // BT
    # Per grid tile: a contiguous time-major (T*BT, C) slab (row index = t*BT + b_in_tile).
    x_tiles = x.reshape(Tdim, NT, BT, C).transpose(1, 0, 2, 3).reshape(NT, Tdim * BT, C)

    def _full(a):  # whole-array VMEM-resident spec (params shared by every grid tile)
        nd = a.ndim
        return pl.BlockSpec(a.shape, lambda i, _n=nd: (0,) * _n)

    out = pl.pallas_call(
        gnn_lstm_kernel,
        out_shape=jax.ShapeDtypeStruct((NT, BT, N_LABELS), jnp.float32),
        grid=(NT,),
        in_specs=[pl.BlockSpec((None, Tdim * BT, C), lambda i: (i, 0, 0))]
                 + [_full(p) for p in kparams],
        out_specs=pl.BlockSpec((None, BT, N_LABELS), lambda i: (i, 0, 0)),
        compiler_params=pltpu.CompilerParams(dimension_semantics=("parallel",)),
    )(x_tiles, *kparams)
    return out.reshape(Bdim, N_LABELS)


# ------------------------- parameters & reference -------------------------

def init_torch_params(key):
    """Parameters in PyTorch layout: gate order (i, f, g, o), weights (4H, in)."""
    ks = jax.random.split(key, 11)
    s = 1.0 / jnp.sqrt(H)
    emb = jax.random.normal(ks[0], (N_CODES, H), jnp.float32)
    wih = jax.random.uniform(ks[1], (N_LAYERS, 4 * H, H), jnp.float32, -s, s)
    whh = jax.random.uniform(ks[2], (N_LAYERS, 4 * H, H), jnp.float32, -s, s)
    b_ih = jax.random.uniform(ks[3], (N_LAYERS, 4 * H), jnp.float32, -s, s)
    b_hh = jax.random.uniform(ks[4], (N_LAYERS, 4 * H), jnp.float32, -s, s)
    w1 = jax.random.uniform(ks[5], (ATT_H, H), jnp.float32, -s, s)
    b1 = jax.random.uniform(ks[6], (ATT_H,), jnp.float32, -s, s)
    w2 = jax.random.uniform(ks[7], (1, ATT_H), jnp.float32, -1 / 8.0, 1 / 8.0)
    b2 = jax.random.uniform(ks[8], (1,), jnp.float32, -1 / 8.0, 1 / 8.0)
    wf = jax.random.uniform(ks[9], (N_LABELS, H), jnp.float32, -s, s)
    bf = jax.random.uniform(ks[10], (N_LABELS,), jnp.float32, -s, s)
    return (emb, wih, whh, b_ih, b_hh, w1, b1, w2, b2, wf, bf)


def prep_kernel_params(tp):
    """Reorder gates (i,f,g,o)->(i,f,o,g), fuse [Wih;Whh] per layer, combine biases,
    and scatter each gate into its own 128-lane group (zero-padded) so the kernel's
    gate slices and the 128-wide hidden state need no cross-lane rotates."""
    emb, wih, whh, b_ih, b_hh, w1, b1, w2, b2, wf, bf = tp
    perm = jnp.concatenate([jnp.arange(0, 2 * H),        # i, f
                            jnp.arange(3 * H, 4 * H),    # o
                            jnp.arange(2 * H, 3 * H)])   # g
    wih_t = jnp.transpose(wih[:, perm, :], (0, 2, 1))    # (L, H, 4H), cols grouped i|f|o|g
    whh_t = jnp.transpose(whh[:, perm, :], (0, 2, 1))    # (L, H, 4H)
    b_t = (b_ih + b_hh)[:, perm]                         # (L, 4H)

    W = jnp.zeros((N_LAYERS, 2 * LG, 4 * LG), jnp.float32)   # rows: [x_in pad128 | h pad128]
    bl = jnp.zeros((N_LAYERS, 1, 4 * LG), jnp.float32)
    for gi in range(4):
        W = W.at[:, 0:H, gi * LG:gi * LG + H].set(wih_t[:, :, gi * H:(gi + 1) * H])
        W = W.at[:, LG:LG + H, gi * LG:gi * LG + H].set(whh_t[:, :, gi * H:(gi + 1) * H])
        bl = bl.at[:, 0, gi * LG:gi * LG + H].set(b_t[:, gi * H:(gi + 1) * H])

    emb_p = jnp.zeros((N_CODES, LG), jnp.float32).at[:, :H].set(emb)
    w1_p = jnp.zeros((LG, ATT_H), jnp.float32).at[:H, :].set(w1.T)
    wf_p = jnp.zeros((LG, N_LABELS), jnp.float32).at[:H, :].set(wf.T)
    return (emb_p, W, bl, w1_p, b1.reshape(1, ATT_H),
            w2.T, b2.reshape(1, 1), wf_p, bf.reshape(1, N_LABELS))


def reference_forward(x, tp):
    """Pure-JAX reference mirroring the PyTorch forward (eval mode, GNN branch omitted)."""
    emb, wih, whh, b_ih, b_hh, w1, b1, w2, b2, wf, bf = tp
    Bdim = x.shape[1]
    xe = jax.nn.relu(jnp.einsum('tbc,ch->tbh', x, emb))                    # (T,B,H)

    def step(carry, xt):
        hs, cs = carry
        inp = xt
        nh, nc = [], []
        for l in range(N_LAYERS):
            g = inp @ wih[l].T + hs[l] @ whh[l].T + b_ih[l] + b_hh[l]
            i = jax.nn.sigmoid(g[:, :H]); f = jax.nn.sigmoid(g[:, H:2 * H])
            gg = jnp.tanh(g[:, 2 * H:3 * H]); o = jax.nn.sigmoid(g[:, 3 * H:])
            cn = f * cs[l] + i * gg
            hn = o * jnp.tanh(cn)
            nh.append(hn); nc.append(cn); inp = hn
        return (jnp.stack(nh), jnp.stack(nc)), inp

    init = (jnp.zeros((N_LAYERS, Bdim, H)), jnp.zeros((N_LAYERS, Bdim, H)))
    _, outs = lax.scan(step, init, xe)                                     # (T,B,H)
    e = (jax.nn.relu(outs @ w1.T + b1) @ w2.T + b2)[..., 0]                # (T,B)
    w = jax.nn.softmax(e, axis=0)                                          # softmax over T
    ctx = jnp.sum(outs * w[..., None], axis=0)                             # (B,H)
    logit = ctx @ wf.T + bf
    return jax.nn.softmax(logit, axis=1)


if __name__ == "__main__":
    B = 16                       # 2 batch tiles of BT=8 -> exercises the parallel grid axis
    key = jax.random.PRNGKey(0)
    kx, kp = jax.random.split(key)
    x = jax.random.normal(kx, (T, B, N_CODES), jnp.float32)
    tparams = init_torch_params(kp)
    kparams = prep_kernel_params(tparams)

    out = jax.block_until_ready(gnn_lstm_forward(x, kparams))
    ref = jax.block_until_ready(reference_forward(x, tparams))

    assert out.shape == (B, N_LABELS)
    assert jnp.allclose(out, ref, atol=2e-3, rtol=2e-3), (out, ref)
    print("KERNEL_OK")
</pallas_src>

<mosaic_0001>
module attributes {stable_mosaic.version = 11 : i64} {
  func.func @gnn_lstm_kernel(%arg0: i32, %arg1: memref<1x64x5xf32, #tpu.memory_space<vmem>>, %arg2: memref<5x128xf32, #tpu.memory_space<vmem>>, %arg3: memref<4x256x512xf32, #tpu.memory_space<vmem>>, %arg4: memref<4x1x512xf32, #tpu.memory_space<vmem>>, %arg5: memref<128x64xf32, #tpu.memory_space<vmem>>, %arg6: memref<1x64xf32, #tpu.memory_space<vmem>>, %arg7: memref<64x1xf32, #tpu.memory_space<vmem>>, %arg8: memref<1x1xf32, #tpu.memory_space<vmem>>, %arg9: memref<128x3xf32, #tpu.memory_space<vmem>>, %arg10: memref<1x3xf32, #tpu.memory_space<vmem>>, %arg11: memref<1x8x3xf32, #tpu.memory_space<vmem>>) attributes {dimension_semantics = [#tpu.dimension_semantics<parallel>], iteration_bounds = array<i64: 2>, scalar_prefetch = 0 : i64, scratch_operands = 0 : i64, tpu.core_type = #tpu.core_type<tc>, window_params = [{transform_indices = @transform_0, window_bounds = array<i64: 1, 64, 5>}, {pipeline_mode = #tpu.pipeline_mode<synchronous>, transform_indices = @transform_1, window_bounds = array<i64: 5, 128>}, {pipeline_mode = #tpu.pipeline_mode<synchronous>, transform_indices = @transform_2, window_bounds = array<i64: 4, 256, 512>}, {pipeline_mode = #tpu.pipeline_mode<synchronous>, transform_indices = @transform_3, window_bounds = array<i64: 4, 1, 512>}, {pipeline_mode = #tpu.pipeline_mode<synchronous>, transform_indices = @transform_4, window_bounds = array<i64: 128, 64>}, {pipeline_mode = #tpu.pipeline_mode<synchronous>, transform_indices = @transform_5, window_bounds = array<i64: 1, 64>}, {pipeline_mode = #tpu.pipeline_mode<synchronous>, transform_indices = @transform_6, window_bounds = array<i64: 64, 1>}, {pipeline_mode = #tpu.pipeline_mode<synchronous>, transform_indices = @transform_7, window_bounds = array<i64: 1, 1>}, {pipeline_mode = #tpu.pipeline_mode<synchronous>, transform_indices = @transform_8, window_bounds = array<i64: 128, 3>}, {pipeline_mode = #tpu.pipeline_mode<synchronous>, transform_indices = @transform_9, window_bounds = array<i64: 1, 3>}, {transform_indices = @transform_10, window_bounds = array<i64: 1, 8, 3>}]} {
    %c0 = arith.constant 0 : index
    %c0_0 = arith.constant 0 : index
    %c0_1 = arith.constant 0 : index
    %0 = vector.load %arg1[%c0, %c0_0, %c0_1] : memref<1x64x5xf32, #tpu.memory_space<vmem>>, vector<1x64x5xf32>
    %1 = vector.shape_cast %0 : vector<1x64x5xf32> to vector<64x5xf32>
    %c0_2 = arith.constant 0 : index
    %c0_3 = arith.constant 0 : index
    %2 = vector.load %arg2[%c0_2, %c0_3] : memref<5x128xf32, #tpu.memory_space<vmem>>, vector<5x128xf32>
    %cst = arith.constant dense<0.000000e+00> : vector<64x128xf32>
    %3 = tpu.matmul %1, %2, %cst {dimension_numbers = #tpu.dot_dimension_numbers<[1], [0], [0], [1], [0, 0, 1, 1], [], []>} : vector<64x5xf32>, vector<5x128xf32>, vector<64x128xf32> -> vector<64x128xf32>
    %cst_4 = arith.constant 0.000000e+00 : f32
    %4 = vector.broadcast %cst_4 : f32 to vector<64x128xf32>
    %5 = arith.maximumf %3, %4 : vector<64x128xf32>
    %6 = vector.extract_strided_slice %5 {offsets = [0, 0], sizes = [8, 128], strides = [1, 1]} : vector<64x128xf32> to vector<8x128xf32>
    %7 = vector.extract_strided_slice %5 {offsets = [8, 0], sizes = [8, 128], strides = [1, 1]} : vector<64x128xf32> to vector<8x128xf32>
    %8 = vector.extract_strided_slice %5 {offsets = [16, 0], sizes = [8, 128], strides = [1, 1]} : vector<64x128xf32> to vector<8x128xf32>
    %9 = vector.extract_strided_slice %5 {offsets = [24, 0], sizes = [8, 128], strides = [1, 1]} : vector<64x128xf32> to vector<8x128xf32>
    %10 = vector.extract_strided_slice %5 {offsets = [32, 0], sizes = [8, 128], strides = [1, 1]} : vector<64x128xf32> to vector<8x128xf32>
    %11 = vector.extract_strided_slice %5 {offsets = [40, 0], sizes = [8, 128], strides = [1, 1]} : vector<64x128xf32> to vector<8x128xf32>
    %12 = vector.extract_strided_slice %5 {offsets = [48, 0], sizes = [8, 128], strides = [1, 1]} : vector<64x128xf32> to vector<8x128xf32>
    %13 = vector.extract_strided_slice %5 {offsets = [56, 0], sizes = [8, 128], strides = [1, 1]} : vector<64x128xf32> to vector<8x128xf32>
    %cst_5 = arith.constant 0.000000e+00 : f32
    %14 = vector.broadcast %cst_5 : f32 to vector<8x128xf32>
    %cst_6 = arith.constant 0.000000e+00 : f32
    %15 = vector.broadcast %cst_6 : f32 to vector<8x128xf32>
    %cst_7 = arith.constant 0.000000e+00 : f32
    %16 = vector.broadcast %cst_7 : f32 to vector<8x128xf32>
    %cst_8 = arith.constant 0.000000e+00 : f32
    %17 = vector.broadcast %cst_8 : f32 to vector<8x128xf32>
    %cst_9 = arith.constant 0.000000e+00 : f32
    %18 = vector.broadcast %cst_9 : f32 to vector<8x128xf32>
    %cst_10 = arith.constant 0.000000e+00 : f32
    %19 = vector.broadcast %cst_10 : f32 to vector<8x128xf32>
    %cst_11 = arith.constant 0.000000e+00 : f32
    %20 = vector.broadcast %cst_11 : f32 to vector<8x128xf32>
    %cst_12 = arith.constant 0.000000e+00 : f32
    %21 = vector.broadcast %cst_12 : f32 to vector<8x128xf32>
    %22 = tpu.concatenate %6, %14 in 1 : vector<8x128xf32>, vector<8x128xf32> -> vector<8x256xf32>
    %c0_13 = arith.constant 0 : index
    %c0_14 = arith.constant 0 : index
    %c0_15 = arith.constant 0 : index
    %23 = vector.load %arg3[%c0_13, %c0_14, %c0_15] : memref<4x256x512xf32, #tpu.memory_space<vmem>>, vector<1x256x512xf32>
    %24 = vector.shape_cast %23 : vector<1x256x512xf32> to vector<256x512xf32>
    %cst_16 = arith.constant dense<0.000000e+00> : vector<8x512xf32>
    %25 = tpu.matmul %22, %24, %cst_16 {dimension_numbers = #tpu.dot_dimension_numbers<[1], [0], [0], [1], [0, 0, 1, 1], [], []>} : vector<8x256xf32>, vector<256x512xf32>, vector<8x512xf32> -> vector<8x512xf32>
    %c0_17 = arith.constant 0 : index
    %c0_18 = arith.constant 0 : index
    %c0_19 = arith.constant 0 : index
    %26 = vector.load %arg4[%c0_17, %c0_18, %c0_19] : memref<4x1x512xf32, #tpu.memory_space<vmem>>, vector<1x1x512xf32>
    %27 = vector.shape_cast %26 : vector<1x1x512xf32> to vector<1x512xf32>
    %28 = vector.broadcast %27 : vector<1x512xf32> to vector<8x512xf32>
    %29 = arith.addf %25, %28 : vector<8x512xf32>
    %30 = vector.extract_strided_slice %29 {offsets = [0, 0], sizes = [8, 384], strides = [1, 1]} : vector<8x512xf32> to vector<8x384xf32>
    %31 = arith.negf %30 : vector<8x384xf32>
    %32 = math.exp %31 : vector<8x384xf32>
    %cst_20 = arith.constant 1.000000e+00 : f32
    %33 = vector.broadcast %cst_20 : f32 to vector<8x384xf32>
    %34 = arith.addf %33, %32 : vector<8x384xf32>
    %35 = arith.divf %33, %34 : vector<8x384xf32>
    %36 = vector.extract_strided_slice %35 {offsets = [0, 0], sizes = [8, 128], strides = [1, 1]} : vector<8x384xf32> to vector<8x128xf32>
    %37 = vector.extract_strided_slice %35 {offsets = [0, 128], sizes = [8, 128], strides = [1, 1]} : vector<8x384xf32> to vector<8x128xf32>
    %38 = vector.extract_strided_slice %35 {offsets = [0, 256], sizes = [8, 128], strides = [1, 1]} : vector<8x384xf32> to vector<8x128xf32>
    %39 = vector.extract_strided_slice %29 {offsets = [0, 384], sizes = [8, 128], strides = [1, 1]} : vector<8x512xf32> to vector<8x128xf32>
    %40 = math.tanh %39 : vector<8x128xf32>
    %41 = arith.mulf %37, %18 : vector<8x128xf32>
    %42 = arith.mulf %36, %40 : vector<8x128xf32>
    %43 = arith.addf %41, %42 : vector<8x128xf32>
    %44 = math.tanh %43 : vector<8x128xf32>
    %45 = arith.mulf %38, %44 : vector<8x128xf32>
    %46 = tpu.concatenate %7, %45 in 1 : vector<8x128xf32>, vector<8x128xf32> -> vector<8x256xf32>
    %c0_21 = arith.constant 0 : index
    %c0_22 = arith.constant 0 : index
    %c0_23 = arith.constant 0 : index
    %47 = vector.load %arg3[%c0_21, %c0_22, %c0_23] : memref<4x256x512xf32, #tpu.memory_space<vmem>>, vector<1x256x512xf32>
    %48 = vector.shape_cast %47 : vector<1x256x512xf32> to vector<256x512xf32>
    %cst_24 = arith.constant dense<0.000000e+00> : vector<8x512xf32>
    %49 = tpu.matmul %46, %48, %cst_24 {dimension_numbers = #tpu.dot_dimension_numbers<[1], [0], [0], [1], [0, 0, 1, 1], [], []>} : vector<8x256xf32>, vector<256x512xf32>, vector<8x512xf32> -> vector<8x512xf32>
    %c0_25 = arith.constant 0 : index
    %c0_26 = arith.constant 0 : index
    %c0_27 = arith.constant 0 : index
    %50 = vector.load %arg4[%c0_25, %c0_26, %c0_27] : memref<4x1x512xf32, #tpu.memory_space<vmem>>, vector<1x1x512xf32>
    %51 = vector.shape_cast %50 : vector<1x1x512xf32> to vector<1x512xf32>
    %52 = vector.broadcast %51 : vector<1x512xf32> to vector<8x512xf32>
    %53 = arith.addf %49, %52 : vector<8x512xf32>
    %54 = vector.extract_strided_slice %53 {offsets = [0, 0], sizes = [8, 384], strides = [1, 1]} : vector<8x512xf32> to vector<8x384xf32>
    %55 = arith.negf %54 : vector<8x384xf32>
    %56 = math.exp %55 : vector<8x384xf32>
    %cst_28 = arith.constant 1.000000e+00 : f32
    %57 = vector.broadcast %cst_28 : f32 to vector<8x384xf32>
    %58 = arith.addf %57, %56 : vector<8x384xf32>
    %59 = arith.divf %57, %58 : vector<8x384xf32>
    %60 = vector.extract_strided_slice %59 {offsets = [0, 0], sizes = [8, 128], strides = [1, 1]} : vector<8x384xf32> to vector<8x128xf32>
    %61 = vector.extract_strided_slice %59 {offsets = [0, 128], sizes = [8, 128], strides = [1, 1]} : vector<8x384xf32> to vector<8x128xf32>
    %62 = vector.extract_strided_slice %59 {offsets = [0, 256], sizes = [8, 128], strides = [1, 1]} : vector<8x384xf32> to vector<8x128xf32>
    %63 = vector.extract_strided_slice %53 {offsets = [0, 384], sizes = [8, 128], strides = [1, 1]} : vector<8x512xf32> to vector<8x128xf32>
    %64 = math.tanh %63 : vector<8x128xf32>
    %65 = arith.mulf %61, %43 : vector<8x128xf32>
    %66 = arith.mulf %60, %64 : vector<8x128xf32>
    %67 = arith.addf %65, %66 : vector<8x128xf32>
    %68 = math.tanh %67 : vector<8x128xf32>
    %69 = arith.mulf %62, %68 : vector<8x128xf32>
    %70 = tpu.concatenate %45, %15 in 1 : vector<8x128xf32>, vector<8x128xf32> -> vector<8x256xf32>
    %c1 = arith.constant 1 : index
    %c0_29 = arith.constant 0 : index
    %c0_30 = arith.constant 0 : index
    %71 = vector.load %arg3[%c1, %c0_29, %c0_30] : memref<4x256x512xf32, #tpu.memory_space<vmem>>, vector<1x256x512xf32>
    %72 = vector.shape_cast %71 : vector<1x256x512xf32> to vector<256x512xf32>
    %cst_31 = arith.constant dense<0.000000e+00> : vector<8x512xf32>
    %73 = tpu.matmul %70, %72, %cst_31 {dimension_numbers = #tpu.dot_dimension_numbers<[1], [0], [0], [1], [0, 0, 1, 1], [], []>} : vector<8x256xf32>, vector<256x512xf32>, vector<8x512xf32> -> vector<8x512xf32>
    %c1_32 = arith.constant 1 : index
    %c0_33 = arith.constant 0 : index
    %c0_34 = arith.constant 0 : index
    %74 = vector.load %arg4[%c1_32, %c0_33, %c0_34] : memref<4x1x512xf32, #tpu.memory_space<vmem>>, vector<1x1x512xf32>
    %75 = vector.shape_cast %74 : vector<1x1x512xf32> to vector<1x512xf32>
    %76 = vector.broadcast %75 : vector<1x512xf32> to vector<8x512xf32>
    %77 = arith.addf %73, %76 : vector<8x512xf32>
    %78 = vector.extract_strided_slice %77 {offsets = [0, 0], sizes = [8, 384], strides = [1, 1]} : vector<8x512xf32> to vector<8x384xf32>
    %79 = arith.negf %78 : vector<8x384xf32>
    %80 = math.exp %79 : vector<8x384xf32>
    %cst_35 = arith.constant 1.000000e+00 : f32
    %81 = vector.broadcast %cst_35 : f32 to vector<8x384xf32>
    %82 = arith.addf %81, %80 : vector<8x384xf32>
    %83 = arith.divf %81, %82 : vector<8x384xf32>
    %84 = vector.extract_strided_slice %83 {offsets = [0, 0], sizes = [8, 128], strides = [1, 1]} : vector<8x384xf32> to vector<8x128xf32>
    %85 = vector.extract_strided_slice %83 {offsets = [0, 128], sizes = [8, 128], strides = [1, 1]} : vector<8x384xf32> to vector<8x128xf32>
    %86 = vector.extract_strided_slice %83 {offsets = [0, 256], sizes = [8, 128], strides = [1, 1]} : vector<8x384xf32> to vector<8x128xf32>
    %87 = vector.extract_strided_slice %77 {offsets = [0, 384], sizes = [8, 128], strides = [1, 1]} : vector<8x512xf32> to vector<8x128xf32>
    %88 = math.tanh %87 : vector<8x128xf32>
    %89 = arith.mulf %85, %19 : vector<8x128xf32>
    %90 = arith.mulf %84, %88 : vector<8x128xf32>
    %91 = arith.addf %89, %90 : vector<8x128xf32>
    %92 = math.tanh %91 : vector<8x128xf32>
    %93 = arith.mulf %86, %92 : vector<8x128xf32>
    %94 = tpu.concatenate %8, %69 in 1 : vector<8x128xf32>, vector<8x128xf32> -> vector<8x256xf32>
    %c0_36 = arith.constant 0 : index
    %c0_37 = arith.constant 0 : index
    %c0_38 = arith.constant 0 : index
    %95 = vector.load %arg3[%c0_36, %c0_37, %c0_38] : memref<4x256x512xf32, #tpu.memory_space<vmem>>, vector<1x256x512xf32>
    %96 = vector.shape_cast %95 : vector<1x256x512xf32> to vector<256x512xf32>
    %cst_39 = arith.constant dense<0.000000e+00> : vector<8x512xf32>
    %97 = tpu.matmul %94, %96, %cst_39 {dimension_numbers = #tpu.dot_dimension_numbers<[1], [0], [0], [1], [0, 0, 1, 1], [], []>} : vector<8x256xf32>, vector<256x512xf32>, vector<8x512xf32> -> vector<8x512xf32>
    %c0_40 = arith.constant 0 : index
    %c0_41 = arith.constant 0 : index
    %c0_42 = arith.constant 0 : index
    %98 = vector.load %arg4[%c0_40, %c0_41, %c0_42] : memref<4x1x512xf32, #tpu.memory_space<vmem>>, vector<1x1x512xf32>
    %99 = vector.shape_cast %98 : vector<1x1x512xf32> to vector<1x512xf32>
    %100 = vector.broadcast %99 : vector<1x512xf32> to vector<8x512xf32>
    %101 = arith.addf %97, %100 : vector<8x512xf32>
    %102 = vector.extract_strided_slice %101 {offsets = [0, 0], sizes = [8, 384], strides = [1, 1]} : vector<8x512xf32> to vector<8x384xf32>
    %103 = arith.negf %102 : vector<8x384xf32>
    %104 = math.exp %103 : vector<8x384xf32>
    %cst_43 = arith.constant 1.000000e+00 : f32
    %105 = vector.broadcast %cst_43 : f32 to vector<8x384xf32>
    %106 = arith.addf %105, %104 : vector<8x384xf32>
    %107 = arith.divf %105, %106 : vector<8x384xf32>
    %108 = vector.extract_strided_slice %107 {offsets = [0, 0], sizes = [8, 128], strides = [1, 1]} : vector<8x384xf32> to vector<8x128xf32>
    %109 = vector.extract_strided_slice %107 {offsets = [0, 128], sizes = [8, 128], strides = [1, 1]} : vector<8x384xf32> to vector<8x128xf32>
    %110 = vector.extract_strided_slice %107 {offsets = [0, 256], sizes = [8, 128], strides = [1, 1]} : vector<8x384xf32> to vector<8x128xf32>
    %111 = vector.extract_strided_slice %101 {offsets = [0, 384], sizes = [8, 128], strides = [1, 1]} : vector<8x512xf32> to vector<8x128xf32>
    %112 = math.tanh %111 : vector<8x128xf32>
    %113 = arith.mulf %109, %67 : vector<8x128xf32>
    %114 = arith.mulf %108, %112 : vector<8x128xf32>
    %115 = arith.addf %113, %114 : vector<8x128xf32>
    %116 = math.tanh %115 : vector<8x128xf32>
    %117 = arith.mulf %110, %116 : vector<8x128xf32>
    %118 = tpu.concatenate %69, %93 in 1 : vector<8x128xf32>, vector<8x128xf32> -> vector<8x256xf32>
    %c1_44 = arith.constant 1 : index
    %c0_45 = arith.constant 0 : index
    %c0_46 = arith.constant 0 : index
    %119 = vector.load %arg3[%c1_44, %c0_45, %c0_46] : memref<4x256x512xf32, #tpu.memory_space<vmem>>, vector<1x256x512xf32>
    %120 = vector.shape_cast %119 : vector<1x256x512xf32> to vector<256x512xf32>
    %cst_47 = arith.constant dense<0.000000e+00> : vector<8x512xf32>
    %121 = tpu.matmul %118, %120, %cst_47 {dimension_numbers = #tpu.dot_dimension_numbers<[1], [0], [0], [1], [0, 0, 1, 1], [], []>} : vector<8x256xf32>, vector<256x512xf32>, vector<8x512xf32> -> vector<8x512xf32>
    %c1_48 = arith.constant 1 : index
    %c0_49 = arith.constant 0 : index
    %c0_50 = arith.constant 0 : index
    %122 = vector.load %arg4[%c1_48, %c0_49, %c0_50] : memref<4x1x512xf32, #tpu.memory_space<vmem>>, vector<1x1x512xf32>
    %123 = vector.shape_cast %122 : vector<1x1x512xf32> to vector<1x512xf32>
    %124 = vector.broadcast %123 : vector<1x512xf32> to vector<8x512xf32>
    %125 = arith.addf %121, %124 : vector<8x512xf32>
    %126 = vector.extract_strided_slice %125 {offsets = [0, 0], sizes = [8, 384], strides = [1, 1]} : vector<8x512xf32> to vector<8x384xf32>
    %127 = arith.negf %126 : vector<8x384xf32>
    %128 = math.exp %127 : vector<8x384xf32>
    %cst_51 = arith.constant 1.000000e+00 : f32
    %129 = vector.broadcast %cst_51 : f32 to vector<8x384xf32>
    %130 = arith.addf %129, %128 : vector<8x384xf32>
    %131 = arith.divf %129, %130 : vector<8x384xf32>
    %132 = vector.extract_strided_slice %131 {offsets = [0, 0], sizes = [8, 128], strides = [1, 1]} : vector<8x384xf32> to vector<8x128xf32>
    %133 = vector.extract_strided_slice %131 {offsets = [0, 128], sizes = [8, 128], strides = [1, 1]} : vector<8x384xf32> to vector<8x128xf32>
    %134 = vector.extract_strided_slice %131 {offsets = [0, 256], sizes = [8, 128], strides = [1, 1]} : vector<8x384xf32> to vector<8x128xf32>
    %135 = vector.extract_strided_slice %125 {offsets = [0, 384], sizes = [8, 128], strides = [1, 1]} : vector<8x512xf32> to vector<8x128xf32>
    %136 = math.tanh %135 : vector<8x128xf32>
    %137 = arith.mulf %133, %91 : vector<8x128xf32>
    %138 = arith.mulf %132, %136 : vector<8x128xf32>
    %139 = arith.addf %137, %138 : vector<8x128xf32>
    %140 = math.tanh %139 : vector<8x128xf32>
    %141 = arith.mulf %134, %140 : vector<8x128xf32>
    %142 = tpu.concatenate %93, %16 in 1 : vector<8x128xf32>, vector<8x128xf32> -> vector<8x256xf32>
    %c2 = arith.constant 2 : index
    %c0_52 = arith.constant 0 : index
    %c0_53 = arith.constant 0 : index
    %143 = vector.load %arg3[%c2, %c0_52, %c0_53] : memref<4x256x512xf32, #tpu.memory_space<vmem>>, vector<1x256x512xf32>
    %144 = vector.shape_cast %143 : vector<1x256x512xf32> to vector<256x512xf32>
    %cst_54 = arith.constant dense<0.000000e+00> : vector<8x512xf32>
    %145 = tpu.matmul %142, %144, %cst_54 {dimension_numbers = #tpu.dot_dimension_numbers<[1], [0], [0], [1], [0, 0, 1, 1], [], []>} : vector<8x256xf32>, vector<256x512xf32>, vector<8x512xf32> -> vector<8x512xf32>
    %c2_55 = arith.constant 2 : index
    %c0_56 = arith.constant 0 : index
    %c0_57 = arith.constant 0 : index
    %146 = vector.load %arg4[%c2_55, %c0_56, %c0_57] : memref<4x1x512xf32, #tpu.memory_space<vmem>>, vector<1x1x512xf32>
    %147 = vector.shape_cast %146 : vector<1x1x512xf32> to vector<1x512xf32>
    %148 = vector.broadcast %147 : vector<1x512xf32> to vector<8x512xf32>
    %149 = arith.addf %145, %148 : vector<8x512xf32>
    %150 = vector.extract_strided_slice %149 {offsets = [0, 0], sizes = [8, 384], strides = [1, 1]} : vector<8x512xf32> to vector<8x384xf32>
    %151 = arith.negf %150 : vector<8x384xf32>
    %152 = math.exp %151 : vector<8x384xf32>
    %cst_58 = arith.constant 1.000000e+00 : f32
    %153 = vector.broadcast %cst_58 : f32 to vector<8x384xf32>
    %154 = arith.addf %153, %152 : vector<8x384xf32>
    %155 = arith.divf %153, %154 : vector<8x384xf32>
    %156 = vector.extract_strided_slice %155 {offsets = [0, 0], sizes = [8, 128], strides = [1, 1]} : vector<8x384xf32> to vector<8x128xf32>
    %157 = vector.extract_strided_slice %155 {offsets = [0, 128], sizes = [8, 128], strides = [1, 1]} : vector<8x384xf32> to vector<8x128xf32>
    %158 = vector.extract_strided_slice %155 {offsets = [0, 256], sizes = [8, 128], strides = [1, 1]} : vector<8x384xf32> to vector<8x128xf32>
    %159 = vector.extract_strided_slice %149 {offsets = [0, 384], sizes = [8, 128], strides = [1, 1]} : vector<8x512xf32> to vector<8x128xf32>
    %160 = math.tanh %159 : vector<8x128xf32>
    %161 = arith.mulf %157, %20 : vector<8x128xf32>
    %162 = arith.mulf %156, %160 : vector<8x128xf32>
    %163 = arith.addf %161, %162 : vector<8x128xf32>
    %164 = math.tanh %163 : vector<8x128xf32>
    %165 = arith.mulf %158, %164 : vector<8x128xf32>
    %166 = tpu.concatenate %9, %117 in 1 : vector<8x128xf32>, vector<8x128xf32> -> vector<8x256xf32>
    %c0_59 = arith.constant 0 : index
    %c0_60 = arith.constant 0 : index
    %c0_61 = arith.constant 0 : index
    %167 = vector.load %arg3[%c0_59, %c0_60, %c0_61] : memref<4x256x512xf32, #tpu.memory_space<vmem>>, vector<1x256x512xf32>
    %168 = vector.shape_cast %167 : vector<1x256x512xf32> to vector<256x512xf32>
    %cst_62 = arith.constant dense<0.000000e+00> : vector<8x512xf32>
    %169 = tpu.matmul %166, %168, %cst_62 {dimension_numbers = #tpu.dot_dimension_numbers<[1], [0], [0], [1], [0, 0, 1, 1], [], []>} : vector<8x256xf32>, vector<256x512xf32>, vector<8x512xf32> -> vector<8x512xf32>
    %c0_63 = arith.constant 0 : index
    %c0_64 = arith.constant 0 : index
    %c0_65 = arith.constant 0 : index
    %170 = vector.load %arg4[%c0_63, %c0_64, %c0_65] : memref<4x1x512xf32, #tpu.memory_space<vmem>>, vector<1x1x512xf32>
    %171 = vector.shape_cast %170 : vector<1x1x512xf32> to vector<1x512xf32>
    %172 = vector.broadcast %171 : vector<1x512xf32> to vector<8x512xf32>
    %173 = arith.addf %169, %172 : vector<8x512xf32>
    %174 = vector.extract_strided_slice %173 {offsets = [0, 0], sizes = [8, 384], strides = [1, 1]} : vector<8x512xf32> to vector<8x384xf32>
    %175 = arith.negf %174 : vector<8x384xf32>
    %176 = math.exp %175 : vector<8x384xf32>
    %cst_66 = arith.constant 1.000000e+00 : f32
    %177 = vector.broadcast %cst_66 : f32 to vector<8x384xf32>
    %178 = arith.addf %177, %176 : vector<8x384xf32>
    %179 = arith.divf %177, %178 : vector<8x384xf32>
    %180 = vector.extract_strided_slice %179 {offsets = [0, 0], sizes = [8, 128], strides = [1, 1]} : vector<8x384xf32> to vector<8x128xf32>
    %181 = vector.extract_strided_slice %179 {offsets = [0, 128], sizes = [8, 128], strides = [1, 1]} : vector<8x384xf32> to vector<8x128xf32>
    %182 = vector.extract_strided_slice %179 {offsets = [0, 256], sizes = [8, 128], strides = [1, 1]} : vector<8x384xf32> to vector<8x128xf32>
    %183 = vector.extract_strided_slice %173 {offsets = [0, 384], sizes = [8, 128], strides = [1, 1]} : vector<8x512xf32> to vector<8x128xf32>
    %184 = math.tanh %183 : vector<8x128xf32>
    %185 = arith.mulf %181, %115 : vector<8x128xf32>
    %186 = arith.mulf %180, %184 : vector<8x128xf32>
    %187 = arith.addf %185, %186 : vector<8x128xf32>
    %188 = math.tanh %187 : vector<8x128xf32>
    %189 = arith.mulf %182, %188 : vector<8x128xf32>
    %190 = tpu.concatenate %117, %141 in 1 : vector<8x128xf32>, vector<8x128xf32> -> vector<8x256xf32>
    %c1_67 = arith.constant 1 : index
    %c0_68 = arith.constant 0 : index
    %c0_69 = arith.constant 0 : index
    %191 = vector.load %arg3[%c1_67, %c0_68, %c0_69] : memref<4x256x512xf32, #tpu.memory_space<vmem>>, vector<1x256x512xf32>
    %192 = vector.shape_cast %191 : vector<1x256x512xf32> to vector<256x512xf32>
    %cst_70 = arith.constant dense<0.000000e+00> : vector<8x512xf32>
    %193 = tpu.matmul %190, %192, %cst_70 {dimension_numbers = #tpu.dot_dimension_numbers<[1], [0], [0], [1], [0, 0, 1, 1], [], []>} : vector<8x256xf32>, vector<256x512xf32>, vector<8x512xf32> -> vector<8x512xf32>
    %c1_71 = arith.constant 1 : index
    %c0_72 = arith.constant 0 : index
    %c0_73 = arith.constant 0 : index
    %194 = vector.load %arg4[%c1_71, %c0_72, %c0_73] : memref<4x1x512xf32, #tpu.memory_space<vmem>>, vector<1x1x512xf32>
    %195 = vector.shape_cast %194 : vector<1x1x512xf32> to vector<1x512xf32>
    %196 = vector.broadcast %195 : vector<1x512xf32> to vector<8x512xf32>
    %197 = arith.addf %193, %196 : vector<8x512xf32>
    %198 = vector.extract_strided_slice %197 {offsets = [0, 0], sizes = [8, 384], strides = [1, 1]} : vector<8x512xf32> to vector<8x384xf32>
    %199 = arith.negf %198 : vector<8x384xf32>
    %200 = math.exp %199 : vector<8x384xf32>
    %cst_74 = arith.constant 1.000000e+00 : f32
    %201 = vector.broadcast %cst_74 : f32 to vector<8x384xf32>
    %202 = arith.addf %201, %200 : vector<8x384xf32>
    %203 = arith.divf %201, %202 : vector<8x384xf32>
    %204 = vector.extract_strided_slice %203 {offsets = [0, 0], sizes = [8, 128], strides = [1, 1]} : vector<8x384xf32> to vector<8x128xf32>
    %205 = vector.extract_strided_slice %203 {offsets = [0, 128], sizes = [8, 128], strides = [1, 1]} : vector<8x384xf32> to vector<8x128xf32>
    %206 = vector.extract_strided_slice %203 {offsets = [0, 256], sizes = [8, 128], strides = [1, 1]} : vector<8x384xf32> to vector<8x128xf32>
    %207 = vector.extract_strided_slice %197 {offsets = [0, 384], sizes = [8, 128], strides = [1, 1]} : vector<8x512xf32> to vector<8x128xf32>
    %208 = math.tanh %207 : vector<8x128xf32>
    %209 = arith.mulf %205, %139 : vector<8x128xf32>
    %210 = arith.mulf %204, %208 : vector<8x128xf32>
    %211 = arith.addf %209, %210 : vector<8x128xf32>
    %212 = math.tanh %211 : vector<8x128xf32>
    %213 = arith.mulf %206, %212 : vector<8x128xf32>
    %214 = tpu.concatenate %141, %165 in 1 : vector<8x128xf32>, vector<8x128xf32> -> vector<8x256xf32>
    %c2_75 = arith.constant 2 : index
    %c0_76 = arith.constant 0 : index
    %c0_77 = arith.constant 0 : index
    %215 = vector.load %arg3[%c2_75, %c0_76, %c0_77] : memref<4x256x512xf32, #tpu.memory_space<vmem>>, vector<1x256x512xf32>
    %216 = vector.shape_cast %215 : vector<1x256x512xf32> to vector<256x512xf32>
    %cst_78 = arith.constant dense<0.000000e+00> : vector<8x512xf32>
    %217 = tpu.matmul %214, %216, %cst_78 {dimension_numbers = #tpu.dot_dimension_numbers<[1], [0], [0], [1], [0, 0, 1, 1], [], []>} : vector<8x256xf32>, vector<256x512xf32>, vector<8x512xf32> -> vector<8x512xf32>
    %c2_79 = arith.constant 2 : index
    %c0_80 = arith.constant 0 : index
    %c0_81 = arith.constant 0 : index
    %218 = vector.load %arg4[%c2_79, %c0_80, %c0_81] : memref<4x1x512xf32, #tpu.memory_space<vmem>>, vector<1x1x512xf32>
    %219 = vector.shape_cast %218 : vector<1x1x512xf32> to vector<1x512xf32>
    %220 = vector.broadcast %219 : vector<1x512xf32> to vector<8x512xf32>
    %221 = arith.addf %217, %220 : vector<8x512xf32>
    %222 = vector.extract_strided_slice %221 {offsets = [0, 0], sizes = [8, 384], strides = [1, 1]} : vector<8x512xf32> to vector<8x384xf32>
    %223 = arith.negf %222 : vector<8x384xf32>
    %224 = math.exp %223 : vector<8x384xf32>
    %cst_82 = arith.constant 1.000000e+00 : f32
    %225 = vector.broadcast %cst_82 : f32 to vector<8x384xf32>
    %226 = arith.addf %225, %224 : vector<8x384xf32>
    %227 = arith.divf %225, %226 : vector<8x384xf32>
    %228 = vector.extract_strided_slice %227 {offsets = [0, 0], sizes = [8, 128], strides = [1, 1]} : vector<8x384xf32> to vector<8x128xf32>
    %229 = vector.extract_strided_slice %227 {offsets = [0, 128], sizes = [8, 128], strides = [1, 1]} : vector<8x384xf32> to vector<8x128xf32>
    %230 = vector.extract_strided_slice %227 {offsets = [0, 256], sizes = [8, 128], strides = [1, 1]} : vector<8x384xf32> to vector<8x128xf32>
    %231 = vector.extract_strided_slice %221 {offsets = [0, 384], sizes = [8, 128], strides = [1, 1]} : vector<8x512xf32> to vector<8x128xf32>
    %232 = math.tanh %231 : vector<8x128xf32>
    %233 = arith.mulf %229, %163 : vector<8x128xf32>
    %234 = arith.mulf %228, %232 : vector<8x128xf32>
    %235 = arith.addf %233, %234 : vector<8x128xf32>
    %236 = math.tanh %235 : vector<8x128xf32>
    %237 = arith.mulf %230, %236 : vector<8x128xf32>
    %238 = tpu.concatenate %165, %17 in 1 : vector<8x128xf32>, vector<8x128xf32> -> vector<8x256xf32>
    %c3 = arith.constant 3 : index
    %c0_83 = arith.constant 0 : index
    %c0_84 = arith.constant 0 : index
    %239 = vector.load %arg3[%c3, %c0_83, %c0_84] : memref<4x256x512xf32, #tpu.memory_space<vmem>>, vector<1x256x512xf32>
    %240 = vector.shape_cast %239 : vector<1x256x512xf32> to vector<256x512xf32>
    %cst_85 = arith.constant dense<0.000000e+00> : vector<8x512xf32>
    %241 = tpu.matmul %238, %240, %cst_85 {dimension_numbers = #tpu.dot_dimension_numbers<[1], [0], [0], [1], [0, 0, 1, 1], [], []>} : vector<8x256xf32>, vector<256x512xf32>, vector<8x512xf32> -> vector<8x512xf32>
    %c3_86 = arith.constant 3 : index
    %c0_87 = arith.constant 0 : index
    %c0_88 = arith.constant 0 : index
    %242 = vector.load %arg4[%c3_86, %c0_87, %c0_88] : memref<4x1x512xf32, #tpu.memory_space<vmem>>, vector<1x1x512xf32>
    %243 = vector.shape_cast %242 : vector<1x1x512xf32> to vector<1x512xf32>
    %244 = vector.broadcast %243 : vector<1x512xf32> to vector<8x512xf32>
    %245 = arith.addf %241, %244 : vector<8x512xf32>
    %246 = vector.extract_strided_slice %245 {offsets = [0, 0], sizes = [8, 384], strides = [1, 1]} : vector<8x512xf32> to vector<8x384xf32>
    %247 = arith.negf %246 : vector<8x384xf32>
    %248 = math.exp %247 : vector<8x384xf32>
    %cst_89 = arith.constant 1.000000e+00 : f32
    %249 = vector.broadcast %cst_89 : f32 to vector<8x384xf32>
    %250 = arith.addf %249, %248 : vector<8x384xf32>
    %251 = arith.divf %249, %250 : vector<8x384xf32>
    %252 = vector.extract_strided_slice %251 {offsets = [0, 0], sizes = [8, 128], strides = [1, 1]} : vector<8x384xf32> to vector<8x128xf32>
    %253 = vector.extract_strided_slice %251 {offsets = [0, 128], sizes = [8, 128], strides = [1, 1]} : vector<8x384xf32> to vector<8x128xf32>
    %254 = vector.extract_strided_slice %251 {offsets = [0, 256], sizes = [8, 128], strides = [1, 1]} : vector<8x384xf32> to vector<8x128xf32>
    %255 = vector.extract_strided_slice %245 {offsets = [0, 384], sizes = [8, 128], strides = [1, 1]} : vector<8x512xf32> to vector<8x128xf32>
    %256 = math.tanh %255 : vector<8x128xf32>
    %257 = arith.mulf %253, %21 : vector<8x128xf32>
    %258 = arith.mulf %252, %256 : vector<8x128xf32>
    %259 = arith.addf %257, %258 : vector<8x128xf32>
    %260 = math.tanh %259 : vector<8x128xf32>
    %261 = arith.mulf %254, %260 : vector<8x128xf32>
    %262 = tpu.concatenate %10, %189 in 1 : vector<8x128xf32>, vector<8x128xf32> -> vector<8x256xf32>
    %c0_90 = arith.constant 0 : index
    %c0_91 = arith.constant 0 : index
    %c0_92 = arith.constant 0 : index
    %263 = vector.load %arg3[%c0_90, %c0_91, %c0_92] : memref<4x256x512xf32, #tpu.memory_space<vmem>>, vector<1x256x512xf32>
    %264 = vector.shape_cast %263 : vector<1x256x512xf32> to vector<256x512xf32>
    %cst_93 = arith.constant dense<0.000000e+00> : vector<8x512xf32>
    %265 = tpu.matmul %262, %264, %cst_93 {dimension_numbers = #tpu.dot_dimension_numbers<[1], [0], [0], [1], [0, 0, 1, 1], [], []>} : vector<8x256xf32>, vector<256x512xf32>, vector<8x512xf32> -> vector<8x512xf32>
    %c0_94 = arith.constant 0 : index
    %c0_95 = arith.constant 0 : index
    %c0_96 = arith.constant 0 : index
    %266 = vector.load %arg4[%c0_94, %c0_95, %c0_96] : memref<4x1x512xf32, #tpu.memory_space<vmem>>, vector<1x1x512xf32>
    %267 = vector.shape_cast %266 : vector<1x1x512xf32> to vector<1x512xf32>
    %268 = vector.broadcast %267 : vector<1x512xf32> to vector<8x512xf32>
    %269 = arith.addf %265, %268 : vector<8x512xf32>
    %270 = vector.extract_strided_slice %269 {offsets = [0, 0], sizes = [8, 384], strides = [1, 1]} : vector<8x512xf32> to vector<8x384xf32>
    %271 = arith.negf %270 : vector<8x384xf32>
    %272 = math.exp %271 : vector<8x384xf32>
    %cst_97 = arith.constant 1.000000e+00 : f32
    %273 = vector.broadcast %cst_97 : f32 to vector<8x384xf32>
    %274 = arith.addf %273, %272 : vector<8x384xf32>
    %275 = arith.divf %273, %274 : vector<8x384xf32>
    %276 = vector.extract_strided_slice %275 {offsets = [0, 0], sizes = [8, 128], strides = [1, 1]} : vector<8x384xf32> to vector<8x128xf32>
    %277 = vector.extract_strided_slice %275 {offsets = [0, 128], sizes = [8, 128], strides = [1, 1]} : vector<8x384xf32> to vector<8x128xf32>
    %278 = vector.extract_strided_slice %275 {offsets = [0, 256], sizes = [8, 128], strides = [1, 1]} : vector<8x384xf32> to vector<8x128xf32>
    %279 = vector.extract_strided_slice %269 {offsets = [0, 384], sizes = [8, 128], strides = [1, 1]} : vector<8x512xf32> to vector<8x128xf32>
    %280 = math.tanh %279 : vector<8x128xf32>
    %281 = arith.mulf %277, %187 : vector<8x128xf32>
    %282 = arith.mulf %276, %280 : vector<8x128xf32>
    %283 = arith.addf %281, %282 : vector<8x128xf32>
    %284 = math.tanh %283 : vector<8x128xf32>
    %285 = arith.mulf %278, %284 : vector<8x128xf32>
    %286 = tpu.concatenate %189, %213 in 1 : vector<8x128xf32>, vector<8x128xf32> -> vector<8x256xf32>
    %c1_98 = arith.constant 1 : index
    %c0_99 = arith.constant 0 : index
    %c0_100 = arith.constant 0 : index
    %287 = vector.load %arg3[%c1_98, %c0_99, %c0_100] : memref<4x256x512xf32, #tpu.memory_space<vmem>>, vector<1x256x512xf32>
    %288 = vector.shape_cast %287 : vector<1x256x512xf32> to vector<256x512xf32>
    %cst_101 = arith.constant dense<0.000000e+00> : vector<8x512xf32>
    %289 = tpu.matmul %286, %288, %cst_101 {dimension_numbers = #tpu.dot_dimension_numbers<[1], [0], [0], [1], [0, 0, 1, 1], [], []>} : vector<8x256xf32>, vector<256x512xf32>, vector<8x512xf32> -> vector<8x512xf32>
    %c1_102 = arith.constant 1 : index
    %c0_103 = arith.constant 0 : index
    %c0_104 = arith.constant 0 : index
    %290 = vector.load %arg4[%c1_102, %c0_103, %c0_104] : memref<4x1x512xf32, #tpu.memory_space<vmem>>, vector<1x1x512xf32>
    %291 = vector.shape_cast %290 : vector<1x1x512xf32> to vector<1x512xf32>
    %292 = vector.broadcast %291 : vector<1x512xf32> to vector<8x512xf32>
    %293 = arith.addf %289, %292 : vector<8x512xf32>
    %294 = vector.extract_strided_slice %293 {offsets = [0, 0], sizes = [8, 384], strides = [1, 1]} : vector<8x512xf32> to vector<8x384xf32>
    %295 = arith.negf %294 : vector<8x384xf32>
    %296 = math.exp %295 : vector<8x384xf32>
    %cst_105 = arith.constant 1.000000e+00 : f32
    %297 = vector.broadcast %cst_105 : f32 to vector<8x384xf32>
    %298 = arith.addf %297, %296 : vector<8x384xf32>
    %299 = arith.divf %297, %298 : vector<8x384xf32>
    %300 = vector.extract_strided_slice %299 {offsets = [0, 0], sizes = [8, 128], strides = [1, 1]} : vector<8x384xf32> to vector<8x128xf32>
    %301 = vector.extract_strided_slice %299 {offsets = [0, 128], sizes = [8, 128], strides = [1, 1]} : vector<8x384xf32> to vector<8x128xf32>
    %302 = vector.extract_strided_slice %299 {offsets = [0, 256], sizes = [8, 128], strides = [1, 1]} : vector<8x384xf32> to vector<8x128xf32>
    %303 = vector.extract_strided_slice %293 {offsets = [0, 384], sizes = [8, 128], strides = [1, 1]} : vector<8x512xf32> to vector<8x128xf32>
    %304 = math.tanh %303 : vector<8x128xf32>
    %305 = arith.mulf %301, %211 : vector<8x128xf32>
    %306 = arith.mulf %300, %304 : vector<8x128xf32>
    %307 = arith.addf %305, %306 : vector<8x128xf32>
    %308 = math.tanh %307 : vector<8x128xf32>
    %309 = arith.mulf %302, %308 : vector<8x128xf32>
    %310 = tpu.concatenate %213, %237 in 1 : vector<8x128xf32>, vector<8x128xf32> -> vector<8x256xf32>
    %c2_106 = arith.constant 2 : index
    %c0_107 = arith.constant 0 : index
    %c0_108 = arith.constant 0 : index
    %311 = vector.load %arg3[%c2_106, %c0_107, %c0_108] : memref<4x256x512xf32, #tpu.memory_space<vmem>>, vector<1x256x512xf32>
    %312 = vector.shape_cast %311 : vector<1x256x512xf32> to vector<256x512xf32>
    %cst_109 = arith.constant dense<0.000000e+00> : vector<8x512xf32>
    %313 = tpu.matmul %310, %312, %cst_109 {dimension_numbers = #tpu.dot_dimension_numbers<[1], [0], [0], [1], [0, 0, 1, 1], [], []>} : vector<8x256xf32>, vector<256x512xf32>, vector<8x512xf32> -> vector<8x512xf32>
    %c2_110 = arith.constant 2 : index
    %c0_111 = arith.constant 0 : index
    %c0_112 = arith.constant 0 : index
    %314 = vector.load %arg4[%c2_110, %c0_111, %c0_112] : memref<4x1x512xf32, #tpu.memory_space<vmem>>, vector<1x1x512xf32>
    %315 = vector.shape_cast %314 : vector<1x1x512xf32> to vector<1x512xf32>
    %316 = vector.broadcast %315 : vector<1x512xf32> to vector<8x512xf32>
    %317 = arith.addf %313, %316 : vector<8x512xf32>
    %318 = vector.extract_strided_slice %317 {offsets = [0, 0], sizes = [8, 384], strides = [1, 1]} : vector<8x512xf32> to vector<8x384xf32>
    %319 = arith.negf %318 : vector<8x384xf32>
    %320 = math.exp %319 : vector<8x384xf32>
    %cst_113 = arith.constant 1.000000e+00 : f32
    %321 = vector.broadcast %cst_113 : f32 to vector<8x384xf32>
    %322 = arith.addf %321, %320 : vector<8x384xf32>
    %323 = arith.divf %321, %322 : vector<8x384xf32>
    %324 = vector.extract_strided_slice %323 {offsets = [0, 0], sizes = [8, 128], strides = [1, 1]} : vector<8x384xf32> to vector<8x128xf32>
    %325 = vector.extract_strided_slice %323 {offsets = [0, 128], sizes = [8, 128], strides = [1, 1]} : vector<8x384xf32> to vector<8x128xf32>
    %326 = vector.extract_strided_slice %323 {offsets = [0, 256], sizes = [8, 128], strides = [1, 1]} : vector<8x384xf32> to vector<8x128xf32>
    %327 = vector.extract_strided_slice %317 {offsets = [0, 384], sizes = [8, 128], strides = [1, 1]} : vector<8x512xf32> to vector<8x128xf32>
    %328 = math.tanh %327 : vector<8x128xf32>
    %329 = arith.mulf %325, %235 : vector<8x128xf32>
    %330 = arith.mulf %324, %328 : vector<8x128xf32>
    %331 = arith.addf %329, %330 : vector<8x128xf32>
    %332 = math.tanh %331 : vector<8x128xf32>
    %333 = arith.mulf %326, %332 : vector<8x128xf32>
    %334 = tpu.concatenate %237, %261 in 1 : vector<8x128xf32>, vector<8x128xf32> -> vector<8x256xf32>
    %c3_114 = arith.constant 3 : index
    %c0_115 = arith.constant 0 : index
    %c0_116 = arith.constant 0 : index
    %335 = vector.load %arg3[%c3_114, %c0_115, %c0_116] : memref<4x256x512xf32, #tpu.memory_space<vmem>>, vector<1x256x512xf32>
    %336 = vector.shape_cast %335 : vector<1x256x512xf32> to vector<256x512xf32>
    %cst_117 = arith.constant dense<0.000000e+00> : vector<8x512xf32>
    %337 = tpu.matmul %334, %336, %cst_117 {dimension_numbers = #tpu.dot_dimension_numbers<[1], [0], [0], [1], [0, 0, 1, 1], [], []>} : vector<8x256xf32>, vector<256x512xf32>, vector<8x512xf32> -> vector<8x512xf32>
    %c3_118 = arith.constant 3 : index
    %c0_119 = arith.constant 0 : index
    %c0_120 = arith.constant 0 : index
    %338 = vector.load %arg4[%c3_118, %c0_119, %c0_120] : memref<4x1x512xf32, #tpu.memory_space<vmem>>, vector<1x1x512xf32>
    %339 = vector.shape_cast %338 : vector<1x1x512xf32> to vector<1x512xf32>
    %340 = vector.broadcast %339 : vector<1x512xf32> to vector<8x512xf32>
    %341 = arith.addf %337, %340 : vector<8x512xf32>
    %342 = vector.extract_strided_slice %341 {offsets = [0, 0], sizes = [8, 384], strides = [1, 1]} : vector<8x512xf32> to vector<8x384xf32>
    %343 = arith.negf %342 : vector<8x384xf32>
    %344 = math.exp %343 : vector<8x384xf32>
    %cst_121 = arith.constant 1.000000e+00 : f32
    %345 = vector.broadcast %cst_121 : f32 to vector<8x384xf32>
    %346 = arith.addf %345, %344 : vector<8x384xf32>
    %347 = arith.divf %345, %346 : vector<8x384xf32>
    %348 = vector.extract_strided_slice %347 {offsets = [0, 0], sizes = [8, 128], strides = [1, 1]} : vector<8x384xf32> to vector<8x128xf32>
    %349 = vector.extract_strided_slice %347 {offsets = [0, 128], sizes = [8, 128], strides = [1, 1]} : vector<8x384xf32> to vector<8x128xf32>
    %350 = vector.extract_strided_slice %347 {offsets = [0, 256], sizes = [8, 128], strides = [1, 1]} : vector<8x384xf32> to vector<8x128xf32>
    %351 = vector.extract_strided_slice %341 {offsets = [0, 384], sizes = [8, 128], strides = [1, 1]} : vector<8x512xf32> to vector<8x128xf32>
    %352 = math.tanh %351 : vector<8x128xf32>
    %353 = arith.mulf %349, %259 : vector<8x128xf32>
    %354 = arith.mulf %348, %352 : vector<8x128xf32>
    %355 = arith.addf %353, %354 : vector<8x128xf32>
    %356 = math.tanh %355 : vector<8x128xf32>
    %357 = arith.mulf %350, %356 : vector<8x128xf32>
    %358 = tpu.concatenate %11, %285 in 1 : vector<8x128xf32>, vector<8x128xf32> -> vector<8x256xf32>
    %c0_122 = arith.constant 0 : index
    %c0_123 = arith.constant 0 : index
    %c0_124 = arith.constant 0 : index
    %359 = vector.load %arg3[%c0_122, %c0_123, %c0_124] : memref<4x256x512xf32, #tpu.memory_space<vmem>>, vector<1x256x512xf32>
    %360 = vector.shape_cast %359 : vector<1x256x512xf32> to vector<256x512xf32>
    %cst_125 = arith.constant dense<0.000000e+00> : vector<8x512xf32>
    %361 = tpu.matmul %358, %360, %cst_125 {dimension_numbers = #tpu.dot_dimension_numbers<[1], [0], [0], [1], [0, 0, 1, 1], [], []>} : vector<8x256xf32>, vector<256x512xf32>, vector<8x512xf32> -> vector<8x512xf32>
    %c0_126 = arith.constant 0 : index
    %c0_127 = arith.constant 0 : index
    %c0_128 = arith.constant 0 : index
    %362 = vector.load %arg4[%c0_126, %c0_127, %c0_128] : memref<4x1x512xf32, #tpu.memory_space<vmem>>, vector<1x1x512xf32>
    %363 = vector.shape_cast %362 : vector<1x1x512xf32> to vector<1x512xf32>
    %364 = vector.broadcast %363 : vector<1x512xf32> to vector<8x512xf32>
    %365 = arith.addf %361, %364 : vector<8x512xf32>
    %366 = vector.extract_strided_slice %365 {offsets = [0, 0], sizes = [8, 384], strides = [1, 1]} : vector<8x512xf32> to vector<8x384xf32>
    %367 = arith.negf %366 : vector<8x384xf32>
    %368 = math.exp %367 : vector<8x384xf32>
    %cst_129 = arith.constant 1.000000e+00 : f32
    %369 = vector.broadcast %cst_129 : f32 to vector<8x384xf32>
    %370 = arith.addf %369, %368 : vector<8x384xf32>
    %371 = arith.divf %369, %370 : vector<8x384xf32>
    %372 = vector.extract_strided_slice %371 {offsets = [0, 0], sizes = [8, 128], strides = [1, 1]} : vector<8x384xf32> to vector<8x128xf32>
    %373 = vector.extract_strided_slice %371 {offsets = [0, 128], sizes = [8, 128], strides = [1, 1]} : vector<8x384xf32> to vector<8x128xf32>
    %374 = vector.extract_strided_slice %371 {offsets = [0, 256], sizes = [8, 128], strides = [1, 1]} : vector<8x384xf32> to vector<8x128xf32>
    %375 = vector.extract_strided_slice %365 {offsets = [0, 384], sizes = [8, 128], strides = [1, 1]} : vector<8x512xf32> to vector<8x128xf32>
    %376 = math.tanh %375 : vector<8x128xf32>
    %377 = arith.mulf %373, %283 : vector<8x128xf32>
    %378 = arith.mulf %372, %376 : vector<8x128xf32>
    %379 = arith.addf %377, %378 : vector<8x128xf32>
    %380 = math.tanh %379 : vector<8x128xf32>
    %381 = arith.mulf %374, %380 : vector<8x128xf32>
    %382 = tpu.concatenate %285, %309 in 1 : vector<8x128xf32>, vector<8x128xf32> -> vector<8x256xf32>
    %c1_130 = arith.constant 1 : index
    %c0_131 = arith.constant 0 : index
    %c0_132 = arith.constant 0 : index
    %383 = vector.load %arg3[%c1_130, %c0_131, %c0_132] : memref<4x256x512xf32, #tpu.memory_space<vmem>>, vector<1x256x512xf32>
    %384 = vector.shape_cast %383 : vector<1x256x512xf32> to vector<256x512xf32>
    %cst_133 = arith.constant dense<0.000000e+00> : vector<8x512xf32>
    %385 = tpu.matmul %382, %384, %cst_133 {dimension_numbers = #tpu.dot_dimension_numbers<[1], [0], [0], [1], [0, 0, 1, 1], [], []>} : vector<8x256xf32>, vector<256x512xf32>, vector<8x512xf32> -> vector<8x512xf32>
    %c1_134 = arith.constant 1 : index
    %c0_135 = arith.constant 0 : index
    %c0_136 = arith.constant 0 : index
    %386 = vector.load %arg4[%c1_134, %c0_135, %c0_136] : memref<4x1x512xf32, #tpu.memory_space<vmem>>, vector<1x1x512xf32>
    %387 = vector.shape_cast %386 : vector<1x1x512xf32> to vector<1x512xf32>
    %388 = vector.broadcast %387 : vector<1x512xf32> to vector<8x512xf32>
    %389 = arith.addf %385, %388 : vector<8x512xf32>
    %390 = vector.extract_strided_slice %389 {offsets = [0, 0], sizes = [8, 384], strides = [1, 1]} : vector<8x512xf32> to vector<8x384xf32>
    %391 = arith.negf %390 : vector<8x384xf32>
    %392 = math.exp %391 : vector<8x384xf32>
    %cst_137 = arith.constant 1.000000e+00 : f32
    %393 = vector.broadcast %cst_137 : f32 to vector<8x384xf32>
    %394 = arith.addf %393, %392 : vector<8x384xf32>
    %395 = arith.divf %393, %394 : vector<8x384xf32>
    %396 = vector.extract_strided_slice %395 {offsets = [0, 0], sizes = [8, 128], strides = [1, 1]} : vector<8x384xf32> to vector<8x128xf32>
    %397 = vector.extract_strided_slice %395 {offsets = [0, 128], sizes = [8, 128], strides = [1, 1]} : vector<8x384xf32> to vector<8x128xf32>
    %398 = vector.extract_strided_slice %395 {offsets = [0, 256], sizes = [8, 128], strides = [1, 1]} : vector<8x384xf32> to vector<8x128xf32>
    %399 = vector.extract_strided_slice %389 {offsets = [0, 384], sizes = [8, 128], strides = [1, 1]} : vector<8x512xf32> to vector<8x128xf32>
    %400 = math.tanh %399 : vector<8x128xf32>
    %401 = arith.mulf %397, %307 : vector<8x128xf32>
    %402 = arith.mulf %396, %400 : vector<8x128xf32>
    %403 = arith.addf %401, %402 : vector<8x128xf32>
    %404 = math.tanh %403 : vector<8x128xf32>
    %405 = arith.mulf %398, %404 : vector<8x128xf32>
    %406 = tpu.concatenate %309, %333 in 1 : vector<8x128xf32>, vector<8x128xf32> -> vector<8x256xf32>
    %c2_138 = arith.constant 2 : index
    %c0_139 = arith.constant 0 : index
    %c0_140 = arith.constant 0 : index
    %407 = vector.load %arg3[%c2_138, %c0_139, %c0_140] : memref<4x256x512xf32, #tpu.memory_space<vmem>>, vector<1x256x512xf32>
    %408 = vector.shape_cast %407 : vector<1x256x512xf32> to vector<256x512xf32>
    %cst_141 = arith.constant dense<0.000000e+00> : vector<8x512xf32>
    %409 = tpu.matmul %406, %408, %cst_141 {dimension_numbers = #tpu.dot_dimension_numbers<[1], [0], [0], [1], [0, 0, 1, 1], [], []>} : vector<8x256xf32>, vector<256x512xf32>, vector<8x512xf32> -> vector<8x512xf32>
    %c2_142 = arith.constant 2 : index
    %c0_143 = arith.constant 0 : index
    %c0_144 = arith.constant 0 : index
    %410 = vector.load %arg4[%c2_142, %c0_143, %c0_144] : memref<4x1x512xf32, #tpu.memory_space<vmem>>, vector<1x1x512xf32>
    %411 = vector.shape_cast %410 : vector<1x1x512xf32> to vector<1x512xf32>
    %412 = vector.broadcast %411 : vector<1x512xf32> to vector<8x512xf32>
    %413 = arith.addf %409, %412 : vector<8x512xf32>
    %414 = vector.extract_strided_slice %413 {offsets = [0, 0], sizes = [8, 384], strides = [1, 1]} : vector<8x512xf32> to vector<8x384xf32>
    %415 = arith.negf %414 : vector<8x384xf32>
    %416 = math.exp %415 : vector<8x384xf32>
    %cst_145 = arith.constant 1.000000e+00 : f32
    %417 = vector.broadcast %cst_145 : f32 to vector<8x384xf32>
    %418 = arith.addf %417, %416 : vector<8x384xf32>
    %419 = arith.divf %417, %418 : vector<8x384xf32>
    %420 = vector.extract_strided_slice %419 {offsets = [0, 0], sizes = [8, 128], strides = [1, 1]} : vector<8x384xf32> to vector<8x128xf32>
    %421 = vector.extract_strided_slice %419 {offsets = [0, 128], sizes = [8, 128], strides = [1, 1]} : vector<8x384xf32> to vector<8x128xf32>
    %422 = vector.extract_strided_slice %419 {offsets = [0, 256], sizes = [8, 128], strides = [1, 1]} : vector<8x384xf32> to vector<8x128xf32>
    %423 = vector.extract_strided_slice %413 {offsets = [0, 384], sizes = [8, 128], strides = [1, 1]} : vector<8x512xf32> to vector<8x128xf32>
    %424 = math.tanh %423 : vector<8x128xf32>
    %425 = arith.mulf %421, %331 : vector<8x128xf32>
    %426 = arith.mulf %420, %424 : vector<8x128xf32>
    %427 = arith.addf %425, %426 : vector<8x128xf32>
    %428 = math.tanh %427 : vector<8x128xf32>
    %429 = arith.mulf %422, %428 : vector<8x128xf32>
    %430 = tpu.concatenate %333, %357 in 1 : vector<8x128xf32>, vector<8x128xf32> -> vector<8x256xf32>
    %c3_146 = arith.constant 3 : index
    %c0_147 = arith.constant 0 : index
    %c0_148 = arith.constant 0 : index
    %431 = vector.load %arg3[%c3_146, %c0_147, %c0_148] : memref<4x256x512xf32, #tpu.memory_space<vmem>>, vector<1x256x512xf32>
    %432 = vector.shape_cast %431 : vector<1x256x512xf32> to vector<256x512xf32>
    %cst_149 = arith.constant dense<0.000000e+00> : vector<8x512xf32>
    %433 = tpu.matmul %430, %432, %cst_149 {dimension_numbers = #tpu.dot_dimension_numbers<[1], [0], [0], [1], [0, 0, 1, 1], [], []>} : vector<8x256xf32>, vector<256x512xf32>, vector<8x512xf32> -> vector<8x512xf32>
    %c3_150 = arith.constant 3 : index
    %c0_151 = arith.constant 0 : index
    %c0_152 = arith.constant 0 : index
    %434 = vector.load %arg4[%c3_150, %c0_151, %c0_152] : memref<4x1x512xf32, #tpu.memory_space<vmem>>, vector<1x1x512xf32>
    %435 = vector.shape_cast %434 : vector<1x1x512xf32> to vector<1x512xf32>
    %436 = vector.broadcast %435 : vector<1x512xf32> to vector<8x512xf32>
    %437 = arith.addf %433, %436 : vector<8x512xf32>
    %438 = vector.extract_strided_slice %437 {offsets = [0, 0], sizes = [8, 384], strides = [1, 1]} : vector<8x512xf32> to vector<8x384xf32>
    %439 = arith.negf %438 : vector<8x384xf32>
    %440 = math.exp %439 : vector<8x384xf32>
    %cst_153 = arith.constant 1.000000e+00 : f32
    %441 = vector.broadcast %cst_153 : f32 to vector<8x384xf32>
    %442 = arith.addf %441, %440 : vector<8x384xf32>
    %443 = arith.divf %441, %442 : vector<8x384xf32>
    %444 = vector.extract_strided_slice %443 {offsets = [0, 0], sizes = [8, 128], strides = [1, 1]} : vector<8x384xf32> to vector<8x128xf32>
    %445 = vector.extract_strided_slice %443 {offsets = [0, 128], sizes = [8, 128], strides = [1, 1]} : vector<8x384xf32> to vector<8x128xf32>
    %446 = vector.extract_strided_slice %443 {offsets = [0, 256], sizes = [8, 128], strides = [1, 1]} : vector<8x384xf32> to vector<8x128xf32>
    %447 = vector.extract_strided_slice %437 {offsets = [0, 384], sizes = [8, 128], strides = [1, 1]} : vector<8x512xf32> to vector<8x128xf32>
    %448 = math.tanh %447 : vector<8x128xf32>
    %449 = arith.mulf %445, %355 : vector<8x128xf32>
    %450 = arith.mulf %444, %448 : vector<8x128xf32>
    %451 = arith.addf %449, %450 : vector<8x128xf32>
    %452 = math.tanh %451 : vector<8x128xf32>
    %453 = arith.mulf %446, %452 : vector<8x128xf32>
    %454 = tpu.concatenate %12, %381 in 1 : vector<8x128xf32>, vector<8x128xf32> -> vector<8x256xf32>
    %c0_154 = arith.constant 0 : index
    %c0_155 = arith.constant 0 : index
    %c0_156 = arith.constant 0 : index
    %455 = vector.load %arg3[%c0_154, %c0_155, %c0_156] : memref<4x256x512xf32, #tpu.memory_space<vmem>>, vector<1x256x512xf32>
    %456 = vector.shape_cast %455 : vector<1x256x512xf32> to vector<256x512xf32>
    %cst_157 = arith.constant dense<0.000000e+00> : vector<8x512xf32>
    %457 = tpu.matmul %454, %456, %cst_157 {dimension_numbers = #tpu.dot_dimension_numbers<[1], [0], [0], [1], [0, 0, 1, 1], [], []>} : vector<8x256xf32>, vector<256x512xf32>, vector<8x512xf32> -> vector<8x512xf32>
    %c0_158 = arith.constant 0 : index
    %c0_159 = arith.constant 0 : index
    %c0_160 = arith.constant 0 : index
    %458 = vector.load %arg4[%c0_158, %c0_159, %c0_160] : memref<4x1x512xf32, #tpu.memory_space<vmem>>, vector<1x1x512xf32>
    %459 = vector.shape_cast %458 : vector<1x1x512xf32> to vector<1x512xf32>
    %460 = vector.broadcast %459 : vector<1x512xf32> to vector<8x512xf32>
    %461 = arith.addf %457, %460 : vector<8x512xf32>
    %462 = vector.extract_strided_slice %461 {offsets = [0, 0], sizes = [8, 384], strides = [1, 1]} : vector<8x512xf32> to vector<8x384xf32>
    %463 = arith.negf %462 : vector<8x384xf32>
    %464 = math.exp %463 : vector<8x384xf32>
    %cst_161 = arith.constant 1.000000e+00 : f32
    %465 = vector.broadcast %cst_161 : f32 to vector<8x384xf32>
    %466 = arith.addf %465, %464 : vector<8x384xf32>
    %467 = arith.divf %465, %466 : vector<8x384xf32>
    %468 = vector.extract_strided_slice %467 {offsets = [0, 0], sizes = [8, 128], strides = [1, 1]} : vector<8x384xf32> to vector<8x128xf32>
    %469 = vector.extract_strided_slice %467 {offsets = [0, 128], sizes = [8, 128], strides = [1, 1]} : vector<8x384xf32> to vector<8x128xf32>
    %470 = vector.extract_strided_slice %467 {offsets = [0, 256], sizes = [8, 128], strides = [1, 1]} : vector<8x384xf32> to vector<8x128xf32>
    %471 = vector.extract_strided_slice %461 {offsets = [0, 384], sizes = [8, 128], strides = [1, 1]} : vector<8x512xf32> to vector<8x128xf32>
    %472 = math.tanh %471 : vector<8x128xf32>
    %473 = arith.mulf %469, %379 : vector<8x128xf32>
    %474 = arith.mulf %468, %472 : vector<8x128xf32>
    %475 = arith.addf %473, %474 : vector<8x128xf32>
    %476 = math.tanh %475 : vector<8x128xf32>
    %477 = arith.mulf %470, %476 : vector<8x128xf32>
    %478 = tpu.concatenate %381, %405 in 1 : vector<8x128xf32>, vector<8x128xf32> -> vector<8x256xf32>
    %c1_162 = arith.constant 1 : index
    %c0_163 = arith.constant 0 : index
    %c0_164 = arith.constant 0 : index
    %479 = vector.load %arg3[%c1_162, %c0_163, %c0_164] : memref<4x256x512xf32, #tpu.memory_space<vmem>>, vector<1x256x512xf32>
    %480 = vector.shape_cast %479 : vector<1x256x512xf32> to vector<256x512xf32>
    %cst_165 = arith.constant dense<0.000000e+00> : vector<8x512xf32>
    %481 = tpu.matmul %478, %480, %cst_165 {dimension_numbers = #tpu.dot_dimension_numbers<[1], [0], [0], [1], [0, 0, 1, 1], [], []>} : vector<8x256xf32>, vector<256x512xf32>, vector<8x512xf32> -> vector<8x512xf32>
    %c1_166 = arith.constant 1 : index
    %c0_167 = arith.constant 0 : index
    %c0_168 = arith.constant 0 : index
    %482 = vector.load %arg4[%c1_166, %c0_167, %c0_168] : memref<4x1x512xf32, #tpu.memory_space<vmem>>, vector<1x1x512xf32>
    %483 = vector.shape_cast %482 : vector<1x1x512xf32> to vector<1x512xf32>
    %484 = vector.broadcast %483 : vector<1x512xf32> to vector<8x512xf32>
    %485 = arith.addf %481, %484 : vector<8x512xf32>
    %486 = vector.extract_strided_slice %485 {offsets = [0, 0], sizes = [8, 384], strides = [1, 1]} : vector<8x512xf32> to vector<8x384xf32>
    %487 = arith.negf %486 : vector<8x384xf32>
    %488 = math.exp %487 : vector<8x384xf32>
    %cst_169 = arith.constant 1.000000e+00 : f32
    %489 = vector.broadcast %cst_169 : f32 to vector<8x384xf32>
    %490 = arith.addf %489, %488 : vector<8x384xf32>
    %491 = arith.divf %489, %490 : vector<8x384xf32>
    %492 = vector.extract_strided_slice %491 {offsets = [0, 0], sizes = [8, 128], strides = [1, 1]} : vector<8x384xf32> to vector<8x128xf32>
    %493 = vector.extract_strided_slice %491 {offsets = [0, 128], sizes = [8, 128], strides = [1, 1]} : vector<8x384xf32> to vector<8x128xf32>
    %494 = vector.extract_strided_slice %491 {offsets = [0, 256], sizes = [8, 128], strides = [1, 1]} : vector<8x384xf32> to vector<8x128xf32>
    %495 = vector.extract_strided_slice %485 {offsets = [0, 384], sizes = [8, 128], strides = [1, 1]} : vector<8x512xf32> to vector<8x128xf32>
    %496 = math.tanh %495 : vector<8x128xf32>
    %497 = arith.mulf %493, %403 : vector<8x128xf32>
    %498 = arith.mulf %492, %496 : vector<8x128xf32>
    %499 = arith.addf %497, %498 : vector<8x128xf32>
    %500 = math.tanh %499 : vector<8x128xf32>
    %501 = arith.mulf %494, %500 : vector<8x128xf32>
    %502 = tpu.concatenate %405, %429 in 1 : vector<8x128xf32>, vector<8x128xf32> -> vector<8x256xf32>
    %c2_170 = arith.constant 2 : index
    %c0_171 = arith.constant 0 : index
    %c0_172 = arith.constant 0 : index
    %503 = vector.load %arg3[%c2_170, %c0_171, %c0_172] : memref<4x256x512xf32, #tpu.memory_space<vmem>>, vector<1x256x512xf32>
    %504 = vector.shape_cast %503 : vector<1x256x512xf32> to vector<256x512xf32>
    %cst_173 = arith.constant dense<0.000000e+00> : vector<8x512xf32>
    %505 = tpu.matmul %502, %504, %cst_173 {dimension_numbers = #tpu.dot_dimension_numbers<[1], [0], [0], [1], [0, 0, 1, 1], [], []>} : vector<8x256xf32>, vector<256x512xf32>, vector<8x512xf32> -> vector<8x512xf32>
    %c2_174 = arith.constant 2 : index
    %c0_175 = arith.constant 0 : index
    %c0_176 = arith.constant 0 : index
    %506 = vector.load %arg4[%c2_174, %c0_175, %c0_176] : memref<4x1x512xf32, #tpu.memory_space<vmem>>, vector<1x1x512xf32>
    %507 = vector.shape_cast %506 : vector<1x1x512xf32> to vector<1x512xf32>
    %508 = vector.broadcast %507 : vector<1x512xf32> to vector<8x512xf32>
    %509 = arith.addf %505, %508 : vector<8x512xf32>
    %510 = vector.extract_strided_slice %509 {offsets = [0, 0], sizes = [8, 384], strides = [1, 1]} : vector<8x512xf32> to vector<8x384xf32>
    %511 = arith.negf %510 : vector<8x384xf32>
    %512 = math.exp %511 : vector<8x384xf32>
    %cst_177 = arith.constant 1.000000e+00 : f32
    %513 = vector.broadcast %cst_177 : f32 to vector<8x384xf32>
    %514 = arith.addf %513, %512 : vector<8x384xf32>
    %515 = arith.divf %513, %514 : vector<8x384xf32>
    %516 = vector.extract_strided_slice %515 {offsets = [0, 0], sizes = [8, 128], strides = [1, 1]} : vector<8x384xf32> to vector<8x128xf32>
    %517 = vector.extract_strided_slice %515 {offsets = [0, 128], sizes = [8, 128], strides = [1, 1]} : vector<8x384xf32> to vector<8x128xf32>
    %518 = vector.extract_strided_slice %515 {offsets = [0, 256], sizes = [8, 128], strides = [1, 1]} : vector<8x384xf32> to vector<8x128xf32>
    %519 = vector.extract_strided_slice %509 {offsets = [0, 384], sizes = [8, 128], strides = [1, 1]} : vector<8x512xf32> to vector<8x128xf32>
    %520 = math.tanh %519 : vector<8x128xf32>
    %521 = arith.mulf %517, %427 : vector<8x128xf32>
    %522 = arith.mulf %516, %520 : vector<8x128xf32>
    %523 = arith.addf %521, %522 : vector<8x128xf32>
    %524 = math.tanh %523 : vector<8x128xf32>
    %525 = arith.mulf %518, %524 : vector<8x128xf32>
    %526 = tpu.concatenate %429, %453 in 1 : vector<8x128xf32>, vector<8x128xf32> -> vector<8x256xf32>
    %c3_178 = arith.constant 3 : index
    %c0_179 = arith.constant 0 : index
    %c0_180 = arith.constant 0 : index
    %527 = vector.load %arg3[%c3_178, %c0_179, %c0_180] : memref<4x256x512xf32, #tpu.memory_space<vmem>>, vector<1x256x512xf32>
    %528 = vector.shape_cast %527 : vector<1x256x512xf32> to vector<256x512xf32>
    %cst_181 = arith.constant dense<0.000000e+00> : vector<8x512xf32>
    %529 = tpu.matmul %526, %528, %cst_181 {dimension_numbers = #tpu.dot_dimension_numbers<[1], [0], [0], [1], [0, 0, 1, 1], [], []>} : vector<8x256xf32>, vector<256x512xf32>, vector<8x512xf32> -> vector<8x512xf32>
    %c3_182 = arith.constant 3 : index
    %c0_183 = arith.constant 0 : index
    %c0_184 = arith.constant 0 : index
    %530 = vector.load %arg4[%c3_182, %c0_183, %c0_184] : memref<4x1x512xf32, #tpu.memory_space<vmem>>, vector<1x1x512xf32>
    %531 = vector.shape_cast %530 : vector<1x1x512xf32> to vector<1x512xf32>
    %532 = vector.broadcast %531 : vector<1x512xf32> to vector<8x512xf32>
    %533 = arith.addf %529, %532 : vector<8x512xf32>
    %534 = vector.extract_strided_slice %533 {offsets = [0, 0], sizes = [8, 384], strides = [1, 1]} : vector<8x512xf32> to vector<8x384xf32>
    %535 = arith.negf %534 : vector<8x384xf32>
    %536 = math.exp %535 : vector<8x384xf32>
    %cst_185 = arith.constant 1.000000e+00 : f32
    %537 = vector.broadcast %cst_185 : f32 to vector<8x384xf32>
    %538 = arith.addf %537, %536 : vector<8x384xf32>
    %539 = arith.divf %537, %538 : vector<8x384xf32>
    %540 = vector.extract_strided_slice %539 {offsets = [0, 0], sizes = [8, 128], strides = [1, 1]} : vector<8x384xf32> to vector<8x128xf32>
    %541 = vector.extract_strided_slice %539 {offsets = [0, 128], sizes = [8, 128], strides = [1, 1]} : vector<8x384xf32> to vector<8x128xf32>
    %542 = vector.extract_strided_slice %539 {offsets = [0, 256], sizes = [8, 128], strides = [1, 1]} : vector<8x384xf32> to vector<8x128xf32>
    %543 = vector.extract_strided_slice %533 {offsets = [0, 384], sizes = [8, 128], strides = [1, 1]} : vector<8x512xf32> to vector<8x128xf32>
    %544 = math.tanh %543 : vector<8x128xf32>
    %545 = arith.mulf %541, %451 : vector<8x128xf32>
    %546 = arith.mulf %540, %544 : vector<8x128xf32>
    %547 = arith.addf %545, %546 : vector<8x128xf32>
    %548 = math.tanh %547 : vector<8x128xf32>
    %549 = arith.mulf %542, %548 : vector<8x128xf32>
    %550 = tpu.concatenate %13, %477 in 1 : vector<8x128xf32>, vector<8x128xf32> -> vector<8x256xf32>
    %c0_186 = arith.constant 0 : index
    %c0_187 = arith.constant 0 : index
    %c0_188 = arith.constant 0 : index
    %551 = vector.load %arg3[%c0_186, %c0_187, %c0_188] : memref<4x256x512xf32, #tpu.memory_space<vmem>>, vector<1x256x512xf32>
    %552 = vector.shape_cast %551 : vector<1x256x512xf32> to vector<256x512xf32>
    %cst_189 = arith.constant dense<0.000000e+00> : vector<8x512xf32>
    %553 = tpu.matmul %550, %552, %cst_189 {dimension_numbers = #tpu.dot_dimension_numbers<[1], [0], [0], [1], [0, 0, 1, 1], [], []>} : vector<8x256xf32>, vector<256x512xf32>, vector<8x512xf32> -> vector<8x512xf32>
    %c0_190 = arith.constant 0 : index
    %c0_191 = arith.constant 0 : index
    %c0_192 = arith.constant 0 : index
    %554 = vector.load %arg4[%c0_190, %c0_191, %c0_192] : memref<4x1x512xf32, #tpu.memory_space<vmem>>, vector<1x1x512xf32>
    %555 = vector.shape_cast %554 : vector<1x1x512xf32> to vector<1x512xf32>
    %556 = vector.broadcast %555 : vector<1x512xf32> to vector<8x512xf32>
    %557 = arith.addf %553, %556 : vector<8x512xf32>
    %558 = vector.extract_strided_slice %557 {offsets = [0, 0], sizes = [8, 384], strides = [1, 1]} : vector<8x512xf32> to vector<8x384xf32>
    %559 = arith.negf %558 : vector<8x384xf32>
    %560 = math.exp %559 : vector<8x384xf32>
    %cst_193 = arith.constant 1.000000e+00 : f32
    %561 = vector.broadcast %cst_193 : f32 to vector<8x384xf32>
    %562 = arith.addf %561, %560 : vector<8x384xf32>
    %563 = arith.divf %561, %562 : vector<8x384xf32>
    %564 = vector.extract_strided_slice %563 {offsets = [0, 0], sizes = [8, 128], strides = [1, 1]} : vector<8x384xf32> to vector<8x128xf32>
    %565 = vector.extract_strided_slice %563 {offsets = [0, 128], sizes = [8, 128], strides = [1, 1]} : vector<8x384xf32> to vector<8x128xf32>
    %566 = vector.extract_strided_slice %563 {offsets = [0, 256], sizes = [8, 128], strides = [1, 1]} : vector<8x384xf32> to vector<8x128xf32>
    %567 = vector.extract_strided_slice %557 {offsets = [0, 384], sizes = [8, 128], strides = [1, 1]} : vector<8x512xf32> to vector<8x128xf32>
    %568 = math.tanh %567 : vector<8x128xf32>
    %569 = arith.mulf %565, %475 : vector<8x128xf32>
    %570 = arith.mulf %564, %568 : vector<8x128xf32>
    %571 = arith.addf %569, %570 : vector<8x128xf32>
    %572 = math.tanh %571 : vector<8x128xf32>
    %573 = arith.mulf %566, %572 : vector<8x128xf32>
    %574 = tpu.concatenate %477, %501 in 1 : vector<8x128xf32>, vector<8x128xf32> -> vector<8x256xf32>
    %c1_194 = arith.constant 1 : index
    %c0_195 = arith.constant 0 : index
    %c0_196 = arith.constant 0 : index
    %575 = vector.load %arg3[%c1_194, %c0_195, %c0_196] : memref<4x256x512xf32, #tpu.memory_space<vmem>>, vector<1x256x512xf32>
    %576 = vector.shape_cast %575 : vector<1x256x512xf32> to vector<256x512xf32>
    %cst_197 = arith.constant dense<0.000000e+00> : vector<8x512xf32>
    %577 = tpu.matmul %574, %576, %cst_197 {dimension_numbers = #tpu.dot_dimension_numbers<[1], [0], [0], [1], [0, 0, 1, 1], [], []>} : vector<8x256xf32>, vector<256x512xf32>, vector<8x512xf32> -> vector<8x512xf32>
    %c1_198 = arith.constant 1 : index
    %c0_199 = arith.constant 0 : index
    %c0_200 = arith.constant 0 : index
    %578 = vector.load %arg4[%c1_198, %c0_199, %c0_200] : memref<4x1x512xf32, #tpu.memory_space<vmem>>, vector<1x1x512xf32>
    %579 = vector.shape_cast %578 : vector<1x1x512xf32> to vector<1x512xf32>
    %580 = vector.broadcast %579 : vector<1x512xf32> to vector<8x512xf32>
    %581 = arith.addf %577, %580 : vector<8x512xf32>
    %582 = vector.extract_strided_slice %581 {offsets = [0, 0], sizes = [8, 384], strides = [1, 1]} : vector<8x512xf32> to vector<8x384xf32>
    %583 = arith.negf %582 : vector<8x384xf32>
    %584 = math.exp %583 : vector<8x384xf32>
    %cst_201 = arith.constant 1.000000e+00 : f32
    %585 = vector.broadcast %cst_201 : f32 to vector<8x384xf32>
    %586 = arith.addf %585, %584 : vector<8x384xf32>
    %587 = arith.divf %585, %586 : vector<8x384xf32>
    %588 = vector.extract_strided_slice %587 {offsets = [0, 0], sizes = [8, 128], strides = [1, 1]} : vector<8x384xf32> to vector<8x128xf32>
    %589 = vector.extract_strided_slice %587 {offsets = [0, 128], sizes = [8, 128], strides = [1, 1]} : vector<8x384xf32> to vector<8x128xf32>
    %590 = vector.extract_strided_slice %587 {offsets = [0, 256], sizes = [8, 128], strides = [1, 1]} : vector<8x384xf32> to vector<8x128xf32>
    %591 = vector.extract_strided_slice %581 {offsets = [0, 384], sizes = [8, 128], strides = [1, 1]} : vector<8x512xf32> to vector<8x128xf32>
    %592 = math.tanh %591 : vector<8x128xf32>
    %593 = arith.mulf %589, %499 : vector<8x128xf32>
    %594 = arith.mulf %588, %592 : vector<8x128xf32>
    %595 = arith.addf %593, %594 : vector<8x128xf32>
    %596 = math.tanh %595 : vector<8x128xf32>
    %597 = arith.mulf %590, %596 : vector<8x128xf32>
    %598 = tpu.concatenate %501, %525 in 1 : vector<8x128xf32>, vector<8x128xf32> -> vector<8x256xf32>
    %c2_202 = arith.constant 2 : index
    %c0_203 = arith.constant 0 : index
    %c0_204 = arith.constant 0 : index
    %599 = vector.load %arg3[%c2_202, %c0_203, %c0_204] : memref<4x256x512xf32, #tpu.memory_space<vmem>>, vector<1x256x512xf32>
    %600 = vector.shape_cast %599 : vector<1x256x512xf32> to vector<256x512xf32>
    %cst_205 = arith.constant dense<0.000000e+00> : vector<8x512xf32>
    %601 = tpu.matmul %598, %600, %cst_205 {dimension_numbers = #tpu.dot_dimension_numbers<[1], [0], [0], [1], [0, 0, 1, 1], [], []>} : vector<8x256xf32>, vector<256x512xf32>, vector<8x512xf32> -> vector<8x512xf32>
    %c2_206 = arith.constant 2 : index
    %c0_207 = arith.constant 0 : index
    %c0_208 = arith.constant 0 : index
    %602 = vector.load %arg4[%c2_206, %c0_207, %c0_208] : memref<4x1x512xf32, #tpu.memory_space<vmem>>, vector<1x1x512xf32>
    %603 = vector.shape_cast %602 : vector<1x1x512xf32> to vector<1x512xf32>
    %604 = vector.broadcast %603 : vector<1x512xf32> to vector<8x512xf32>
    %605 = arith.addf %601, %604 : vector<8x512xf32>
    %606 = vector.extract_strided_slice %605 {offsets = [0, 0], sizes = [8, 384], strides = [1, 1]} : vector<8x512xf32> to vector<8x384xf32>
    %607 = arith.negf %606 : vector<8x384xf32>
    %608 = math.exp %607 : vector<8x384xf32>
    %cst_209 = arith.constant 1.000000e+00 : f32
    %609 = vector.broadcast %cst_209 : f32 to vector<8x384xf32>
    %610 = arith.addf %609, %608 : vector<8x384xf32>
    %611 = arith.divf %609, %610 : vector<8x384xf32>
    %612 = vector.extract_strided_slice %611 {offsets = [0, 0], sizes = [8, 128], strides = [1, 1]} : vector<8x384xf32> to vector<8x128xf32>
    %613 = vector.extract_strided_slice %611 {offsets = [0, 128], sizes = [8, 128], strides = [1, 1]} : vector<8x384xf32> to vector<8x128xf32>
    %614 = vector.extract_strided_slice %611 {offsets = [0, 256], sizes = [8, 128], strides = [1, 1]} : vector<8x384xf32> to vector<8x128xf32>
    %615 = vector.extract_strided_slice %605 {offsets = [0, 384], sizes = [8, 128], strides = [1, 1]} : vector<8x512xf32> to vector<8x128xf32>
    %616 = math.tanh %615 : vector<8x128xf32>
    %617 = arith.mulf %613, %523 : vector<8x128xf32>
    %618 = arith.mulf %612, %616 : vector<8x128xf32>
    %619 = arith.addf %617, %618 : vector<8x128xf32>
    %620 = math.tanh %619 : vector<8x128xf32>
    %621 = arith.mulf %614, %620 : vector<8x128xf32>
    %622 = tpu.concatenate %525, %549 in 1 : vector<8x128xf32>, vector<8x128xf32> -> vector<8x256xf32>
    %c3_210 = arith.constant 3 : index
    %c0_211 = arith.constant 0 : index
    %c0_212 = arith.constant 0 : index
    %623 = vector.load %arg3[%c3_210, %c0_211, %c0_212] : memref<4x256x512xf32, #tpu.memory_space<vmem>>, vector<1x256x512xf32>
    %624 = vector.shape_cast %623 : vector<1x256x512xf32> to vector<256x512xf32>
    %cst_213 = arith.constant dense<0.000000e+00> : vector<8x512xf32>
    %625 = tpu.matmul %622, %624, %cst_213 {dimension_numbers = #tpu.dot_dimension_numbers<[1], [0], [0], [1], [0, 0, 1, 1], [], []>} : vector<8x256xf32>, vector<256x512xf32>, vector<8x512xf32> -> vector<8x512xf32>
    %c3_214 = arith.constant 3 : index
    %c0_215 = arith.constant 0 : index
    %c0_216 = arith.constant 0 : index
    %626 = vector.load %arg4[%c3_214, %c0_215, %c0_216] : memref<4x1x512xf32, #tpu.memory_space<vmem>>, vector<1x1x512xf32>
    %627 = vector.shape_cast %626 : vector<1x1x512xf32> to vector<1x512xf32>
    %628 = vector.broadcast %627 : vector<1x512xf32> to vector<8x512xf32>
    %629 = arith.addf %625, %628 : vector<8x512xf32>
    %630 = vector.extract_strided_slice %629 {offsets = [0, 0], sizes = [8, 384], strides = [1, 1]} : vector<8x512xf32> to vector<8x384xf32>
    %631 = arith.negf %630 : vector<8x384xf32>
    %632 = math.exp %631 : vector<8x384xf32>
    %cst_217 = arith.constant 1.000000e+00 : f32
    %633 = vector.broadcast %cst_217 : f32 to vector<8x384xf32>
    %634 = arith.addf %633, %632 : vector<8x384xf32>
    %635 = arith.divf %633, %634 : vector<8x384xf32>
    %636 = vector.extract_strided_slice %635 {offsets = [0, 0], sizes = [8, 128], strides = [1, 1]} : vector<8x384xf32> to vector<8x128xf32>
    %637 = vector.extract_strided_slice %635 {offsets = [0, 128], sizes = [8, 128], strides = [1, 1]} : vector<8x384xf32> to vector<8x128xf32>
    %638 = vector.extract_strided_slice %635 {offsets = [0, 256], sizes = [8, 128], strides = [1, 1]} : vector<8x384xf32> to vector<8x128xf32>
    %639 = vector.extract_strided_slice %629 {offsets = [0, 384], sizes = [8, 128], strides = [1, 1]} : vector<8x512xf32> to vector<8x128xf32>
    %640 = math.tanh %639 : vector<8x128xf32>
    %641 = arith.mulf %637, %547 : vector<8x128xf32>
    %642 = arith.mulf %636, %640 : vector<8x128xf32>
    %643 = arith.addf %641, %642 : vector<8x128xf32>
    %644 = math.tanh %643 : vector<8x128xf32>
    %645 = arith.mulf %638, %644 : vector<8x128xf32>
    %646 = tpu.concatenate %573, %597 in 1 : vector<8x128xf32>, vector<8x128xf32> -> vector<8x256xf32>
    %c1_218 = arith.constant 1 : index
    %c0_219 = arith.constant 0 : index
    %c0_220 = arith.constant 0 : index
    %647 = vector.load %arg3[%c1_218, %c0_219, %c0_220] : memref<4x256x512xf32, #tpu.memory_space<vmem>>, vector<1x256x512xf32>
    %648 = vector.shape_cast %647 : vector<1x256x512xf32> to vector<256x512xf32>
    %cst_221 = arith.constant dense<0.000000e+00> : vector<8x512xf32>
    %649 = tpu.matmul %646, %648, %cst_221 {dimension_numbers = #tpu.dot_dimension_numbers<[1], [0], [0], [1], [0, 0, 1, 1], [], []>} : vector<8x256xf32>, vector<256x512xf32>, vector<8x512xf32> -> vector<8x512xf32>
    %c1_222 = arith.constant 1 : index
    %c0_223 = arith.constant 0 : index
    %c0_224 = arith.constant 0 : index
    %650 = vector.load %arg4[%c1_222, %c0_223, %c0_224] : memref<4x1x512xf32, #tpu.memory_space<vmem>>, vector<1x1x512xf32>
    %651 = vector.shape_cast %650 : vector<1x1x512xf32> to vector<1x512xf32>
    %652 = vector.broadcast %651 : vector<1x512xf32> to vector<8x512xf32>
    %653 = arith.addf %649, %652 : vector<8x512xf32>
    %654 = vector.extract_strided_slice %653 {offsets = [0, 0], sizes = [8, 384], strides = [1, 1]} : vector<8x512xf32> to vector<8x384xf32>
    %655 = arith.negf %654 : vector<8x384xf32>
    %656 = math.exp %655 : vector<8x384xf32>
    %cst_225 = arith.constant 1.000000e+00 : f32
    %657 = vector.broadcast %cst_225 : f32 to vector<8x384xf32>
    %658 = arith.addf %657, %656 : vector<8x384xf32>
    %659 = arith.divf %657, %658 : vector<8x384xf32>
    %660 = vector.extract_strided_slice %659 {offsets = [0, 0], sizes = [8, 128], strides = [1, 1]} : vector<8x384xf32> to vector<8x128xf32>
    %661 = vector.extract_strided_slice %659 {offsets = [0, 128], sizes = [8, 128], strides = [1, 1]} : vector<8x384xf32> to vector<8x128xf32>
    %662 = vector.extract_strided_slice %659 {offsets = [0, 256], sizes = [8, 128], strides = [1, 1]} : vector<8x384xf32> to vector<8x128xf32>
    %663 = vector.extract_strided_slice %653 {offsets = [0, 384], sizes = [8, 128], strides = [1, 1]} : vector<8x512xf32> to vector<8x128xf32>
    %664 = math.tanh %663 : vector<8x128xf32>
    %665 = arith.mulf %661, %595 : vector<8x128xf32>
    %666 = arith.mulf %660, %664 : vector<8x128xf32>
    %667 = arith.addf %665, %666 : vector<8x128xf32>
    %668 = math.tanh %667 : vector<8x128xf32>
    %669 = arith.mulf %662, %668 : vector<8x128xf32>
    %670 = tpu.concatenate %597, %621 in 1 : vector<8x128xf32>, vector<8x128xf32> -> vector<8x256xf32>
    %c2_226 = arith.constant 2 : index
    %c0_227 = arith.constant 0 : index
    %c0_228 = arith.constant 0 : index
    %671 = vector.load %arg3[%c2_226, %c0_227, %c0_228] : memref<4x256x512xf32, #tpu.memory_space<vmem>>, vector<1x256x512xf32>
    %672 = vector.shape_cast %671 : vector<1x256x512xf32> to vector<256x512xf32>
    %cst_229 = arith.constant dense<0.000000e+00> : vector<8x512xf32>
    %673 = tpu.matmul %670, %672, %cst_229 {dimension_numbers = #tpu.dot_dimension_numbers<[1], [0], [0], [1], [0, 0, 1, 1], [], []>} : vector<8x256xf32>, vector<256x512xf32>, vector<8x512xf32> -> vector<8x512xf32>
    %c2_230 = arith.constant 2 : index
    %c0_231 = arith.constant 0 : index
    %c0_232 = arith.constant 0 : index
    %674 = vector.load %arg4[%c2_230, %c0_231, %c0_232] : memref<4x1x512xf32, #tpu.memory_space<vmem>>, vector<1x1x512xf32>
    %675 = vector.shape_cast %674 : vector<1x1x512xf32> to vector<1x512xf32>
    %676 = vector.broadcast %675 : vector<1x512xf32> to vector<8x512xf32>
    %677 = arith.addf %673, %676 : vector<8x512xf32>
    %678 = vector.extract_strided_slice %677 {offsets = [0, 0], sizes = [8, 384], strides = [1, 1]} : vector<8x512xf32> to vector<8x384xf32>
    %679 = arith.negf %678 : vector<8x384xf32>
    %680 = math.exp %679 : vector<8x384xf32>
    %cst_233 = arith.constant 1.000000e+00 : f32
    %681 = vector.broadcast %cst_233 : f32 to vector<8x384xf32>
    %682 = arith.addf %681, %680 : vector<8x384xf32>
    %683 = arith.divf %681, %682 : vector<8x384xf32>
    %684 = vector.extract_strided_slice %683 {offsets = [0, 0], sizes = [8, 128], strides = [1, 1]} : vector<8x384xf32> to vector<8x128xf32>
    %685 = vector.extract_strided_slice %683 {offsets = [0, 128], sizes = [8, 128], strides = [1, 1]} : vector<8x384xf32> to vector<8x128xf32>
    %686 = vector.extract_strided_slice %683 {offsets = [0, 256], sizes = [8, 128], strides = [1, 1]} : vector<8x384xf32> to vector<8x128xf32>
    %687 = vector.extract_strided_slice %677 {offsets = [0, 384], sizes = [8, 128], strides = [1, 1]} : vector<8x512xf32> to vector<8x128xf32>
    %688 = math.tanh %687 : vector<8x128xf32>
    %689 = arith.mulf %685, %619 : vector<8x128xf32>
    %690 = arith.mulf %684, %688 : vector<8x128xf32>
    %691 = arith.addf %689, %690 : vector<8x128xf32>
    %692 = math.tanh %691 : vector<8x128xf32>
    %693 = arith.mulf %686, %692 : vector<8x128xf32>
    %694 = tpu.concatenate %621, %645 in 1 : vector<8x128xf32>, vector<8x128xf32> -> vector<8x256xf32>
    %c3_234 = arith.constant 3 : index
    %c0_235 = arith.constant 0 : index
    %c0_236 = arith.constant 0 : index
    %695 = vector.load %arg3[%c3_234, %c0_235, %c0_236] : memref<4x256x512xf32, #tpu.memory_space<vmem>>, vector<1x256x512xf32>
    %696 = vector.shape_cast %695 : vector<1x256x512xf32> to vector<256x512xf32>
    %cst_237 = arith.constant dense<0.000000e+00> : vector<8x512xf32>
    %697 = tpu.matmul %694, %696, %cst_237 {dimension_numbers = #tpu.dot_dimension_numbers<[1], [0], [0], [1], [0, 0, 1, 1], [], []>} : vector<8x256xf32>, vector<256x512xf32>, vector<8x512xf32> -> vector<8x512xf32>
    %c3_238 = arith.constant 3 : index
    %c0_239 = arith.constant 0 : index
    %c0_240 = arith.constant 0 : index
    %698 = vector.load %arg4[%c3_238, %c0_239, %c0_240] : memref<4x1x512xf32, #tpu.memory_space<vmem>>, vector<1x1x512xf32>
    %699 = vector.shape_cast %698 : vector<1x1x512xf32> to vector<1x512xf32>
    %700 = vector.broadcast %699 : vector<1x512xf32> to vector<8x512xf32>
    %701 = arith.addf %697, %700 : vector<8x512xf32>
    %702 = vector.extract_strided_slice %701 {offsets = [0, 0], sizes = [8, 384], strides = [1, 1]} : vector<8x512xf32> to vector<8x384xf32>
    %703 = arith.negf %702 : vector<8x384xf32>
    %704 = math.exp %703 : vector<8x384xf32>
    %cst_241 = arith.constant 1.000000e+00 : f32
    %705 = vector.broadcast %cst_241 : f32 to vector<8x384xf32>
    %706 = arith.addf %705, %704 : vector<8x384xf32>
    %707 = arith.divf %705, %706 : vector<8x384xf32>
    %708 = vector.extract_strided_slice %707 {offsets = [0, 0], sizes = [8, 128], strides = [1, 1]} : vector<8x384xf32> to vector<8x128xf32>
    %709 = vector.extract_strided_slice %707 {offsets = [0, 128], sizes = [8, 128], strides = [1, 1]} : vector<8x384xf32> to vector<8x128xf32>
    %710 = vector.extract_strided_slice %707 {offsets = [0, 256], sizes = [8, 128], strides = [1, 1]} : vector<8x384xf32> to vector<8x128xf32>
    %711 = vector.extract_strided_slice %701 {offsets = [0, 384], sizes = [8, 128], strides = [1, 1]} : vector<8x512xf32> to vector<8x128xf32>
    %712 = math.tanh %711 : vector<8x128xf32>
    %713 = arith.mulf %709, %643 : vector<8x128xf32>
    %714 = arith.mulf %708, %712 : vector<8x128xf32>
    %715 = arith.addf %713, %714 : vector<8x128xf32>
    %716 = math.tanh %715 : vector<8x128xf32>
    %717 = arith.mulf %710, %716 : vector<8x128xf32>
    %718 = tpu.concatenate %669, %693 in 1 : vector<8x128xf32>, vector<8x128xf32> -> vector<8x256xf32>
    %c2_242 = arith.constant 2 : index
    %c0_243 = arith.constant 0 : index
    %c0_244 = arith.constant 0 : index
    %719 = vector.load %arg3[%c2_242, %c0_243, %c0_244] : memref<4x256x512xf32, #tpu.memory_space<vmem>>, vector<1x256x512xf32>
    %720 = vector.shape_cast %719 : vector<1x256x512xf32> to vector<256x512xf32>
    %cst_245 = arith.constant dense<0.000000e+00> : vector<8x512xf32>
    %721 = tpu.matmul %718, %720, %cst_245 {dimension_numbers = #tpu.dot_dimension_numbers<[1], [0], [0], [1], [0, 0, 1, 1], [], []>} : vector<8x256xf32>, vector<256x512xf32>, vector<8x512xf32> -> vector<8x512xf32>
    %c2_246 = arith.constant 2 : index
    %c0_247 = arith.constant 0 : index
    %c0_248 = arith.constant 0 : index
    %722 = vector.load %arg4[%c2_246, %c0_247, %c0_248] : memref<4x1x512xf32, #tpu.memory_space<vmem>>, vector<1x1x512xf32>
    %723 = vector.shape_cast %722 : vector<1x1x512xf32> to vector<1x512xf32>
    %724 = vector.broadcast %723 : vector<1x512xf32> to vector<8x512xf32>
    %725 = arith.addf %721, %724 : vector<8x512xf32>
    %726 = vector.extract_strided_slice %725 {offsets = [0, 0], sizes = [8, 384], strides = [1, 1]} : vector<8x512xf32> to vector<8x384xf32>
    %727 = arith.negf %726 : vector<8x384xf32>
    %728 = math.exp %727 : vector<8x384xf32>
    %cst_249 = arith.constant 1.000000e+00 : f32
    %729 = vector.broadcast %cst_249 : f32 to vector<8x384xf32>
    %730 = arith.addf %729, %728 : vector<8x384xf32>
    %731 = arith.divf %729, %730 : vector<8x384xf32>
    %732 = vector.extract_strided_slice %731 {offsets = [0, 0], sizes = [8, 128], strides = [1, 1]} : vector<8x384xf32> to vector<8x128xf32>
    %733 = vector.extract_strided_slice %731 {offsets = [0, 128], sizes = [8, 128], strides = [1, 1]} : vector<8x384xf32> to vector<8x128xf32>
    %734 = vector.extract_strided_slice %731 {offsets = [0, 256], sizes = [8, 128], strides = [1, 1]} : vector<8x384xf32> to vector<8x128xf32>
    %735 = vector.extract_strided_slice %725 {offsets = [0, 384], sizes = [8, 128], strides = [1, 1]} : vector<8x512xf32> to vector<8x128xf32>
    %736 = math.tanh %735 : vector<8x128xf32>
    %737 = arith.mulf %733, %691 : vector<8x128xf32>
    %738 = arith.mulf %732, %736 : vector<8x128xf32>
    %739 = arith.addf %737, %738 : vector<8x128xf32>
    %740 = math.tanh %739 : vector<8x128xf32>
    %741 = arith.mulf %734, %740 : vector<8x128xf32>
    %742 = tpu.concatenate %693, %717 in 1 : vector<8x128xf32>, vector<8x128xf32> -> vector<8x256xf32>
    %c3_250 = arith.constant 3 : index
    %c0_251 = arith.constant 0 : index
    %c0_252 = arith.constant 0 : index
    %743 = vector.load %arg3[%c3_250, %c0_251, %c0_252] : memref<4x256x512xf32, #tpu.memory_space<vmem>>, vector<1x256x512xf32>
    %744 = vector.shape_cast %743 : vector<1x256x512xf32> to vector<256x512xf32>
    %cst_253 = arith.constant dense<0.000000e+00> : vector<8x512xf32>
    %745 = tpu.matmul %742, %744, %cst_253 {dimension_numbers = #tpu.dot_dimension_numbers<[1], [0], [0], [1], [0, 0, 1, 1], [], []>} : vector<8x256xf32>, vector<256x512xf32>, vector<8x512xf32> -> vector<8x512xf32>
    %c3_254 = arith.constant 3 : index
    %c0_255 = arith.constant 0 : index
    %c0_256 = arith.constant 0 : index
    %746 = vector.load %arg4[%c3_254, %c0_255, %c0_256] : memref<4x1x512xf32, #tpu.memory_space<vmem>>, vector<1x1x512xf32>
    %747 = vector.shape_cast %746 : vector<1x1x512xf32> to vector<1x512xf32>
    %748 = vector.broadcast %747 : vector<1x512xf32> to vector<8x512xf32>
    %749 = arith.addf %745, %748 : vector<8x512xf32>
    %750 = vector.extract_strided_slice %749 {offsets = [0, 0], sizes = [8, 384], strides = [1, 1]} : vector<8x512xf32> to vector<8x384xf32>
    %751 = arith.negf %750 : vector<8x384xf32>
    %752 = math.exp %751 : vector<8x384xf32>
    %cst_257 = arith.constant 1.000000e+00 : f32
    %753 = vector.broadcast %cst_257 : f32 to vector<8x384xf32>
    %754 = arith.addf %753, %752 : vector<8x384xf32>
    %755 = arith.divf %753, %754 : vector<8x384xf32>
    %756 = vector.extract_strided_slice %755 {offsets = [0, 0], sizes = [8, 128], strides = [1, 1]} : vector<8x384xf32> to vector<8x128xf32>
    %757 = vector.extract_strided_slice %755 {offsets = [0, 128], sizes = [8, 128], strides = [1, 1]} : vector<8x384xf32> to vector<8x128xf32>
    %758 = vector.extract_strided_slice %755 {offsets = [0, 256], sizes = [8, 128], strides = [1, 1]} : vector<8x384xf32> to vector<8x128xf32>
    %759 = vector.extract_strided_slice %749 {offsets = [0, 384], sizes = [8, 128], strides = [1, 1]} : vector<8x512xf32> to vector<8x128xf32>
    %760 = math.tanh %759 : vector<8x128xf32>
    %761 = arith.mulf %757, %715 : vector<8x128xf32>
    %762 = arith.mulf %756, %760 : vector<8x128xf32>
    %763 = arith.addf %761, %762 : vector<8x128xf32>
    %764 = math.tanh %763 : vector<8x128xf32>
    %765 = arith.mulf %758, %764 : vector<8x128xf32>
    %766 = tpu.concatenate %741, %765 in 1 : vector<8x128xf32>, vector<8x128xf32> -> vector<8x256xf32>
    %c3_258 = arith.constant 3 : index
    %c0_259 = arith.constant 0 : index
    %c0_260 = arith.constant 0 : index
    %767 = vector.load %arg3[%c3_258, %c0_259, %c0_260] : memref<4x256x512xf32, #tpu.memory_space<vmem>>, vector<1x256x512xf32>
    %768 = vector.shape_cast %767 : vector<1x256x512xf32> to vector<256x512xf32>
    %cst_261 = arith.constant dense<0.000000e+00> : vector<8x512xf32>
    %769 = tpu.matmul %766, %768, %cst_261 {dimension_numbers = #tpu.dot_dimension_numbers<[1], [0], [0], [1], [0, 0, 1, 1], [], []>} : vector<8x256xf32>, vector<256x512xf32>, vector<8x512xf32> -> vector<8x512xf32>
    %c3_262 = arith.constant 3 : index
    %c0_263 = arith.constant 0 : index
    %c0_264 = arith.constant 0 : index
    %770 = vector.load %arg4[%c3_262, %c0_263, %c0_264] : memref<4x1x512xf32, #tpu.memory_space<vmem>>, vector<1x1x512xf32>
    %771 = vector.shape_cast %770 : vector<1x1x512xf32> to vector<1x512xf32>
    %772 = vector.broadcast %771 : vector<1x512xf32> to vector<8x512xf32>
    %773 = arith.addf %769, %772 : vector<8x512xf32>
    %774 = vector.extract_strided_slice %773 {offsets = [0, 0], sizes = [8, 384], strides = [1, 1]} : vector<8x512xf32> to vector<8x384xf32>
    %775 = arith.negf %774 : vector<8x384xf32>
    %776 = math.exp %775 : vector<8x384xf32>
    %cst_265 = arith.constant 1.000000e+00 : f32
    %777 = vector.broadcast %cst_265 : f32 to vector<8x384xf32>
    %778 = arith.addf %777, %776 : vector<8x384xf32>
    %779 = arith.divf %777, %778 : vector<8x384xf32>
    %780 = vector.extract_strided_slice %779 {offsets = [0, 0], sizes = [8, 128], strides = [1, 1]} : vector<8x384xf32> to vector<8x128xf32>
    %781 = vector.extract_strided_slice %779 {offsets = [0, 128], sizes = [8, 128], strides = [1, 1]} : vector<8x384xf32> to vector<8x128xf32>
    %782 = vector.extract_strided_slice %779 {offsets = [0, 256], sizes = [8, 128], strides = [1, 1]} : vector<8x384xf32> to vector<8x128xf32>
    %783 = vector.extract_strided_slice %773 {offsets = [0, 384], sizes = [8, 128], strides = [1, 1]} : vector<8x512xf32> to vector<8x128xf32>
    %784 = math.tanh %783 : vector<8x128xf32>
    %785 = arith.mulf %781, %763 : vector<8x128xf32>
    %786 = arith.mulf %780, %784 : vector<8x128xf32>
    %787 = arith.addf %785, %786 : vector<8x128xf32>
    %788 = math.tanh %787 : vector<8x128xf32>
    %789 = arith.mulf %782, %788 : vector<8x128xf32>
    %790 = tpu.concatenate %261, %357, %453, %549, %645, %717, %765, %789 in 0 : vector<8x128xf32>, vector<8x128xf32>, vector<8x128xf32>, vector<8x128xf32>, vector<8x128xf32>, vector<8x128xf32>, vector<8x128xf32>, vector<8x128xf32> -> vector<64x128xf32>
    %c0_266 = arith.constant 0 : index
    %c0_267 = arith.constant 0 : index
    %791 = vector.load %arg5[%c0_266, %c0_267] : memref<128x64xf32, #tpu.memory_space<vmem>>, vector<128x64xf32>
    %cst_268 = arith.constant dense<0.000000e+00> : vector<64x64xf32>
    %792 = tpu.matmul %790, %791, %cst_268 {dimension_numbers = #tpu.dot_dimension_numbers<[1], [0], [0], [1], [0, 0, 1, 1], [], []>} : vector<64x128xf32>, vector<128x64xf32>, vector<64x64xf32> -> vector<64x64xf32>
    %c0_269 = arith.constant 0 : index
    %c0_270 = arith.constant 0 : index
    %793 = vector.load %arg6[%c0_269, %c0_270] : memref<1x64xf32, #tpu.memory_space<vmem>>, vector<1x64xf32>
    %794 = vector.broadcast %793 : vector<1x64xf32> to vector<64x64xf32>
    %795 = arith.addf %792, %794 : vector<64x64xf32>
    %cst_271 = arith.constant 0.000000e+00 : f32
    %796 = vector.broadcast %cst_271 : f32 to vector<64x64xf32>
    %797 = arith.maximumf %795, %796 : vector<64x64xf32>
    %c0_272 = arith.constant 0 : index
    %c0_273 = arith.constant 0 : index
    %798 = vector.load %arg7[%c0_272, %c0_273] : memref<64x1xf32, #tpu.memory_space<vmem>>, vector<64x1xf32>
    %cst_274 = arith.constant dense<0.000000e+00> : vector<64x1xf32>
    %799 = tpu.matmul %797, %798, %cst_274 {dimension_numbers = #tpu.dot_dimension_numbers<[1], [0], [0], [1], [0, 0, 1, 1], [], []>} : vector<64x64xf32>, vector<64x1xf32>, vector<64x1xf32> -> vector<64x1xf32>
    %c0_275 = arith.constant 0 : index
    %c0_276 = arith.constant 0 : index
    %800 = vector.load %arg8[%c0_275, %c0_276] : memref<1x1xf32, #tpu.memory_space<vmem>>, vector<1x1xf32>
    %801 = vector.broadcast %800 : vector<1x1xf32> to vector<64x1xf32>
    %802 = arith.addf %799, %801 : vector<64x1xf32>
    %803 = vector.extract_strided_slice %802 {offsets = [0, 0], sizes = [8, 1], strides = [1, 1]} : vector<64x1xf32> to vector<8x1xf32>
    %804 = vector.extract_strided_slice %802 {offsets = [8, 0], sizes = [8, 1], strides = [1, 1]} : vector<64x1xf32> to vector<8x1xf32>
    %805 = vector.extract_strided_slice %802 {offsets = [16, 0], sizes = [8, 1], strides = [1, 1]} : vector<64x1xf32> to vector<8x1xf32>
    %806 = vector.extract_strided_slice %802 {offsets = [24, 0], sizes = [8, 1], strides = [1, 1]} : vector<64x1xf32> to vector<8x1xf32>
    %807 = vector.extract_strided_slice %802 {offsets = [32, 0], sizes = [8, 1], strides = [1, 1]} : vector<64x1xf32> to vector<8x1xf32>
    %808 = vector.extract_strided_slice %802 {offsets = [40, 0], sizes = [8, 1], strides = [1, 1]} : vector<64x1xf32> to vector<8x1xf32>
    %809 = vector.extract_strided_slice %802 {offsets = [48, 0], sizes = [8, 1], strides = [1, 1]} : vector<64x1xf32> to vector<8x1xf32>
    %810 = vector.extract_strided_slice %802 {offsets = [56, 0], sizes = [8, 1], strides = [1, 1]} : vector<64x1xf32> to vector<8x1xf32>
    %811 = arith.maximumf %803, %804 : vector<8x1xf32>
    %812 = arith.maximumf %811, %805 : vector<8x1xf32>
    %813 = arith.maximumf %812, %806 : vector<8x1xf32>
    %814 = arith.maximumf %813, %807 : vector<8x1xf32>
    %815 = arith.maximumf %814, %808 : vector<8x1xf32>
    %816 = arith.maximumf %815, %809 : vector<8x1xf32>
    %817 = arith.maximumf %816, %810 : vector<8x1xf32>
    %818 = arith.subf %803, %817 : vector<8x1xf32>
    %819 = math.exp %818 : vector<8x1xf32>
    %820 = arith.subf %804, %817 : vector<8x1xf32>
    %821 = math.exp %820 : vector<8x1xf32>
    %822 = arith.subf %805, %817 : vector<8x1xf32>
    %823 = math.exp %822 : vector<8x1xf32>
    %824 = arith.subf %806, %817 : vector<8x1xf32>
    %825 = math.exp %824 : vector<8x1xf32>
    %826 = arith.subf %807, %817 : vector<8x1xf32>
    %827 = math.exp %826 : vector<8x1xf32>
    %828 = arith.subf %808, %817 : vector<8x1xf32>
    %829 = math.exp %828 : vector<8x1xf32>
    %830 = arith.subf %809, %817 : vector<8x1xf32>
    %831 = math.exp %830 : vector<8x1xf32>
    %832 = arith.subf %810, %817 : vector<8x1xf32>
    %833 = math.exp %832 : vector<8x1xf32>
    %834 = arith.addf %819, %821 : vector<8x1xf32>
    %835 = arith.addf %834, %823 : vector<8x1xf32>
    %836 = arith.addf %835, %825 : vector<8x1xf32>
    %837 = arith.addf %836, %827 : vector<8x1xf32>
    %838 = arith.addf %837, %829 : vector<8x1xf32>
    %839 = arith.addf %838, %831 : vector<8x1xf32>
    %840 = arith.addf %839, %833 : vector<8x1xf32>
    %841 = tpu.reciprocal %840 {approx = true} : vector<8x1xf32> -> vector<8x1xf32>
    %842 = arith.mulf %819, %841 : vector<8x1xf32>
    %843 = vector.broadcast %842 : vector<8x1xf32> to vector<8x128xf32>
    %844 = arith.mulf %261, %843 : vector<8x128xf32>
    %845 = arith.mulf %821, %841 : vector<8x1xf32>
    %846 = vector.broadcast %845 : vector<8x1xf32> to vector<8x128xf32>
    %847 = arith.mulf %357, %846 : vector<8x128xf32>
    %848 = arith.addf %844, %847 : vector<8x128xf32>
    %849 = arith.mulf %823, %841 : vector<8x1xf32>
    %850 = vector.broadcast %849 : vector<8x1xf32> to vector<8x128xf32>
    %851 = arith.mulf %453, %850 : vector<8x128xf32>
    %852 = arith.addf %848, %851 : vector<8x128xf32>
    %853 = arith.mulf %825, %841 : vector<8x1xf32>
    %854 = vector.broadcast %853 : vector<8x1xf32> to vector<8x128xf32>
    %855 = arith.mulf %549, %854 : vector<8x128xf32>
    %856 = arith.addf %852, %855 : vector<8x128xf32>
    %857 = arith.mulf %827, %841 : vector<8x1xf32>
    %858 = vector.broadcast %857 : vector<8x1xf32> to vector<8x128xf32>
    %859 = arith.mulf %645, %858 : vector<8x128xf32>
    %860 = arith.addf %856, %859 : vector<8x128xf32>
    %861 = arith.mulf %829, %841 : vector<8x1xf32>
    %862 = vector.broadcast %861 : vector<8x1xf32> to vector<8x128xf32>
    %863 = arith.mulf %717, %862 : vector<8x128xf32>
    %864 = arith.addf %860, %863 : vector<8x128xf32>
    %865 = arith.mulf %831, %841 : vector<8x1xf32>
    %866 = vector.broadcast %865 : vector<8x1xf32> to vector<8x128xf32>
    %867 = arith.mulf %765, %866 : vector<8x128xf32>
    %868 = arith.addf %864, %867 : vector<8x128xf32>
    %869 = arith.mulf %833, %841 : vector<8x1xf32>
    %870 = vector.broadcast %869 : vector<8x1xf32> to vector<8x128xf32>
    %871 = arith.mulf %789, %870 : vector<8x128xf32>
    %872 = arith.addf %868, %871 : vector<8x128xf32>
    %c0_277 = arith.constant 0 : index
    %c0_278 = arith.constant 0 : index
    %873 = vector.load %arg9[%c0_277, %c0_278] : memref<128x3xf32, #tpu.memory_space<vmem>>, vector<128x3xf32>
    %cst_279 = arith.constant dense<0.000000e+00> : vector<8x3xf32>
    %874 = tpu.matmul %872, %873, %cst_279 {dimension_numbers = #tpu.dot_dimension_numbers<[1], [0], [0], [1], [0, 0, 1, 1], [], []>} : vector<8x128xf32>, vector<128x3xf32>, vector<8x3xf32> -> vector<8x3xf32>
    %c0_280 = arith.constant 0 : index
    %c0_281 = arith.constant 0 : index
    %875 = vector.load %arg10[%c0_280, %c0_281] : memref<1x3xf32, #tpu.memory_space<vmem>>, vector<1x3xf32>
    %876 = vector.broadcast %875 : vector<1x3xf32> to vector<8x3xf32>
    %877 = arith.addf %874, %876 : vector<8x3xf32>
    %cst_282 = arith.constant dense<0xFF800000> : vector<8xf32>
    %878 = vector.multi_reduction <maximumf>, %877, %cst_282 [1] : vector<8x3xf32> to vector<8xf32>
    %879 = vector.shape_cast %878 : vector<8xf32> to vector<8x1xf32>
    %880 = vector.broadcast %879 : vector<8x1xf32> to vector<8x3xf32>
    %881 = arith.subf %877, %880 : vector<8x3xf32>
    %882 = math.exp %881 : vector<8x3xf32>
    %cst_283 = arith.constant dense<0.000000e+00> : vector<8xf32>
    %883 = vector.multi_reduction <add>, %882, %cst_283 [1] : vector<8x3xf32> to vector<8xf32>
    %884 = vector.shape_cast %883 : vector<8xf32> to vector<8x1xf32>
    %885 = vector.broadcast %884 : vector<8x1xf32> to vector<8x3xf32>
    %886 = arith.divf %882, %885 : vector<8x3xf32>
    %c0_284 = arith.constant 0 : index
    %c0_285 = arith.constant 0 : index
    %c0_286 = arith.constant 0 : index
    %887 = vector.load %arg11[%c0_284, %c0_285, %c0_286] : memref<1x8x3xf32, #tpu.memory_space<vmem>>, vector<1x8x3xf32>
    %888 = vector.shape_cast %887 : vector<1x8x3xf32> to vector<8x3xf32>
    %889 = vector.shape_cast %886 : vector<8x3xf32> to vector<1x8x3xf32>
    tpu.vector_store %arg11[%c0_284, %c0_285, %c0_286], %889 {strides = array<i32>} : memref<1x8x3xf32, #tpu.memory_space<vmem>>, vector<1x8x3xf32>,
    return
  }
  func.func @transform_0(%arg0: i32) -> (i32, i32, i32) {
    %c0_i32 = arith.constant 0 : i32
    %c0_i32_0 = arith.constant 0 : i32
    %c0_i32_1 = arith.constant 0 : i32
    return %arg0, %c0_i32, %c0_i32_0 : i32, i32, i32
  }
  func.func @transform_1(%arg0: i32) -> (i32, i32) {
    %c0_i32 = arith.constant 0 : i32
    %c0_i32_0 = arith.constant 0 : i32
    %c0_i32_1 = arith.constant 0 : i32
    return %c0_i32, %c0_i32_0 : i32, i32
  }
  func.func @transform_2(%arg0: i32) -> (i32, i32, i32) {
    %c0_i32 = arith.constant 0 : i32
    %c0_i32_0 = arith.constant 0 : i32
    %c0_i32_1 = arith.constant 0 : i32
    %c0_i32_2 = arith.constant 0 : i32
    return %c0_i32, %c0_i32_0, %c0_i32_1 : i32, i32, i32
  }
  func.func @transform_3(%arg0: i32) -> (i32, i32, i32) {
    %c0_i32 = arith.constant 0 : i32
    %c0_i32_0 = arith.constant 0 : i32
    %c0_i32_1 = arith.constant 0 : i32
    %c0_i32_2 = arith.constant 0 : i32
    return %c0_i32, %c0_i32_0, %c0_i32_1 : i32, i32, i32
  }
  func.func @transform_4(%arg0: i32) -> (i32, i32) {
    %c0_i32 = arith.constant 0 : i32
    %c0_i32_0 = arith.constant 0 : i32
    %c0_i32_1 = arith.constant 0 : i32
    return %c0_i32, %c0_i32_0 : i32, i32
  }
  func.func @transform_5(%arg0: i32) -> (i32, i32) {
    %c0_i32 = arith.constant 0 : i32
    %c0_i32_0 = arith.constant 0 : i32
    %c0_i32_1 = arith.constant 0 : i32
    return %c0_i32, %c0_i32_0 : i32, i32
  }
  func.func @transform_6(%arg0: i32) -> (i32, i32) {
    %c0_i32 = arith.constant 0 : i32
    %c0_i32_0 = arith.constant 0 : i32
    %c0_i32_1 = arith.constant 0 : i32
    return %c0_i32, %c0_i32_0 : i32, i32
  }
  func.func @transform_7(%arg0: i32) -> (i32, i32) {
    %c0_i32 = arith.constant 0 : i32
    %c0_i32_0 = arith.constant 0 : i32
    %c0_i32_1 = arith.constant 0 : i32
    return %c0_i32, %c0_i32_0 : i32, i32
  }
  func.func @transform_8(%arg0: i32) -> (i32, i32) {
    %c0_i32 = arith.constant 0 : i32
    %c0_i32_0 = arith.constant 0 : i32
    %c0_i32_1 = arith.constant 0 : i32
    return %c0_i32, %c0_i32_0 : i32, i32
  }
  func.func @transform_9(%arg0: i32) -> (i32, i32) {
    %c0_i32 = arith.constant 0 : i32
    %c0_i32_0 = arith.constant 0 : i32
    %c0_i32_1 = arith.constant 0 : i32
    return %c0_i32, %c0_i32_0 : i32, i32
  }
  func.func @transform_10(%arg0: i32) -> (i32, i32, i32) {
    %c0_i32 = arith.constant 0 : i32
    %c0_i32_0 = arith.constant 0 : i32
    %c0_i32_1 = arith.constant 0 : i32
    return %arg0, %c0_i32, %c0_i32_0 : i32, i32, i32
  }
}

</mosaic_0001>

<llo_original>
// kernel: tpu_custom_call.1
$region0: #{tpu_custom_call.1}
  #allocation0 [shape = 'u32[]', space=smem, size = 0x4, offset = 0x4, fixed_abs, tag = 'smem constant byte address 0x4 - core index']
  #allocation1 [shape = 'u32[72,128]{1,0:T(1,128)}', space=vmem, size = 0x9000, scoped, tag = 'internal scratch']
  #allocation2 [shape = 'f32[1,1]{1,0:T(1,128)S(1)}', space=vmem, size = 0x200, scoped, tag = 'scoped memory for tpu_custom_call.1']
  %s0 = inlined_call_operand.vmem [shape: f32[2,64,5], index: 0, kind: input, shape index: {}]
  %s1 = inlined_call_operand.hbm [shape: f32[5,128], index: 1, kind: input, shape index: {}]
  %s2 = inlined_call_operand.hbm [shape: f32[4,256,512], index: 2, kind: input, shape index: {}]
  %s3 = inlined_call_operand.hbm [shape: f32[4,1,512], index: 3, kind: input, shape index: {}]
  %s4 = inlined_call_operand.vmem [shape: f32[128,64], index: 4, kind: input, shape index: {}]
  %s5 = inlined_call_operand.hbm [shape: f32[1,64], index: 5, kind: input, shape index: {}]
  %s6 = inlined_call_operand.vmem [shape: f32[64,1], index: 6, kind: input, shape index: {}]
  %s7 = inlined_call_operand.<no memory space> [shape: f32[1,1], index: 7, kind: input, shape index: {}]
  %s8 = inlined_call_operand.vmem [shape: f32[128,3], index: 8, kind: input, shape index: {}]
  %s9 = inlined_call_operand.hbm [shape: f32[1,3], index: 9, kind: input, shape index: {}]
  %s10 = inlined_call_operand.vmem [shape: f32[2,8,3], index: 10, kind: output, shape index: {}]
  %s11 = sld [smem:[#allocation0]]
  $region93: #{tpu_custom_call.1} parent=0
    _
  %s13 = ssub.s32 1, %s11
  %s14 = scalar_select 0, %s13, %s11
  %v15 = vstv %s7
  %16 = vst [vmem:[#allocation2] sm:$0x1] %v15
  $region1: #{tpu_custom_call.1} parent=0
    #allocation3 [shape = 'u8[4096]{0}', space=vmem, size = 0x1000, scoped, tag = 'input window, operand 1, single buffered']
    #allocation4 [shape = 's32[2]{0}', space=sflag, size = 0x8, scoped, tag = 'scoped memory for tpu_custom_call.1']
    #allocation5 [shape = 'u8[2097152]{0}', space=vmem, size = 0x200000, scoped, tag = 'input window, operand 2, single buffered']
    #allocation6 [shape = 's32[1]{0}', space=sflag, size = 0x4, scoped, tag = 'scoped memory for tpu_custom_call.1']
    #allocation7 [shape = 'u8[8192]{0}', space=vmem, size = 0x2000, scoped, tag = 'input window, operand 3, single buffered']
    #allocation8 [shape = 'u8[512]{0}', space=vmem, size = 0x400, scoped, tag = 'input window, operand 5, single buffered']
    #allocation9 [shape = 's32[1]{0}', space=sflag, size = 0x4, scoped, tag = 'scoped memory for tpu_custom_call.1']
    #allocation10 [shape = 'u8[512]{0}', space=vmem, size = 0x400, scoped, tag = 'input window, operand 9, single buffered']
    %17 = vsyncpa [#allocation4], 0
    %18 = vsyncpa [#allocation6], 0
    %19 = vsyncpa [#allocation9], 0
    loop: start=0, step=1, limit=4
    $region2: #{tpu_custom_call.1} parent=1 // loop_pre_header
      _
    $region3: #{tpu_custom_call.1} parent=1 // loop_header
      %s21 = sphi 0, %s25
      %p22 = scmp.ge.s32.totalorder %s21, 4
      %s31 = sphi 0, %s33
      %s34 = sphi 0, %s31
      %s35 = sphi 0, %s34
      %s51 = sphi 0, %s35
      %s55 = sphi 0, %s55
      %s57 = sphi 0, %s55
      %s58 = sphi 0, %s57
      %s72 = sphi 0, %s58
      %s76 = sphi 0, %s76
      %s78 = sphi 0, %s76
      %s79 = sphi 0, %s78
      %s93 = sphi 0, %s79
      %s97 = sphi 0, %s97
      %s99 = sphi 0, %s97
      %s100 = sphi 0, %s99
      %s114 = sphi 0, %s100
      %s118 = sphi 0, %s118
      %s120 = sphi 0, %s118
      %s121 = sphi 0, %s120
      %s135 = sphi 0, %s121
      %s139 = sphi 0, %s139
      %s141 = sphi 0, %s139
      %s142 = sphi 0, %s141
      %s156 = sphi 0, %s142
      %s160 = sphi 0, %s160
      %s162 = sphi 0, %s160
      %s163 = sphi 0, %s162
      %s177 = sphi 0, %s163
      %s181 = sphi 0, %s181
      %s183 = sphi 0, %s181
      %s184 = sphi 0, %s183
      %s198 = sphi 0, %s184
      %s202 = sphi 0, %s202
      %s204 = sphi 0, %s202
      %s205 = sphi 0, %s204
      %s219 = sphi 0, %s205
      %s223 = sphi 0, %s223
      %s225 = sphi 0, %s223
      %s226 = sphi 0, %s225
      %s240 = sphi 0, %s226
      %s246 = sphi 0, %s248
      %s249 = sphi 0, %s246
      %s250 = sphi 0, %s249
      %s266 = sphi 0, %s250
    $region4: #{tpu_custom_call.1} parent=1 // loop_header_branch
      %24 = sbr.rel (%p22) target = $region8
    $region5: #{tpu_custom_call.1} parent=1 // loop_body
      %s26 = ssub.s32 %s21, 1
      %s27 = ssub.s32 %s21, 2
      %s28 = sadd.s32 %s21, 1
      %s29 = ssub.s32 %s21, %s28
      %p30 = scmp.eq.s32.totalorder %s29, 0
      %s32 = sadd.s32 %s31, 1
      %s33 = scalar_select %p30, %s31, %s32
      %p36 = pneg %p30
      %p37 = scmp.eq.s32.totalorder %s21, 1
      %p38 = por %p36, %p37
      %p39 = scmp.ne.s32.totalorder %s31, %s34
      %p40 = scmp.eq.s32.totalorder %s21, 0
      %p41 = por %p39, %p40
      %p42 = scmp.ne.s32.totalorder %s31, %s34
      %p43 = scmp.eq.s32.totalorder %s26, 1
      %p44 = por %p42, %p43
      %p45 = scmp.ne.s32.totalorder %s34, %s35
      %p46 = scmp.eq.s32.totalorder %s26, 0
      %p47 = por %p45, %p46
      %p48 = scmp.ne.s32.totalorder %s34, %s35
      %p49 = scmp.eq.s32.totalorder %s27, 1
      %p50 = por %p48, %p49
      %p52 = scmp.ne.s32.totalorder %s35, %s51
      %p53 = scmp.eq.s32.totalorder %s27, 0
      %p54 = por %p52, %p53
      %s56 = sadd.s32 %s55, 1
      %p59 = scmp.eq.s32.totalorder %s21, 1
      %p60 = scmp.ne.s32.totalorder %s55, %s57
      %p61 = scmp.eq.s32.totalorder %s21, 0
      %p62 = por %p60, %p61
      %p63 = scmp.ne.s32.totalorder %s55, %s57
      %p64 = scmp.eq.s32.totalorder %s26, 1
      %p65 = por %p63, %p64
      %p66 = scmp.ne.s32.totalorder %s57, %s58
      %p67 = scmp.eq.s32.totalorder %s26, 0
      %p68 = por %p66, %p67
      %p69 = scmp.ne.s32.totalorder %s57, %s58
      %p70 = scmp.eq.s32.totalorder %s27, 1
      %p71 = por %p69, %p70
      %p73 = scmp.ne.s32.totalorder %s58, %s72
      %p74 = scmp.eq.s32.totalorder %s27, 0
      %p75 = por %p73, %p74
      %s77 = sadd.s32 %s76, 1
      %p80 = scmp.eq.s32.totalorder %s21, 1
      %p81 = scmp.ne.s32.totalorder %s76, %s78
      %p82 = scmp.eq.s32.totalorder %s21, 0
      %p83 = por %p81, %p82
      %p84 = scmp.ne.s32.totalorder %s76, %s78
      %p85 = scmp.eq.s32.totalorder %s26, 1
      %p86 = por %p84, %p85
      %p87 = scmp.ne.s32.totalorder %s78, %s79
      %p88 = scmp.eq.s32.totalorder %s26, 0
      %p89 = por %p87, %p88
      %p90 = scmp.ne.s32.totalorder %s78, %s79
      %p91 = scmp.eq.s32.totalorder %s27, 1
      %p92 = por %p90, %p91
      %p94 = scmp.ne.s32.totalorder %s79, %s93
      %p95 = scmp.eq.s32.totalorder %s27, 0
      %p96 = por %p94, %p95
      %s98 = sadd.s32 %s97, 1
      %p101 = scmp.eq.s32.totalorder %s21, 1
      %p102 = scmp.ne.s32.totalorder %s97, %s99
      %p103 = scmp.eq.s32.totalorder %s21, 0
      %p104 = por %p102, %p103
      %p105 = scmp.ne.s32.totalorder %s97, %s99
      %p106 = scmp.eq.s32.totalorder %s26, 1
      %p107 = por %p105, %p106
      %p108 = scmp.ne.s32.totalorder %s99, %s100
      %p109 = scmp.eq.s32.totalorder %s26, 0
      %p110 = por %p108, %p109
      %p111 = scmp.ne.s32.totalorder %s99, %s100
      %p112 = scmp.eq.s32.totalorder %s27, 1
      %p113 = por %p111, %p112
      %p115 = scmp.ne.s32.totalorder %s100, %s114
      %p116 = scmp.eq.s32.totalorder %s27, 0
      %p117 = por %p115, %p116
      %s119 = sadd.s32 %s118, 1
      %p122 = scmp.eq.s32.totalorder %s21, 1
      %p123 = scmp.ne.s32.totalorder %s118, %s120
      %p124 = scmp.eq.s32.totalorder %s21, 0
      %p125 = por %p123, %p124
      %p126 = scmp.ne.s32.totalorder %s118, %s120
      %p127 = scmp.eq.s32.totalorder %s26, 1
      %p128 = por %p126, %p127
      %p129 = scmp.ne.s32.totalorder %s120, %s121
      %p130 = scmp.eq.s32.totalorder %s26, 0
      %p131 = por %p129, %p130
      %p132 = scmp.ne.s32.totalorder %s120, %s121
      %p133 = scmp.eq.s32.totalorder %s27, 1
      %p134 = por %p132, %p133
      %p136 = scmp.ne.s32.totalorder %s121, %s135
      %p137 = scmp.eq.s32.totalorder %s27, 0
      %p138 = por %p136, %p137
      %s140 = sadd.s32 %s139, 1
      %p143 = scmp.eq.s32.totalorder %s21, 1
      %p144 = scmp.ne.s32.totalorder %s139, %s141
      %p145 = scmp.eq.s32.totalorder %s21, 0
      %p146 = por %p144, %p145
      %p147 = scmp.ne.s32.totalorder %s139, %s141
      %p148 = scmp.eq.s32.totalorder %s26, 1
      %p149 = por %p147, %p148
      %p150 = scmp.ne.s32.totalorder %s141, %s142
      %p151 = scmp.eq.s32.totalorder %s26, 0
      %p152 = por %p150, %p151
      %p153 = scmp.ne.s32.totalorder %s141, %s142
      %p154 = scmp.eq.s32.totalorder %s27, 1
      %p155 = por %p153, %p154
      %p157 = scmp.ne.s32.totalorder %s142, %s156
      %p158 = scmp.eq.s32.totalorder %s27, 0
      %p159 = por %p157, %p158
      %s161 = sadd.s32 %s160, 1
      %p164 = scmp.eq.s32.totalorder %s21, 1
      %p165 = scmp.ne.s32.totalorder %s160, %s162
      %p166 = scmp.eq.s32.totalorder %s21, 0
      %p167 = por %p165, %p166
      %p168 = scmp.ne.s32.totalorder %s160, %s162
      %p169 = scmp.eq.s32.totalorder %s26, 1
      %p170 = por %p168, %p169
      %p171 = scmp.ne.s32.totalorder %s162, %s163
      %p172 = scmp.eq.s32.totalorder %s26, 0
      %p173 = por %p171, %p172
      %p174 = scmp.ne.s32.totalorder %s162, %s163
      %p175 = scmp.eq.s32.totalorder %s27, 1
      %p176 = por %p174, %p175
      %p178 = scmp.ne.s32.totalorder %s163, %s177
      %p179 = scmp.eq.s32.totalorder %s27, 0
      %p180 = por %p178, %p179
      %s182 = sadd.s32 %s181, 1
      %p185 = scmp.eq.s32.totalorder %s21, 1
      %p186 = scmp.ne.s32.totalorder %s181, %s183
      %p187 = scmp.eq.s32.totalorder %s21, 0
      %p188 = por %p186, %p187
      %p189 = scmp.ne.s32.totalorder %s181, %s183
      %p190 = scmp.eq.s32.totalorder %s26, 1
      %p191 = por %p189, %p190
      %p192 = scmp.ne.s32.totalorder %s183, %s184
      %p193 = scmp.eq.s32.totalorder %s26, 0
      %p194 = por %p192, %p193
      %p195 = scmp.ne.s32.totalorder %s183, %s184
      %p196 = scmp.eq.s32.totalorder %s27, 1
      %p197 = por %p195, %p196
      %p199 = scmp.ne.s32.totalorder %s184, %s198
      %p200 = scmp.eq.s32.totalorder %s27, 0
      %p201 = por %p199, %p200
      %s203 = sadd.s32 %s202, 1
      %p206 = scmp.eq.s32.totalorder %s21, 1
      %p207 = scmp.ne.s32.totalorder %s202, %s204
      %p208 = scmp.eq.s32.totalorder %s21, 0
      %p209 = por %p207, %p208
      %p210 = scmp.ne.s32.totalorder %s202, %s204
      %p211 = scmp.eq.s32.totalorder %s26, 1
      %p212 = por %p210, %p211
      %p213 = scmp.ne.s32.totalorder %s204, %s205
      %p214 = scmp.eq.s32.totalorder %s26, 0
      %p215 = por %p213, %p214
      %p216 = scmp.ne.s32.totalorder %s204, %s205
      %p217 = scmp.eq.s32.totalorder %s27, 1
      %p218 = por %p216, %p217
      %p220 = scmp.ne.s32.totalorder %s205, %s219
      %p221 = scmp.eq.s32.totalorder %s27, 0
      %p222 = por %p220, %p221
      %s224 = sadd.s32 %s223, 1
      %p227 = scmp.eq.s32.totalorder %s21, 1
      %p228 = scmp.ne.s32.totalorder %s223, %s225
      %p229 = scmp.eq.s32.totalorder %s21, 0
      %p230 = por %p228, %p229
      %p231 = scmp.ne.s32.totalorder %s223, %s225
      %p232 = scmp.eq.s32.totalorder %s26, 1
      %p233 = por %p231, %p232
      %p234 = scmp.ne.s32.totalorder %s225, %s226
      %p235 = scmp.eq.s32.totalorder %s26, 0
      %p236 = por %p234, %p235
      %p237 = scmp.ne.s32.totalorder %s225, %s226
      %p238 = scmp.eq.s32.totalorder %s27, 1
      %p239 = por %p237, %p238
      %p241 = scmp.ne.s32.totalorder %s226, %s240
      %p242 = scmp.eq.s32.totalorder %s27, 0
      %p243 = por %p241, %p242
      %s244 = ssub.s32 %s21, %s28
      %p245 = scmp.eq.s32.totalorder %s244, 0
      %s247 = sadd.s32 %s246, 1
      %s248 = scalar_select %p245, %s246, %s247
      %p251 = pneg %p245
      %p252 = scmp.eq.s32.totalorder %s21, 1
      %p253 = por %p251, %p252
      %p254 = scmp.ne.s32.totalorder %s246, %s249
      %p255 = scmp.eq.s32.totalorder %s21, 0
      %p256 = por %p254, %p255
      %p257 = scmp.ne.s32.totalorder %s246, %s249
      %p258 = scmp.eq.s32.totalorder %s26, 1
      %p259 = por %p257, %p258
      %p260 = scmp.ne.s32.totalorder %s249, %s250
      %p261 = scmp.eq.s32.totalorder %s26, 0
      %p262 = por %p260, %p261
      %p263 = scmp.ne.s32.totalorder %s249, %s250
      %p264 = scmp.eq.s32.totalorder %s27, 1
      %p265 = por %p263, %p264
      %p267 = scmp.ne.s32.totalorder %s250, %s266
      %p268 = scmp.eq.s32.totalorder %s27, 0
      %p269 = por %p267, %p268
      %p270 = scmp.le.s32.totalorder 1, %s21
      %p271 = scmp.lt.s32.totalorder %s21, 3
      %p272 = pnand %p270, %p271
      %p273 = pneg %p272
      // Predicated region
      $region9: #{tpu_custom_call.1} parent=5 // pred_check
        _
      $region10: #{tpu_custom_call.1} parent=5 // pred_check_branch
        %275 = sbr.rel (%p272) target = $region12
      $region11: #{tpu_custom_call.1} parent=5 // pred_region
        %s276 = ssub.s32 %s21, 1
        // Predicated region
        $region13: #{tpu_custom_call.1} parent=11 // pred_check
          %p277 = pneg %p68
        $region14: #{tpu_custom_call.1} parent=11 // pred_check_branch
          %279 = sbr.rel (%p277) target = $region16
        $region15: #{tpu_custom_call.1} parent=11 // pred_region
          %281 = vsyncadd [#allocation4], 0
          %s283 = sshll.u32 %s1, 4
          %s284 = int_to_ptr.hbm [resolvable:$true] %s283
          %s285 = sshll.u32 [#allocation3], 4
          %s286 = int_to_ptr.vmem [resolvable:$true] %s285
          %288 = dma.hbm_to_vmem [thread:$0]  %s284, 128, %s286, [#allocation4]
        $region16: #{tpu_custom_call.1} parent=11 // pred_fallthru
          _
        // Predicated region
        $region17: #{tpu_custom_call.1} parent=11 // pred_check
          %p289 = pneg %p89
        $region18: #{tpu_custom_call.1} parent=11 // pred_check_branch
          %291 = sbr.rel (%p289) target = $region20
        $region19: #{tpu_custom_call.1} parent=11 // pred_region
          %293 = vsyncadd [#allocation6], 0
          %s294 = sshll.u32 %s2, 4
          %s295 = int_to_ptr.hbm [resolvable:$true] %s294
          %s296 = sshll.u32 [#allocation5], 4
          %s297 = int_to_ptr.vmem [resolvable:$true] %s296
          %302 = dma.hbm_to_vmem [thread:$0]  %s295, 65536, %s297, [#allocation6], 512, 512, 32
        $region20: #{tpu_custom_call.1} parent=11 // pred_fallthru
          _
        // Predicated region
        $region21: #{tpu_custom_call.1} parent=11 // pred_check
          %p303 = pneg %p110
        $region22: #{tpu_custom_call.1} parent=11 // pred_check_branch
          %305 = sbr.rel (%p303) target = $region24
        $region23: #{tpu_custom_call.1} parent=11 // pred_region
          %307 = vsyncadd [#allocation6], 0
          %s308 = sshll.u32 %s3, 4
          %s309 = int_to_ptr.hbm [resolvable:$true] %s308
          %s310 = sshll.u32 [#allocation7], 4
          %s311 = int_to_ptr.vmem [resolvable:$true] %s310
          %316 = dma.hbm_to_vmem [thread:$0]  %s309, 256, %s311, [#allocation6], 64, 64, 4
        $region24: #{tpu_custom_call.1} parent=11 // pred_fallthru
          _
        // Predicated region
        $region25: #{tpu_custom_call.1} parent=11 // pred_check
          %p317 = pneg %p131
        $region26: #{tpu_custom_call.1} parent=11 // pred_check_branch
          %319 = sbr.rel (%p317) target = $region28
        $region27: #{tpu_custom_call.1} parent=11 // pred_region
          _
        $region28: #{tpu_custom_call.1} parent=11 // pred_fallthru
          _
        // Predicated region
        $region29: #{tpu_custom_call.1} parent=11 // pred_check
          %p320 = pneg %p152
        $region30: #{tpu_custom_call.1} parent=11 // pred_check_branch
          %322 = sbr.rel (%p320) target = $region32
        $region31: #{tpu_custom_call.1} parent=11 // pred_region
          %324 = vsyncadd [#allocation9], 0
          %s326 = sshll.u32 %s5, 4
          %s327 = int_to_ptr.hbm [resolvable:$true] %s326
          %s328 = sshll.u32 [#allocation8], 4
          %s329 = int_to_ptr.vmem [resolvable:$true] %s328
          %331 = dma.hbm_to_vmem [thread:$0]  %s327, 16, %s329, [#allocation9]
        $region32: #{tpu_custom_call.1} parent=11 // pred_fallthru
          _
        // Predicated region
        $region33: #{tpu_custom_call.1} parent=11 // pred_check
          %p332 = pneg %p173
        $region34: #{tpu_custom_call.1} parent=11 // pred_check_branch
          %334 = sbr.rel (%p332) target = $region36
        $region35: #{tpu_custom_call.1} parent=11 // pred_region
          _
        $region36: #{tpu_custom_call.1} parent=11 // pred_fallthru
          _
        // Predicated region
        $region37: #{tpu_custom_call.1} parent=11 // pred_check
          %p335 = pneg %p194
        $region38: #{tpu_custom_call.1} parent=11 // pred_check_branch
          %337 = sbr.rel (%p335) target = $region40
        $region39: #{tpu_custom_call.1} parent=11 // pred_region
          _
        $region40: #{tpu_custom_call.1} parent=11 // pred_fallthru
          _
        // Predicated region
        $region41: #{tpu_custom_call.1} parent=11 // pred_check
          %p338 = pneg %p215
        $region42: #{tpu_custom_call.1} parent=11 // pred_check_branch
          %340 = sbr.rel (%p338) target = $region44
        $region43: #{tpu_custom_call.1} parent=11 // pred_region
          _
        $region44: #{tpu_custom_call.1} parent=11 // pred_fallthru
          _
        // Predicated region
        $region45: #{tpu_custom_call.1} parent=11 // pred_check
          %p341 = pneg %p236
        $region46: #{tpu_custom_call.1} parent=11 // pred_check_branch
          %343 = sbr.rel (%p341) target = $region48
        $region47: #{tpu_custom_call.1} parent=11 // pred_region
          %345 = vsyncadd [#allocation9], 0
          %s347 = sshll.u32 %s9, 4
          %s348 = int_to_ptr.hbm [resolvable:$true] %s347
          %s349 = sshll.u32 [#allocation10], 4
          %s350 = int_to_ptr.vmem [resolvable:$true] %s349
          %352 = dma.hbm_to_vmem [thread:$0]  %s348, 16, %s350, [#allocation9]
        $region48: #{tpu_custom_call.1} parent=11 // pred_fallthru
          _
      $region12: #{tpu_custom_call.1} parent=5 // pred_fallthru
        _
      %p353 = scmp.lt.s32.totalorder %s21, 2
      // Predicated region
      $region49: #{tpu_custom_call.1} parent=5 // pred_check
        %p354 = pneg %p353
      $region50: #{tpu_custom_call.1} parent=5 // pred_check_branch
        %356 = sbr.rel (%p354) target = $region52
      $region51: #{tpu_custom_call.1} parent=5 // pred_region
        // Predicated region
        $region53: #{tpu_custom_call.1} parent=51 // pred_check
          %p357 = pneg %p41
        $region54: #{tpu_custom_call.1} parent=51 // pred_check_branch
          %359 = sbr.rel (%p357) target = $region56
        $region55: #{tpu_custom_call.1} parent=51 // pred_region
          %p360 = scmp.lt.s32.totalorder %s21, 1
          %s361 = scalar_select %p360, %s21, 1
          %s362 = smul.addr %s361, 8
          %s363 = smul.addr %s362, 8
          %s364 = scalar_lea.vmem %s0, %s363
        $region56: #{tpu_custom_call.1} parent=51 // pred_fallthru
          _
      $region52: #{tpu_custom_call.1} parent=5 // pred_fallthru
        _
      %p365 = scmp.le.s32.totalorder 1, %s21
      %p366 = scmp.lt.s32.totalorder %s21, 3
      %p367 = pnand %p365, %p366
      %p368 = pneg %p367
      // Predicated region
      $region57: #{tpu_custom_call.1} parent=5 // pred_check
        _
      $region58: #{tpu_custom_call.1} parent=5 // pred_check_branch
        %370 = sbr.rel (%p367) target = $region60
      $region59: #{tpu_custom_call.1} parent=5 // pred_region
        %s371 = ssub.s32 %s21, 1
        // Predicated region
        $region61: #{tpu_custom_call.1} parent=59 // pred_check
          %p372 = pneg %p68
        $region62: #{tpu_custom_call.1} parent=59 // pred_check_branch
          %374 = sbr.rel (%p372) target = $region64
        $region63: #{tpu_custom_call.1} parent=59 // pred_region
          %376 = dma.done [#allocation4], 128
        $region64: #{tpu_custom_call.1} parent=59 // pred_fallthru
          _
        // Predicated region
        $region65: #{tpu_custom_call.1} parent=59 // pred_check
          %p377 = pneg %p89
        $region66: #{tpu_custom_call.1} parent=59 // pred_check_branch
          %379 = sbr.rel (%p377) target = $region68
        $region67: #{tpu_custom_call.1} parent=59 // pred_region
          %381 = dma.done [#allocation6], 65536
        $region68: #{tpu_custom_call.1} parent=59 // pred_fallthru
          _
        // Predicated region
        $region69: #{tpu_custom_call.1} parent=59 // pred_check
          %p382 = pneg %p110
        $region70: #{tpu_custom_call.1} parent=59 // pred_check_branch
          %384 = sbr.rel (%p382) target = $region72
        $region71: #{tpu_custom_call.1} parent=59 // pred_region
          %386 = dma.done [#allocation6], 256
        $region72: #{tpu_custom_call.1} parent=59 // pred_fallthru
          _
        // Predicated region
        $region73: #{tpu_custom_call.1} parent=59 // pred_check
          %p387 = pneg %p152
        $region74: #{tpu_custom_call.1} parent=59 // pred_check_branch
          %389 = sbr.rel (%p387) target = $region76
        $region75: #{tpu_custom_call.1} parent=59 // pred_region
          %391 = dma.done [#allocation9], 16
        $region76: #{tpu_custom_call.1} parent=59 // pred_fallthru
          _
        // Predicated region
        $region77: #{tpu_custom_call.1} parent=59 // pred_check
          %p392 = pneg %p236
        $region78: #{tpu_custom_call.1} parent=59 // pred_check_branch
          %394 = sbr.rel (%p392) target = $region80
        $region79: #{tpu_custom_call.1} parent=59 // pred_region
          %396 = dma.done [#allocation9], 16
        $region80: #{tpu_custom_call.1} parent=59 // pred_fallthru
          _
        %p397 = scmp.lt.s32.totalorder %s26, 1
        %s398 = scalar_select %p397, %s26, 1
        %s399 = smul.addr %s398, 8
        %s400 = smul.addr %s399, 8
        %s401 = scalar_lea.vmem %s0, %s400
        %p402 = pneg %p47
        %p403 = pneg %p44
        %p404 = pneg %p68
        %p405 = pneg %p65
        %p406 = pneg %p89
        %p407 = pneg %p86
        %p408 = pneg %p110
        %p409 = pneg %p107
        %p410 = pneg %p131
        %p411 = pneg %p128
        %p412 = pneg %p152
        %p413 = pneg %p149
        %p414 = pneg %p173
        %p415 = pneg %p170
        %p416 = pneg %p194
        %p417 = pneg %p191
        %p418 = pneg %p215
        %p419 = pneg %p212
        %p420 = pneg %p236
        %p421 = pneg %p233
        %p422 = pneg %p262
        %p423 = pneg %p259
        %p424 = scmp.lt.s32.totalorder %s26, 1
        %s425 = scalar_select %p424, %s26, 1
        %s426 = smul.addr %s425, 8
        %s427 = scalar_lea.vmem %s10, %s426
        %p428 = scmp.lt.s32.totalorder %s26, 1
        %s429 = scalar_select %p428, %s26, 1
        %s430 = smul.addr %s429, 8
        %s431 = smul.addr %s430, 8
        %s432 = scalar_lea.vmem %s0, %s431
        %p433 = scmp.lt.s32.totalorder %s26, 1
        %s434 = scalar_select %p433, %s26, 1
        %s435 = smul.addr %s434, 8
        %s436 = scalar_lea.vmem %s10, %s435
        %v437 = vld [vmem:[%s432] sm:$0xff]
        %v438 = vld [vmem:[%s432 + $0x8] sm:$0xff]
        %v439 = vld [vmem:[%s432 + $0x10] sm:$0xff]
        %v440 = vld [vmem:[%s432 + $0x18] sm:$0xff]
        %v441 = vld [vmem:[%s432 + $0x20] sm:$0xff]
        %v442 = vld [vmem:[%s432 + $0x28] sm:$0xff]
        %v443 = vld [vmem:[%s432 + $0x30] sm:$0xff]
        %v444 = vld [vmem:[%s432 + $0x38] sm:$0xff]
        %v445 = vld [vmem:[#allocation3] sm:$0x1f]
        %vm446 = vcmask 39936
        %v448 = vsel %vm446, %v437, 0
        %v451 = vsel %vm446, %v438, 0
        %v454 = vsel %vm446, %v439, 0
        %v457 = vsel %vm446, %v440, 0
        %v460 = vsel %vm446, %v441, 0
        %v463 = vsel %vm446, %v442, 0
        %v466 = vsel %vm446, %v443, 0
        %v469 = vsel %vm446, %v444, 0
        %vm471 = vcmask 1044480
        %v473 = vsel %vm471, %v445, 0
        %475 = vmatpush.msra.mxu0 0.0
        %476 = vmatpush.msra.mxu0 0.0
        %477 = vmatpush.msra.mxu0 0.0
        %478 = vmatpush.msra.mxu0 0.0
        %479 = vmatpush.msra.mxu0 0.0
        %480 = vmatpush.msra.mxu0 0.0
        %481 = vmatpush.msra.mxu0 0.0
        %482 = vmatpush.msra.mxu0 0.0
        %483 = vmatpush.msra.mxu0 0.0
        %484 = vmatpush.msra.mxu0 0.0
        %485 = vmatpush.msra.mxu0 0.0
        %486 = vmatpush.msra.mxu0 0.0
        %487 = vmatpush.msra.mxu0 0.0
        %488 = vmatpush.msra.mxu0 0.0
        %489 = vmatpush.msra.mxu0 0.0
        %490 = vmatpush.msra.mxu0 %v473
        %491 = vmatmul.f32.gmra.mxu0 %v448
        %v492 = vpop.f32.mrf.mxu0
        %v493 = vadd.f32 0.0, %v492
        %494 = vmatmul.f32.gmra.mxu0 %v451
        %v495 = vpop.f32.mrf.mxu0
        %v496 = vadd.f32 0.0, %v495
        %497 = vmatmul.f32.gmra.mxu0 %v454
        %v498 = vpop.f32.mrf.mxu0
        %v499 = vadd.f32 0.0, %v498
        %500 = vmatmul.f32.gmra.mxu0 %v457
        %v501 = vpop.f32.mrf.mxu0
        %v502 = vadd.f32 0.0, %v501
        %503 = vmatmul.f32.gmra.mxu0 %v460
        %v504 = vpop.f32.mrf.mxu0
        %v505 = vadd.f32 0.0, %v504
        %506 = vmatmul.f32.gmra.mxu0 %v463
        %v507 = vpop.f32.mrf.mxu0
        %v508 = vadd.f32 0.0, %v507
        %509 = vmatmul.f32.gmra.mxu0 %v466
        %v510 = vpop.f32.mrf.mxu0
        %v511 = vadd.f32 0.0, %v510
        %512 = vmatmul.f32.gmra.mxu0 %v469
        %v513 = vpop.f32.mrf.mxu0
        %v514 = vadd.f32 0.0, %v513
        %515 = vdwg.mxu0
        %v516 = vmax.f32 %v493, 0.0
        %v517 = vmax.f32 %v496, 0.0
        %v518 = vmax.f32 %v499, 0.0
        %v519 = vmax.f32 %v502, 0.0
        %v520 = vmax.f32 %v505, 0.0
        %v521 = vmax.f32 %v508, 0.0
        %v522 = vmax.f32 %v511, 0.0
        %v523 = vmax.f32 %v514, 0.0
        %v524 = vld [vmem:[#allocation5] sm:$0xff]
        %v525 = vld [vmem:[#allocation5 + $0x8] sm:$0xff]
        %v526 = vld [vmem:[#allocation5 + $0x10] sm:$0xff]
        %v527 = vld [vmem:[#allocation5 + $0x18] sm:$0xff]
        %v528 = vld [vmem:[#allocation5 + $0x20] sm:$0xff]
        %v529 = vld [vmem:[#allocation5 + $0x28] sm:$0xff]
        %v530 = vld [vmem:[#allocation5 + $0x30] sm:$0xff]
        %v531 = vld [vmem:[#allocation5 + $0x38] sm:$0xff]
        %v532 = vld [vmem:[#allocation5 + $0x40] sm:$0xff]
        %v533 = vld [vmem:[#allocation5 + $0x48] sm:$0xff]
        %v534 = vld [vmem:[#allocation5 + $0x50] sm:$0xff]
        %v535 = vld [vmem:[#allocation5 + $0x58] sm:$0xff]
        %v536 = vld [vmem:[#allocation5 + $0x60] sm:$0xff]
        %v537 = vld [vmem:[#allocation5 + $0x68] sm:$0xff]
        %v538 = vld [vmem:[#allocation5 + $0x70] sm:$0xff]
        %v539 = vld [vmem:[#allocation5 + $0x78] sm:$0xff]
        %v540 = vld [vmem:[#allocation5 + $0x80] sm:$0xff]
        %v541 = vld [vmem:[#allocation5 + $0x88] sm:$0xff]
        %v542 = vld [vmem:[#allocation5 + $0x90] sm:$0xff]
        %v543 = vld [vmem:[#allocation5 + $0x98] sm:$0xff]
        %v544 = vld [vmem:[#allocation5 + $0xa0] sm:$0xff]
        %v545 = vld [vmem:[#allocation5 + $0xa8] sm:$0xff]
        %v546 = vld [vmem:[#allocation5 + $0xb0] sm:$0xff]
        %v547 = vld [vmem:[#allocation5 + $0xb8] sm:$0xff]
        %v548 = vld [vmem:[#allocation5 + $0xc0] sm:$0xff]
        %v549 = vld [vmem:[#allocation5 + $0xc8] sm:$0xff]
        %v550 = vld [vmem:[#allocation5 + $0xd0] sm:$0xff]
        %v551 = vld [vmem:[#allocation5 + $0xd8] sm:$0xff]
        %v552 = vld [vmem:[#allocation5 + $0xe0] sm:$0xff]
        %v553 = vld [vmem:[#allocation5 + $0xe8] sm:$0xff]
        %v554 = vld [vmem:[#allocation5 + $0xf0] sm:$0xff]
        %v555 = vld [vmem:[#allocation5 + $0xf8] sm:$0xff]
        %v556 = vld [vmem:[#allocation5 + $0x100] sm:$0xff]
        %v557 = vld [vmem:[#allocation5 + $0x108] sm:$0xff]
        %v558 = vld [vmem:[#allocation5 + $0x110] sm:$0xff]
        %v559 = vld [vmem:[#allocation5 + $0x118] sm:$0xff]
        %v560 = vld [vmem:[#allocation5 + $0x120] sm:$0xff]
        %v561 = vld [vmem:[#allocation5 + $0x128] sm:$0xff]
        %v562 = vld [vmem:[#allocation5 + $0x130] sm:$0xff]
        %v563 = vld [vmem:[#allocation5 + $0x138] sm:$0xff]
        %v564 = vld [vmem:[#allocation5 + $0x140] sm:$0xff]
        %v565 = vld [vmem:[#allocation5 + $0x148] sm:$0xff]
        %v566 = vld [vmem:[#allocation5 + $0x150] sm:$0xff]
        %v567 = vld [vmem:[#allocation5 + $0x158] sm:$0xff]
        %v568 = vld [vmem:[#allocation5 + $0x160] sm:$0xff]
        %v569 = vld [vmem:[#allocation5 + $0x168] sm:$0xff]
        %v570 = vld [vmem:[#allocation5 + $0x170] sm:$0xff]
        %v571 = vld [vmem:[#allocation5 + $0x178] sm:$0xff]
        %v572 = vld [vmem:[#allocation5 + $0x180] sm:$0xff]
        %v573 = vld [vmem:[#allocation5 + $0x188] sm:$0xff]
        %v574 = vld [vmem:[#allocation5 + $0x190] sm:$0xff]
        %v575 = vld [vmem:[#allocation5 + $0x198] sm:$0xff]
        %v576 = vld [vmem:[#allocation5 + $0x1a0] sm:$0xff]
        %v577 = vld [vmem:[#allocation5 + $0x1a8] sm:$0xff]
        %v578 = vld [vmem:[#allocation5 + $0x1b0] sm:$0xff]
        %v579 = vld [vmem:[#allocation5 + $0x1b8] sm:$0xff]
        %v580 = vld [vmem:[#allocation5 + $0x1c0] sm:$0xff]
        %v581 = vld [vmem:[#allocation5 + $0x1c8] sm:$0xff]
        %v582 = vld [vmem:[#allocation5 + $0x1d0] sm:$0xff]
        %v583 = vld [vmem:[#allocation5 + $0x1d8] sm:$0xff]
        %v584 = vld [vmem:[#allocation5 + $0x1e0] sm:$0xff]
        %v585 = vld [vmem:[#allocation5 + $0x1e8] sm:$0xff]
        %v586 = vld [vmem:[#allocation5 + $0x1f0] sm:$0xff]
        %v587 = vld [vmem:[#allocation5 + $0x1f8] sm:$0xff]
        %v588 = vld [vmem:[#allocation5 + $0x200] sm:$0xff]
        %v589 = vld [vmem:[#allocation5 + $0x208] sm:$0xff]
        %v590 = vld [vmem:[#allocation5 + $0x210] sm:$0xff]
        %v591 = vld [vmem:[#allocation5 + $0x218] sm:$0xff]
        %v592 = vld [vmem:[#allocation5 + $0x220] sm:$0xff]
        %v593 = vld [vmem:[#allocation5 + $0x228] sm:$0xff]
        %v594 = vld [vmem:[#allocation5 + $0x230] sm:$0xff]
        %v595 = vld [vmem:[#allocation5 + $0x238] sm:$0xff]
        %v596 = vld [vmem:[#allocation5 + $0x240] sm:$0xff]
        %v597 = vld [vmem:[#allocation5 + $0x248] sm:$0xff]
        %v598 = vld [vmem:[#allocation5 + $0x250] sm:$0xff]
        %v599 = vld [vmem:[#allocation5 + $0x258] sm:$0xff]
        %v600 = vld [vmem:[#allocation5 + $0x260] sm:$0xff]
        %v601 = vld [vmem:[#allocation5 + $0x268] sm:$0xff]
        %v602 = vld [vmem:[#allocation5 + $0x270] sm:$0xff]
        %v603 = vld [vmem:[#allocation5 + $0x278] sm:$0xff]
        %v604 = vld [vmem:[#allocation5 + $0x280] sm:$0xff]
        %v605 = vld [vmem:[#allocation5 + $0x288] sm:$0xff]
        %v606 = vld [vmem:[#allocation5 + $0x290] sm:$0xff]
        %v607 = vld [vmem:[#allocation5 + $0x298] sm:$0xff]
        %v608 = vld [vmem:[#allocation5 + $0x2a0] sm:$0xff]
        %v609 = vld [vmem:[#allocation5 + $0x2a8] sm:$0xff]
        %v610 = vld [vmem:[#allocation5 + $0x2b0] sm:$0xff]
        %v611 = vld [vmem:[#allocation5 + $0x2b8] sm:$0xff]
        %v612 = vld [vmem:[#allocation5 + $0x2c0] sm:$0xff]
        %v613 = vld [vmem:[#allocation5 + $0x2c8] sm:$0xff]
        %v614 = vld [vmem:[#allocation5 + $0x2d0] sm:$0xff]
        %v615 = vld [vmem:[#allocation5 + $0x2d8] sm:$0xff]
        %v616 = vld [vmem:[#allocation5 + $0x2e0] sm:$0xff]
        %v617 = vld [vmem:[#allocation5 + $0x2e8] sm:$0xff]
        %v618 = vld [vmem:[#allocation5 + $0x2f0] sm:$0xff]
        %v619 = vld [vmem:[#allocation5 + $0x2f8] sm:$0xff]
        %v620 = vld [vmem:[#allocation5 + $0x300] sm:$0xff]
        %v621 = vld [vmem:[#allocation5 + $0x308] sm:$0xff]
        %v622 = vld [vmem:[#allocation5 + $0x310] sm:$0xff]
        %v623 = vld [vmem:[#allocation5 + $0x318] sm:$0xff]
        %v624 = vld [vmem:[#allocation5 + $0x320] sm:$0xff]
        %v625 = vld [vmem:[#allocation5 + $0x328] sm:$0xff]
        %v626 = vld [vmem:[#allocation5 + $0x330] sm:$0xff]
        %v627 = vld [vmem:[#allocation5 + $0x338] sm:$0xff]
        %v628 = vld [vmem:[#allocation5 + $0x340] sm:$0xff]
        %v629 = vld [vmem:[#allocation5 + $0x348] sm:$0xff]
        %v630 = vld [vmem:[#allocation5 + $0x350] sm:$0xff]
        %v631 = vld [vmem:[#allocation5 + $0x358] sm:$0xff]
        %v632 = vld [vmem:[#allocation5 + $0x360] sm:$0xff]
        %v633 = vld [vmem:[#allocation5 + $0x368] sm:$0xff]
        %v634 = vld [vmem:[#allocation5 + $0x370] sm:$0xff]
        %v635 = vld [vmem:[#allocation5 + $0x378] sm:$0xff]
        %v636 = vld [vmem:[#allocation5 + $0x380] sm:$0xff]
        %v637 = vld [vmem:[#allocation5 + $0x388] sm:$0xff]
        %v638 = vld [vmem:[#allocation5 + $0x390] sm:$0xff]
        %v639 = vld [vmem:[#allocation5 + $0x398] sm:$0xff]
        %v640 = vld [vmem:[#allocation5 + $0x3a0] sm:$0xff]
        %v641 = vld [vmem:[#allocation5 + $0x3a8] sm:$0xff]
        %v642 = vld [vmem:[#allocation5 + $0x3b0] sm:$0xff]
        %v643 = vld [vmem:[#allocation5 + $0x3b8] sm:$0xff]
        %v644 = vld [vmem:[#allocation5 + $0x3c0] sm:$0xff]
        %v645 = vld [vmem:[#allocation5 + $0x3c8] sm:$0xff]
        %v646 = vld [vmem:[#allocation5 + $0x3d0] sm:$0xff]
        %v647 = vld [vmem:[#allocation5 + $0x3d8] sm:$0xff]
        %v648 = vld [vmem:[#allocation5 + $0x3e0] sm:$0xff]
        %v649 = vld [vmem:[#allocation5 + $0x3e8] sm:$0xff]
        %v650 = vld [vmem:[#allocation5 + $0x3f0] sm:$0xff]
        %v651 = vld [vmem:[#allocation5 + $0x3f8] sm:$0xff]
        %v652 = vld [vmem:[#allocation7] sm:$0xf]
        %v654 = vperm.slane %v652, 0
        %v655 = vperm.slane %v652, 1
        %v656 = vperm.slane %v652, 2
        %v657 = vperm.slane %v652, 3
        %662 = vmatpush.msra.mxu0 %v584
        %663 = vmatpush.msra.mxu0 %v580
        %664 = vmatpush.msra.mxu0 %v576
        %665 = vmatpush.msra.mxu0 %v572
        %666 = vmatpush.msra.mxu0 %v568
        %667 = vmatpush.msra.mxu0 %v564
        %668 = vmatpush.msra.mxu0 %v560
        %669 = vmatpush.msra.mxu0 %v556
        %670 = vmatpush.msra.mxu0 %v552
        %671 = vmatpush.msra.mxu0 %v548
        %672 = vmatpush.msra.mxu0 %v544
        %673 = vmatpush.msra.mxu0 %v540
        %674 = vmatpush.msra.mxu0 %v536
        %675 = vmatpush.msra.mxu0 %v532
        %676 = vmatpush.msra.mxu0 %v528
        %677 = vmatpush.msra.mxu0 %v524
        %678 = vmatmul.f32.gmra.mxu0 %v516
        %v679 = vpop.f32.mrf.mxu0
        %v680 = vadd.f32 %v654, %v679
        %681 = vdwg.mxu0
        %682 = vmatpush.msra.mxu0 %v648
        %683 = vmatpush.msra.mxu0 %v644
        %684 = vmatpush.msra.mxu0 %v640
        %685 = vmatpush.msra.mxu0 %v636
        %686 = vmatpush.msra.mxu0 %v632
        %687 = vmatpush.msra.mxu0 %v628
        %688 = vmatpush.msra.mxu0 %v624
        %689 = vmatpush.msra.mxu0 %v620
        %690 = vmatpush.msra.mxu0 %v616
        %691 = vmatpush.msra.mxu0 %v612
        %692 = vmatpush.msra.mxu0 %v608
        %693 = vmatpush.msra.mxu0 %v604
        %694 = vmatpush.msra.mxu0 %v600
        %695 = vmatpush.msra.mxu0 %v596
        %696 = vmatpush.msra.mxu0 %v592
        %697 = vmatpush.msra.mxu0 %v588
        %698 = vmatmul.f32.gmra.mxu0 0.0
        %v699 = vpop.f32.mrf.mxu0
        %v700 = vadd.f32 %v680, %v699
        %701 = vdwg.mxu0
        %702 = vmatpush.msra.mxu0 %v585
        %703 = vmatpush.msra.mxu0 %v581
        %704 = vmatpush.msra.mxu0 %v577
        %705 = vmatpush.msra.mxu0 %v573
        %706 = vmatpush.msra.mxu0 %v569
        %707 = vmatpush.msra.mxu0 %v565
        %708 = vmatpush.msra.mxu0 %v561
        %709 = vmatpush.msra.mxu0 %v557
        %710 = vmatpush.msra.mxu0 %v553
        %711 = vmatpush.msra.mxu0 %v549
        %712 = vmatpush.msra.mxu0 %v545
        %713 = vmatpush.msra.mxu0 %v541
        %714 = vmatpush.msra.mxu0 %v537
        %715 = vmatpush.msra.mxu0 %v533
        %716 = vmatpush.msra.mxu0 %v529
        %717 = vmatpush.msra.mxu0 %v525
        %718 = vmatmul.f32.gmra.mxu0 %v516
        %v719 = vpop.f32.mrf.mxu0
        %v720 = vadd.f32 %v655, %v719
        %721 = vdwg.mxu0
        %722 = vmatpush.msra.mxu0 %v649
        %723 = vmatpush.msra.mxu0 %v645
        %724 = vmatpush.msra.mxu0 %v641
        %725 = vmatpush.msra.mxu0 %v637
        %726 = vmatpush.msra.mxu0 %v633
        %727 = vmatpush.msra.mxu0 %v629
        %728 = vmatpush.msra.mxu0 %v625
        %729 = vmatpush.msra.mxu0 %v621
        %730 = vmatpush.msra.mxu0 %v617
        %731 = vmatpush.msra.mxu0 %v613
        %732 = vmatpush.msra.mxu0 %v609
        %733 = vmatpush.msra.mxu0 %v605
        %734 = vmatpush.msra.mxu0 %v601
        %735 = vmatpush.msra.mxu0 %v597
        %736 = vmatpush.msra.mxu0 %v593
        %737 = vmatpush.msra.mxu0 %v589
        %738 = vmatmul.f32.gmra.mxu0 0.0
        %v739 = vpop.f32.mrf.mxu0
        %v740 = vadd.f32 %v720, %v739
        %741 = vdwg.mxu0
        %742 = vmatpush.msra.mxu0 %v586
        %743 = vmatpush.msra.mxu0 %v582
        %744 = vmatpush.msra.mxu0 %v578
        %745 = vmatpush.msra.mxu0 %v574
        %746 = vmatpush.msra.mxu0 %v570
        %747 = vmatpush.msra.mxu0 %v566
        %748 = vmatpush.msra.mxu0 %v562
        %749 = vmatpush.msra.mxu0 %v558
        %750 = vmatpush.msra.mxu0 %v554
        %751 = vmatpush.msra.mxu0 %v550
        %752 = vmatpush.msra.mxu0 %v546
        %753 = vmatpush.msra.mxu0 %v542
        %754 = vmatpush.msra.mxu0 %v538
        %755 = vmatpush.msra.mxu0 %v534
        %756 = vmatpush.msra.mxu0 %v530
        %757 = vmatpush.msra.mxu0 %v526
        %758 = vmatmul.f32.gmra.mxu0 %v516
        %v759 = vpop.f32.mrf.mxu0
        %v760 = vadd.f32 %v656, %v759
        %761 = vdwg.mxu0
        %762 = vmatpush.msra.mxu0 %v650
        %763 = vmatpush.msra.mxu0 %v646
        %764 = vmatpush.msra.mxu0 %v642
        %765 = vmatpush.msra.mxu0 %v638
        %766 = vmatpush.msra.mxu0 %v634
        %767 = vmatpush.msra.mxu0 %v630
        %768 = vmatpush.msra.mxu0 %v626
        %769 = vmatpush.msra.mxu0 %v622
        %770 = vmatpush.msra.mxu0 %v618
        %771 = vmatpush.msra.mxu0 %v614
        %772 = vmatpush.msra.mxu0 %v610
        %773 = vmatpush.msra.mxu0 %v606
        %774 = vmatpush.msra.mxu0 %v602
        %775 = vmatpush.msra.mxu0 %v598
        %776 = vmatpush.msra.mxu0 %v594
        %777 = vmatpush.msra.mxu0 %v590
        %778 = vmatmul.f32.gmra.mxu0 0.0
        %v779 = vpop.f32.mrf.mxu0
        %v780 = vadd.f32 %v760, %v779
        %781 = vdwg.mxu0
        %782 = vmatpush.msra.mxu0 %v587
        %783 = vmatpush.msra.mxu0 %v583
        %784 = vmatpush.msra.mxu0 %v579
        %785 = vmatpush.msra.mxu0 %v575
        %786 = vmatpush.msra.mxu0 %v571
        %787 = vmatpush.msra.mxu0 %v567
        %788 = vmatpush.msra.mxu0 %v563
        %789 = vmatpush.msra.mxu0 %v559
        %790 = vmatpush.msra.mxu0 %v555
        %791 = vmatpush.msra.mxu0 %v551
        %792 = vmatpush.msra.mxu0 %v547
        %793 = vmatpush.msra.mxu0 %v543
        %794 = vmatpush.msra.mxu0 %v539
        %795 = vmatpush.msra.mxu0 %v535
        %796 = vmatpush.msra.mxu0 %v531
        %797 = vmatpush.msra.mxu0 %v527
        %798 = vmatmul.f32.gmra.mxu0 %v516
        %v799 = vpop.f32.mrf.mxu0
        %v800 = vadd.f32 %v657, %v799
        %801 = vdwg.mxu0
        %802 = vmatpush.msra.mxu0 %v651
        %803 = vmatpush.msra.mxu0 %v647
        %804 = vmatpush.msra.mxu0 %v643
        %805 = vmatpush.msra.mxu0 %v639
        %806 = vmatpush.msra.mxu0 %v635
        %807 = vmatpush.msra.mxu0 %v631
        %808 = vmatpush.msra.mxu0 %v627
        %809 = vmatpush.msra.mxu0 %v623
        %810 = vmatpush.msra.mxu0 %v619
        %811 = vmatpush.msra.mxu0 %v615
        %812 = vmatpush.msra.mxu0 %v611
        %813 = vmatpush.msra.mxu0 %v607
        %814 = vmatpush.msra.mxu0 %v603
        %815 = vmatpush.msra.mxu0 %v599
        %816 = vmatpush.msra.mxu0 %v595
        %817 = vmatpush.msra.mxu0 %v591
        %818 = vmatmul.f32.gmra.mxu0 0.0
        %v819 = vpop.f32.mrf.mxu0
        %v820 = vadd.f32 %v800, %v819
        %821 = vdwg.mxu0
        %v822 = vxor.u32 %v700, 2147483648
        %v823 = vxor.u32 %v740, 2147483648
        %v824 = vxor.u32 %v780, 2147483648
        %v825 = vmul.f32 %v822, 1.442695
        %v826 = vpow.pop %v825
        %v827 = vmul.f32 %v823, 1.442695
        %v828 = vpow.pop %v827
        %v829 = vmul.f32 %v824, 1.442695
        %v830 = vpow.pop %v829
        %v831 = vadd.f32 %v826, 1.0
        %v832 = vadd.f32 %v828, 1.0
        %v833 = vadd.f32 %v830, 1.0
        %v834 = vrcp.pop %v831
        %v835 = vmul.f32 %v831, %v834
        %v836 = vsub.f32 1.0, %v835
        %v837 = vmul.f32 %v834, %v836
        %v838 = vadd.f32 %v834, %v837
        %vm839 = vweird.f32 %v831
        %vm840 = vweird.f32 %v834
        %vm841 = vmor %vm839, %vm840
        %v842 = vsel %vm841, %v834, %v838
        %v843 = vand.u32 2147483647, %v831
        %vm844 = vcmp.eq.f32.partialorder %v843, 8.507059e+37
        %v845 = vand.u32 %v831, 2147483648
        %v846 = vor.u32 1.1754944e-38, %v845
        %v847 = vsel %vm844, %v846, %v842
        %v848 = vmul.f32 1.0, %v847
        %v849 = vrcp.pop %v832
        %v850 = vmul.f32 %v832, %v849
        %v851 = vsub.f32 1.0, %v850
        %v852 = vmul.f32 %v849, %v851
        %v853 = vadd.f32 %v849, %v852
        %vm854 = vweird.f32 %v832
        %vm855 = vweird.f32 %v849
        %vm856 = vmor %vm854, %vm855
        %v857 = vsel %vm856, %v849, %v853
        %v858 = vand.u32 2147483647, %v832
        %vm859 = vcmp.eq.f32.partialorder %v858, 8.507059e+37
        %v860 = vand.u32 %v832, 2147483648
        %v861 = vor.u32 1.1754944e-38, %v860
        %v862 = vsel %vm859, %v861, %v857
        %v863 = vmul.f32 1.0, %v862
        %v864 = vrcp.pop %v833
        %v865 = vmul.f32 %v833, %v864
        %v866 = vsub.f32 1.0, %v865
        %v867 = vmul.f32 %v864, %v866
        %v868 = vadd.f32 %v864, %v867
        %vm869 = vweird.f32 %v833
        %vm870 = vweird.f32 %v864
        %vm871 = vmor %vm869, %vm870
        %v872 = vsel %vm871, %v864, %v868
        %v873 = vand.u32 2147483647, %v833
        %vm874 = vcmp.eq.f32.partialorder %v873, 8.507059e+37
        %v875 = vand.u32 %v833, 2147483648
        %v876 = vor.u32 1.1754944e-38, %v875
        %v877 = vsel %vm874, %v876, %v872
        %v878 = vmul.f32 1.0, %v877
        %v879 = vtanh.pop %v820
        %v880 = vmul.f32 %v863, 0.0
        %v881 = vmul.f32 %v848, %v879
        %v882 = vadd.f32 %v880, %v881
        %v883 = vtanh.pop %v882
        %v884 = vmul.f32 %v878, %v883
        %885 = vmatpush.msra.mxu0 %v584
        %886 = vmatpush.msra.mxu0 %v580
        %887 = vmatpush.msra.mxu0 %v576
        %888 = vmatpush.msra.mxu0 %v572
        %889 = vmatpush.msra.mxu0 %v568
        %890 = vmatpush.msra.mxu0 %v564
        %891 = vmatpush.msra.mxu0 %v560
        %892 = vmatpush.msra.mxu0 %v556
        %893 = vmatpush.msra.mxu0 %v552
        %894 = vmatpush.msra.mxu0 %v548
        %895 = vmatpush.msra.mxu0 %v544
        %896 = vmatpush.msra.mxu0 %v540
        %897 = vmatpush.msra.mxu0 %v536
        %898 = vmatpush.msra.mxu0 %v532
        %899 = vmatpush.msra.mxu0 %v528
        %900 = vmatpush.msra.mxu0 %v524
        %901 = vmatmul.f32.gmra.mxu0 %v517
        %v902 = vpop.f32.mrf.mxu0
        %v903 = vadd.f32 %v654, %v902
        %904 = vdwg.mxu0
        %905 = vmatpush.msra.mxu0 %v648
        %906 = vmatpush.msra.mxu0 %v644
        %907 = vmatpush.msra.mxu0 %v640
        %908 = vmatpush.msra.mxu0 %v636
        %909 = vmatpush.msra.mxu0 %v632
        %910 = vmatpush.msra.mxu0 %v628
        %911 = vmatpush.msra.mxu0 %v624
        %912 = vmatpush.msra.mxu0 %v620
        %913 = vmatpush.msra.mxu0 %v616
        %914 = vmatpush.msra.mxu0 %v612
        %915 = vmatpush.msra.mxu0 %v608
        %916 = vmatpush.msra.mxu0 %v604
        %917 = vmatpush.msra.mxu0 %v600
        %918 = vmatpush.msra.mxu0 %v596
        %919 = vmatpush.msra.mxu0 %v592
        %920 = vmatpush.msra.mxu0 %v588
        %921 = vmatmul.f32.gmra.mxu0 %v884
        %v922 = vpop.f32.mrf.mxu0
        %v923 = vadd.f32 %v903, %v922
        %924 = vdwg.mxu0
        %925 = vmatpush.msra.mxu0 %v585
        %926 = vmatpush.msra.mxu0 %v581
        %927 = vmatpush.msra.mxu0 %v577
        %928 = vmatpush.msra.mxu0 %v573
        %929 = vmatpush.msra.mxu0 %v569
        %930 = vmatpush.msra.mxu0 %v565
        %931 = vmatpush.msra.mxu0 %v561
        %932 = vmatpush.msra.mxu0 %v557
        %933 = vmatpush.msra.mxu0 %v553
        %934 = vmatpush.msra.mxu0 %v549
        %935 = vmatpush.msra.mxu0 %v545
        %936 = vmatpush.msra.mxu0 %v541
        %937 = vmatpush.msra.mxu0 %v537
        %938 = vmatpush.msra.mxu0 %v533
        %939 = vmatpush.msra.mxu0 %v529
        %940 = vmatpush.msra.mxu0 %v525
        %941 = vmatmul.f32.gmra.mxu0 %v517
        %v942 = vpop.f32.mrf.mxu0
        %v943 = vadd.f32 %v655, %v942
        %944 = vdwg.mxu0
        %945 = vmatpush.msra.mxu0 %v649
        %946 = vmatpush.msra.mxu0 %v645
        %947 = vmatpush.msra.mxu0 %v641
        %948 = vmatpush.msra.mxu0 %v637
        %949 = vmatpush.msra.mxu0 %v633
        %950 = vmatpush.msra.mxu0 %v629
        %951 = vmatpush.msra.mxu0 %v625
        %952 = vmatpush.msra.mxu0 %v621
        %953 = vmatpush.msra.mxu0 %v617
        %954 = vmatpush.msra.mxu0 %v613
        %955 = vmatpush.msra.mxu0 %v609
        %956 = vmatpush.msra.mxu0 %v605
        %957 = vmatpush.msra.mxu0 %v601
        %958 = vmatpush.msra.mxu0 %v597
        %959 = vmatpush.msra.mxu0 %v593
        %960 = vmatpush.msra.mxu0 %v589
        %961 = vmatmul.f32.gmra.mxu0 %v884
        %v962 = vpop.f32.mrf.mxu0
        %v963 = vadd.f32 %v943, %v962
        %964 = vdwg.mxu0
        %965 = vmatpush.msra.mxu0 %v586
        %966 = vmatpush.msra.mxu0 %v582
        %967 = vmatpush.msra.mxu0 %v578
        %968 = vmatpush.msra.mxu0 %v574
        %969 = vmatpush.msra.mxu0 %v570
        %970 = vmatpush.msra.mxu0 %v566
        %971 = vmatpush.msra.mxu0 %v562
        %972 = vmatpush.msra.mxu0 %v558
        %973 = vmatpush.msra.mxu0 %v554
        %974 = vmatpush.msra.mxu0 %v550
        %975 = vmatpush.msra.mxu0 %v546
        %976 = vmatpush.msra.mxu0 %v542
        %977 = vmatpush.msra.mxu0 %v538
        %978 = vmatpush.msra.mxu0 %v534
        %979 = vmatpush.msra.mxu0 %v530
        %980 = vmatpush.msra.mxu0 %v526
        %981 = vmatmul.f32.gmra.mxu0 %v517
        %v982 = vpop.f32.mrf.mxu0
        %v983 = vadd.f32 %v656, %v982
        %984 = vdwg.mxu0
        %985 = vmatpush.msra.mxu0 %v650
        %986 = vmatpush.msra.mxu0 %v646
        %987 = vmatpush.msra.mxu0 %v642
        %988 = vmatpush.msra.mxu0 %v638
        %989 = vmatpush.msra.mxu0 %v634
        %990 = vmatpush.msra.mxu0 %v630
        %991 = vmatpush.msra.mxu0 %v626
        %992 = vmatpush.msra.mxu0 %v622
        %993 = vmatpush.msra.mxu0 %v618
        %994 = vmatpush.msra.mxu0 %v614
        %995 = vmatpush.msra.mxu0 %v610
        %996 = vmatpush.msra.mxu0 %v606
        %997 = vmatpush.msra.mxu0 %v602
        %998 = vmatpush.msra.mxu0 %v598
        %999 = vmatpush.msra.mxu0 %v594
        %1000 = vmatpush.msra.mxu0 %v590
        %1001 = vmatmul.f32.gmra.mxu0 %v884
        %v1002 = vpop.f32.mrf.mxu0
        %v1003 = vadd.f32 %v983, %v1002
        %1004 = vdwg.mxu0
        %1005 = vmatpush.msra.mxu0 %v587
        %1006 = vmatpush.msra.mxu0 %v583
        %1007 = vmatpush.msra.mxu0 %v579
        %1008 = vmatpush.msra.mxu0 %v575
        %1009 = vmatpush.msra.mxu0 %v571
        %1010 = vmatpush.msra.mxu0 %v567
        %1011 = vmatpush.msra.mxu0 %v563
        %1012 = vmatpush.msra.mxu0 %v559
        %1013 = vmatpush.msra.mxu0 %v555
        %1014 = vmatpush.msra.mxu0 %v551
        %1015 = vmatpush.msra.mxu0 %v547
        %1016 = vmatpush.msra.mxu0 %v543
        %1017 = vmatpush.msra.mxu0 %v539
        %1018 = vmatpush.msra.mxu0 %v535
        %1019 = vmatpush.msra.mxu0 %v531
        %1020 = vmatpush.msra.mxu0 %v527
        %1021 = vmatmul.f32.gmra.mxu0 %v517
        %v1022 = vpop.f32.mrf.mxu0
        %v1023 = vadd.f32 %v657, %v1022
        %1024 = vdwg.mxu0
        %1025 = vmatpush.msra.mxu0 %v651
        %1026 = vmatpush.msra.mxu0 %v647
        %1027 = vmatpush.msra.mxu0 %v643
        %1028 = vmatpush.msra.mxu0 %v639
        %1029 = vmatpush.msra.mxu0 %v635
        %1030 = vmatpush.msra.mxu0 %v631
        %1031 = vmatpush.msra.mxu0 %v627
        %1032 = vmatpush.msra.mxu0 %v623
        %1033 = vmatpush.msra.mxu0 %v619
        %1034 = vmatpush.msra.mxu0 %v615
        %1035 = vmatpush.msra.mxu0 %v611
        %1036 = vmatpush.msra.mxu0 %v607
        %1037 = vmatpush.msra.mxu0 %v603
        %1038 = vmatpush.msra.mxu0 %v599
        %1039 = vmatpush.msra.mxu0 %v595
        %1040 = vmatpush.msra.mxu0 %v591
        %1041 = vmatmul.f32.gmra.mxu0 %v884
        %v1042 = vpop.f32.mrf.mxu0
        %v1043 = vadd.f32 %v1023, %v1042
        %1044 = vdwg.mxu0
        %v1045 = vxor.u32 %v923, 2147483648
        %v1046 = vxor.u32 %v963, 2147483648
        %v1047 = vxor.u32 %v1003, 2147483648
        %v1048 = vmul.f32 %v1045, 1.442695
        %v1049 = vpow.pop %v1048
        %v1050 = vmul.f32 %v1046, 1.442695
        %v1051 = vpow.pop %v1050
        %v1052 = vmul.f32 %v1047, 1.442695
        %v1053 = vpow.pop %v1052
        %v1054 = vadd.f32 %v1049, 1.0
        %v1055 = vadd.f32 %v1051, 1.0
        %v1056 = vadd.f32 %v1053, 1.0
        %v1057 = vrcp.pop %v1054
        %v1058 = vmul.f32 %v1054, %v1057
        %v1059 = vsub.f32 1.0, %v1058
        %v1060 = vmul.f32 %v1057, %v1059
        %v1061 = vadd.f32 %v1057, %v1060
        %vm1062 = vweird.f32 %v1054
        %vm1063 = vweird.f32 %v1057
        %vm1064 = vmor %vm1062, %vm1063
        %v1065 = vsel %vm1064, %v1057, %v1061
        %v1066 = vand.u32 2147483647, %v1054
        %vm1067 = vcmp.eq.f32.partialorder %v1066, 8.507059e+37
        %v1068 = vand.u32 %v1054, 2147483648
        %v1069 = vor.u32 1.1754944e-38, %v1068
        %v1070 = vsel %vm1067, %v1069, %v1065
        %v1071 = vmul.f32 1.0, %v1070
        %v1072 = vrcp.pop %v1055
        %v1073 = vmul.f32 %v1055, %v1072
        %v1074 = vsub.f32 1.0, %v1073
        %v1075 = vmul.f32 %v1072, %v1074
        %v1076 = vadd.f32 %v1072, %v1075
        %vm1077 = vweird.f32 %v1055
        %vm1078 = vweird.f32 %v1072
        %vm1079 = vmor %vm1077, %vm1078
        %v1080 = vsel %vm1079, %v1072, %v1076
        %v1081 = vand.u32 2147483647, %v1055
        %vm1082 = vcmp.eq.f32.partialorder %v1081, 8.507059e+37
        %v1083 = vand.u32 %v1055, 2147483648
        %v1084 = vor.u32 1.1754944e-38, %v1083
        %v1085 = vsel %vm1082, %v1084, %v1080
        %v1086 = vmul.f32 1.0, %v1085
        %v1087 = vrcp.pop %v1056
        %v1088 = vmul.f32 %v1056, %v1087
        %v1089 = vsub.f32 1.0, %v1088
        %v1090 = vmul.f32 %v1087, %v1089
        %v1091 = vadd.f32 %v1087, %v1090
        %vm1092 = vweird.f32 %v1056
        %vm1093 = vweird.f32 %v1087
        %vm1094 = vmor %vm1092, %vm1093
        %v1095 = vsel %vm1094, %v1087, %v1091
        %v1096 = vand.u32 2147483647, %v1056
        %vm1097 = vcmp.eq.f32.partialorder %v1096, 8.507059e+37
        %v1098 = vand.u32 %v1056, 2147483648
        %v1099 = vor.u32 1.1754944e-38, %v1098
        %v1100 = vsel %vm1097, %v1099, %v1095
        %v1101 = vmul.f32 1.0, %v1100
        %v1102 = vtanh.pop %v1043
        %v1103 = vmul.f32 %v1086, %v882
        %v1104 = vmul.f32 %v1071, %v1102
        %v1105 = vadd.f32 %v1103, %v1104
        %v1106 = vtanh.pop %v1105
        %v1107 = vmul.f32 %v1101, %v1106
        %s1108 = scalar_lea.vmem [#allocation5], 1024
        %v1109 = vld [vmem:[%s1108] sm:$0xff]
        %v1110 = vld [vmem:[%s1108 + $0x8] sm:$0xff]
        %v1111 = vld [vmem:[%s1108 + $0x10] sm:$0xff]
        %v1112 = vld [vmem:[%s1108 + $0x18] sm:$0xff]
        %v1113 = vld [vmem:[%s1108 + $0x20] sm:$0xff]
        %v1114 = vld [vmem:[%s1108 + $0x28] sm:$0xff]
        %v1115 = vld [vmem:[%s1108 + $0x30] sm:$0xff]
        %v1116 = vld [vmem:[%s1108 + $0x38] sm:$0xff]
        %v1117 = vld [vmem:[%s1108 + $0x40] sm:$0xff]
        %v1118 = vld [vmem:[%s1108 + $0x48] sm:$0xff]
        %v1119 = vld [vmem:[%s1108 + $0x50] sm:$0xff]
        %v1120 = vld [vmem:[%s1108 + $0x58] sm:$0xff]
        %v1121 = vld [vmem:[%s1108 + $0x60] sm:$0xff]
        %v1122 = vld [vmem:[%s1108 + $0x68] sm:$0xff]
        %v1123 = vld [vmem:[%s1108 + $0x70] sm:$0xff]
        %v1124 = vld [vmem:[%s1108 + $0x78] sm:$0xff]
        %v1125 = vld [vmem:[%s1108 + $0x80] sm:$0xff]
        %v1126 = vld [vmem:[%s1108 + $0x88] sm:$0xff]
        %v1127 = vld [vmem:[%s1108 + $0x90] sm:$0xff]
        %v1128 = vld [vmem:[%s1108 + $0x98] sm:$0xff]
        %v1129 = vld [vmem:[%s1108 + $0xa0] sm:$0xff]
        %v1130 = vld [vmem:[%s1108 + $0xa8] sm:$0xff]
        %v1131 = vld [vmem:[%s1108 + $0xb0] sm:$0xff]
        %v1132 = vld [vmem:[%s1108 + $0xb8] sm:$0xff]
        %v1133 = vld [vmem:[%s1108 + $0xc0] sm:$0xff]
        %v1134 = vld [vmem:[%s1108 + $0xc8] sm:$0xff]
        %v1135 = vld [vmem:[%s1108 + $0xd0] sm:$0xff]
        %v1136 = vld [vmem:[%s1108 + $0xd8] sm:$0xff]
        %v1137 = vld [vmem:[%s1108 + $0xe0] sm:$0xff]
        %v1138 = vld [vmem:[%s1108 + $0xe8] sm:$0xff]
        %v1139 = vld [vmem:[%s1108 + $0xf0] sm:$0xff]
        %v1140 = vld [vmem:[%s1108 + $0xf8] sm:$0xff]
        %v1141 = vld [vmem:[%s1108 + $0x100] sm:$0xff]
        %v1142 = vld [vmem:[%s1108 + $0x108] sm:$0xff]
        %v1143 = vld [vmem:[%s1108 + $0x110] sm:$0xff]
        %v1144 = vld [vmem:[%s1108 + $0x118] sm:$0xff]
        %v1145 = vld [vmem:[%s1108 + $0x120] sm:$0xff]
        %v1146 = vld [vmem:[%s1108 + $0x128] sm:$0xff]
        %v1147 = vld [vmem:[%s1108 + $0x130] sm:$0xff]
        %v1148 = vld [vmem:[%s1108 + $0x138] sm:$0xff]
        %v1149 = vld [vmem:[%s1108 + $0x140] sm:$0xff]
        %v1150 = vld [vmem:[%s1108 + $0x148] sm:$0xff]
        %v1151 = vld [vmem:[%s1108 + $0x150] sm:$0xff]
        %v1152 = vld [vmem:[%s1108 + $0x158] sm:$0xff]
        %v1153 = vld [vmem:[%s1108 + $0x160] sm:$0xff]
        %v1154 = vld [vmem:[%s1108 + $0x168] sm:$0xff]
        %v1155 = vld [vmem:[%s1108 + $0x170] sm:$0xff]
        %v1156 = vld [vmem:[%s1108 + $0x178] sm:$0xff]
        %v1157 = vld [vmem:[%s1108 + $0x180] sm:$0xff]
        %v1158 = vld [vmem:[%s1108 + $0x188] sm:$0xff]
        %v1159 = vld [vmem:[%s1108 + $0x190] sm:$0xff]
        %v1160 = vld [vmem:[%s1108 + $0x198] sm:$0xff]
        %v1161 = vld [vmem:[%s1108 + $0x1a0] sm:$0xff]
        %v1162 = vld [vmem:[%s1108 + $0x1a8] sm:$0xff]
        %v1163 = vld [vmem:[%s1108 + $0x1b0] sm:$0xff]
        %v1164 = vld [vmem:[%s1108 + $0x1b8] sm:$0xff]
        %v1165 = vld [vmem:[%s1108 + $0x1c0] sm:$0xff]
        %v1166 = vld [vmem:[%s1108 + $0x1c8] sm:$0xff]
        %v1167 = vld [vmem:[%s1108 + $0x1d0] sm:$0xff]
        %v1168 = vld [vmem:[%s1108 + $0x1d8] sm:$0xff]
        %v1169 = vld [vmem:[%s1108 + $0x1e0] sm:$0xff]
        %v1170 = vld [vmem:[%s1108 + $0x1e8] sm:$0xff]
        %v1171 = vld [vmem:[%s1108 + $0x1f0] sm:$0xff]
        %v1172 = vld [vmem:[%s1108 + $0x1f8] sm:$0xff]
        %v1173 = vld [vmem:[%s1108 + $0x200] sm:$0xff]
        %v1174 = vld [vmem:[%s1108 + $0x208] sm:$0xff]
        %v1175 = vld [vmem:[%s1108 + $0x210] sm:$0xff]
        %v1176 = vld [vmem:[%s1108 + $0x218] sm:$0xff]
        %v1177 = vld [vmem:[%s1108 + $0x220] sm:$0xff]
        %v1178 = vld [vmem:[%s1108 + $0x228] sm:$0xff]
        %v1179 = vld [vmem:[%s1108 + $0x230] sm:$0xff]
        %v1180 = vld [vmem:[%s1108 + $0x238] sm:$0xff]
        %v1181 = vld [vmem:[%s1108 + $0x240] sm:$0xff]
        %v1182 = vld [vmem:[%s1108 + $0x248] sm:$0xff]
        %v1183 = vld [vmem:[%s1108 + $0x250] sm:$0xff]
        %v1184 = vld [vmem:[%s1108 + $0x258] sm:$0xff]
        %v1185 = vld [vmem:[%s1108 + $0x260] sm:$0xff]
        %v1186 = vld [vmem:[%s1108 + $0x268] sm:$0xff]
        %v1187 = vld [vmem:[%s1108 + $0x270] sm:$0xff]
        %v1188 = vld [vmem:[%s1108 + $0x278] sm:$0xff]
        %v1189 = vld [vmem:[%s1108 + $0x280] sm:$0xff]
        %v1190 = vld [vmem:[%s1108 + $0x288] sm:$0xff]
        %v1191 = vld [vmem:[%s1108 + $0x290] sm:$0xff]
        %v1192 = vld [vmem:[%s1108 + $0x298] sm:$0xff]
        %v1193 = vld [vmem:[%s1108 + $0x2a0] sm:$0xff]
        %v1194 = vld [vmem:[%s1108 + $0x2a8] sm:$0xff]
        %v1195 = vld [vmem:[%s1108 + $0x2b0] sm:$0xff]
        %v1196 = vld [vmem:[%s1108 + $0x2b8] sm:$0xff]
        %v1197 = vld [vmem:[%s1108 + $0x2c0] sm:$0xff]
        %v1198 = vld [vmem:[%s1108 + $0x2c8] sm:$0xff]
        %v1199 = vld [vmem:[%s1108 + $0x2d0] sm:$0xff]
        %v1200 = vld [vmem:[%s1108 + $0x2d8] sm:$0xff]
        %v1201 = vld [vmem:[%s1108 + $0x2e0] sm:$0xff]
        %v1202 = vld [vmem:[%s1108 + $0x2e8] sm:$0xff]
        %v1203 = vld [vmem:[%s1108 + $0x2f0] sm:$0xff]
        %v1204 = vld [vmem:[%s1108 + $0x2f8] sm:$0xff]
        %v1205 = vld [vmem:[%s1108 + $0x300] sm:$0xff]
        %v1206 = vld [vmem:[%s1108 + $0x308] sm:$0xff]
        %v1207 = vld [vmem:[%s1108 + $0x310] sm:$0xff]
        %v1208 = vld [vmem:[%s1108 + $0x318] sm:$0xff]
        %v1209 = vld [vmem:[%s1108 + $0x320] sm:$0xff]
        %v1210 = vld [vmem:[%s1108 + $0x328] sm:$0xff]
        %v1211 = vld [vmem:[%s1108 + $0x330] sm:$0xff]
        %v1212 = vld [vmem:[%s1108 + $0x338] sm:$0xff]
        %v1213 = vld [vmem:[%s1108 + $0x340] sm:$0xff]
        %v1214 = vld [vmem:[%s1108 + $0x348] sm:$0xff]
        %v1215 = vld [vmem:[%s1108 + $0x350] sm:$0xff]
        %v1216 = vld [vmem:[%s1108 + $0x358] sm:$0xff]
        %v1217 = vld [vmem:[%s1108 + $0x360] sm:$0xff]
        %v1218 = vld [vmem:[%s1108 + $0x368] sm:$0xff]
        %v1219 = vld [vmem:[%s1108 + $0x370] sm:$0xff]
        %v1220 = vld [vmem:[%s1108 + $0x378] sm:$0xff]
        %v1221 = vld [vmem:[%s1108 + $0x380] sm:$0xff]
        %v1222 = vld [vmem:[%s1108 + $0x388] sm:$0xff]
        %v1223 = vld [vmem:[%s1108 + $0x390] sm:$0xff]
        %v1224 = vld [vmem:[%s1108 + $0x398] sm:$0xff]
        %v1225 = vld [vmem:[%s1108 + $0x3a0] sm:$0xff]
        %v1226 = vld [vmem:[%s1108 + $0x3a8] sm:$0xff]
        %v1227 = vld [vmem:[%s1108 + $0x3b0] sm:$0xff]
        %v1228 = vld [vmem:[%s1108 + $0x3b8] sm:$0xff]
        %v1229 = vld [vmem:[%s1108 + $0x3c0] sm:$0xff]
        %v1230 = vld [vmem:[%s1108 + $0x3c8] sm:$0xff]
        %v1231 = vld [vmem:[%s1108 + $0x3d0] sm:$0xff]
        %v1232 = vld [vmem:[%s1108 + $0x3d8] sm:$0xff]
        %v1233 = vld [vmem:[%s1108 + $0x3e0] sm:$0xff]
        %v1234 = vld [vmem:[%s1108 + $0x3e8] sm:$0xff]
        %v1235 = vld [vmem:[%s1108 + $0x3f0] sm:$0xff]
        %v1236 = vld [vmem:[%s1108 + $0x3f8] sm:$0xff]
        %s1237 = scalar_lea.vmem [#allocation7], 4
        %v1238 = vld [vmem:[%s1237] sm:$0xf]
        %v1240 = vperm.slane %v1238, 0
        %v1241 = vperm.slane %v1238, 1
        %v1242 = vperm.slane %v1238, 2
        %v1243 = vperm.slane %v1238, 3
        %1248 = vmatpush.msra.mxu0 %v1169
        %1249 = vmatpush.msra.mxu0 %v1165
        %1250 = vmatpush.msra.mxu0 %v1161
        %1251 = vmatpush.msra.mxu0 %v1157
        %1252 = vmatpush.msra.mxu0 %v1153
        %1253 = vmatpush.msra.mxu0 %v1149
        %1254 = vmatpush.msra.mxu0 %v1145
        %1255 = vmatpush.msra.mxu0 %v1141
        %1256 = vmatpush.msra.mxu0 %v1137
        %1257 = vmatpush.msra.mxu0 %v1133
        %1258 = vmatpush.msra.mxu0 %v1129
        %1259 = vmatpush.msra.mxu0 %v1125
        %1260 = vmatpush.msra.mxu0 %v1121
        %1261 = vmatpush.msra.mxu0 %v1117
        %1262 = vmatpush.msra.mxu0 %v1113
        %1263 = vmatpush.msra.mxu0 %v1109
        %1264 = vmatmul.f32.gmra.mxu0 %v884
        %v1265 = vpop.f32.mrf.mxu0
        %v1266 = vadd.f32 %v1240, %v1265
        %1267 = vdwg.mxu0
        %1268 = vmatpush.msra.mxu0 %v1233
        %1269 = vmatpush.msra.mxu0 %v1229
        %1270 = vmatpush.msra.mxu0 %v1225
        %1271 = vmatpush.msra.mxu0 %v1221
        %1272 = vmatpush.msra.mxu0 %v1217
        %1273 = vmatpush.msra.mxu0 %v1213
        %1274 = vmatpush.msra.mxu0 %v1209
        %1275 = vmatpush.msra.mxu0 %v1205
        %1276 = vmatpush.msra.mxu0 %v1201
        %1277 = vmatpush.msra.mxu0 %v1197
        %1278 = vmatpush.msra.mxu0 %v1193
        %1279 = vmatpush.msra.mxu0 %v1189
        %1280 = vmatpush.msra.mxu0 %v1185
        %1281 = vmatpush.msra.mxu0 %v1181
        %1282 = vmatpush.msra.mxu0 %v1177
        %1283 = vmatpush.msra.mxu0 %v1173
        %1284 = vmatmul.f32.gmra.mxu0 0.0
        %v1285 = vpop.f32.mrf.mxu0
        %v1286 = vadd.f32 %v1266, %v1285
        %1287 = vdwg.mxu0
        %1288 = vmatpush.msra.mxu0 %v1170
        %1289 = vmatpush.msra.mxu0 %v1166
        %1290 = vmatpush.msra.mxu0 %v1162
        %1291 = vmatpush.msra.mxu0 %v1158
        %1292 = vmatpush.msra.mxu0 %v1154
        %1293 = vmatpush.msra.mxu0 %v1150
        %1294 = vmatpush.msra.mxu0 %v1146
        %1295 = vmatpush.msra.mxu0 %v1142
        %1296 = vmatpush.msra.mxu0 %v1138
        %1297 = vmatpush.msra.mxu0 %v1134
        %1298 = vmatpush.msra.mxu0 %v1130
        %1299 = vmatpush.msra.mxu0 %v1126
        %1300 = vmatpush.msra.mxu0 %v1122
        %1301 = vmatpush.msra.mxu0 %v1118
        %1302 = vmatpush.msra.mxu0 %v1114
        %1303 = vmatpush.msra.mxu0 %v1110
        %1304 = vmatmul.f32.gmra.mxu0 %v884
        %v1305 = vpop.f32.mrf.mxu0
        %v1306 = vadd.f32 %v1241, %v1305
        %1307 = vdwg.mxu0
        %1308 = vmatpush.msra.mxu0 %v1234
        %1309 = vmatpush.msra.mxu0 %v1230
        %1310 = vmatpush.msra.mxu0 %v1226
        %1311 = vmatpush.msra.mxu0 %v1222
        %1312 = vmatpush.msra.mxu0 %v1218
        %1313 = vmatpush.msra.mxu0 %v1214
        %1314 = vmatpush.msra.mxu0 %v1210
        %1315 = vmatpush.msra.mxu0 %v1206
        %1316 = vmatpush.msra.mxu0 %v1202
        %1317 = vmatpush.msra.mxu0 %v1198
        %1318 = vmatpush.msra.mxu0 %v1194
        %1319 = vmatpush.msra.mxu0 %v1190
        %1320 = vmatpush.msra.mxu0 %v1186
        %1321 = vmatpush.msra.mxu0 %v1182
        %1322 = vmatpush.msra.mxu0 %v1178
        %1323 = vmatpush.msra.mxu0 %v1174
        %1324 = vmatmul.f32.gmra.mxu0 0.0
        %v1325 = vpop.f32.mrf.mxu0
        %v1326 = vadd.f32 %v1306, %v1325
        %1327 = vdwg.mxu0
        %1328 = vmatpush.msra.mxu0 %v1171
        %1329 = vmatpush.msra.mxu0 %v1167
        %1330 = vmatpush.msra.mxu0 %v1163
        %1331 = vmatpush.msra.mxu0 %v1159
        %1332 = vmatpush.msra.mxu0 %v1155
        %1333 = vmatpush.msra.mxu0 %v1151
        %1334 = vmatpush.msra.mxu0 %v1147
        %1335 = vmatpush.msra.mxu0 %v1143
        %1336 = vmatpush.msra.mxu0 %v1139
        %1337 = vmatpush.msra.mxu0 %v1135
        %1338 = vmatpush.msra.mxu0 %v1131
        %1339 = vmatpush.msra.mxu0 %v1127
        %1340 = vmatpush.msra.mxu0 %v1123
        %1341 = vmatpush.msra.mxu0 %v1119
        %1342 = vmatpush.msra.mxu0 %v1115
        %1343 = vmatpush.msra.mxu0 %v1111
        %1344 = vmatmul.f32.gmra.mxu0 %v884
        %v1345 = vpop.f32.mrf.mxu0
        %v1346 = vadd.f32 %v1242, %v1345
        %1347 = vdwg.mxu0
        %1348 = vmatpush.msra.mxu0 %v1235
        %1349 = vmatpush.msra.mxu0 %v1231
        %1350 = vmatpush.msra.mxu0 %v1227
        %1351 = vmatpush.msra.mxu0 %v1223
        %1352 = vmatpush.msra.mxu0 %v1219
        %1353 = vmatpush.msra.mxu0 %v1215
        %1354 = vmatpush.msra.mxu0 %v1211
        %1355 = vmatpush.msra.mxu0 %v1207
        %1356 = vmatpush.msra.mxu0 %v1203
        %1357 = vmatpush.msra.mxu0 %v1199
        %1358 = vmatpush.msra.mxu0 %v1195
        %1359 = vmatpush.msra.mxu0 %v1191
        %1360 = vmatpush.msra.mxu0 %v1187
        %1361 = vmatpush.msra.mxu0 %v1183
        %1362 = vmatpush.msra.mxu0 %v1179
        %1363 = vmatpush.msra.mxu0 %v1175
        %1364 = vmatmul.f32.gmra.mxu0 0.0
        %v1365 = vpop.f32.mrf.mxu0
        %v1366 = vadd.f32 %v1346, %v1365
        %1367 = vdwg.mxu0
        %1368 = vmatpush.msra.mxu0 %v1172
        %1369 = vmatpush.msra.mxu0 %v1168
        %1370 = vmatpush.msra.mxu0 %v1164
        %1371 = vmatpush.msra.mxu0 %v1160
        %1372 = vmatpush.msra.mxu0 %v1156
        %1373 = vmatpush.msra.mxu0 %v1152
        %1374 = vmatpush.msra.mxu0 %v1148
        %1375 = vmatpush.msra.mxu0 %v1144
        %1376 = vmatpush.msra.mxu0 %v1140
        %1377 = vmatpush.msra.mxu0 %v1136
        %1378 = vmatpush.msra.mxu0 %v1132
        %1379 = vmatpush.msra.mxu0 %v1128
        %1380 = vmatpush.msra.mxu0 %v1124
        %1381 = vmatpush.msra.mxu0 %v1120
        %1382 = vmatpush.msra.mxu0 %v1116
        %1383 = vmatpush.msra.mxu0 %v1112
        %1384 = vmatmul.f32.gmra.mxu0 %v884
        %v1385 = vpop.f32.mrf.mxu0
        %v1386 = vadd.f32 %v1243, %v1385
        %1387 = vdwg.mxu0
        %1388 = vmatpush.msra.mxu0 %v1236
        %1389 = vmatpush.msra.mxu0 %v1232
        %1390 = vmatpush.msra.mxu0 %v1228
        %1391 = vmatpush.msra.mxu0 %v1224
        %1392 = vmatpush.msra.mxu0 %v1220
        %1393 = vmatpush.msra.mxu0 %v1216
        %1394 = vmatpush.msra.mxu0 %v1212
        %1395 = vmatpush.msra.mxu0 %v1208
        %1396 = vmatpush.msra.mxu0 %v1204
        %1397 = vmatpush.msra.mxu0 %v1200
        %1398 = vmatpush.msra.mxu0 %v1196
        %1399 = vmatpush.msra.mxu0 %v1192
        %1400 = vmatpush.msra.mxu0 %v1188
        %1401 = vmatpush.msra.mxu0 %v1184
        %1402 = vmatpush.msra.mxu0 %v1180
        %1403 = vmatpush.msra.mxu0 %v1176
        %1404 = vmatmul.f32.gmra.mxu0 0.0
        %v1405 = vpop.f32.mrf.mxu0
        %v1406 = vadd.f32 %v1386, %v1405
        %1407 = vdwg.mxu0
        %v1408 = vxor.u32 %v1286, 2147483648
        %v1409 = vxor.u32 %v1326, 2147483648
        %v1410 = vxor.u32 %v1366, 2147483648
        %v1411 = vmul.f32 %v1408, 1.442695
        %v1412 = vpow.pop %v1411
        %v1413 = vmul.f32 %v1409, 1.442695
        %v1414 = vpow.pop %v1413
        %v1415 = vmul.f32 %v1410, 1.442695
        %v1416 = vpow.pop %v1415
        %v1417 = vadd.f32 %v1412, 1.0
        %v1418 = vadd.f32 %v1414, 1.0
        %v1419 = vadd.f32 %v1416, 1.0
        %v1420 = vrcp.pop %v1417
        %v1421 = vmul.f32 %v1417, %v1420
        %v1422 = vsub.f32 1.0, %v1421
        %v1423 = vmul.f32 %v1420, %v1422
        %v1424 = vadd.f32 %v1420, %v1423
        %vm1425 = vweird.f32 %v1417
        %vm1426 = vweird.f32 %v1420
        %vm1427 = vmor %vm1425, %vm1426
        %v1428 = vsel %vm1427, %v1420, %v1424
        %v1429 = vand.u32 2147483647, %v1417
        %vm1430 = vcmp.eq.f32.partialorder %v1429, 8.507059e+37
        %v1431 = vand.u32 %v1417, 2147483648
        %v1432 = vor.u32 1.1754944e-38, %v1431
        %v1433 = vsel %vm1430, %v1432, %v1428
        %v1434 = vmul.f32 1.0, %v1433
        %v1435 = vrcp.pop %v1418
        %v1436 = vmul.f32 %v1418, %v1435
        %v1437 = vsub.f32 1.0, %v1436
        %v1438 = vmul.f32 %v1435, %v1437
        %v1439 = vadd.f32 %v1435, %v1438
        %vm1440 = vweird.f32 %v1418
        %vm1441 = vweird.f32 %v1435
        %vm1442 = vmor %vm1440, %vm1441
        %v1443 = vsel %vm1442, %v1435, %v1439
        %v1444 = vand.u32 2147483647, %v1418
        %vm1445 = vcmp.eq.f32.partialorder %v1444, 8.507059e+37
        %v1446 = vand.u32 %v1418, 2147483648
        %v1447 = vor.u32 1.1754944e-38, %v1446
        %v1448 = vsel %vm1445, %v1447, %v1443
        %v1449 = vmul.f32 1.0, %v1448
        %v1450 = vrcp.pop %v1419
        %v1451 = vmul.f32 %v1419, %v1450
        %v1452 = vsub.f32 1.0, %v1451
        %v1453 = vmul.f32 %v1450, %v1452
        %v1454 = vadd.f32 %v1450, %v1453
        %vm1455 = vweird.f32 %v1419
        %vm1456 = vweird.f32 %v1450
        %vm1457 = vmor %vm1455, %vm1456
        %v1458 = vsel %vm1457, %v1450, %v1454
        %v1459 = vand.u32 2147483647, %v1419
        %vm1460 = vcmp.eq.f32.partialorder %v1459, 8.507059e+37
        %v1461 = vand.u32 %v1419, 2147483648
        %v1462 = vor.u32 1.1754944e-38, %v1461
        %v1463 = vsel %vm1460, %v1462, %v1458
        %v1464 = vmul.f32 1.0, %v1463
        %v1465 = vtanh.pop %v1406
        %v1466 = vmul.f32 %v1449, 0.0
        %v1467 = vmul.f32 %v1434, %v1465
        %v1468 = vadd.f32 %v1466, %v1467
        %v1469 = vtanh.pop %v1468
        %v1470 = vmul.f32 %v1464, %v1469
        %1471 = vmatpush.msra.mxu0 %v584
        %1472 = vmatpush.msra.mxu0 %v580
        %1473 = vmatpush.msra.mxu0 %v576
        %1474 = vmatpush.msra.mxu0 %v572
        %1475 = vmatpush.msra.mxu0 %v568
        %1476 = vmatpush.msra.mxu0 %v564
        %1477 = vmatpush.msra.mxu0 %v560
        %1478 = vmatpush.msra.mxu0 %v556
        %1479 = vmatpush.msra.mxu0 %v552
        %1480 = vmatpush.msra.mxu0 %v548
        %1481 = vmatpush.msra.mxu0 %v544
        %1482 = vmatpush.msra.mxu0 %v540
        %1483 = vmatpush.msra.mxu0 %v536
        %1484 = vmatpush.msra.mxu0 %v532
        %1485 = vmatpush.msra.mxu0 %v528
        %1486 = vmatpush.msra.mxu0 %v524
        %1487 = vmatmul.f32.gmra.mxu0 %v518
        %v1488 = vpop.f32.mrf.mxu0
        %v1489 = vadd.f32 %v654, %v1488
        %1490 = vdwg.mxu0
        %1491 = vmatpush.msra.mxu0 %v648
        %1492 = vmatpush.msra.mxu0 %v644
        %1493 = vmatpush.msra.mxu0 %v640
        %1494 = vmatpush.msra.mxu0 %v636
        %1495 = vmatpush.msra.mxu0 %v632
        %1496 = vmatpush.msra.mxu0 %v628
        %1497 = vmatpush.msra.mxu0 %v624
        %1498 = vmatpush.msra.mxu0 %v620
        %1499 = vmatpush.msra.mxu0 %v616
        %1500 = vmatpush.msra.mxu0 %v612
        %1501 = vmatpush.msra.mxu0 %v608
        %1502 = vmatpush.msra.mxu0 %v604
        %1503 = vmatpush.msra.mxu0 %v600
        %1504 = vmatpush.msra.mxu0 %v596
        %1505 = vmatpush.msra.mxu0 %v592
        %1506 = vmatpush.msra.mxu0 %v588
        %1507 = vmatmul.f32.gmra.mxu0 %v1107
        %v1508 = vpop.f32.mrf.mxu0
        %v1509 = vadd.f32 %v1489, %v1508
        %1510 = vdwg.mxu0
        %1511 = vmatpush.msra.mxu0 %v585
        %1512 = vmatpush.msra.mxu0 %v581
        %1513 = vmatpush.msra.mxu0 %v577
        %1514 = vmatpush.msra.mxu0 %v573
        %1515 = vmatpush.msra.mxu0 %v569
        %1516 = vmatpush.msra.mxu0 %v565
        %1517 = vmatpush.msra.mxu0 %v561
        %1518 = vmatpush.msra.mxu0 %v557
        %1519 = vmatpush.msra.mxu0 %v553
        %1520 = vmatpush.msra.mxu0 %v549
        %1521 = vmatpush.msra.mxu0 %v545
        %1522 = vmatpush.msra.mxu0 %v541
        %1523 = vmatpush.msra.mxu0 %v537
        %1524 = vmatpush.msra.mxu0 %v533
        %1525 = vmatpush.msra.mxu0 %v529
        %1526 = vmatpush.msra.mxu0 %v525
        %1527 = vmatmul.f32.gmra.mxu0 %v518
        %v1528 = vpop.f32.mrf.mxu0
        %v1529 = vadd.f32 %v655, %v1528
        %1530 = vdwg.mxu0
        %1531 = vmatpush.msra.mxu0 %v649
        %1532 = vmatpush.msra.mxu0 %v645
        %1533 = vmatpush.msra.mxu0 %v641
        %1534 = vmatpush.msra.mxu0 %v637
        %1535 = vmatpush.msra.mxu0 %v633
        %1536 = vmatpush.msra.mxu0 %v629
        %1537 = vmatpush.msra.mxu0 %v625
        %1538 = vmatpush.msra.mxu0 %v621
        %1539 = vmatpush.msra.mxu0 %v617
        %1540 = vmatpush.msra.mxu0 %v613
        %1541 = vmatpush.msra.mxu0 %v609
        %1542 = vmatpush.msra.mxu0 %v605
        %1543 = vmatpush.msra.mxu0 %v601
        %1544 = vmatpush.msra.mxu0 %v597
        %1545 = vmatpush.msra.mxu0 %v593
        %1546 = vmatpush.msra.mxu0 %v589
        %1547 = vmatmul.f32.gmra.mxu0 %v1107
        %v1548 = vpop.f32.mrf.mxu0
        %v1549 = vadd.f32 %v1529, %v1548
        %1550 = vdwg.mxu0
        %1551 = vmatpush.msra.mxu0 %v586
        %1552 = vmatpush.msra.mxu0 %v582
        %1553 = vmatpush.msra.mxu0 %v578
        %1554 = vmatpush.msra.mxu0 %v574
        %1555 = vmatpush.msra.mxu0 %v570
        %1556 = vmatpush.msra.mxu0 %v566
        %1557 = vmatpush.msra.mxu0 %v562
        %1558 = vmatpush.msra.mxu0 %v558
        %1559 = vmatpush.msra.mxu0 %v554
        %1560 = vmatpush.msra.mxu0 %v550
        %1561 = vmatpush.msra.mxu0 %v546
        %1562 = vmatpush.msra.mxu0 %v542
        %1563 = vmatpush.msra.mxu0 %v538
        %1564 = vmatpush.msra.mxu0 %v534
        %1565 = vmatpush.msra.mxu0 %v530
        %1566 = vmatpush.msra.mxu0 %v526
        %1567 = vmatmul.f32.gmra.mxu0 %v518
        %v1568 = vpop.f32.mrf.mxu0
        %v1569 = vadd.f32 %v656, %v1568
        %1570 = vdwg.mxu0
        %1571 = vmatpush.msra.mxu0 %v650
        %1572 = vmatpush.msra.mxu0 %v646
        %1573 = vmatpush.msra.mxu0 %v642
        %1574 = vmatpush.msra.mxu0 %v638
        %1575 = vmatpush.msra.mxu0 %v634
        %1576 = vmatpush.msra.mxu0 %v630
        %1577 = vmatpush.msra.mxu0 %v626
        %1578 = vmatpush.msra.mxu0 %v622
        %1579 = vmatpush.msra.mxu0 %v618
        %1580 = vmatpush.msra.mxu0 %v614
        %1581 = vmatpush.msra.mxu0 %v610
        %1582 = vmatpush.msra.mxu0 %v606
        %1583 = vmatpush.msra.mxu0 %v602
        %1584 = vmatpush.msra.mxu0 %v598
        %1585 = vmatpush.msra.mxu0 %v594
        %1586 = vmatpush.msra.mxu0 %v590
        %1587 = vmatmul.f32.gmra.mxu0 %v1107
        %v1588 = vpop.f32.mrf.mxu0
        %v1589 = vadd.f32 %v1569, %v1588
        %1590 = vdwg.mxu0
        %1591 = vmatpush.msra.mxu0 %v587
        %1592 = vmatpush.msra.mxu0 %v583
        %1593 = vmatpush.msra.mxu0 %v579
        %1594 = vmatpush.msra.mxu0 %v575
        %1595 = vmatpush.msra.mxu0 %v571
        %1596 = vmatpush.msra.mxu0 %v567
        %1597 = vmatpush.msra.mxu0 %v563
        %1598 = vmatpush.msra.mxu0 %v559
        %1599 = vmatpush.msra.mxu0 %v555
        %1600 = vmatpush.msra.mxu0 %v551
        %1601 = vmatpush.msra.mxu0 %v547
        %1602 = vmatpush.msra.mxu0 %v543
        %1603 = vmatpush.msra.mxu0 %v539
        %1604 = vmatpush.msra.mxu0 %v535
        %1605 = vmatpush.msra.mxu0 %v531
        %1606 = vmatpush.msra.mxu0 %v527
        %1607 = vmatmul.f32.gmra.mxu0 %v518
        %v1608 = vpop.f32.mrf.mxu0
        %v1609 = vadd.f32 %v657, %v1608
        %1610 = vdwg.mxu0
        %1611 = vmatpush.msra.mxu0 %v651
        %1612 = vmatpush.msra.mxu0 %v647
        %1613 = vmatpush.msra.mxu0 %v643
        %1614 = vmatpush.msra.mxu0 %v639
        %1615 = vmatpush.msra.mxu0 %v635
        %1616 = vmatpush.msra.mxu0 %v631
        %1617 = vmatpush.msra.mxu0 %v627
        %1618 = vmatpush.msra.mxu0 %v623
        %1619 = vmatpush.msra.mxu0 %v619
        %1620 = vmatpush.msra.mxu0 %v615
        %1621 = vmatpush.msra.mxu0 %v611
        %1622 = vmatpush.msra.mxu0 %v607
        %1623 = vmatpush.msra.mxu0 %v603
        %1624 = vmatpush.msra.mxu0 %v599
        %1625 = vmatpush.msra.mxu0 %v595
        %1626 = vmatpush.msra.mxu0 %v591
        %1627 = vmatmul.f32.gmra.mxu0 %v1107
        %v1628 = vpop.f32.mrf.mxu0
        %v1629 = vadd.f32 %v1609, %v1628
        %1630 = vdwg.mxu0
        %v1631 = vxor.u32 %v1509, 2147483648
        %v1632 = vxor.u32 %v1549, 2147483648
        %v1633 = vxor.u32 %v1589, 2147483648
        %v1634 = vmul.f32 %v1631, 1.442695
        %v1635 = vpow.pop %v1634
        %v1636 = vmul.f32 %v1632, 1.442695
        %v1637 = vpow.pop %v1636
        %v1638 = vmul.f32 %v1633, 1.442695
        %v1639 = vpow.pop %v1638
        %v1640 = vadd.f32 %v1635, 1.0
        %v1641 = vadd.f32 %v1637, 1.0
        %v1642 = vadd.f32 %v1639, 1.0
        %v1643 = vrcp.pop %v1640
        %v1644 = vmul.f32 %v1640, %v1643
        %v1645 = vsub.f32 1.0, %v1644
        %v1646 = vmul.f32 %v1643, %v1645
        %v1647 = vadd.f32 %v1643, %v1646
        %vm1648 = vweird.f32 %v1640
        %vm1649 = vweird.f32 %v1643
        %vm1650 = vmor %vm1648, %vm1649
        %v1651 = vsel %vm1650, %v1643, %v1647
        %v1652 = vand.u32 2147483647, %v1640
        %vm1653 = vcmp.eq.f32.partialorder %v1652, 8.507059e+37
        %v1654 = vand.u32 %v1640, 2147483648
        %v1655 = vor.u32 1.1754944e-38, %v1654
        %v1656 = vsel %vm1653, %v1655, %v1651
        %v1657 = vmul.f32 1.0, %v1656
        %v1658 = vrcp.pop %v1641
        %v1659 = vmul.f32 %v1641, %v1658
        %v1660 = vsub.f32 1.0, %v1659
        %v1661 = vmul.f32 %v1658, %v1660
        %v1662 = vadd.f32 %v1658, %v1661
        %vm1663 = vweird.f32 %v1641
        %vm1664 = vweird.f32 %v1658
        %vm1665 = vmor %vm1663, %vm1664
        %v1666 = vsel %vm1665, %v1658, %v1662
        %v1667 = vand.u32 2147483647, %v1641
        %vm1668 = vcmp.eq.f32.partialorder %v1667, 8.507059e+37
        %v1669 = vand.u32 %v1641, 2147483648
        %v1670 = vor.u32 1.1754944e-38, %v1669
        %v1671 = vsel %vm1668, %v1670, %v1666
        %v1672 = vmul.f32 1.0, %v1671
        %v1673 = vrcp.pop %v1642
        %v1674 = vmul.f32 %v1642, %v1673
        %v1675 = vsub.f32 1.0, %v1674
        %v1676 = vmul.f32 %v1673, %v1675
        %v1677 = vadd.f32 %v1673, %v1676
        %vm1678 = vweird.f32 %v1642
        %vm1679 = vweird.f32 %v1673
        %vm1680 = vmor %vm1678, %vm1679
        %v1681 = vsel %vm1680, %v1673, %v1677
        %v1682 = vand.u32 2147483647, %v1642
        %vm1683 = vcmp.eq.f32.partialorder %v1682, 8.507059e+37
        %v1684 = vand.u32 %v1642, 2147483648
        %v1685 = vor.u32 1.1754944e-38, %v1684
        %v1686 = vsel %vm1683, %v1685, %v1681
        %v1687 = vmul.f32 1.0, %v1686
        %v1688 = vtanh.pop %v1629
        %v1689 = vmul.f32 %v1672, %v1105
        %v1690 = vmul.f32 %v1657, %v1688
        %v1691 = vadd.f32 %v1689, %v1690
        %v1692 = vtanh.pop %v1691
        %v1693 = vmul.f32 %v1687, %v1692
        %1694 = vmatpush.msra.mxu0 %v1169
        %1695 = vmatpush.msra.mxu0 %v1165
        %1696 = vmatpush.msra.mxu0 %v1161
        %1697 = vmatpush.msra.mxu0 %v1157
        %1698 = vmatpush.msra.mxu0 %v1153
        %1699 = vmatpush.msra.mxu0 %v1149
        %1700 = vmatpush.msra.mxu0 %v1145
        %1701 = vmatpush.msra.mxu0 %v1141
        %1702 = vmatpush.msra.mxu0 %v1137
        %1703 = vmatpush.msra.mxu0 %v1133
        %1704 = vmatpush.msra.mxu0 %v1129
        %1705 = vmatpush.msra.mxu0 %v1125
        %1706 = vmatpush.msra.mxu0 %v1121
        %1707 = vmatpush.msra.mxu0 %v1117
        %1708 = vmatpush.msra.mxu0 %v1113
        %1709 = vmatpush.msra.mxu0 %v1109
        %1710 = vmatmul.f32.gmra.mxu0 %v1107
        %v1711 = vpop.f32.mrf.mxu0
        %v1712 = vadd.f32 %v1240, %v1711
        %1713 = vdwg.mxu0
        %1714 = vmatpush.msra.mxu0 %v1233
        %1715 = vmatpush.msra.mxu0 %v1229
        %1716 = vmatpush.msra.mxu0 %v1225
        %1717 = vmatpush.msra.mxu0 %v1221
        %1718 = vmatpush.msra.mxu0 %v1217
        %1719 = vmatpush.msra.mxu0 %v1213
        %1720 = vmatpush.msra.mxu0 %v1209
        %1721 = vmatpush.msra.mxu0 %v1205
        %1722 = vmatpush.msra.mxu0 %v1201
        %1723 = vmatpush.msra.mxu0 %v1197
        %1724 = vmatpush.msra.mxu0 %v1193
        %1725 = vmatpush.msra.mxu0 %v1189
        %1726 = vmatpush.msra.mxu0 %v1185
        %1727 = vmatpush.msra.mxu0 %v1181
        %1728 = vmatpush.msra.mxu0 %v1177
        %1729 = vmatpush.msra.mxu0 %v1173
        %1730 = vmatmul.f32.gmra.mxu0 %v1470
        %v1731 = vpop.f32.mrf.mxu0
        %v1732 = vadd.f32 %v1712, %v1731
        %1733 = vdwg.mxu0
        %1734 = vmatpush.msra.mxu0 %v1170
        %1735 = vmatpush.msra.mxu0 %v1166
        %1736 = vmatpush.msra.mxu0 %v1162
        %1737 = vmatpush.msra.mxu0 %v1158
        %1738 = vmatpush.msra.mxu0 %v1154
        %1739 = vmatpush.msra.mxu0 %v1150
        %1740 = vmatpush.msra.mxu0 %v1146
        %1741 = vmatpush.msra.mxu0 %v1142
        %1742 = vmatpush.msra.mxu0 %v1138
        %1743 = vmatpush.msra.mxu0 %v1134
        %1744 = vmatpush.msra.mxu0 %v1130
        %1745 = vmatpush.msra.mxu0 %v1126
        %1746 = vmatpush.msra.mxu0 %v1122
        %1747 = vmatpush.msra.mxu0 %v1118
        %1748 = vmatpush.msra.mxu0 %v1114
        %1749 = vmatpush.msra.mxu0 %v1110
        %1750 = vmatmul.f32.gmra.mxu0 %v1107
        %v1751 = vpop.f32.mrf.mxu0
        %v1752 = vadd.f32 %v1241, %v1751
        %1753 = vdwg.mxu0
        %1754 = vmatpush.msra.mxu0 %v1234
        %1755 = vmatpush.msra.mxu0 %v1230
        %1756 = vmatpush.msra.mxu0 %v1226
        %1757 = vmatpush.msra.mxu0 %v1222
        %1758 = vmatpush.msra.mxu0 %v1218
        %1759 = vmatpush.msra.mxu0 %v1214
        %1760 = vmatpush.msra.mxu0 %v1210
        %1761 = vmatpush.msra.mxu0 %v1206
        %1762 = vmatpush.msra.mxu0 %v1202
        %1763 = vmatpush.msra.mxu0 %v1198
        %1764 = vmatpush.msra.mxu0 %v1194
        %1765 = vmatpush.msra.mxu0 %v1190
        %1766 = vmatpush.msra.mxu0 %v1186
        %1767 = vmatpush.msra.mxu0 %v1182
        %1768 = vmatpush.msra.mxu0 %v1178
        %1769 = vmatpush.msra.mxu0 %v1174
        %1770 = vmatmul.f32.gmra.mxu0 %v1470
        %v1771 = vpop.f32.mrf.mxu0
        %v1772 = vadd.f32 %v1752, %v1771
        %1773 = vdwg.mxu0
        %1774 = vmatpush.msra.mxu0 %v1171
        %1775 = vmatpush.msra.mxu0 %v1167
        %1776 = vmatpush.msra.mxu0 %v1163
        %1777 = vmatpush.msra.mxu0 %v1159
        %1778 = vmatpush.msra.mxu0 %v1155
        %1779 = vmatpush.msra.mxu0 %v1151
        %1780 = vmatpush.msra.mxu0 %v1147
        %1781 = vmatpush.msra.mxu0 %v1143
        %1782 = vmatpush.msra.mxu0 %v1139
        %1783 = vmatpush.msra.mxu0 %v1135
        %1784 = vmatpush.msra.mxu0 %v1131
        %1785 = vmatpush.msra.mxu0 %v1127
        %1786 = vmatpush.msra.mxu0 %v1123
        %1787 = vmatpush.msra.mxu0 %v1119
        %1788 = vmatpush.msra.mxu0 %v1115
        %1789 = vmatpush.msra.mxu0 %v1111
        %1790 = vmatmul.f32.gmra.mxu0 %v1107
        %v1791 = vpop.f32.mrf.mxu0
        %v1792 = vadd.f32 %v1242, %v1791
        %1793 = vdwg.mxu0
        %1794 = vmatpush.msra.mxu0 %v1235
        %1795 = vmatpush.msra.mxu0 %v1231
        %1796 = vmatpush.msra.mxu0 %v1227
        %1797 = vmatpush.msra.mxu0 %v1223
        %1798 = vmatpush.msra.mxu0 %v1219
        %1799 = vmatpush.msra.mxu0 %v1215
        %1800 = vmatpush.msra.mxu0 %v1211
        %1801 = vmatpush.msra.mxu0 %v1207
        %1802 = vmatpush.msra.mxu0 %v1203
        %1803 = vmatpush.msra.mxu0 %v1199
        %1804 = vmatpush.msra.mxu0 %v1195
        %1805 = vmatpush.msra.mxu0 %v1191
        %1806 = vmatpush.msra.mxu0 %v1187
        %1807 = vmatpush.msra.mxu0 %v1183
        %1808 = vmatpush.msra.mxu0 %v1179
        %1809 = vmatpush.msra.mxu0 %v1175
        %1810 = vmatmul.f32.gmra.mxu0 %v1470
        %v1811 = vpop.f32.mrf.mxu0
        %v1812 = vadd.f32 %v1792, %v1811
        %1813 = vdwg.mxu0
        %1814 = vmatpush.msra.mxu0 %v1172
        %1815 = vmatpush.msra.mxu0 %v1168
        %1816 = vmatpush.msra.mxu0 %v1164
        %1817 = vmatpush.msra.mxu0 %v1160
        %1818 = vmatpush.msra.mxu0 %v1156
        %1819 = vmatpush.msra.mxu0 %v1152
        %1820 = vmatpush.msra.mxu0 %v1148
        %1821 = vmatpush.msra.mxu0 %v1144
        %1822 = vmatpush.msra.mxu0 %v1140
        %1823 = vmatpush.msra.mxu0 %v1136
        %1824 = vmatpush.msra.mxu0 %v1132
        %1825 = vmatpush.msra.mxu0 %v1128
        %1826 = vmatpush.msra.mxu0 %v1124
        %1827 = vmatpush.msra.mxu0 %v1120
        %1828 = vmatpush.msra.mxu0 %v1116
        %1829 = vmatpush.msra.mxu0 %v1112
        %1830 = vmatmul.f32.gmra.mxu0 %v1107
        %v1831 = vpop.f32.mrf.mxu0
        %v1832 = vadd.f32 %v1243, %v1831
        %1833 = vdwg.mxu0
        %1834 = vmatpush.msra.mxu0 %v1236
        %1835 = vmatpush.msra.mxu0 %v1232
        %1836 = vmatpush.msra.mxu0 %v1228
        %1837 = vmatpush.msra.mxu0 %v1224
        %1838 = vmatpush.msra.mxu0 %v1220
        %1839 = vmatpush.msra.mxu0 %v1216
        %1840 = vmatpush.msra.mxu0 %v1212
        %1841 = vmatpush.msra.mxu0 %v1208
        %1842 = vmatpush.msra.mxu0 %v1204
        %1843 = vmatpush.msra.mxu0 %v1200
        %1844 = vmatpush.msra.mxu0 %v1196
        %1845 = vmatpush.msra.mxu0 %v1192
        %1846 = vmatpush.msra.mxu0 %v1188
        %1847 = vmatpush.msra.mxu0 %v1184
        %1848 = vmatpush.msra.mxu0 %v1180
        %1849 = vmatpush.msra.mxu0 %v1176
        %1850 = vmatmul.f32.gmra.mxu0 %v1470
        %v1851 = vpop.f32.mrf.mxu0
        %v1852 = vadd.f32 %v1832, %v1851
        %1853 = vdwg.mxu0
        %v1854 = vxor.u32 %v1732, 2147483648
        %v1855 = vxor.u32 %v1772, 2147483648
        %v1856 = vxor.u32 %v1812, 2147483648
        %v1857 = vmul.f32 %v1854, 1.442695
        %v1858 = vpow.pop %v1857
        %v1859 = vmul.f32 %v1855, 1.442695
        %v1860 = vpow.pop %v1859
        %v1861 = vmul.f32 %v1856, 1.442695
        %v1862 = vpow.pop %v1861
        %v1863 = vadd.f32 %v1858, 1.0
        %v1864 = vadd.f32 %v1860, 1.0
        %v1865 = vadd.f32 %v1862, 1.0
        %v1866 = vrcp.pop %v1863
        %v1867 = vmul.f32 %v1863, %v1866
        %v1868 = vsub.f32 1.0, %v1867
        %v1869 = vmul.f32 %v1866, %v1868
        %v1870 = vadd.f32 %v1866, %v1869
        %vm1871 = vweird.f32 %v1863
        %vm1872 = vweird.f32 %v1866
        %vm1873 = vmor %vm1871, %vm1872
        %v1874 = vsel %vm1873, %v1866, %v1870
        %v1875 = vand.u32 2147483647, %v1863
        %vm1876 = vcmp.eq.f32.partialorder %v1875, 8.507059e+37
        %v1877 = vand.u32 %v1863, 2147483648
        %v1878 = vor.u32 1.1754944e-38, %v1877
        %v1879 = vsel %vm1876, %v1878, %v1874
        %v1880 = vmul.f32 1.0, %v1879
        %v1881 = vrcp.pop %v1864
        %v1882 = vmul.f32 %v1864, %v1881
        %v1883 = vsub.f32 1.0, %v1882
        %v1884 = vmul.f32 %v1881, %v1883
        %v1885 = vadd.f32 %v1881, %v1884
        %vm1886 = vweird.f32 %v1864
        %vm1887 = vweird.f32 %v1881
        %vm1888 = vmor %vm1886, %vm1887
        %v1889 = vsel %vm1888, %v1881, %v1885
        %v1890 = vand.u32 2147483647, %v1864
        %vm1891 = vcmp.eq.f32.partialorder %v1890, 8.507059e+37
        %v1892 = vand.u32 %v1864, 2147483648
        %v1893 = vor.u32 1.1754944e-38, %v1892
        %v1894 = vsel %vm1891, %v1893, %v1889
        %v1895 = vmul.f32 1.0, %v1894
        %v1896 = vrcp.pop %v1865
        %v1897 = vmul.f32 %v1865, %v1896
        %v1898 = vsub.f32 1.0, %v1897
        %v1899 = vmul.f32 %v1896, %v1898
        %v1900 = vadd.f32 %v1896, %v1899
        %vm1901 = vweird.f32 %v1865
        %vm1902 = vweird.f32 %v1896
        %vm1903 = vmor %vm1901, %vm1902
        %v1904 = vsel %vm1903, %v1896, %v1900
        %v1905 = vand.u32 2147483647, %v1865
        %vm1906 = vcmp.eq.f32.partialorder %v1905, 8.507059e+37
        %v1907 = vand.u32 %v1865, 2147483648
        %v1908 = vor.u32 1.1754944e-38, %v1907
        %v1909 = vsel %vm1906, %v1908, %v1904
        %v1910 = vmul.f32 1.0, %v1909
        %v1911 = vtanh.pop %v1852
        %v1912 = vmul.f32 %v1895, %v1468
        %v1913 = vmul.f32 %v1880, %v1911
        %v1914 = vadd.f32 %v1912, %v1913
        %v1915 = vtanh.pop %v1914
        %v1916 = vmul.f32 %v1910, %v1915
        %s1917 = scalar_lea.vmem [#allocation5], 2048
        %v1918 = vld [vmem:[%s1917] sm:$0xff]
        %v1919 = vld [vmem:[%s1917 + $0x8] sm:$0xff]
        %v1920 = vld [vmem:[%s1917 + $0x10] sm:$0xff]
        %v1921 = vld [vmem:[%s1917 + $0x18] sm:$0xff]
        %v1922 = vld [vmem:[%s1917 + $0x20] sm:$0xff]
        %v1923 = vld [vmem:[%s1917 + $0x28] sm:$0xff]
        %v1924 = vld [vmem:[%s1917 + $0x30] sm:$0xff]
        %v1925 = vld [vmem:[%s1917 + $0x38] sm:$0xff]
        %v1926 = vld [vmem:[%s1917 + $0x40] sm:$0xff]
        %v1927 = vld [vmem:[%s1917 + $0x48] sm:$0xff]
        %v1928 = vld [vmem:[%s1917 + $0x50] sm:$0xff]
        %v1929 = vld [vmem:[%s1917 + $0x58] sm:$0xff]
        %v1930 = vld [vmem:[%s1917 + $0x60] sm:$0xff]
        %v1931 = vld [vmem:[%s1917 + $0x68] sm:$0xff]
        %v1932 = vld [vmem:[%s1917 + $0x70] sm:$0xff]
        %v1933 = vld [vmem:[%s1917 + $0x78] sm:$0xff]
        %v1934 = vld [vmem:[%s1917 + $0x80] sm:$0xff]
        %v1935 = vld [vmem:[%s1917 + $0x88] sm:$0xff]
        %v1936 = vld [vmem:[%s1917 + $0x90] sm:$0xff]
        %v1937 = vld [vmem:[%s1917 + $0x98] sm:$0xff]
        %v1938 = vld [vmem:[%s1917 + $0xa0] sm:$0xff]
        %v1939 = vld [vmem:[%s1917 + $0xa8] sm:$0xff]
        %v1940 = vld [vmem:[%s1917 + $0xb0] sm:$0xff]
        %v1941 = vld [vmem:[%s1917 + $0xb8] sm:$0xff]
        %v1942 = vld [vmem:[%s1917 + $0xc0] sm:$0xff]
        %v1943 = vld [vmem:[%s1917 + $0xc8] sm:$0xff]
        %v1944 = vld [vmem:[%s1917 + $0xd0] sm:$0xff]
        %v1945 = vld [vmem:[%s1917 + $0xd8] sm:$0xff]
        %v1946 = vld [vmem:[%s1917 + $0xe0] sm:$0xff]
        %v1947 = vld [vmem:[%s1917 + $0xe8] sm:$0xff]
        %v1948 = vld [vmem:[%s1917 + $0xf0] sm:$0xff]
        %v1949 = vld [vmem:[%s1917 + $0xf8] sm:$0xff]
        %v1950 = vld [vmem:[%s1917 + $0x100] sm:$0xff]
        %v1951 = vld [vmem:[%s1917 + $0x108] sm:$0xff]
        %v1952 = vld [vmem:[%s1917 + $0x110] sm:$0xff]
        %v1953 = vld [vmem:[%s1917 + $0x118] sm:$0xff]
        %v1954 = vld [vmem:[%s1917 + $0x120] sm:$0xff]
        %v1955 = vld [vmem:[%s1917 + $0x128] sm:$0xff]
        %v1956 = vld [vmem:[%s1917 + $0x130] sm:$0xff]
        %v1957 = vld [vmem:[%s1917 + $0x138] sm:$0xff]
        %v1958 = vld [vmem:[%s1917 + $0x140] sm:$0xff]
        %v1959 = vld [vmem:[%s1917 + $0x148] sm:$0xff]
        %v1960 = vld [vmem:[%s1917 + $0x150] sm:$0xff]
        %v1961 = vld [vmem:[%s1917 + $0x158] sm:$0xff]
        %v1962 = vld [vmem:[%s1917 + $0x160] sm:$0xff]
        %v1963 = vld [vmem:[%s1917 + $0x168] sm:$0xff]
        %v1964 = vld [vmem:[%s1917 + $0x170] sm:$0xff]
        %v1965 = vld [vmem:[%s1917 + $0x178] sm:$0xff]
        %v1966 = vld [vmem:[%s1917 + $0x180] sm:$0xff]
        %v1967 = vld [vmem:[%s1917 + $0x188] sm:$0xff]
        %v1968 = vld [vmem:[%s1917 + $0x190] sm:$0xff]
        %v1969 = vld [vmem:[%s1917 + $0x198] sm:$0xff]
        %v1970 = vld [vmem:[%s1917 + $0x1a0] sm:$0xff]
        %v1971 = vld [vmem:[%s1917 + $0x1a8] sm:$0xff]
        %v1972 = vld [vmem:[%s1917 + $0x1b0] sm:$0xff]
        %v1973 = vld [vmem:[%s1917 + $0x1b8] sm:$0xff]
        %v1974 = vld [vmem:[%s1917 + $0x1c0] sm:$0xff]
        %v1975 = vld [vmem:[%s1917 + $0x1c8] sm:$0xff]
        %v1976 = vld [vmem:[%s1917 + $0x1d0] sm:$0xff]
        %v1977 = vld [vmem:[%s1917 + $0x1d8] sm:$0xff]
        %v1978 = vld [vmem:[%s1917 + $0x1e0] sm:$0xff]
        %v1979 = vld [vmem:[%s1917 + $0x1e8] sm:$0xff]
        %v1980 = vld [vmem:[%s1917 + $0x1f0] sm:$0xff]
        %v1981 = vld [vmem:[%s1917 + $0x1f8] sm:$0xff]
        %v1982 = vld [vmem:[%s1917 + $0x200] sm:$0xff]
        %v1983 = vld [vmem:[%s1917 + $0x208] sm:$0xff]
        %v1984 = vld [vmem:[%s1917 + $0x210] sm:$0xff]
        %v1985 = vld [vmem:[%s1917 + $0x218] sm:$0xff]
        %v1986 = vld [vmem:[%s1917 + $0x220] sm:$0xff]
        %v1987 = vld [vmem:[%s1917 + $0x228] sm:$0xff]
        %v1988 = vld [vmem:[%s1917 + $0x230] sm:$0xff]
        %v1989 = vld [vmem:[%s1917 + $0x238] sm:$0xff]
        %v1990 = vld [vmem:[%s1917 + $0x240] sm:$0xff]
        %v1991 = vld [vmem:[%s1917 + $0x248] sm:$0xff]
        %v1992 = vld [vmem:[%s1917 + $0x250] sm:$0xff]
        %v1993 = vld [vmem:[%s1917 + $0x258] sm:$0xff]
        %v1994 = vld [vmem:[%s1917 + $0x260] sm:$0xff]
        %v1995 = vld [vmem:[%s1917 + $0x268] sm:$0xff]
        %v1996 = vld [vmem:[%s1917 + $0x270] sm:$0xff]
        %v1997 = vld [vmem:[%s1917 + $0x278] sm:$0xff]
        %v1998 = vld [vmem:[%s1917 + $0x280] sm:$0xff]
        %v1999 = vld [vmem:[%s1917 + $0x288] sm:$0xff]
        %v2000 = vld [vmem:[%s1917 + $0x290] sm:$0xff]
        %v2001 = vld [vmem:[%s1917 + $0x298] sm:$0xff]
        %v2002 = vld [vmem:[%s1917 + $0x2a0] sm:$0xff]
        %v2003 = vld [vmem:[%s1917 + $0x2a8] sm:$0xff]
        %v2004 = vld [vmem:[%s1917 + $0x2b0] sm:$0xff]
        %v2005 = vld [vmem:[%s1917 + $0x2b8] sm:$0xff]
        %v2006 = vld [vmem:[%s1917 + $0x2c0] sm:$0xff]
        %v2007 = vld [vmem:[%s1917 + $0x2c8] sm:$0xff]
        %v2008 = vld [vmem:[%s1917 + $0x2d0] sm:$0xff]
        %v2009 = vld [vmem:[%s1917 + $0x2d8] sm:$0xff]
        %v2010 = vld [vmem:[%s1917 + $0x2e0] sm:$0xff]
        %v2011 = vld [vmem:[%s1917 + $0x2e8] sm:$0xff]
        %v2012 = vld [vmem:[%s1917 + $0x2f0] sm:$0xff]
        %v2013 = vld [vmem:[%s1917 + $0x2f8] sm:$0xff]
        %v2014 = vld [vmem:[%s1917 + $0x300] sm:$0xff]
        %v2015 = vld [vmem:[%s1917 + $0x308] sm:$0xff]
        %v2016 = vld [vmem:[%s1917 + $0x310] sm:$0xff]
        %v2017 = vld [vmem:[%s1917 + $0x318] sm:$0xff]
        %v2018 = vld [vmem:[%s1917 + $0x320] sm:$0xff]
        %v2019 = vld [vmem:[%s1917 + $0x328] sm:$0xff]
        %v2020 = vld [vmem:[%s1917 + $0x330] sm:$0xff]
        %v2021 = vld [vmem:[%s1917 + $0x338] sm:$0xff]
        %v2022 = vld [vmem:[%s1917 + $0x340] sm:$0xff]
        %v2023 = vld [vmem:[%s1917 + $0x348] sm:$0xff]
        %v2024 = vld [vmem:[%s1917 + $0x350] sm:$0xff]
        %v2025 = vld [vmem:[%s1917 + $0x358] sm:$0xff]
        %v2026 = vld [vmem:[%s1917 + $0x360] sm:$0xff]
        %v2027 = vld [vmem:[%s1917 + $0x368] sm:$0xff]
        %v2028 = vld [vmem:[%s1917 + $0x370] sm:$0xff]
        %v2029 = vld [vmem:[%s1917 + $0x378] sm:$0xff]
        %v2030 = vld [vmem:[%s1917 + $0x380] sm:$0xff]
        %v2031 = vld [vmem:[%s1917 + $0x388] sm:$0xff]
        %v2032 = vld [vmem:[%s1917 + $0x390] sm:$0xff]
        %v2033 = vld [vmem:[%s1917 + $0x398] sm:$0xff]
        %v2034 = vld [vmem:[%s1917 + $0x3a0] sm:$0xff]
        %v2035 = vld [vmem:[%s1917 + $0x3a8] sm:$0xff]
        %v2036 = vld [vmem:[%s1917 + $0x3b0] sm:$0xff]
        %v2037 = vld [vmem:[%s1917 + $0x3b8] sm:$0xff]
        %v2038 = vld [vmem:[%s1917 + $0x3c0] sm:$0xff]
        %v2039 = vld [vmem:[%s1917 + $0x3c8] sm:$0xff]
        %v2040 = vld [vmem:[%s1917 + $0x3d0] sm:$0xff]
        %v2041 = vld [vmem:[%s1917 + $0x3d8] sm:$0xff]
        %v2042 = vld [vmem:[%s1917 + $0x3e0] sm:$0xff]
        %v2043 = vld [vmem:[%s1917 + $0x3e8] sm:$0xff]
        %v2044 = vld [vmem:[%s1917 + $0x3f0] sm:$0xff]
        %v2045 = vld [vmem:[%s1917 + $0x3f8] sm:$0xff]
        %s2046 = scalar_lea.vmem [#allocation7], 8
        %v2047 = vld [vmem:[%s2046] sm:$0xf]
        %v2049 = vperm.slane %v2047, 0
        %v2050 = vperm.slane %v2047, 1
        %v2051 = vperm.slane %v2047, 2
        %v2052 = vperm.slane %v2047, 3
        %2057 = vmatpush.msra.mxu0 %v1978
        %2058 = vmatpush.msra.mxu0 %v1974
        %2059 = vmatpush.msra.mxu0 %v1970
        %2060 = vmatpush.msra.mxu0 %v1966
        %2061 = vmatpush.msra.mxu0 %v1962
        %2062 = vmatpush.msra.mxu0 %v1958
        %2063 = vmatpush.msra.mxu0 %v1954
        %2064 = vmatpush.msra.mxu0 %v1950
        %2065 = vmatpush.msra.mxu0 %v1946
        %2066 = vmatpush.msra.mxu0 %v1942
        %2067 = vmatpush.msra.mxu0 %v1938
        %2068 = vmatpush.msra.mxu0 %v1934
        %2069 = vmatpush.msra.mxu0 %v1930
        %2070 = vmatpush.msra.mxu0 %v1926
        %2071 = vmatpush.msra.mxu0 %v1922
        %2072 = vmatpush.msra.mxu0 %v1918
        %2073 = vmatmul.f32.gmra.mxu0 %v1470
        %v2074 = vpop.f32.mrf.mxu0
        %v2075 = vadd.f32 %v2049, %v2074
        %2076 = vdwg.mxu0
        %2077 = vmatpush.msra.mxu0 %v2042
        %2078 = vmatpush.msra.mxu0 %v2038
        %2079 = vmatpush.msra.mxu0 %v2034
        %2080 = vmatpush.msra.mxu0 %v2030
        %2081 = vmatpush.msra.mxu0 %v2026
        %2082 = vmatpush.msra.mxu0 %v2022
        %2083 = vmatpush.msra.mxu0 %v2018
        %2084 = vmatpush.msra.mxu0 %v2014
        %2085 = vmatpush.msra.mxu0 %v2010
        %2086 = vmatpush.msra.mxu0 %v2006
        %2087 = vmatpush.msra.mxu0 %v2002
        %2088 = vmatpush.msra.mxu0 %v1998
        %2089 = vmatpush.msra.mxu0 %v1994
        %2090 = vmatpush.msra.mxu0 %v1990
        %2091 = vmatpush.msra.mxu0 %v1986
        %2092 = vmatpush.msra.mxu0 %v1982
        %2093 = vmatmul.f32.gmra.mxu0 0.0
        %v2094 = vpop.f32.mrf.mxu0
        %v2095 = vadd.f32 %v2075, %v2094
        %2096 = vdwg.mxu0
        %2097 = vmatpush.msra.mxu0 %v1979
        %2098 = vmatpush.msra.mxu0 %v1975
        %2099 = vmatpush.msra.mxu0 %v1971
        %2100 = vmatpush.msra.mxu0 %v1967
        %2101 = vmatpush.msra.mxu0 %v1963
        %2102 = vmatpush.msra.mxu0 %v1959
        %2103 = vmatpush.msra.mxu0 %v1955
        %2104 = vmatpush.msra.mxu0 %v1951
        %2105 = vmatpush.msra.mxu0 %v1947
        %2106 = vmatpush.msra.mxu0 %v1943
        %2107 = vmatpush.msra.mxu0 %v1939
        %2108 = vmatpush.msra.mxu0 %v1935
        %2109 = vmatpush.msra.mxu0 %v1931
        %2110 = vmatpush.msra.mxu0 %v1927
        %2111 = vmatpush.msra.mxu0 %v1923
        %2112 = vmatpush.msra.mxu0 %v1919
        %2113 = vmatmul.f32.gmra.mxu0 %v1470
        %v2114 = vpop.f32.mrf.mxu0
        %v2115 = vadd.f32 %v2050, %v2114
        %2116 = vdwg.mxu0
        %2117 = vmatpush.msra.mxu0 %v2043
        %2118 = vmatpush.msra.mxu0 %v2039
        %2119 = vmatpush.msra.mxu0 %v2035
        %2120 = vmatpush.msra.mxu0 %v2031
        %2121 = vmatpush.msra.mxu0 %v2027
        %2122 = vmatpush.msra.mxu0 %v2023
        %2123 = vmatpush.msra.mxu0 %v2019
        %2124 = vmatpush.msra.mxu0 %v2015
        %2125 = vmatpush.msra.mxu0 %v2011
        %2126 = vmatpush.msra.mxu0 %v2007
        %2127 = vmatpush.msra.mxu0 %v2003
        %2128 = vmatpush.msra.mxu0 %v1999
        %2129 = vmatpush.msra.mxu0 %v1995
        %2130 = vmatpush.msra.mxu0 %v1991
        %2131 = vmatpush.msra.mxu0 %v1987
        %2132 = vmatpush.msra.mxu0 %v1983
        %2133 = vmatmul.f32.gmra.mxu0 0.0
        %v2134 = vpop.f32.mrf.mxu0
        %v2135 = vadd.f32 %v2115, %v2134
        %2136 = vdwg.mxu0
        %2137 = vmatpush.msra.mxu0 %v1980
        %2138 = vmatpush.msra.mxu0 %v1976
        %2139 = vmatpush.msra.mxu0 %v1972
        %2140 = vmatpush.msra.mxu0 %v1968
        %2141 = vmatpush.msra.mxu0 %v1964
        %2142 = vmatpush.msra.mxu0 %v1960
        %2143 = vmatpush.msra.mxu0 %v1956
        %2144 = vmatpush.msra.mxu0 %v1952
        %2145 = vmatpush.msra.mxu0 %v1948
        %2146 = vmatpush.msra.mxu0 %v1944
        %2147 = vmatpush.msra.mxu0 %v1940
        %2148 = vmatpush.msra.mxu0 %v1936
        %2149 = vmatpush.msra.mxu0 %v1932
        %2150 = vmatpush.msra.mxu0 %v1928
        %2151 = vmatpush.msra.mxu0 %v1924
        %2152 = vmatpush.msra.mxu0 %v1920
        %2153 = vmatmul.f32.gmra.mxu0 %v1470
        %v2154 = vpop.f32.mrf.mxu0
        %v2155 = vadd.f32 %v2051, %v2154
        %2156 = vdwg.mxu0
        %2157 = vmatpush.msra.mxu0 %v2044
        %2158 = vmatpush.msra.mxu0 %v2040
        %2159 = vmatpush.msra.mxu0 %v2036
        %2160 = vmatpush.msra.mxu0 %v2032
        %2161 = vmatpush.msra.mxu0 %v2028
        %2162 = vmatpush.msra.mxu0 %v2024
        %2163 = vmatpush.msra.mxu0 %v2020
        %2164 = vmatpush.msra.mxu0 %v2016
        %2165 = vmatpush.msra.mxu0 %v2012
        %2166 = vmatpush.msra.mxu0 %v2008
        %2167 = vmatpush.msra.mxu0 %v2004
        %2168 = vmatpush.msra.mxu0 %v2000
        %2169 = vmatpush.msra.mxu0 %v1996
        %2170 = vmatpush.msra.mxu0 %v1992
        %2171 = vmatpush.msra.mxu0 %v1988
        %2172 = vmatpush.msra.mxu0 %v1984
        %2173 = vmatmul.f32.gmra.mxu0 0.0
        %v2174 = vpop.f32.mrf.mxu0
        %v2175 = vadd.f32 %v2155, %v2174
        %2176 = vdwg.mxu0
        %2177 = vmatpush.msra.mxu0 %v1981
        %2178 = vmatpush.msra.mxu0 %v1977
        %2179 = vmatpush.msra.mxu0 %v1973
        %2180 = vmatpush.msra.mxu0 %v1969
        %2181 = vmatpush.msra.mxu0 %v1965
        %2182 = vmatpush.msra.mxu0 %v1961
        %2183 = vmatpush.msra.mxu0 %v1957
        %2184 = vmatpush.msra.mxu0 %v1953
        %2185 = vmatpush.msra.mxu0 %v1949
        %2186 = vmatpush.msra.mxu0 %v1945
        %2187 = vmatpush.msra.mxu0 %v1941
        %2188 = vmatpush.msra.mxu0 %v1937
        %2189 = vmatpush.msra.mxu0 %v1933
        %2190 = vmatpush.msra.mxu0 %v1929
        %2191 = vmatpush.msra.mxu0 %v1925
        %2192 = vmatpush.msra.mxu0 %v1921
        %2193 = vmatmul.f32.gmra.mxu0 %v1470
        %v2194 = vpop.f32.mrf.mxu0
        %v2195 = vadd.f32 %v2052, %v2194
        %2196 = vdwg.mxu0
        %2197 = vmatpush.msra.mxu0 %v2045
        %2198 = vmatpush.msra.mxu0 %v2041
        %2199 = vmatpush.msra.mxu0 %v2037
        %2200 = vmatpush.msra.mxu0 %v2033
        %2201 = vmatpush.msra.mxu0 %v2029
        %2202 = vmatpush.msra.mxu0 %v2025
        %2203 = vmatpush.msra.mxu0 %v2021
        %2204 = vmatpush.msra.mxu0 %v2017
        %2205 = vmatpush.msra.mxu0 %v2013
        %2206 = vmatpush.msra.mxu0 %v2009
        %2207 = vmatpush.msra.mxu0 %v2005
        %2208 = vmatpush.msra.mxu0 %v2001
        %2209 = vmatpush.msra.mxu0 %v1997
        %2210 = vmatpush.msra.mxu0 %v1993
        %2211 = vmatpush.msra.mxu0 %v1989
        %2212 = vmatpush.msra.mxu0 %v1985
        %2213 = vmatmul.f32.gmra.mxu0 0.0
        %v2214 = vpop.f32.mrf.mxu0
        %v2215 = vadd.f32 %v2195, %v2214
        %2216 = vdwg.mxu0
        %v2217 = vxor.u32 %v2095, 2147483648
        %v2218 = vxor.u32 %v2135, 2147483648
        %v2219 = vxor.u32 %v2175, 2147483648
        %v2220 = vmul.f32 %v2217, 1.442695
        %v2221 = vpow.pop %v2220
        %v2222 = vmul.f32 %v2218, 1.442695
        %v2223 = vpow.pop %v2222
        %v2224 = vmul.f32 %v2219, 1.442695
        %v2225 = vpow.pop %v2224
        %v2226 = vadd.f32 %v2221, 1.0
        %v2227 = vadd.f32 %v2223, 1.0
        %v2228 = vadd.f32 %v2225, 1.0
        %v2229 = vrcp.pop %v2226
        %v2230 = vmul.f32 %v2226, %v2229
        %v2231 = vsub.f32 1.0, %v2230
        %v2232 = vmul.f32 %v2229, %v2231
        %v2233 = vadd.f32 %v2229, %v2232
        %vm2234 = vweird.f32 %v2226
        %vm2235 = vweird.f32 %v2229
        %vm2236 = vmor %vm2234, %vm2235
        %v2237 = vsel %vm2236, %v2229, %v2233
        %v2238 = vand.u32 2147483647, %v2226
        %vm2239 = vcmp.eq.f32.partialorder %v2238, 8.507059e+37
        %v2240 = vand.u32 %v2226, 2147483648
        %v2241 = vor.u32 1.1754944e-38, %v2240
        %v2242 = vsel %vm2239, %v2241, %v2237
        %v2243 = vmul.f32 1.0, %v2242
        %v2244 = vrcp.pop %v2227
        %v2245 = vmul.f32 %v2227, %v2244
        %v2246 = vsub.f32 1.0, %v2245
        %v2247 = vmul.f32 %v2244, %v2246
        %v2248 = vadd.f32 %v2244, %v2247
        %vm2249 = vweird.f32 %v2227
        %vm2250 = vweird.f32 %v2244
        %vm2251 = vmor %vm2249, %vm2250
        %v2252 = vsel %vm2251, %v2244, %v2248
        %v2253 = vand.u32 2147483647, %v2227
        %vm2254 = vcmp.eq.f32.partialorder %v2253, 8.507059e+37
        %v2255 = vand.u32 %v2227, 2147483648
        %v2256 = vor.u32 1.1754944e-38, %v2255
        %v2257 = vsel %vm2254, %v2256, %v2252
        %v2258 = vmul.f32 1.0, %v2257
        %v2259 = vrcp.pop %v2228
        %v2260 = vmul.f32 %v2228, %v2259
        %v2261 = vsub.f32 1.0, %v2260
        %v2262 = vmul.f32 %v2259, %v2261
        %v2263 = vadd.f32 %v2259, %v2262
        %vm2264 = vweird.f32 %v2228
        %vm2265 = vweird.f32 %v2259
        %vm2266 = vmor %vm2264, %vm2265
        %v2267 = vsel %vm2266, %v2259, %v2263
        %v2268 = vand.u32 2147483647, %v2228
        %vm2269 = vcmp.eq.f32.partialorder %v2268, 8.507059e+37
        %v2270 = vand.u32 %v2228, 2147483648
        %v2271 = vor.u32 1.1754944e-38, %v2270
        %v2272 = vsel %vm2269, %v2271, %v2267
        %v2273 = vmul.f32 1.0, %v2272
        %v2274 = vtanh.pop %v2215
        %v2275 = vmul.f32 %v2258, 0.0
        %v2276 = vmul.f32 %v2243, %v2274
        %v2277 = vadd.f32 %v2275, %v2276
        %v2278 = vtanh.pop %v2277
        %v2279 = vmul.f32 %v2273, %v2278
        %2280 = vmatpush.msra.mxu0 %v584
        %2281 = vmatpush.msra.mxu0 %v580
        %2282 = vmatpush.msra.mxu0 %v576
        %2283 = vmatpush.msra.mxu0 %v572
        %2284 = vmatpush.msra.mxu0 %v568
        %2285 = vmatpush.msra.mxu0 %v564
        %2286 = vmatpush.msra.mxu0 %v560
        %2287 = vmatpush.msra.mxu0 %v556
        %2288 = vmatpush.msra.mxu0 %v552
        %2289 = vmatpush.msra.mxu0 %v548
        %2290 = vmatpush.msra.mxu0 %v544
        %2291 = vmatpush.msra.mxu0 %v540
        %2292 = vmatpush.msra.mxu0 %v536
        %2293 = vmatpush.msra.mxu0 %v532
        %2294 = vmatpush.msra.mxu0 %v528
        %2295 = vmatpush.msra.mxu0 %v524
        %2296 = vmatmul.f32.gmra.mxu0 %v519
        %v2297 = vpop.f32.mrf.mxu0
        %v2298 = vadd.f32 %v654, %v2297
        %2299 = vdwg.mxu0
        %2300 = vmatpush.msra.mxu0 %v648
        %2301 = vmatpush.msra.mxu0 %v644
        %2302 = vmatpush.msra.mxu0 %v640
        %2303 = vmatpush.msra.mxu0 %v636
        %2304 = vmatpush.msra.mxu0 %v632
        %2305 = vmatpush.msra.mxu0 %v628
        %2306 = vmatpush.msra.mxu0 %v624
        %2307 = vmatpush.msra.mxu0 %v620
        %2308 = vmatpush.msra.mxu0 %v616
        %2309 = vmatpush.msra.mxu0 %v612
        %2310 = vmatpush.msra.mxu0 %v608
        %2311 = vmatpush.msra.mxu0 %v604
        %2312 = vmatpush.msra.mxu0 %v600
        %2313 = vmatpush.msra.mxu0 %v596
        %2314 = vmatpush.msra.mxu0 %v592
        %2315 = vmatpush.msra.mxu0 %v588
        %2316 = vmatmul.f32.gmra.mxu0 %v1693
        %v2317 = vpop.f32.mrf.mxu0
        %v2318 = vadd.f32 %v2298, %v2317
        %2319 = vdwg.mxu0
        %2320 = vmatpush.msra.mxu0 %v585
        %2321 = vmatpush.msra.mxu0 %v581
        %2322 = vmatpush.msra.mxu0 %v577
        %2323 = vmatpush.msra.mxu0 %v573
        %2324 = vmatpush.msra.mxu0 %v569
        %2325 = vmatpush.msra.mxu0 %v565
        %2326 = vmatpush.msra.mxu0 %v561
        %2327 = vmatpush.msra.mxu0 %v557
        %2328 = vmatpush.msra.mxu0 %v553
        %2329 = vmatpush.msra.mxu0 %v549
        %2330 = vmatpush.msra.mxu0 %v545
        %2331 = vmatpush.msra.mxu0 %v541
        %2332 = vmatpush.msra.mxu0 %v537
        %2333 = vmatpush.msra.mxu0 %v533
        %2334 = vmatpush.msra.mxu0 %v529
        %2335 = vmatpush.msra.mxu0 %v525
        %2336 = vmatmul.f32.gmra.mxu0 %v519
        %v2337 = vpop.f32.mrf.mxu0
        %v2338 = vadd.f32 %v655, %v2337
        %2339 = vdwg.mxu0
        %2340 = vmatpush.msra.mxu0 %v649
        %2341 = vmatpush.msra.mxu0 %v645
        %2342 = vmatpush.msra.mxu0 %v641
        %2343 = vmatpush.msra.mxu0 %v637
        %2344 = vmatpush.msra.mxu0 %v633
        %2345 = vmatpush.msra.mxu0 %v629
        %2346 = vmatpush.msra.mxu0 %v625
        %2347 = vmatpush.msra.mxu0 %v621
        %2348 = vmatpush.msra.mxu0 %v617
        %2349 = vmatpush.msra.mxu0 %v613
        %2350 = vmatpush.msra.mxu0 %v609
        %2351 = vmatpush.msra.mxu0 %v605
        %2352 = vmatpush.msra.mxu0 %v601
        %2353 = vmatpush.msra.mxu0 %v597
        %2354 = vmatpush.msra.mxu0 %v593
        %2355 = vmatpush.msra.mxu0 %v589
        %2356 = vmatmul.f32.gmra.mxu0 %v1693
        %v2357 = vpop.f32.mrf.mxu0
        %v2358 = vadd.f32 %v2338, %v2357
        %2359 = vdwg.mxu0
        %2360 = vmatpush.msra.mxu0 %v586
        %2361 = vmatpush.msra.mxu0 %v582
        %2362 = vmatpush.msra.mxu0 %v578
        %2363 = vmatpush.msra.mxu0 %v574
        %2364 = vmatpush.msra.mxu0 %v570
        %2365 = vmatpush.msra.mxu0 %v566
        %2366 = vmatpush.msra.mxu0 %v562
        %2367 = vmatpush.msra.mxu0 %v558
        %2368 = vmatpush.msra.mxu0 %v554
        %2369 = vmatpush.msra.mxu0 %v550
        %2370 = vmatpush.msra.mxu0 %v546
        %2371 = vmatpush.msra.mxu0 %v542
        %2372 = vmatpush.msra.mxu0 %v538
        %2373 = vmatpush.msra.mxu0 %v534
        %2374 = vmatpush.msra.mxu0 %v530
        %2375 = vmatpush.msra.mxu0 %v526
        %2376 = vmatmul.f32.gmra.mxu0 %v519
        %v2377 = vpop.f32.mrf.mxu0
        %v2378 = vadd.f32 %v656, %v2377
        %2379 = vdwg.mxu0
        %2380 = vmatpush.msra.mxu0 %v650
        %2381 = vmatpush.msra.mxu0 %v646
        %2382 = vmatpush.msra.mxu0 %v642
        %2383 = vmatpush.msra.mxu0 %v638
        %2384 = vmatpush.msra.mxu0 %v634
        %2385 = vmatpush.msra.mxu0 %v630
        %2386 = vmatpush.msra.mxu0 %v626
        %2387 = vmatpush.msra.mxu0 %v622
        %2388 = vmatpush.msra.mxu0 %v618
        %2389 = vmatpush.msra.mxu0 %v614
        %2390 = vmatpush.msra.mxu0 %v610
        %2391 = vmatpush.msra.mxu0 %v606
        %2392 = vmatpush.msra.mxu0 %v602
        %2393 = vmatpush.msra.mxu0 %v598
        %2394 = vmatpush.msra.mxu0 %v594
        %2395 = vmatpush.msra.mxu0 %v590
        %2396 = vmatmul.f32.gmra.mxu0 %v1693
        %v2397 = vpop.f32.mrf.mxu0
        %v2398 = vadd.f32 %v2378, %v2397
        %2399 = vdwg.mxu0
        %2400 = vmatpush.msra.mxu0 %v587
        %2401 = vmatpush.msra.mxu0 %v583
        %2402 = vmatpush.msra.mxu0 %v579
        %2403 = vmatpush.msra.mxu0 %v575
        %2404 = vmatpush.msra.mxu0 %v571
        %2405 = vmatpush.msra.mxu0 %v567
        %2406 = vmatpush.msra.mxu0 %v563
        %2407 = vmatpush.msra.mxu0 %v559
        %2408 = vmatpush.msra.mxu0 %v555
        %2409 = vmatpush.msra.mxu0 %v551
        %2410 = vmatpush.msra.mxu0 %v547
        %2411 = vmatpush.msra.mxu0 %v543
        %2412 = vmatpush.msra.mxu0 %v539
        %2413 = vmatpush.msra.mxu0 %v535
        %2414 = vmatpush.msra.mxu0 %v531
        %2415 = vmatpush.msra.mxu0 %v527
        %2416 = vmatmul.f32.gmra.mxu0 %v519
        %v2417 = vpop.f32.mrf.mxu0
        %v2418 = vadd.f32 %v657, %v2417
        %2419 = vdwg.mxu0
        %2420 = vmatpush.msra.mxu0 %v651
        %2421 = vmatpush.msra.mxu0 %v647
        %2422 = vmatpush.msra.mxu0 %v643
        %2423 = vmatpush.msra.mxu0 %v639
        %2424 = vmatpush.msra.mxu0 %v635
        %2425 = vmatpush.msra.mxu0 %v631
        %2426 = vmatpush.msra.mxu0 %v627
        %2427 = vmatpush.msra.mxu0 %v623
        %2428 = vmatpush.msra.mxu0 %v619
        %2429 = vmatpush.msra.mxu0 %v615
        %2430 = vmatpush.msra.mxu0 %v611
        %2431 = vmatpush.msra.mxu0 %v607
        %2432 = vmatpush.msra.mxu0 %v603
        %2433 = vmatpush.msra.mxu0 %v599
        %2434 = vmatpush.msra.mxu0 %v595
        %2435 = vmatpush.msra.mxu0 %v591
        %2436 = vmatmul.f32.gmra.mxu0 %v1693
        %v2437 = vpop.f32.mrf.mxu0
        %v2438 = vadd.f32 %v2418, %v2437
        %2439 = vdwg.mxu0
        %v2440 = vxor.u32 %v2318, 2147483648
        %v2441 = vxor.u32 %v2358, 2147483648
        %v2442 = vxor.u32 %v2398, 2147483648
        %v2443 = vmul.f32 %v2440, 1.442695
        %v2444 = vpow.pop %v2443
        %v2445 = vmul.f32 %v2441, 1.442695
        %v2446 = vpow.pop %v2445
        %v2447 = vmul.f32 %v2442, 1.442695
        %v2448 = vpow.pop %v2447
        %v2449 = vadd.f32 %v2444, 1.0
        %v2450 = vadd.f32 %v2446, 1.0
        %v2451 = vadd.f32 %v2448, 1.0
        %v2452 = vrcp.pop %v2449
        %v2453 = vmul.f32 %v2449, %v2452
        %v2454 = vsub.f32 1.0, %v2453
        %v2455 = vmul.f32 %v2452, %v2454
        %v2456 = vadd.f32 %v2452, %v2455
        %vm2457 = vweird.f32 %v2449
        %vm2458 = vweird.f32 %v2452
        %vm2459 = vmor %vm2457, %vm2458
        %v2460 = vsel %vm2459, %v2452, %v2456
        %v2461 = vand.u32 2147483647, %v2449
        %vm2462 = vcmp.eq.f32.partialorder %v2461, 8.507059e+37
        %v2463 = vand.u32 %v2449, 2147483648
        %v2464 = vor.u32 1.1754944e-38, %v2463
        %v2465 = vsel %vm2462, %v2464, %v2460
        %v2466 = vmul.f32 1.0, %v2465
        %v2467 = vrcp.pop %v2450
        %v2468 = vmul.f32 %v2450, %v2467
        %v2469 = vsub.f32 1.0, %v2468
        %v2470 = vmul.f32 %v2467, %v2469
        %v2471 = vadd.f32 %v2467, %v2470
        %vm2472 = vweird.f32 %v2450
        %vm2473 = vweird.f32 %v2467
        %vm2474 = vmor %vm2472, %vm2473
        %v2475 = vsel %vm2474, %v2467, %v2471
        %v2476 = vand.u32 2147483647, %v2450
        %vm2477 = vcmp.eq.f32.partialorder %v2476, 8.507059e+37
        %v2478 = vand.u32 %v2450, 2147483648
        %v2479 = vor.u32 1.1754944e-38, %v2478
        %v2480 = vsel %vm2477, %v2479, %v2475
        %v2481 = vmul.f32 1.0, %v2480
        %v2482 = vrcp.pop %v2451
        %v2483 = vmul.f32 %v2451, %v2482
        %v2484 = vsub.f32 1.0, %v2483
        %v2485 = vmul.f32 %v2482, %v2484
        %v2486 = vadd.f32 %v2482, %v2485
        %vm2487 = vweird.f32 %v2451
        %vm2488 = vweird.f32 %v2482
        %vm2489 = vmor %vm2487, %vm2488
        %v2490 = vsel %vm2489, %v2482, %v2486
        %v2491 = vand.u32 2147483647, %v2451
        %vm2492 = vcmp.eq.f32.partialorder %v2491, 8.507059e+37
        %v2493 = vand.u32 %v2451, 2147483648
        %v2494 = vor.u32 1.1754944e-38, %v2493
        %v2495 = vsel %vm2492, %v2494, %v2490
        %v2496 = vmul.f32 1.0, %v2495
        %v2497 = vtanh.pop %v2438
        %v2498 = vmul.f32 %v2481, %v1691
        %v2499 = vmul.f32 %v2466, %v2497
        %v2500 = vadd.f32 %v2498, %v2499
        %v2501 = vtanh.pop %v2500
        %v2502 = vmul.f32 %v2496, %v2501
        %2503 = vmatpush.msra.mxu0 %v1169
        %2504 = vmatpush.msra.mxu0 %v1165
        %2505 = vmatpush.msra.mxu0 %v1161
        %2506 = vmatpush.msra.mxu0 %v1157
        %2507 = vmatpush.msra.mxu0 %v1153
        %2508 = vmatpush.msra.mxu0 %v1149
        %2509 = vmatpush.msra.mxu0 %v1145
        %2510 = vmatpush.msra.mxu0 %v1141
        %2511 = vmatpush.msra.mxu0 %v1137
        %2512 = vmatpush.msra.mxu0 %v1133
        %2513 = vmatpush.msra.mxu0 %v1129
        %2514 = vmatpush.msra.mxu0 %v1125
        %2515 = vmatpush.msra.mxu0 %v1121
        %2516 = vmatpush.msra.mxu0 %v1117
        %2517 = vmatpush.msra.mxu0 %v1113
        %2518 = vmatpush.msra.mxu0 %v1109
        %2519 = vmatmul.f32.gmra.mxu0 %v1693
        %v2520 = vpop.f32.mrf.mxu0
        %v2521 = vadd.f32 %v1240, %v2520
        %2522 = vdwg.mxu0
        %2523 = vmatpush.msra.mxu0 %v1233
        %2524 = vmatpush.msra.mxu0 %v1229
        %2525 = vmatpush.msra.mxu0 %v1225
        %2526 = vmatpush.msra.mxu0 %v1221
        %2527 = vmatpush.msra.mxu0 %v1217
        %2528 = vmatpush.msra.mxu0 %v1213
        %2529 = vmatpush.msra.mxu0 %v1209
        %2530 = vmatpush.msra.mxu0 %v1205
        %2531 = vmatpush.msra.mxu0 %v1201
        %2532 = vmatpush.msra.mxu0 %v1197
        %2533 = vmatpush.msra.mxu0 %v1193
        %2534 = vmatpush.msra.mxu0 %v1189
        %2535 = vmatpush.msra.mxu0 %v1185
        %2536 = vmatpush.msra.mxu0 %v1181
        %2537 = vmatpush.msra.mxu0 %v1177
        %2538 = vmatpush.msra.mxu0 %v1173
        %2539 = vmatmul.f32.gmra.mxu0 %v1916
        %v2540 = vpop.f32.mrf.mxu0
        %v2541 = vadd.f32 %v2521, %v2540
        %2542 = vdwg.mxu0
        %2543 = vmatpush.msra.mxu0 %v1170
        %2544 = vmatpush.msra.mxu0 %v1166
        %2545 = vmatpush.msra.mxu0 %v1162
        %2546 = vmatpush.msra.mxu0 %v1158
        %2547 = vmatpush.msra.mxu0 %v1154
        %2548 = vmatpush.msra.mxu0 %v1150
        %2549 = vmatpush.msra.mxu0 %v1146
        %2550 = vmatpush.msra.mxu0 %v1142
        %2551 = vmatpush.msra.mxu0 %v1138
        %2552 = vmatpush.msra.mxu0 %v1134
        %2553 = vmatpush.msra.mxu0 %v1130
        %2554 = vmatpush.msra.mxu0 %v1126
        %2555 = vmatpush.msra.mxu0 %v1122
        %2556 = vmatpush.msra.mxu0 %v1118
        %2557 = vmatpush.msra.mxu0 %v1114
        %2558 = vmatpush.msra.mxu0 %v1110
        %2559 = vmatmul.f32.gmra.mxu0 %v1693
        %v2560 = vpop.f32.mrf.mxu0
        %v2561 = vadd.f32 %v1241, %v2560
        %2562 = vdwg.mxu0
        %2563 = vmatpush.msra.mxu0 %v1234
        %2564 = vmatpush.msra.mxu0 %v1230
        %2565 = vmatpush.msra.mxu0 %v1226
        %2566 = vmatpush.msra.mxu0 %v1222
        %2567 = vmatpush.msra.mxu0 %v1218
        %2568 = vmatpush.msra.mxu0 %v1214
        %2569 = vmatpush.msra.mxu0 %v1210
        %2570 = vmatpush.msra.mxu0 %v1206
        %2571 = vmatpush.msra.mxu0 %v1202
        %2572 = vmatpush.msra.mxu0 %v1198
        %2573 = vmatpush.msra.mxu0 %v1194
        %2574 = vmatpush.msra.mxu0 %v1190
        %2575 = vmatpush.msra.mxu0 %v1186
        %2576 = vmatpush.msra.mxu0 %v1182
        %2577 = vmatpush.msra.mxu0 %v1178
        %2578 = vmatpush.msra.mxu0 %v1174
        %2579 = vmatmul.f32.gmra.mxu0 %v1916
        %v2580 = vpop.f32.mrf.mxu0
        %v2581 = vadd.f32 %v2561, %v2580
        %2582 = vdwg.mxu0
        %2583 = vmatpush.msra.mxu0 %v1171
        %2584 = vmatpush.msra.mxu0 %v1167
        %2585 = vmatpush.msra.mxu0 %v1163
        %2586 = vmatpush.msra.mxu0 %v1159
        %2587 = vmatpush.msra.mxu0 %v1155
        %2588 = vmatpush.msra.mxu0 %v1151
        %2589 = vmatpush.msra.mxu0 %v1147
        %2590 = vmatpush.msra.mxu0 %v1143
        %2591 = vmatpush.msra.mxu0 %v1139
        %2592 = vmatpush.msra.mxu0 %v1135
        %2593 = vmatpush.msra.mxu0 %v1131
        %2594 = vmatpush.msra.mxu0 %v1127
        %2595 = vmatpush.msra.mxu0 %v1123
        %2596 = vmatpush.msra.mxu0 %v1119
        %2597 = vmatpush.msra.mxu0 %v1115
        %2598 = vmatpush.msra.mxu0 %v1111
        %2599 = vmatmul.f32.gmra.mxu0 %v1693
        %v2600 = vpop.f32.mrf.mxu0
        %v2601 = vadd.f32 %v1242, %v2600
        %2602 = vdwg.mxu0
        %2603 = vmatpush.msra.mxu0 %v1235
        %2604 = vmatpush.msra.mxu0 %v1231
        %2605 = vmatpush.msra.mxu0 %v1227
        %2606 = vmatpush.msra.mxu0 %v1223
        %2607 = vmatpush.msra.mxu0 %v1219
        %2608 = vmatpush.msra.mxu0 %v1215
        %2609 = vmatpush.msra.mxu0 %v1211
        %2610 = vmatpush.msra.mxu0 %v1207
        %2611 = vmatpush.msra.mxu0 %v1203
        %2612 = vmatpush.msra.mxu0 %v1199
        %2613 = vmatpush.msra.mxu0 %v1195
        %2614 = vmatpush.msra.mxu0 %v1191
        %2615 = vmatpush.msra.mxu0 %v1187
        %2616 = vmatpush.msra.mxu0 %v1183
        %2617 = vmatpush.msra.mxu0 %v1179
        %2618 = vmatpush.msra.mxu0 %v1175
        %2619 = vmatmul.f32.gmra.mxu0 %v1916
        %v2620 = vpop.f32.mrf.mxu0
        %v2621 = vadd.f32 %v2601, %v2620
        %2622 = vdwg.mxu0
        %2623 = vmatpush.msra.mxu0 %v1172
        %2624 = vmatpush.msra.mxu0 %v1168
        %2625 = vmatpush.msra.mxu0 %v1164
        %2626 = vmatpush.msra.mxu0 %v1160
        %2627 = vmatpush.msra.mxu0 %v1156
        %2628 = vmatpush.msra.mxu0 %v1152
        %2629 = vmatpush.msra.mxu0 %v1148
        %2630 = vmatpush.msra.mxu0 %v1144
        %2631 = vmatpush.msra.mxu0 %v1140
        %2632 = vmatpush.msra.mxu0 %v1136
        %2633 = vmatpush.msra.mxu0 %v1132
        %2634 = vmatpush.msra.mxu0 %v1128
        %2635 = vmatpush.msra.mxu0 %v1124
        %2636 = vmatpush.msra.mxu0 %v1120
        %2637 = vmatpush.msra.mxu0 %v1116
        %2638 = vmatpush.msra.mxu0 %v1112
        %2639 = vmatmul.f32.gmra.mxu0 %v1693
        %v2640 = vpop.f32.mrf.mxu0
        %v2641 = vadd.f32 %v1243, %v2640
        %2642 = vdwg.mxu0
        %2643 = vmatpush.msra.mxu0 %v1236
        %2644 = vmatpush.msra.mxu0 %v1232
        %2645 = vmatpush.msra.mxu0 %v1228
        %2646 = vmatpush.msra.mxu0 %v1224
        %2647 = vmatpush.msra.mxu0 %v1220
        %2648 = vmatpush.msra.mxu0 %v1216
        %2649 = vmatpush.msra.mxu0 %v1212
        %2650 = vmatpush.msra.mxu0 %v1208
        %2651 = vmatpush.msra.mxu0 %v1204
        %2652 = vmatpush.msra.mxu0 %v1200
        %2653 = vmatpush.msra.mxu0 %v1196
        %2654 = vmatpush.msra.mxu0 %v1192
        %2655 = vmatpush.msra.mxu0 %v1188
        %2656 = vmatpush.msra.mxu0 %v1184
        %2657 = vmatpush.msra.mxu0 %v1180
        %2658 = vmatpush.msra.mxu0 %v1176
        %2659 = vmatmul.f32.gmra.mxu0 %v1916
        %v2660 = vpop.f32.mrf.mxu0
        %v2661 = vadd.f32 %v2641, %v2660
        %2662 = vdwg.mxu0
        %v2663 = vxor.u32 %v2541, 2147483648
        %v2664 = vxor.u32 %v2581, 2147483648
        %v2665 = vxor.u32 %v2621, 2147483648
        %v2666 = vmul.f32 %v2663, 1.442695
        %v2667 = vpow.pop %v2666
        %v2668 = vmul.f32 %v2664, 1.442695
        %v2669 = vpow.pop %v2668
        %v2670 = vmul.f32 %v2665, 1.442695
        %v2671 = vpow.pop %v2670
        %v2672 = vadd.f32 %v2667, 1.0
        %v2673 = vadd.f32 %v2669, 1.0
        %v2674 = vadd.f32 %v2671, 1.0
        %v2675 = vrcp.pop %v2672
        %v2676 = vmul.f32 %v2672, %v2675
        %v2677 = vsub.f32 1.0, %v2676
        %v2678 = vmul.f32 %v2675, %v2677
        %v2679 = vadd.f32 %v2675, %v2678
        %vm2680 = vweird.f32 %v2672
        %vm2681 = vweird.f32 %v2675
        %vm2682 = vmor %vm2680, %vm2681
        %v2683 = vsel %vm2682, %v2675, %v2679
        %v2684 = vand.u32 2147483647, %v2672
        %vm2685 = vcmp.eq.f32.partialorder %v2684, 8.507059e+37
        %v2686 = vand.u32 %v2672, 2147483648
        %v2687 = vor.u32 1.1754944e-38, %v2686
        %v2688 = vsel %vm2685, %v2687, %v2683
        %v2689 = vmul.f32 1.0, %v2688
        %v2690 = vrcp.pop %v2673
        %v2691 = vmul.f32 %v2673, %v2690
        %v2692 = vsub.f32 1.0, %v2691
        %v2693 = vmul.f32 %v2690, %v2692
        %v2694 = vadd.f32 %v2690, %v2693
        %vm2695 = vweird.f32 %v2673
        %vm2696 = vweird.f32 %v2690
        %vm2697 = vmor %vm2695, %vm2696
        %v2698 = vsel %vm2697, %v2690, %v2694
        %v2699 = vand.u32 2147483647, %v2673
        %vm2700 = vcmp.eq.f32.partialorder %v2699, 8.507059e+37
        %v2701 = vand.u32 %v2673, 2147483648
        %v2702 = vor.u32 1.1754944e-38, %v2701
        %v2703 = vsel %vm2700, %v2702, %v2698
        %v2704 = vmul.f32 1.0, %v2703
        %v2705 = vrcp.pop %v2674
        %v2706 = vmul.f32 %v2674, %v2705
        %v2707 = vsub.f32 1.0, %v2706
        %v2708 = vmul.f32 %v2705, %v2707
        %v2709 = vadd.f32 %v2705, %v2708
        %vm2710 = vweird.f32 %v2674
        %vm2711 = vweird.f32 %v2705
        %vm2712 = vmor %vm2710, %vm2711
        %v2713 = vsel %vm2712, %v2705, %v2709
        %v2714 = vand.u32 2147483647, %v2674
        %vm2715 = vcmp.eq.f32.partialorder %v2714, 8.507059e+37
        %v2716 = vand.u32 %v2674, 2147483648
        %v2717 = vor.u32 1.1754944e-38, %v2716
        %v2718 = vsel %vm2715, %v2717, %v2713
        %v2719 = vmul.f32 1.0, %v2718
        %v2720 = vtanh.pop %v2661
        %v2721 = vmul.f32 %v2704, %v1914
        %v2722 = vmul.f32 %v2689, %v2720
        %v2723 = vadd.f32 %v2721, %v2722
        %v2724 = vtanh.pop %v2723
        %v2725 = vmul.f32 %v2719, %v2724
        %2726 = vmatpush.msra.mxu0 %v1978
        %2727 = vmatpush.msra.mxu0 %v1974
        %2728 = vmatpush.msra.mxu0 %v1970
        %2729 = vmatpush.msra.mxu0 %v1966
        %2730 = vmatpush.msra.mxu0 %v1962
        %2731 = vmatpush.msra.mxu0 %v1958
        %2732 = vmatpush.msra.mxu0 %v1954
        %2733 = vmatpush.msra.mxu0 %v1950
        %2734 = vmatpush.msra.mxu0 %v1946
        %2735 = vmatpush.msra.mxu0 %v1942
        %2736 = vmatpush.msra.mxu0 %v1938
        %2737 = vmatpush.msra.mxu0 %v1934
        %2738 = vmatpush.msra.mxu0 %v1930
        %2739 = vmatpush.msra.mxu0 %v1926
        %2740 = vmatpush.msra.mxu0 %v1922
        %2741 = vmatpush.msra.mxu0 %v1918
        %2742 = vmatmul.f32.gmra.mxu0 %v1916
        %v2743 = vpop.f32.mrf.mxu0
        %v2744 = vadd.f32 %v2049, %v2743
        %2745 = vdwg.mxu0
        %2746 = vmatpush.msra.mxu0 %v2042
        %2747 = vmatpush.msra.mxu0 %v2038
        %2748 = vmatpush.msra.mxu0 %v2034
        %2749 = vmatpush.msra.mxu0 %v2030
        %2750 = vmatpush.msra.mxu0 %v2026
        %2751 = vmatpush.msra.mxu0 %v2022
        %2752 = vmatpush.msra.mxu0 %v2018
        %2753 = vmatpush.msra.mxu0 %v2014
        %2754 = vmatpush.msra.mxu0 %v2010
        %2755 = vmatpush.msra.mxu0 %v2006
        %2756 = vmatpush.msra.mxu0 %v2002
        %2757 = vmatpush.msra.mxu0 %v1998
        %2758 = vmatpush.msra.mxu0 %v1994
        %2759 = vmatpush.msra.mxu0 %v1990
        %2760 = vmatpush.msra.mxu0 %v1986
        %2761 = vmatpush.msra.mxu0 %v1982
        %2762 = vmatmul.f32.gmra.mxu0 %v2279
        %v2763 = vpop.f32.mrf.mxu0
        %v2764 = vadd.f32 %v2744, %v2763
        %2765 = vdwg.mxu0
        %2766 = vmatpush.msra.mxu0 %v1979
        %2767 = vmatpush.msra.mxu0 %v1975
        %2768 = vmatpush.msra.mxu0 %v1971
        %2769 = vmatpush.msra.mxu0 %v1967
        %2770 = vmatpush.msra.mxu0 %v1963
        %2771 = vmatpush.msra.mxu0 %v1959
        %2772 = vmatpush.msra.mxu0 %v1955
        %2773 = vmatpush.msra.mxu0 %v1951
        %2774 = vmatpush.msra.mxu0 %v1947
        %2775 = vmatpush.msra.mxu0 %v1943
        %2776 = vmatpush.msra.mxu0 %v1939
        %2777 = vmatpush.msra.mxu0 %v1935
        %2778 = vmatpush.msra.mxu0 %v1931
        %2779 = vmatpush.msra.mxu0 %v1927
        %2780 = vmatpush.msra.mxu0 %v1923
        %2781 = vmatpush.msra.mxu0 %v1919
        %2782 = vmatmul.f32.gmra.mxu0 %v1916
        %v2783 = vpop.f32.mrf.mxu0
        %v2784 = vadd.f32 %v2050, %v2783
        %2785 = vdwg.mxu0
        %2786 = vmatpush.msra.mxu0 %v2043
        %2787 = vmatpush.msra.mxu0 %v2039
        %2788 = vmatpush.msra.mxu0 %v2035
        %2789 = vmatpush.msra.mxu0 %v2031
        %2790 = vmatpush.msra.mxu0 %v2027
        %2791 = vmatpush.msra.mxu0 %v2023
        %2792 = vmatpush.msra.mxu0 %v2019
        %2793 = vmatpush.msra.mxu0 %v2015
        %2794 = vmatpush.msra.mxu0 %v2011
        %2795 = vmatpush.msra.mxu0 %v2007
        %2796 = vmatpush.msra.mxu0 %v2003
        %2797 = vmatpush.msra.mxu0 %v1999
        %2798 = vmatpush.msra.mxu0 %v1995
        %2799 = vmatpush.msra.mxu0 %v1991
        %2800 = vmatpush.msra.mxu0 %v1987
        %2801 = vmatpush.msra.mxu0 %v1983
        %2802 = vmatmul.f32.gmra.mxu0 %v2279
        %v2803 = vpop.f32.mrf.mxu0
        %v2804 = vadd.f32 %v2784, %v2803
        %2805 = vdwg.mxu0
        %2806 = vmatpush.msra.mxu0 %v1980
        %2807 = vmatpush.msra.mxu0 %v1976
        %2808 = vmatpush.msra.mxu0 %v1972
        %2809 = vmatpush.msra.mxu0 %v1968
        %2810 = vmatpush.msra.mxu0 %v1964
        %2811 = vmatpush.msra.mxu0 %v1960
        %2812 = vmatpush.msra.mxu0 %v1956
        %2813 = vmatpush.msra.mxu0 %v1952
        %2814 = vmatpush.msra.mxu0 %v1948
        %2815 = vmatpush.msra.mxu0 %v1944
        %2816 = vmatpush.msra.mxu0 %v1940
        %2817 = vmatpush.msra.mxu0 %v1936
        %2818 = vmatpush.msra.mxu0 %v1932
        %2819 = vmatpush.msra.mxu0 %v1928
        %2820 = vmatpush.msra.mxu0 %v1924
        %2821 = vmatpush.msra.mxu0 %v1920
        %2822 = vmatmul.f32.gmra.mxu0 %v1916
        %v2823 = vpop.f32.mrf.mxu0
        %v2824 = vadd.f32 %v2051, %v2823
        %2825 = vdwg.mxu0
        %2826 = vmatpush.msra.mxu0 %v2044
        %2827 = vmatpush.msra.mxu0 %v2040
        %2828 = vmatpush.msra.mxu0 %v2036
        %2829 = vmatpush.msra.mxu0 %v2032
        %2830 = vmatpush.msra.mxu0 %v2028
        %2831 = vmatpush.msra.mxu0 %v2024
        %2832 = vmatpush.msra.mxu0 %v2020
        %2833 = vmatpush.msra.mxu0 %v2016
        %2834 = vmatpush.msra.mxu0 %v2012
        %2835 = vmatpush.msra.mxu0 %v2008
        %2836 = vmatpush.msra.mxu0 %v2004
        %2837 = vmatpush.msra.mxu0 %v2000
        %2838 = vmatpush.msra.mxu0 %v1996
        %2839 = vmatpush.msra.mxu0 %v1992
        %2840 = vmatpush.msra.mxu0 %v1988
        %2841 = vmatpush.msra.mxu0 %v1984
        %2842 = vmatmul.f32.gmra.mxu0 %v2279
        %v2843 = vpop.f32.mrf.mxu0
        %v2844 = vadd.f32 %v2824, %v2843
        %2845 = vdwg.mxu0
        %2846 = vmatpush.msra.mxu0 %v1981
        %2847 = vmatpush.msra.mxu0 %v1977
        %2848 = vmatpush.msra.mxu0 %v1973
        %2849 = vmatpush.msra.mxu0 %v1969
        %2850 = vmatpush.msra.mxu0 %v1965
        %2851 = vmatpush.msra.mxu0 %v1961
        %2852 = vmatpush.msra.mxu0 %v1957
        %2853 = vmatpush.msra.mxu0 %v1953
        %2854 = vmatpush.msra.mxu0 %v1949
        %2855 = vmatpush.msra.mxu0 %v1945
        %2856 = vmatpush.msra.mxu0 %v1941
        %2857 = vmatpush.msra.mxu0 %v1937
        %2858 = vmatpush.msra.mxu0 %v1933
        %2859 = vmatpush.msra.mxu0 %v1929
        %2860 = vmatpush.msra.mxu0 %v1925
        %2861 = vmatpush.msra.mxu0 %v1921
        %2862 = vmatmul.f32.gmra.mxu0 %v1916
        %v2863 = vpop.f32.mrf.mxu0
        %v2864 = vadd.f32 %v2052, %v2863
        %2865 = vdwg.mxu0
        %2866 = vmatpush.msra.mxu0 %v2045
        %2867 = vmatpush.msra.mxu0 %v2041
        %2868 = vmatpush.msra.mxu0 %v2037
        %2869 = vmatpush.msra.mxu0 %v2033
        %2870 = vmatpush.msra.mxu0 %v2029
        %2871 = vmatpush.msra.mxu0 %v2025
        %2872 = vmatpush.msra.mxu0 %v2021
        %2873 = vmatpush.msra.mxu0 %v2017
        %2874 = vmatpush.msra.mxu0 %v2013
        %2875 = vmatpush.msra.mxu0 %v2009
        %2876 = vmatpush.msra.mxu0 %v2005
        %2877 = vmatpush.msra.mxu0 %v2001
        %2878 = vmatpush.msra.mxu0 %v1997
        %2879 = vmatpush.msra.mxu0 %v1993
        %2880 = vmatpush.msra.mxu0 %v1989
        %2881 = vmatpush.msra.mxu0 %v1985
        %2882 = vmatmul.f32.gmra.mxu0 %v2279
        %v2883 = vpop.f32.mrf.mxu0
        %v2884 = vadd.f32 %v2864, %v2883
        %2885 = vdwg.mxu0
        %v2886 = vxor.u32 %v2764, 2147483648
        %v2887 = vxor.u32 %v2804, 2147483648
        %v2888 = vxor.u32 %v2844, 2147483648
        %v2889 = vmul.f32 %v2886, 1.442695
        %v2890 = vpow.pop %v2889
        %v2891 = vmul.f32 %v2887, 1.442695
        %v2892 = vpow.pop %v2891
        %v2893 = vmul.f32 %v2888, 1.442695
        %v2894 = vpow.pop %v2893
        %v2895 = vadd.f32 %v2890, 1.0
        %v2896 = vadd.f32 %v2892, 1.0
        %v2897 = vadd.f32 %v2894, 1.0
        %v2898 = vrcp.pop %v2895
        %v2899 = vmul.f32 %v2895, %v2898
        %v2900 = vsub.f32 1.0, %v2899
        %v2901 = vmul.f32 %v2898, %v2900
        %v2902 = vadd.f32 %v2898, %v2901
        %vm2903 = vweird.f32 %v2895
        %vm2904 = vweird.f32 %v2898
        %vm2905 = vmor %vm2903, %vm2904
        %v2906 = vsel %vm2905, %v2898, %v2902
        %v2907 = vand.u32 2147483647, %v2895
        %vm2908 = vcmp.eq.f32.partialorder %v2907, 8.507059e+37
        %v2909 = vand.u32 %v2895, 2147483648
        %v2910 = vor.u32 1.1754944e-38, %v2909
        %v2911 = vsel %vm2908, %v2910, %v2906
        %v2912 = vmul.f32 1.0, %v2911
        %v2913 = vrcp.pop %v2896
        %v2914 = vmul.f32 %v2896, %v2913
        %v2915 = vsub.f32 1.0, %v2914
        %v2916 = vmul.f32 %v2913, %v2915
        %v2917 = vadd.f32 %v2913, %v2916
        %vm2918 = vweird.f32 %v2896
        %vm2919 = vweird.f32 %v2913
        %vm2920 = vmor %vm2918, %vm2919
        %v2921 = vsel %vm2920, %v2913, %v2917
        %v2922 = vand.u32 2147483647, %v2896
        %vm2923 = vcmp.eq.f32.partialorder %v2922, 8.507059e+37
        %v2924 = vand.u32 %v2896, 2147483648
        %v2925 = vor.u32 1.1754944e-38, %v2924
        %v2926 = vsel %vm2923, %v2925, %v2921
        %v2927 = vmul.f32 1.0, %v2926
        %v2928 = vrcp.pop %v2897
        %v2929 = vmul.f32 %v2897, %v2928
        %v2930 = vsub.f32 1.0, %v2929
        %v2931 = vmul.f32 %v2928, %v2930
        %v2932 = vadd.f32 %v2928, %v2931
        %vm2933 = vweird.f32 %v2897
        %vm2934 = vweird.f32 %v2928
        %vm2935 = vmor %vm2933, %vm2934
        %v2936 = vsel %vm2935, %v2928, %v2932
        %v2937 = vand.u32 2147483647, %v2897
        %vm2938 = vcmp.eq.f32.partialorder %v2937, 8.507059e+37
        %v2939 = vand.u32 %v2897, 2147483648
        %v2940 = vor.u32 1.1754944e-38, %v2939
        %v2941 = vsel %vm2938, %v2940, %v2936
        %v2942 = vmul.f32 1.0, %v2941
        %v2943 = vtanh.pop %v2884
        %v2944 = vmul.f32 %v2927, %v2277
        %v2945 = vmul.f32 %v2912, %v2943
        %v2946 = vadd.f32 %v2944, %v2945
        %v2947 = vtanh.pop %v2946
        %v2948 = vmul.f32 %v2942, %v2947
        %s2949 = scalar_lea.vmem [#allocation5], 3072
        %v2950 = vld [vmem:[%s2949] sm:$0xff]
        %v2951 = vld [vmem:[%s2949 + $0x8] sm:$0xff]
        %v2952 = vld [vmem:[%s2949 + $0x10] sm:$0xff]
        %v2953 = vld [vmem:[%s2949 + $0x18] sm:$0xff]
        %v2954 = vld [vmem:[%s2949 + $0x20] sm:$0xff]
        %v2955 = vld [vmem:[%s2949 + $0x28] sm:$0xff]
        %v2956 = vld [vmem:[%s2949 + $0x30] sm:$0xff]
        %v2957 = vld [vmem:[%s2949 + $0x38] sm:$0xff]
        %v2958 = vld [vmem:[%s2949 + $0x40] sm:$0xff]
        %v2959 = vld [vmem:[%s2949 + $0x48] sm:$0xff]
        %v2960 = vld [vmem:[%s2949 + $0x50] sm:$0xff]
        %v2961 = vld [vmem:[%s2949 + $0x58] sm:$0xff]
        %v2962 = vld [vmem:[%s2949 + $0x60] sm:$0xff]
        %v2963 = vld [vmem:[%s2949 + $0x68] sm:$0xff]
        %v2964 = vld [vmem:[%s2949 + $0x70] sm:$0xff]
        %v2965 = vld [vmem:[%s2949 + $0x78] sm:$0xff]
        %v2966 = vld [vmem:[%s2949 + $0x80] sm:$0xff]
        %v2967 = vld [vmem:[%s2949 + $0x88] sm:$0xff]
        %v2968 = vld [vmem:[%s2949 + $0x90] sm:$0xff]
        %v2969 = vld [vmem:[%s2949 + $0x98] sm:$0xff]
        %v2970 = vld [vmem:[%s2949 + $0xa0] sm:$0xff]
        %v2971 = vld [vmem:[%s2949 + $0xa8] sm:$0xff]
        %v2972 = vld [vmem:[%s2949 + $0xb0] sm:$0xff]
        %v2973 = vld [vmem:[%s2949 + $0xb8] sm:$0xff]
        %v2974 = vld [vmem:[%s2949 + $0xc0] sm:$0xff]
        %v2975 = vld [vmem:[%s2949 + $0xc8] sm:$0xff]
        %v2976 = vld [vmem:[%s2949 + $0xd0] sm:$0xff]
        %v2977 = vld [vmem:[%s2949 + $0xd8] sm:$0xff]
        %v2978 = vld [vmem:[%s2949 + $0xe0] sm:$0xff]
        %v2979 = vld [vmem:[%s2949 + $0xe8] sm:$0xff]
        %v2980 = vld [vmem:[%s2949 + $0xf0] sm:$0xff]
        %v2981 = vld [vmem:[%s2949 + $0xf8] sm:$0xff]
        %v2982 = vld [vmem:[%s2949 + $0x100] sm:$0xff]
        %v2983 = vld [vmem:[%s2949 + $0x108] sm:$0xff]
        %v2984 = vld [vmem:[%s2949 + $0x110] sm:$0xff]
        %v2985 = vld [vmem:[%s2949 + $0x118] sm:$0xff]
        %v2986 = vld [vmem:[%s2949 + $0x120] sm:$0xff]
        %v2987 = vld [vmem:[%s2949 + $0x128] sm:$0xff]
        %v2988 = vld [vmem:[%s2949 + $0x130] sm:$0xff]
        %v2989 = vld [vmem:[%s2949 + $0x138] sm:$0xff]
        %v2990 = vld [vmem:[%s2949 + $0x140] sm:$0xff]
        %v2991 = vld [vmem:[%s2949 + $0x148] sm:$0xff]
        %v2992 = vld [vmem:[%s2949 + $0x150] sm:$0xff]
        %v2993 = vld [vmem:[%s2949 + $0x158] sm:$0xff]
        %v2994 = vld [vmem:[%s2949 + $0x160] sm:$0xff]
        %v2995 = vld [vmem:[%s2949 + $0x168] sm:$0xff]
        %v2996 = vld [vmem:[%s2949 + $0x170] sm:$0xff]
        %v2997 = vld [vmem:[%s2949 + $0x178] sm:$0xff]
        %v2998 = vld [vmem:[%s2949 + $0x180] sm:$0xff]
        %v2999 = vld [vmem:[%s2949 + $0x188] sm:$0xff]
        %v3000 = vld [vmem:[%s2949 + $0x190] sm:$0xff]
        %v3001 = vld [vmem:[%s2949 + $0x198] sm:$0xff]
        %v3002 = vld [vmem:[%s2949 + $0x1a0] sm:$0xff]
        %v3003 = vld [vmem:[%s2949 + $0x1a8] sm:$0xff]
        %v3004 = vld [vmem:[%s2949 + $0x1b0] sm:$0xff]
        %v3005 = vld [vmem:[%s2949 + $0x1b8] sm:$0xff]
        %v3006 = vld [vmem:[%s2949 + $0x1c0] sm:$0xff]
        %v3007 = vld [vmem:[%s2949 + $0x1c8] sm:$0xff]
        %v3008 = vld [vmem:[%s2949 + $0x1d0] sm:$0xff]
        %v3009 = vld [vmem:[%s2949 + $0x1d8] sm:$0xff]
        %v3010 = vld [vmem:[%s2949 + $0x1e0] sm:$0xff]
        %v3011 = vld [vmem:[%s2949 + $0x1e8] sm:$0xff]
        %v3012 = vld [vmem:[%s2949 + $0x1f0] sm:$0xff]
        %v3013 = vld [vmem:[%s2949 + $0x1f8] sm:$0xff]
        %v3014 = vld [vmem:[%s2949 + $0x200] sm:$0xff]
        %v3015 = vld [vmem:[%s2949 + $0x208] sm:$0xff]
        %v3016 = vld [vmem:[%s2949 + $0x210] sm:$0xff]
        %v3017 = vld [vmem:[%s2949 + $0x218] sm:$0xff]
        %v3018 = vld [vmem:[%s2949 + $0x220] sm:$0xff]
        %v3019 = vld [vmem:[%s2949 + $0x228] sm:$0xff]
        %v3020 = vld [vmem:[%s2949 + $0x230] sm:$0xff]
        %v3021 = vld [vmem:[%s2949 + $0x238] sm:$0xff]
        %v3022 = vld [vmem:[%s2949 + $0x240] sm:$0xff]
        %v3023 = vld [vmem:[%s2949 + $0x248] sm:$0xff]
        %v3024 = vld [vmem:[%s2949 + $0x250] sm:$0xff]
        %v3025 = vld [vmem:[%s2949 + $0x258] sm:$0xff]
        %v3026 = vld [vmem:[%s2949 + $0x260] sm:$0xff]
        %v3027 = vld [vmem:[%s2949 + $0x268] sm:$0xff]
        %v3028 = vld [vmem:[%s2949 + $0x270] sm:$0xff]
        %v3029 = vld [vmem:[%s2949 + $0x278] sm:$0xff]
        %v3030 = vld [vmem:[%s2949 + $0x280] sm:$0xff]
        %v3031 = vld [vmem:[%s2949 + $0x288] sm:$0xff]
        %v3032 = vld [vmem:[%s2949 + $0x290] sm:$0xff]
        %v3033 = vld [vmem:[%s2949 + $0x298] sm:$0xff]
        %v3034 = vld [vmem:[%s2949 + $0x2a0] sm:$0xff]
        %v3035 = vld [vmem:[%s2949 + $0x2a8] sm:$0xff]
        %v3036 = vld [vmem:[%s2949 + $0x2b0] sm:$0xff]
        %v3037 = vld [vmem:[%s2949 + $0x2b8] sm:$0xff]
        %v3038 = vld [vmem:[%s2949 + $0x2c0] sm:$0xff]
        %v3039 = vld [vmem:[%s2949 + $0x2c8] sm:$0xff]
        %v3040 = vld [vmem:[%s2949 + $0x2d0] sm:$0xff]
        %v3041 = vld [vmem:[%s2949 + $0x2d8] sm:$0xff]
        %v3042 = vld [vmem:[%s2949 + $0x2e0] sm:$0xff]
        %v3043 = vld [vmem:[%s2949 + $0x2e8] sm:$0xff]
        %v3044 = vld [vmem:[%s2949 + $0x2f0] sm:$0xff]
        %v3045 = vld [vmem:[%s2949 + $0x2f8] sm:$0xff]
        %v3046 = vld [vmem:[%s2949 + $0x300] sm:$0xff]
        %v3047 = vld [vmem:[%s2949 + $0x308] sm:$0xff]
        %v3048 = vld [vmem:[%s2949 + $0x310] sm:$0xff]
        %v3049 = vld [vmem:[%s2949 + $0x318] sm:$0xff]
        %v3050 = vld [vmem:[%s2949 + $0x320] sm:$0xff]
        %v3051 = vld [vmem:[%s2949 + $0x328] sm:$0xff]
        %v3052 = vld [vmem:[%s2949 + $0x330] sm:$0xff]
        %v3053 = vld [vmem:[%s2949 + $0x338] sm:$0xff]
        %v3054 = vld [vmem:[%s2949 + $0x340] sm:$0xff]
        %v3055 = vld [vmem:[%s2949 + $0x348] sm:$0xff]
        %v3056 = vld [vmem:[%s2949 + $0x350] sm:$0xff]
        %v3057 = vld [vmem:[%s2949 + $0x358] sm:$0xff]
        %v3058 = vld [vmem:[%s2949 + $0x360] sm:$0xff]
        %v3059 = vld [vmem:[%s2949 + $0x368] sm:$0xff]
        %v3060 = vld [vmem:[%s2949 + $0x370] sm:$0xff]
        %v3061 = vld [vmem:[%s2949 + $0x378] sm:$0xff]
        %v3062 = vld [vmem:[%s2949 + $0x380] sm:$0xff]
        %v3063 = vld [vmem:[%s2949 + $0x388] sm:$0xff]
        %v3064 = vld [vmem:[%s2949 + $0x390] sm:$0xff]
        %v3065 = vld [vmem:[%s2949 + $0x398] sm:$0xff]
        %v3066 = vld [vmem:[%s2949 + $0x3a0] sm:$0xff]
        %v3067 = vld [vmem:[%s2949 + $0x3a8] sm:$0xff]
        %v3068 = vld [vmem:[%s2949 + $0x3b0] sm:$0xff]
        %v3069 = vld [vmem:[%s2949 + $0x3b8] sm:$0xff]
        %v3070 = vld [vmem:[%s2949 + $0x3c0] sm:$0xff]
        %v3071 = vld [vmem:[%s2949 + $0x3c8] sm:$0xff]
        %v3072 = vld [vmem:[%s2949 + $0x3d0] sm:$0xff]
        %v3073 = vld [vmem:[%s2949 + $0x3d8] sm:$0xff]
        %v3074 = vld [vmem:[%s2949 + $0x3e0] sm:$0xff]
        %v3075 = vld [vmem:[%s2949 + $0x3e8] sm:$0xff]
        %v3076 = vld [vmem:[%s2949 + $0x3f0] sm:$0xff]
        %v3077 = vld [vmem:[%s2949 + $0x3f8] sm:$0xff]
        %s3078 = scalar_lea.vmem [#allocation7], 12
        %v3079 = vld [vmem:[%s3078] sm:$0xf]
        %v3081 = vperm.slane %v3079, 0
        %v3082 = vperm.slane %v3079, 1
        %v3083 = vperm.slane %v3079, 2
        %v3084 = vperm.slane %v3079, 3
        %3089 = vmatpush.msra.mxu0 %v3010
        %3090 = vmatpush.msra.mxu0 %v3006
        %3091 = vmatpush.msra.mxu0 %v3002
        %3092 = vmatpush.msra.mxu0 %v2998
        %3093 = vmatpush.msra.mxu0 %v2994
        %3094 = vmatpush.msra.mxu0 %v2990
        %3095 = vmatpush.msra.mxu0 %v2986
        %3096 = vmatpush.msra.mxu0 %v2982
        %3097 = vmatpush.msra.mxu0 %v2978
        %3098 = vmatpush.msra.mxu0 %v2974
        %3099 = vmatpush.msra.mxu0 %v2970
        %3100 = vmatpush.msra.mxu0 %v2966
        %3101 = vmatpush.msra.mxu0 %v2962
        %3102 = vmatpush.msra.mxu0 %v2958
        %3103 = vmatpush.msra.mxu0 %v2954
        %3104 = vmatpush.msra.mxu0 %v2950
        %3105 = vmatmul.f32.gmra.mxu0 %v2279
        %v3106 = vpop.f32.mrf.mxu0
        %v3107 = vadd.f32 %v3081, %v3106
        %3108 = vdwg.mxu0
        %3109 = vmatpush.msra.mxu0 %v3074
        %3110 = vmatpush.msra.mxu0 %v3070
        %3111 = vmatpush.msra.mxu0 %v3066
        %3112 = vmatpush.msra.mxu0 %v3062
        %3113 = vmatpush.msra.mxu0 %v3058
        %3114 = vmatpush.msra.mxu0 %v3054
        %3115 = vmatpush.msra.mxu0 %v3050
        %3116 = vmatpush.msra.mxu0 %v3046
        %3117 = vmatpush.msra.mxu0 %v3042
        %3118 = vmatpush.msra.mxu0 %v3038
        %3119 = vmatpush.msra.mxu0 %v3034
        %3120 = vmatpush.msra.mxu0 %v3030
        %3121 = vmatpush.msra.mxu0 %v3026
        %3122 = vmatpush.msra.mxu0 %v3022
        %3123 = vmatpush.msra.mxu0 %v3018
        %3124 = vmatpush.msra.mxu0 %v3014
        %3125 = vmatmul.f32.gmra.mxu0 0.0
        %v3126 = vpop.f32.mrf.mxu0
        %v3127 = vadd.f32 %v3107, %v3126
        %3128 = vdwg.mxu0
        %3129 = vmatpush.msra.mxu0 %v3011
        %3130 = vmatpush.msra.mxu0 %v3007
        %3131 = vmatpush.msra.mxu0 %v3003
        %3132 = vmatpush.msra.mxu0 %v2999
        %3133 = vmatpush.msra.mxu0 %v2995
        %3134 = vmatpush.msra.mxu0 %v2991
        %3135 = vmatpush.msra.mxu0 %v2987
        %3136 = vmatpush.msra.mxu0 %v2983
        %3137 = vmatpush.msra.mxu0 %v2979
        %3138 = vmatpush.msra.mxu0 %v2975
        %3139 = vmatpush.msra.mxu0 %v2971
        %3140 = vmatpush.msra.mxu0 %v2967
        %3141 = vmatpush.msra.mxu0 %v2963
        %3142 = vmatpush.msra.mxu0 %v2959
        %3143 = vmatpush.msra.mxu0 %v2955
        %3144 = vmatpush.msra.mxu0 %v2951
        %3145 = vmatmul.f32.gmra.mxu0 %v2279
        %v3146 = vpop.f32.mrf.mxu0
        %v3147 = vadd.f32 %v3082, %v3146
        %3148 = vdwg.mxu0
        %3149 = vmatpush.msra.mxu0 %v3075
        %3150 = vmatpush.msra.mxu0 %v3071
        %3151 = vmatpush.msra.mxu0 %v3067
        %3152 = vmatpush.msra.mxu0 %v3063
        %3153 = vmatpush.msra.mxu0 %v3059
        %3154 = vmatpush.msra.mxu0 %v3055
        %3155 = vmatpush.msra.mxu0 %v3051
        %3156 = vmatpush.msra.mxu0 %v3047
        %3157 = vmatpush.msra.mxu0 %v3043
        %3158 = vmatpush.msra.mxu0 %v3039
        %3159 = vmatpush.msra.mxu0 %v3035
        %3160 = vmatpush.msra.mxu0 %v3031
        %3161 = vmatpush.msra.mxu0 %v3027
        %3162 = vmatpush.msra.mxu0 %v3023
        %3163 = vmatpush.msra.mxu0 %v3019
        %3164 = vmatpush.msra.mxu0 %v3015
        %3165 = vmatmul.f32.gmra.mxu0 0.0
        %v3166 = vpop.f32.mrf.mxu0
        %v3167 = vadd.f32 %v3147, %v3166
        %3168 = vdwg.mxu0
        %3169 = vmatpush.msra.mxu0 %v3012
        %3170 = vmatpush.msra.mxu0 %v3008
        %3171 = vmatpush.msra.mxu0 %v3004
        %3172 = vmatpush.msra.mxu0 %v3000
        %3173 = vmatpush.msra.mxu0 %v2996
        %3174 = vmatpush.msra.mxu0 %v2992
        %3175 = vmatpush.msra.mxu0 %v2988
        %3176 = vmatpush.msra.mxu0 %v2984
        %3177 = vmatpush.msra.mxu0 %v2980
        %3178 = vmatpush.msra.mxu0 %v2976
        %3179 = vmatpush.msra.mxu0 %v2972
        %3180 = vmatpush.msra.mxu0 %v2968
        %3181 = vmatpush.msra.mxu0 %v2964
        %3182 = vmatpush.msra.mxu0 %v2960
        %3183 = vmatpush.msra.mxu0 %v2956
        %3184 = vmatpush.msra.mxu0 %v2952
        %3185 = vmatmul.f32.gmra.mxu0 %v2279
        %v3186 = vpop.f32.mrf.mxu0
        %v3187 = vadd.f32 %v3083, %v3186
        %3188 = vdwg.mxu0
        %3189 = vmatpush.msra.mxu0 %v3076
        %3190 = vmatpush.msra.mxu0 %v3072
        %3191 = vmatpush.msra.mxu0 %v3068
        %3192 = vmatpush.msra.mxu0 %v3064
        %3193 = vmatpush.msra.mxu0 %v3060
        %3194 = vmatpush.msra.mxu0 %v3056
        %3195 = vmatpush.msra.mxu0 %v3052
        %3196 = vmatpush.msra.mxu0 %v3048
        %3197 = vmatpush.msra.mxu0 %v3044
        %3198 = vmatpush.msra.mxu0 %v3040
        %3199 = vmatpush.msra.mxu0 %v3036
        %3200 = vmatpush.msra.mxu0 %v3032
        %3201 = vmatpush.msra.mxu0 %v3028
        %3202 = vmatpush.msra.mxu0 %v3024
        %3203 = vmatpush.msra.mxu0 %v3020
        %3204 = vmatpush.msra.mxu0 %v3016
        %3205 = vmatmul.f32.gmra.mxu0 0.0
        %v3206 = vpop.f32.mrf.mxu0
        %v3207 = vadd.f32 %v3187, %v3206
        %3208 = vdwg.mxu0
        %3209 = vmatpush.msra.mxu0 %v3013
        %3210 = vmatpush.msra.mxu0 %v3009
        %3211 = vmatpush.msra.mxu0 %v3005
        %3212 = vmatpush.msra.mxu0 %v3001
        %3213 = vmatpush.msra.mxu0 %v2997
        %3214 = vmatpush.msra.mxu0 %v2993
        %3215 = vmatpush.msra.mxu0 %v2989
        %3216 = vmatpush.msra.mxu0 %v2985
        %3217 = vmatpush.msra.mxu0 %v2981
        %3218 = vmatpush.msra.mxu0 %v2977
        %3219 = vmatpush.msra.mxu0 %v2973
        %3220 = vmatpush.msra.mxu0 %v2969
        %3221 = vmatpush.msra.mxu0 %v2965
        %3222 = vmatpush.msra.mxu0 %v2961
        %3223 = vmatpush.msra.mxu0 %v2957
        %3224 = vmatpush.msra.mxu0 %v2953
        %3225 = vmatmul.f32.gmra.mxu0 %v2279
        %v3226 = vpop.f32.mrf.mxu0
        %v3227 = vadd.f32 %v3084, %v3226
        %3228 = vdwg.mxu0
        %3229 = vmatpush.msra.mxu0 %v3077
        %3230 = vmatpush.msra.mxu0 %v3073
        %3231 = vmatpush.msra.mxu0 %v3069
        %3232 = vmatpush.msra.mxu0 %v3065
        %3233 = vmatpush.msra.mxu0 %v3061
        %3234 = vmatpush.msra.mxu0 %v3057
        %3235 = vmatpush.msra.mxu0 %v3053
        %3236 = vmatpush.msra.mxu0 %v3049
        %3237 = vmatpush.msra.mxu0 %v3045
        %3238 = vmatpush.msra.mxu0 %v3041
        %3239 = vmatpush.msra.mxu0 %v3037
        %3240 = vmatpush.msra.mxu0 %v3033
        %3241 = vmatpush.msra.mxu0 %v3029
        %3242 = vmatpush.msra.mxu0 %v3025
        %3243 = vmatpush.msra.mxu0 %v3021
        %3244 = vmatpush.msra.mxu0 %v3017
        %3245 = vmatmul.f32.gmra.mxu0 0.0
        %v3246 = vpop.f32.mrf.mxu0
        %v3247 = vadd.f32 %v3227, %v3246
        %3248 = vdwg.mxu0
        %v3249 = vxor.u32 %v3127, 2147483648
        %v3250 = vxor.u32 %v3167, 2147483648
        %v3251 = vxor.u32 %v3207, 2147483648
        %v3252 = vmul.f32 %v3249, 1.442695
        %v3253 = vpow.pop %v3252
        %v3254 = vmul.f32 %v3250, 1.442695
        %v3255 = vpow.pop %v3254
        %v3256 = vmul.f32 %v3251, 1.442695
        %v3257 = vpow.pop %v3256
        %v3258 = vadd.f32 %v3253, 1.0
        %v3259 = vadd.f32 %v3255, 1.0
        %v3260 = vadd.f32 %v3257, 1.0
        %v3261 = vrcp.pop %v3258
        %v3262 = vmul.f32 %v3258, %v3261
        %v3263 = vsub.f32 1.0, %v3262
        %v3264 = vmul.f32 %v3261, %v3263
        %v3265 = vadd.f32 %v3261, %v3264
        %vm3266 = vweird.f32 %v3258
        %vm3267 = vweird.f32 %v3261
        %vm3268 = vmor %vm3266, %vm3267
        %v3269 = vsel %vm3268, %v3261, %v3265
        %v3270 = vand.u32 2147483647, %v3258
        %vm3271 = vcmp.eq.f32.partialorder %v3270, 8.507059e+37
        %v3272 = vand.u32 %v3258, 2147483648
        %v3273 = vor.u32 1.1754944e-38, %v3272
        %v3274 = vsel %vm3271, %v3273, %v3269
        %v3275 = vmul.f32 1.0, %v3274
        %v3276 = vrcp.pop %v3259
        %v3277 = vmul.f32 %v3259, %v3276
        %v3278 = vsub.f32 1.0, %v3277
        %v3279 = vmul.f32 %v3276, %v3278
        %v3280 = vadd.f32 %v3276, %v3279
        %vm3281 = vweird.f32 %v3259
        %vm3282 = vweird.f32 %v3276
        %vm3283 = vmor %vm3281, %vm3282
        %v3284 = vsel %vm3283, %v3276, %v3280
        %v3285 = vand.u32 2147483647, %v3259
        %vm3286 = vcmp.eq.f32.partialorder %v3285, 8.507059e+37
        %v3287 = vand.u32 %v3259, 2147483648
        %v3288 = vor.u32 1.1754944e-38, %v3287
        %v3289 = vsel %vm3286, %v3288, %v3284
        %v3290 = vmul.f32 1.0, %v3289
        %v3291 = vrcp.pop %v3260
        %v3292 = vmul.f32 %v3260, %v3291
        %v3293 = vsub.f32 1.0, %v3292
        %v3294 = vmul.f32 %v3291, %v3293
        %v3295 = vadd.f32 %v3291, %v3294
        %vm3296 = vweird.f32 %v3260
        %vm3297 = vweird.f32 %v3291
        %vm3298 = vmor %vm3296, %vm3297
        %v3299 = vsel %vm3298, %v3291, %v3295
        %v3300 = vand.u32 2147483647, %v3260
        %vm3301 = vcmp.eq.f32.partialorder %v3300, 8.507059e+37
        %v3302 = vand.u32 %v3260, 2147483648
        %v3303 = vor.u32 1.1754944e-38, %v3302
        %v3304 = vsel %vm3301, %v3303, %v3299
        %v3305 = vmul.f32 1.0, %v3304
        %v3306 = vtanh.pop %v3247
        %v3307 = vmul.f32 %v3290, 0.0
        %v3308 = vmul.f32 %v3275, %v3306
        %v3309 = vadd.f32 %v3307, %v3308
        %v3310 = vtanh.pop %v3309
        %v3311 = vmul.f32 %v3305, %v3310
        %3312 = vmatpush.msra.mxu0 %v584
        %3313 = vmatpush.msra.mxu0 %v580
        %3314 = vmatpush.msra.mxu0 %v576
        %3315 = vmatpush.msra.mxu0 %v572
        %3316 = vmatpush.msra.mxu0 %v568
        %3317 = vmatpush.msra.mxu0 %v564
        %3318 = vmatpush.msra.mxu0 %v560
        %3319 = vmatpush.msra.mxu0 %v556
        %3320 = vmatpush.msra.mxu0 %v552
        %3321 = vmatpush.msra.mxu0 %v548
        %3322 = vmatpush.msra.mxu0 %v544
        %3323 = vmatpush.msra.mxu0 %v540
        %3324 = vmatpush.msra.mxu0 %v536
        %3325 = vmatpush.msra.mxu0 %v532
        %3326 = vmatpush.msra.mxu0 %v528
        %3327 = vmatpush.msra.mxu0 %v524
        %3328 = vmatmul.f32.gmra.mxu0 %v520
        %v3329 = vpop.f32.mrf.mxu0
        %v3330 = vadd.f32 %v654, %v3329
        %3331 = vdwg.mxu0
        %3332 = vmatpush.msra.mxu0 %v648
        %3333 = vmatpush.msra.mxu0 %v644
        %3334 = vmatpush.msra.mxu0 %v640
        %3335 = vmatpush.msra.mxu0 %v636
        %3336 = vmatpush.msra.mxu0 %v632
        %3337 = vmatpush.msra.mxu0 %v628
        %3338 = vmatpush.msra.mxu0 %v624
        %3339 = vmatpush.msra.mxu0 %v620
        %3340 = vmatpush.msra.mxu0 %v616
        %3341 = vmatpush.msra.mxu0 %v612
        %3342 = vmatpush.msra.mxu0 %v608
        %3343 = vmatpush.msra.mxu0 %v604
        %3344 = vmatpush.msra.mxu0 %v600
        %3345 = vmatpush.msra.mxu0 %v596
        %3346 = vmatpush.msra.mxu0 %v592
        %3347 = vmatpush.msra.mxu0 %v588
        %3348 = vmatmul.f32.gmra.mxu0 %v2502
        %v3349 = vpop.f32.mrf.mxu0
        %v3350 = vadd.f32 %v3330, %v3349
        %3351 = vdwg.mxu0
        %3352 = vmatpush.msra.mxu0 %v585
        %3353 = vmatpush.msra.mxu0 %v581
        %3354 = vmatpush.msra.mxu0 %v577
        %3355 = vmatpush.msra.mxu0 %v573
        %3356 = vmatpush.msra.mxu0 %v569
        %3357 = vmatpush.msra.mxu0 %v565
        %3358 = vmatpush.msra.mxu0 %v561
        %3359 = vmatpush.msra.mxu0 %v557
        %3360 = vmatpush.msra.mxu0 %v553
        %3361 = vmatpush.msra.mxu0 %v549
        %3362 = vmatpush.msra.mxu0 %v545
        %3363 = vmatpush.msra.mxu0 %v541
        %3364 = vmatpush.msra.mxu0 %v537
        %3365 = vmatpush.msra.mxu0 %v533
        %3366 = vmatpush.msra.mxu0 %v529
        %3367 = vmatpush.msra.mxu0 %v525
        %3368 = vmatmul.f32.gmra.mxu0 %v520
        %v3369 = vpop.f32.mrf.mxu0
        %v3370 = vadd.f32 %v655, %v3369
        %3371 = vdwg.mxu0
        %3372 = vmatpush.msra.mxu0 %v649
        %3373 = vmatpush.msra.mxu0 %v645
        %3374 = vmatpush.msra.mxu0 %v641
        %3375 = vmatpush.msra.mxu0 %v637
        %3376 = vmatpush.msra.mxu0 %v633
        %3377 = vmatpush.msra.mxu0 %v629
        %3378 = vmatpush.msra.mxu0 %v625
        %3379 = vmatpush.msra.mxu0 %v621
        %3380 = vmatpush.msra.mxu0 %v617
        %3381 = vmatpush.msra.mxu0 %v613
        %3382 = vmatpush.msra.mxu0 %v609
        %3383 = vmatpush.msra.mxu0 %v605
        %3384 = vmatpush.msra.mxu0 %v601
        %3385 = vmatpush.msra.mxu0 %v597
        %3386 = vmatpush.msra.mxu0 %v593
        %3387 = vmatpush.msra.mxu0 %v589
        %3388 = vmatmul.f32.gmra.mxu0 %v2502
        %v3389 = vpop.f32.mrf.mxu0
        %v3390 = vadd.f32 %v3370, %v3389
        %3391 = vdwg.mxu0
        %3392 = vmatpush.msra.mxu0 %v586
        %3393 = vmatpush.msra.mxu0 %v582
        %3394 = vmatpush.msra.mxu0 %v578
        %3395 = vmatpush.msra.mxu0 %v574
        %3396 = vmatpush.msra.mxu0 %v570
        %3397 = vmatpush.msra.mxu0 %v566
        %3398 = vmatpush.msra.mxu0 %v562
        %3399 = vmatpush.msra.mxu0 %v558
        %3400 = vmatpush.msra.mxu0 %v554
        %3401 = vmatpush.msra.mxu0 %v550
        %3402 = vmatpush.msra.mxu0 %v546
        %3403 = vmatpush.msra.mxu0 %v542
        %3404 = vmatpush.msra.mxu0 %v538
        %3405 = vmatpush.msra.mxu0 %v534
        %3406 = vmatpush.msra.mxu0 %v530
        %3407 = vmatpush.msra.mxu0 %v526
        %3408 = vmatmul.f32.gmra.mxu0 %v520
        %v3409 = vpop.f32.mrf.mxu0
        %v3410 = vadd.f32 %v656, %v3409
        %3411 = vdwg.mxu0
        %3412 = vmatpush.msra.mxu0 %v650
        %3413 = vmatpush.msra.mxu0 %v646
        %3414 = vmatpush.msra.mxu0 %v642
        %3415 = vmatpush.msra.mxu0 %v638
        %3416 = vmatpush.msra.mxu0 %v634
        %3417 = vmatpush.msra.mxu0 %v630
        %3418 = vmatpush.msra.mxu0 %v626
        %3419 = vmatpush.msra.mxu0 %v622
        %3420 = vmatpush.msra.mxu0 %v618
        %3421 = vmatpush.msra.mxu0 %v614
        %3422 = vmatpush.msra.mxu0 %v610
        %3423 = vmatpush.msra.mxu0 %v606
        %3424 = vmatpush.msra.mxu0 %v602
        %3425 = vmatpush.msra.mxu0 %v598
        %3426 = vmatpush.msra.mxu0 %v594
        %3427 = vmatpush.msra.mxu0 %v590
        %3428 = vmatmul.f32.gmra.mxu0 %v2502
        %v3429 = vpop.f32.mrf.mxu0
        %v3430 = vadd.f32 %v3410, %v3429
        %3431 = vdwg.mxu0
        %3432 = vmatpush.msra.mxu0 %v587
        %3433 = vmatpush.msra.mxu0 %v583
        %3434 = vmatpush.msra.mxu0 %v579
        %3435 = vmatpush.msra.mxu0 %v575
        %3436 = vmatpush.msra.mxu0 %v571
        %3437 = vmatpush.msra.mxu0 %v567
        %3438 = vmatpush.msra.mxu0 %v563
        %3439 = vmatpush.msra.mxu0 %v559
        %3440 = vmatpush.msra.mxu0 %v555
        %3441 = vmatpush.msra.mxu0 %v551
        %3442 = vmatpush.msra.mxu0 %v547
        %3443 = vmatpush.msra.mxu0 %v543
        %3444 = vmatpush.msra.mxu0 %v539
        %3445 = vmatpush.msra.mxu0 %v535
        %3446 = vmatpush.msra.mxu0 %v531
        %3447 = vmatpush.msra.mxu0 %v527
        %3448 = vmatmul.f32.gmra.mxu0 %v520
        %v3449 = vpop.f32.mrf.mxu0
        %v3450 = vadd.f32 %v657, %v3449
        %3451 = vdwg.mxu0
        %3452 = vmatpush.msra.mxu0 %v651
        %3453 = vmatpush.msra.mxu0 %v647
        %3454 = vmatpush.msra.mxu0 %v643
        %3455 = vmatpush.msra.mxu0 %v639
        %3456 = vmatpush.msra.mxu0 %v635
        %3457 = vmatpush.msra.mxu0 %v631
        %3458 = vmatpush.msra.mxu0 %v627
        %3459 = vmatpush.msra.mxu0 %v623
        %3460 = vmatpush.msra.mxu0 %v619
        %3461 = vmatpush.msra.mxu0 %v615
        %3462 = vmatpush.msra.mxu0 %v611
        %3463 = vmatpush.msra.mxu0 %v607
        %3464 = vmatpush.msra.mxu0 %v603
        %3465 = vmatpush.msra.mxu0 %v599
        %3466 = vmatpush.msra.mxu0 %v595
        %3467 = vmatpush.msra.mxu0 %v591
        %3468 = vmatmul.f32.gmra.mxu0 %v2502
        %v3469 = vpop.f32.mrf.mxu0
        %v3470 = vadd.f32 %v3450, %v3469
        %3471 = vdwg.mxu0
        %v3472 = vxor.u32 %v3350, 2147483648
        %v3473 = vxor.u32 %v3390, 2147483648
        %v3474 = vxor.u32 %v3430, 2147483648
        %v3475 = vmul.f32 %v3472, 1.442695
        %v3476 = vpow.pop %v3475
        %v3477 = vmul.f32 %v3473, 1.442695
        %v3478 = vpow.pop %v3477
        %v3479 = vmul.f32 %v3474, 1.442695
        %v3480 = vpow.pop %v3479
        %v3481 = vadd.f32 %v3476, 1.0
        %v3482 = vadd.f32 %v3478, 1.0
        %v3483 = vadd.f32 %v3480, 1.0
        %v3484 = vrcp.pop %v3481
        %v3485 = vmul.f32 %v3481, %v3484
        %v3486 = vsub.f32 1.0, %v3485
        %v3487 = vmul.f32 %v3484, %v3486
        %v3488 = vadd.f32 %v3484, %v3487
        %vm3489 = vweird.f32 %v3481
        %vm3490 = vweird.f32 %v3484
        %vm3491 = vmor %vm3489, %vm3490
        %v3492 = vsel %vm3491, %v3484, %v3488
        %v3493 = vand.u32 2147483647, %v3481
        %vm3494 = vcmp.eq.f32.partialorder %v3493, 8.507059e+37
        %v3495 = vand.u32 %v3481, 2147483648
        %v3496 = vor.u32 1.1754944e-38, %v3495
        %v3497 = vsel %vm3494, %v3496, %v3492
        %v3498 = vmul.f32 1.0, %v3497
        %v3499 = vrcp.pop %v3482
        %v3500 = vmul.f32 %v3482, %v3499
        %v3501 = vsub.f32 1.0, %v3500
        %v3502 = vmul.f32 %v3499, %v3501
        %v3503 = vadd.f32 %v3499, %v3502
        %vm3504 = vweird.f32 %v3482
        %vm3505 = vweird.f32 %v3499
        %vm3506 = vmor %vm3504, %vm3505
        %v3507 = vsel %vm3506, %v3499, %v3503
        %v3508 = vand.u32 2147483647, %v3482
        %vm3509 = vcmp.eq.f32.partialorder %v3508, 8.507059e+37
        %v3510 = vand.u32 %v3482, 2147483648
        %v3511 = vor.u32 1.1754944e-38, %v3510
        %v3512 = vsel %vm3509, %v3511, %v3507
        %v3513 = vmul.f32 1.0, %v3512
        %v3514 = vrcp.pop %v3483
        %v3515 = vmul.f32 %v3483, %v3514
        %v3516 = vsub.f32 1.0, %v3515
        %v3517 = vmul.f32 %v3514, %v3516
        %v3518 = vadd.f32 %v3514, %v3517
        %vm3519 = vweird.f32 %v3483
        %vm3520 = vweird.f32 %v3514
        %vm3521 = vmor %vm3519, %vm3520
        %v3522 = vsel %vm3521, %v3514, %v3518
        %v3523 = vand.u32 2147483647, %v3483
        %vm3524 = vcmp.eq.f32.partialorder %v3523, 8.507059e+37
        %v3525 = vand.u32 %v3483, 2147483648
        %v3526 = vor.u32 1.1754944e-38, %v3525
        %v3527 = vsel %vm3524, %v3526, %v3522
        %v3528 = vmul.f32 1.0, %v3527
        %v3529 = vtanh.pop %v3470
        %v3530 = vmul.f32 %v3513, %v2500
        %v3531 = vmul.f32 %v3498, %v3529
        %v3532 = vadd.f32 %v3530, %v3531
        %v3533 = vtanh.pop %v3532
        %v3534 = vmul.f32 %v3528, %v3533
        %3535 = vmatpush.msra.mxu0 %v1169
        %3536 = vmatpush.msra.mxu0 %v1165
        %3537 = vmatpush.msra.mxu0 %v1161
        %3538 = vmatpush.msra.mxu0 %v1157
        %3539 = vmatpush.msra.mxu0 %v1153
        %3540 = vmatpush.msra.mxu0 %v1149
        %3541 = vmatpush.msra.mxu0 %v1145
        %3542 = vmatpush.msra.mxu0 %v1141
        %3543 = vmatpush.msra.mxu0 %v1137
        %3544 = vmatpush.msra.mxu0 %v1133
        %3545 = vmatpush.msra.mxu0 %v1129
        %3546 = vmatpush.msra.mxu0 %v1125
        %3547 = vmatpush.msra.mxu0 %v1121
        %3548 = vmatpush.msra.mxu0 %v1117
        %3549 = vmatpush.msra.mxu0 %v1113
        %3550 = vmatpush.msra.mxu0 %v1109
        %3551 = vmatmul.f32.gmra.mxu0 %v2502
        %v3552 = vpop.f32.mrf.mxu0
        %v3553 = vadd.f32 %v1240, %v3552
        %3554 = vdwg.mxu0
        %3555 = vmatpush.msra.mxu0 %v1233
        %3556 = vmatpush.msra.mxu0 %v1229
        %3557 = vmatpush.msra.mxu0 %v1225
        %3558 = vmatpush.msra.mxu0 %v1221
        %3559 = vmatpush.msra.mxu0 %v1217
        %3560 = vmatpush.msra.mxu0 %v1213
        %3561 = vmatpush.msra.mxu0 %v1209
        %3562 = vmatpush.msra.mxu0 %v1205
        %3563 = vmatpush.msra.mxu0 %v1201
        %3564 = vmatpush.msra.mxu0 %v1197
        %3565 = vmatpush.msra.mxu0 %v1193
        %3566 = vmatpush.msra.mxu0 %v1189
        %3567 = vmatpush.msra.mxu0 %v1185
        %3568 = vmatpush.msra.mxu0 %v1181
        %3569 = vmatpush.msra.mxu0 %v1177
        %3570 = vmatpush.msra.mxu0 %v1173
        %3571 = vmatmul.f32.gmra.mxu0 %v2725
        %v3572 = vpop.f32.mrf.mxu0
        %v3573 = vadd.f32 %v3553, %v3572
        %3574 = vdwg.mxu0
        %3575 = vmatpush.msra.mxu0 %v1170
        %3576 = vmatpush.msra.mxu0 %v1166
        %3577 = vmatpush.msra.mxu0 %v1162
        %3578 = vmatpush.msra.mxu0 %v1158
        %3579 = vmatpush.msra.mxu0 %v1154
        %3580 = vmatpush.msra.mxu0 %v1150
        %3581 = vmatpush.msra.mxu0 %v1146
        %3582 = vmatpush.msra.mxu0 %v1142
        %3583 = vmatpush.msra.mxu0 %v1138
        %3584 = vmatpush.msra.mxu0 %v1134
        %3585 = vmatpush.msra.mxu0 %v1130
        %3586 = vmatpush.msra.mxu0 %v1126
        %3587 = vmatpush.msra.mxu0 %v1122
        %3588 = vmatpush.msra.mxu0 %v1118
        %3589 = vmatpush.msra.mxu0 %v1114
        %3590 = vmatpush.msra.mxu0 %v1110
        %3591 = vmatmul.f32.gmra.mxu0 %v2502
        %v3592 = vpop.f32.mrf.mxu0
        %v3593 = vadd.f32 %v1241, %v3592
        %3594 = vdwg.mxu0
        %3595 = vmatpush.msra.mxu0 %v1234
        %3596 = vmatpush.msra.mxu0 %v1230
        %3597 = vmatpush.msra.mxu0 %v1226
        %3598 = vmatpush.msra.mxu0 %v1222
        %3599 = vmatpush.msra.mxu0 %v1218
        %3600 = vmatpush.msra.mxu0 %v1214
        %3601 = vmatpush.msra.mxu0 %v1210
        %3602 = vmatpush.msra.mxu0 %v1206
        %3603 = vmatpush.msra.mxu0 %v1202
        %3604 = vmatpush.msra.mxu0 %v1198
        %3605 = vmatpush.msra.mxu0 %v1194
        %3606 = vmatpush.msra.mxu0 %v1190
        %3607 = vmatpush.msra.mxu0 %v1186
        %3608 = vmatpush.msra.mxu0 %v1182
        %3609 = vmatpush.msra.mxu0 %v1178
        %3610 = vmatpush.msra.mxu0 %v1174
        %3611 = vmatmul.f32.gmra.mxu0 %v2725
        %v3612 = vpop.f32.mrf.mxu0
        %v3613 = vadd.f32 %v3593, %v3612
        %3614 = vdwg.mxu0
        %3615 = vmatpush.msra.mxu0 %v1171
        %3616 = vmatpush.msra.mxu0 %v1167
        %3617 = vmatpush.msra.mxu0 %v1163
        %3618 = vmatpush.msra.mxu0 %v1159
        %3619 = vmatpush.msra.mxu0 %v1155
        %3620 = vmatpush.msra.mxu0 %v1151
        %3621 = vmatpush.msra.mxu0 %v1147
        %3622 = vmatpush.msra.mxu0 %v1143
        %3623 = vmatpush.msra.mxu0 %v1139
        %3624 = vmatpush.msra.mxu0 %v1135
        %3625 = vmatpush.msra.mxu0 %v1131
        %3626 = vmatpush.msra.mxu0 %v1127
        %3627 = vmatpush.msra.mxu0 %v1123
        %3628 = vmatpush.msra.mxu0 %v1119
        %3629 = vmatpush.msra.mxu0 %v1115
        %3630 = vmatpush.msra.mxu0 %v1111
        %3631 = vmatmul.f32.gmra.mxu0 %v2502
        %v3632 = vpop.f32.mrf.mxu0
        %v3633 = vadd.f32 %v1242, %v3632
        %3634 = vdwg.mxu0
        %3635 = vmatpush.msra.mxu0 %v1235
        %3636 = vmatpush.msra.mxu0 %v1231
        %3637 = vmatpush.msra.mxu0 %v1227
        %3638 = vmatpush.msra.mxu0 %v1223
        %3639 = vmatpush.msra.mxu0 %v1219
        %3640 = vmatpush.msra.mxu0 %v1215
        %3641 = vmatpush.msra.mxu0 %v1211
        %3642 = vmatpush.msra.mxu0 %v1207
        %3643 = vmatpush.msra.mxu0 %v1203
        %3644 = vmatpush.msra.mxu0 %v1199
        %3645 = vmatpush.msra.mxu0 %v1195
        %3646 = vmatpush.msra.mxu0 %v1191
        %3647 = vmatpush.msra.mxu0 %v1187
        %3648 = vmatpush.msra.mxu0 %v1183
        %3649 = vmatpush.msra.mxu0 %v1179
        %3650 = vmatpush.msra.mxu0 %v1175
        %3651 = vmatmul.f32.gmra.mxu0 %v2725
        %v3652 = vpop.f32.mrf.mxu0
        %v3653 = vadd.f32 %v3633, %v3652
        %3654 = vdwg.mxu0
        %3655 = vmatpush.msra.mxu0 %v1172
        %3656 = vmatpush.msra.mxu0 %v1168
        %3657 = vmatpush.msra.mxu0 %v1164
        %3658 = vmatpush.msra.mxu0 %v1160
        %3659 = vmatpush.msra.mxu0 %v1156
        %3660 = vmatpush.msra.mxu0 %v1152
        %3661 = vmatpush.msra.mxu0 %v1148
        %3662 = vmatpush.msra.mxu0 %v1144
        %3663 = vmatpush.msra.mxu0 %v1140
        %3664 = vmatpush.msra.mxu0 %v1136
        %3665 = vmatpush.msra.mxu0 %v1132
        %3666 = vmatpush.msra.mxu0 %v1128
        %3667 = vmatpush.msra.mxu0 %v1124
        %3668 = vmatpush.msra.mxu0 %v1120
        %3669 = vmatpush.msra.mxu0 %v1116
        %3670 = vmatpush.msra.mxu0 %v1112
        %3671 = vmatmul.f32.gmra.mxu0 %v2502
        %v3672 = vpop.f32.mrf.mxu0
        %v3673 = vadd.f32 %v1243, %v3672
        %3674 = vdwg.mxu0
        %3675 = vmatpush.msra.mxu0 %v1236
        %3676 = vmatpush.msra.mxu0 %v1232
        %3677 = vmatpush.msra.mxu0 %v1228
        %3678 = vmatpush.msra.mxu0 %v1224
        %3679 = vmatpush.msra.mxu0 %v1220
        %3680 = vmatpush.msra.mxu0 %v1216
        %3681 = vmatpush.msra.mxu0 %v1212
        %3682 = vmatpush.msra.mxu0 %v1208
        %3683 = vmatpush.msra.mxu0 %v1204
        %3684 = vmatpush.msra.mxu0 %v1200
        %3685 = vmatpush.msra.mxu0 %v1196
        %3686 = vmatpush.msra.mxu0 %v1192
        %3687 = vmatpush.msra.mxu0 %v1188
        %3688 = vmatpush.msra.mxu0 %v1184
        %3689 = vmatpush.msra.mxu0 %v1180
        %3690 = vmatpush.msra.mxu0 %v1176
        %3691 = vmatmul.f32.gmra.mxu0 %v2725
        %v3692 = vpop.f32.mrf.mxu0
        %v3693 = vadd.f32 %v3673, %v3692
        %3694 = vdwg.mxu0
        %v3695 = vxor.u32 %v3573, 2147483648
        %v3696 = vxor.u32 %v3613, 2147483648
        %v3697 = vxor.u32 %v3653, 2147483648
        %v3698 = vmul.f32 %v3695, 1.442695
        %v3699 = vpow.pop %v3698
        %v3700 = vmul.f32 %v3696, 1.442695
        %v3701 = vpow.pop %v3700
        %v3702 = vmul.f32 %v3697, 1.442695
        %v3703 = vpow.pop %v3702
        %v3704 = vadd.f32 %v3699, 1.0
        %v3705 = vadd.f32 %v3701, 1.0
        %v3706 = vadd.f32 %v3703, 1.0
        %v3707 = vrcp.pop %v3704
        %v3708 = vmul.f32 %v3704, %v3707
        %v3709 = vsub.f32 1.0, %v3708
        %v3710 = vmul.f32 %v3707, %v3709
        %v3711 = vadd.f32 %v3707, %v3710
        %vm3712 = vweird.f32 %v3704
        %vm3713 = vweird.f32 %v3707
        %vm3714 = vmor %vm3712, %vm3713
        %v3715 = vsel %vm3714, %v3707, %v3711
        %v3716 = vand.u32 2147483647, %v3704
        %vm3717 = vcmp.eq.f32.partialorder %v3716, 8.507059e+37
        %v3718 = vand.u32 %v3704, 2147483648
        %v3719 = vor.u32 1.1754944e-38, %v3718
        %v3720 = vsel %vm3717, %v3719, %v3715
        %v3721 = vmul.f32 1.0, %v3720
        %v3722 = vrcp.pop %v3705
        %v3723 = vmul.f32 %v3705, %v3722
        %v3724 = vsub.f32 1.0, %v3723
        %v3725 = vmul.f32 %v3722, %v3724
        %v3726 = vadd.f32 %v3722, %v3725
        %vm3727 = vweird.f32 %v3705
        %vm3728 = vweird.f32 %v3722
        %vm3729 = vmor %vm3727, %vm3728
        %v3730 = vsel %vm3729, %v3722, %v3726
        %v3731 = vand.u32 2147483647, %v3705
        %vm3732 = vcmp.eq.f32.partialorder %v3731, 8.507059e+37
        %v3733 = vand.u32 %v3705, 2147483648
        %v3734 = vor.u32 1.1754944e-38, %v3733
        %v3735 = vsel %vm3732, %v3734, %v3730
        %v3736 = vmul.f32 1.0, %v3735
        %v3737 = vrcp.pop %v3706
        %v3738 = vmul.f32 %v3706, %v3737
        %v3739 = vsub.f32 1.0, %v3738
        %v3740 = vmul.f32 %v3737, %v3739
        %v3741 = vadd.f32 %v3737, %v3740
        %vm3742 = vweird.f32 %v3706
        %vm3743 = vweird.f32 %v3737
        %vm3744 = vmor %vm3742, %vm3743
        %v3745 = vsel %vm3744, %v3737, %v3741
        %v3746 = vand.u32 2147483647, %v3706
        %vm3747 = vcmp.eq.f32.partialorder %v3746, 8.507059e+37
        %v3748 = vand.u32 %v3706, 2147483648
        %v3749 = vor.u32 1.1754944e-38, %v3748
        %v3750 = vsel %vm3747, %v3749, %v3745
        %v3751 = vmul.f32 1.0, %v3750
        %v3752 = vtanh.pop %v3693
        %v3753 = vmul.f32 %v3736, %v2723
        %v3754 = vmul.f32 %v3721, %v3752
        %v3755 = vadd.f32 %v3753, %v3754
        %v3756 = vtanh.pop %v3755
        %v3757 = vmul.f32 %v3751, %v3756
        %3758 = vmatpush.msra.mxu0 %v1978
        %3759 = vmatpush.msra.mxu0 %v1974
        %3760 = vmatpush.msra.mxu0 %v1970
        %3761 = vmatpush.msra.mxu0 %v1966
        %3762 = vmatpush.msra.mxu0 %v1962
        %3763 = vmatpush.msra.mxu0 %v1958
        %3764 = vmatpush.msra.mxu0 %v1954
        %3765 = vmatpush.msra.mxu0 %v1950
        %3766 = vmatpush.msra.mxu0 %v1946
        %3767 = vmatpush.msra.mxu0 %v1942
        %3768 = vmatpush.msra.mxu0 %v1938
        %3769 = vmatpush.msra.mxu0 %v1934
        %3770 = vmatpush.msra.mxu0 %v1930
        %3771 = vmatpush.msra.mxu0 %v1926
        %3772 = vmatpush.msra.mxu0 %v1922
        %3773 = vmatpush.msra.mxu0 %v1918
        %3774 = vmatmul.f32.gmra.mxu0 %v2725
        %v3775 = vpop.f32.mrf.mxu0
        %v3776 = vadd.f32 %v2049, %v3775
        %3777 = vdwg.mxu0
        %3778 = vmatpush.msra.mxu0 %v2042
        %3779 = vmatpush.msra.mxu0 %v2038
        %3780 = vmatpush.msra.mxu0 %v2034
        %3781 = vmatpush.msra.mxu0 %v2030
        %3782 = vmatpush.msra.mxu0 %v2026
        %3783 = vmatpush.msra.mxu0 %v2022
        %3784 = vmatpush.msra.mxu0 %v2018
        %3785 = vmatpush.msra.mxu0 %v2014
        %3786 = vmatpush.msra.mxu0 %v2010
        %3787 = vmatpush.msra.mxu0 %v2006
        %3788 = vmatpush.msra.mxu0 %v2002
        %3789 = vmatpush.msra.mxu0 %v1998
        %3790 = vmatpush.msra.mxu0 %v1994
        %3791 = vmatpush.msra.mxu0 %v1990
        %3792 = vmatpush.msra.mxu0 %v1986
        %3793 = vmatpush.msra.mxu0 %v1982
        %3794 = vmatmul.f32.gmra.mxu0 %v2948
        %v3795 = vpop.f32.mrf.mxu0
        %v3796 = vadd.f32 %v3776, %v3795
        %3797 = vdwg.mxu0
        %3798 = vmatpush.msra.mxu0 %v1979
        %3799 = vmatpush.msra.mxu0 %v1975
        %3800 = vmatpush.msra.mxu0 %v1971
        %3801 = vmatpush.msra.mxu0 %v1967
        %3802 = vmatpush.msra.mxu0 %v1963
        %3803 = vmatpush.msra.mxu0 %v1959
        %3804 = vmatpush.msra.mxu0 %v1955
        %3805 = vmatpush.msra.mxu0 %v1951
        %3806 = vmatpush.msra.mxu0 %v1947
        %3807 = vmatpush.msra.mxu0 %v1943
        %3808 = vmatpush.msra.mxu0 %v1939
        %3809 = vmatpush.msra.mxu0 %v1935
        %3810 = vmatpush.msra.mxu0 %v1931
        %3811 = vmatpush.msra.mxu0 %v1927
        %3812 = vmatpush.msra.mxu0 %v1923
        %3813 = vmatpush.msra.mxu0 %v1919
        %3814 = vmatmul.f32.gmra.mxu0 %v2725
        %v3815 = vpop.f32.mrf.mxu0
        %v3816 = vadd.f32 %v2050, %v3815
        %3817 = vdwg.mxu0
        %3818 = vmatpush.msra.mxu0 %v2043
        %3819 = vmatpush.msra.mxu0 %v2039
        %3820 = vmatpush.msra.mxu0 %v2035
        %3821 = vmatpush.msra.mxu0 %v2031
        %3822 = vmatpush.msra.mxu0 %v2027
        %3823 = vmatpush.msra.mxu0 %v2023
        %3824 = vmatpush.msra.mxu0 %v2019
        %3825 = vmatpush.msra.mxu0 %v2015
        %3826 = vmatpush.msra.mxu0 %v2011
        %3827 = vmatpush.msra.mxu0 %v2007
        %3828 = vmatpush.msra.mxu0 %v2003
        %3829 = vmatpush.msra.mxu0 %v1999
        %3830 = vmatpush.msra.mxu0 %v1995
        %3831 = vmatpush.msra.mxu0 %v1991
        %3832 = vmatpush.msra.mxu0 %v1987
        %3833 = vmatpush.msra.mxu0 %v1983
        %3834 = vmatmul.f32.gmra.mxu0 %v2948
        %v3835 = vpop.f32.mrf.mxu0
        %v3836 = vadd.f32 %v3816, %v3835
        %3837 = vdwg.mxu0
        %3838 = vmatpush.msra.mxu0 %v1980
        %3839 = vmatpush.msra.mxu0 %v1976
        %3840 = vmatpush.msra.mxu0 %v1972
        %3841 = vmatpush.msra.mxu0 %v1968
        %3842 = vmatpush.msra.mxu0 %v1964
        %3843 = vmatpush.msra.mxu0 %v1960
        %3844 = vmatpush.msra.mxu0 %v1956
        %3845 = vmatpush.msra.mxu0 %v1952
        %3846 = vmatpush.msra.mxu0 %v1948
        %3847 = vmatpush.msra.mxu0 %v1944
        %3848 = vmatpush.msra.mxu0 %v1940
        %3849 = vmatpush.msra.mxu0 %v1936
        %3850 = vmatpush.msra.mxu0 %v1932
        %3851 = vmatpush.msra.mxu0 %v1928
        %3852 = vmatpush.msra.mxu0 %v1924
        %3853 = vmatpush.msra.mxu0 %v1920
        %3854 = vmatmul.f32.gmra.mxu0 %v2725
        %v3855 = vpop.f32.mrf.mxu0
        %v3856 = vadd.f32 %v2051, %v3855
        %3857 = vdwg.mxu0
        %3858 = vmatpush.msra.mxu0 %v2044
        %3859 = vmatpush.msra.mxu0 %v2040
        %3860 = vmatpush.msra.mxu0 %v2036
        %3861 = vmatpush.msra.mxu0 %v2032
        %3862 = vmatpush.msra.mxu0 %v2028
        %3863 = vmatpush.msra.mxu0 %v2024
        %3864 = vmatpush.msra.mxu0 %v2020
        %3865 = vmatpush.msra.mxu0 %v2016
        %3866 = vmatpush.msra.mxu0 %v2012
        %3867 = vmatpush.msra.mxu0 %v2008
        %3868 = vmatpush.msra.mxu0 %v2004
        %3869 = vmatpush.msra.mxu0 %v2000
        %3870 = vmatpush.msra.mxu0 %v1996
        %3871 = vmatpush.msra.mxu0 %v1992
        %3872 = vmatpush.msra.mxu0 %v1988
        %3873 = vmatpush.msra.mxu0 %v1984
        %3874 = vmatmul.f32.gmra.mxu0 %v2948
        %v3875 = vpop.f32.mrf.mxu0
        %v3876 = vadd.f32 %v3856, %v3875
        %3877 = vdwg.mxu0
        %3878 = vmatpush.msra.mxu0 %v1981
        %3879 = vmatpush.msra.mxu0 %v1977
        %3880 = vmatpush.msra.mxu0 %v1973
        %3881 = vmatpush.msra.mxu0 %v1969
        %3882 = vmatpush.msra.mxu0 %v1965
        %3883 = vmatpush.msra.mxu0 %v1961
        %3884 = vmatpush.msra.mxu0 %v1957
        %3885 = vmatpush.msra.mxu0 %v1953
        %3886 = vmatpush.msra.mxu0 %v1949
        %3887 = vmatpush.msra.mxu0 %v1945
        %3888 = vmatpush.msra.mxu0 %v1941
        %3889 = vmatpush.msra.mxu0 %v1937
        %3890 = vmatpush.msra.mxu0 %v1933
        %3891 = vmatpush.msra.mxu0 %v1929
        %3892 = vmatpush.msra.mxu0 %v1925
        %3893 = vmatpush.msra.mxu0 %v1921
        %3894 = vmatmul.f32.gmra.mxu0 %v2725
        %v3895 = vpop.f32.mrf.mxu0
        %v3896 = vadd.f32 %v2052, %v3895
        %3897 = vdwg.mxu0
        %3898 = vmatpush.msra.mxu0 %v2045
        %3899 = vmatpush.msra.mxu0 %v2041
        %3900 = vmatpush.msra.mxu0 %v2037
        %3901 = vmatpush.msra.mxu0 %v2033
        %3902 = vmatpush.msra.mxu0 %v2029
        %3903 = vmatpush.msra.mxu0 %v2025
        %3904 = vmatpush.msra.mxu0 %v2021
        %3905 = vmatpush.msra.mxu0 %v2017
        %3906 = vmatpush.msra.mxu0 %v2013
        %3907 = vmatpush.msra.mxu0 %v2009
        %3908 = vmatpush.msra.mxu0 %v2005
        %3909 = vmatpush.msra.mxu0 %v2001
        %3910 = vmatpush.msra.mxu0 %v1997
        %3911 = vmatpush.msra.mxu0 %v1993
        %3912 = vmatpush.msra.mxu0 %v1989
        %3913 = vmatpush.msra.mxu0 %v1985
        %3914 = vmatmul.f32.gmra.mxu0 %v2948
        %v3915 = vpop.f32.mrf.mxu0
        %v3916 = vadd.f32 %v3896, %v3915
        %3917 = vdwg.mxu0
        %v3918 = vxor.u32 %v3796, 2147483648
        %v3919 = vxor.u32 %v3836, 2147483648
        %v3920 = vxor.u32 %v3876, 2147483648
        %v3921 = vmul.f32 %v3918, 1.442695
        %v3922 = vpow.pop %v3921
        %v3923 = vmul.f32 %v3919, 1.442695
        %v3924 = vpow.pop %v3923
        %v3925 = vmul.f32 %v3920, 1.442695
        %v3926 = vpow.pop %v3925
        %v3927 = vadd.f32 %v3922, 1.0
        %v3928 = vadd.f32 %v3924, 1.0
        %v3929 = vadd.f32 %v3926, 1.0
        %v3930 = vrcp.pop %v3927
        %v3931 = vmul.f32 %v3927, %v3930
        %v3932 = vsub.f32 1.0, %v3931
        %v3933 = vmul.f32 %v3930, %v3932
        %v3934 = vadd.f32 %v3930, %v3933
        %vm3935 = vweird.f32 %v3927
        %vm3936 = vweird.f32 %v3930
        %vm3937 = vmor %vm3935, %vm3936
        %v3938 = vsel %vm3937, %v3930, %v3934
        %v3939 = vand.u32 2147483647, %v3927
        %vm3940 = vcmp.eq.f32.partialorder %v3939, 8.507059e+37
        %v3941 = vand.u32 %v3927, 2147483648
        %v3942 = vor.u32 1.1754944e-38, %v3941
        %v3943 = vsel %vm3940, %v3942, %v3938
        %v3944 = vmul.f32 1.0, %v3943
        %v3945 = vrcp.pop %v3928
        %v3946 = vmul.f32 %v3928, %v3945
        %v3947 = vsub.f32 1.0, %v3946
        %v3948 = vmul.f32 %v3945, %v3947
        %v3949 = vadd.f32 %v3945, %v3948
        %vm3950 = vweird.f32 %v3928
        %vm3951 = vweird.f32 %v3945
        %vm3952 = vmor %vm3950, %vm3951
        %v3953 = vsel %vm3952, %v3945, %v3949
        %v3954 = vand.u32 2147483647, %v3928
        %vm3955 = vcmp.eq.f32.partialorder %v3954, 8.507059e+37
        %v3956 = vand.u32 %v3928, 2147483648
        %v3957 = vor.u32 1.1754944e-38, %v3956
        %v3958 = vsel %vm3955, %v3957, %v3953
        %v3959 = vmul.f32 1.0, %v3958
        %v3960 = vrcp.pop %v3929
        %v3961 = vmul.f32 %v3929, %v3960
        %v3962 = vsub.f32 1.0, %v3961
        %v3963 = vmul.f32 %v3960, %v3962
        %v3964 = vadd.f32 %v3960, %v3963
        %vm3965 = vweird.f32 %v3929
        %vm3966 = vweird.f32 %v3960
        %vm3967 = vmor %vm3965, %vm3966
        %v3968 = vsel %vm3967, %v3960, %v3964
        %v3969 = vand.u32 2147483647, %v3929
        %vm3970 = vcmp.eq.f32.partialorder %v3969, 8.507059e+37
        %v3971 = vand.u32 %v3929, 2147483648
        %v3972 = vor.u32 1.1754944e-38, %v3971
        %v3973 = vsel %vm3970, %v3972, %v3968
        %v3974 = vmul.f32 1.0, %v3973
        %v3975 = vtanh.pop %v3916
        %v3976 = vmul.f32 %v3959, %v2946
        %v3977 = vmul.f32 %v3944, %v3975
        %v3978 = vadd.f32 %v3976, %v3977
        %v3979 = vtanh.pop %v3978
        %v3980 = vmul.f32 %v3974, %v3979
        %3981 = vmatpush.msra.mxu0 %v3010
        %3982 = vmatpush.msra.mxu0 %v3006
        %3983 = vmatpush.msra.mxu0 %v3002
        %3984 = vmatpush.msra.mxu0 %v2998
        %3985 = vmatpush.msra.mxu0 %v2994
        %3986 = vmatpush.msra.mxu0 %v2990
        %3987 = vmatpush.msra.mxu0 %v2986
        %3988 = vmatpush.msra.mxu0 %v2982
        %3989 = vmatpush.msra.mxu0 %v2978
        %3990 = vmatpush.msra.mxu0 %v2974
        %3991 = vmatpush.msra.mxu0 %v2970
        %3992 = vmatpush.msra.mxu0 %v2966
        %3993 = vmatpush.msra.mxu0 %v2962
        %3994 = vmatpush.msra.mxu0 %v2958
        %3995 = vmatpush.msra.mxu0 %v2954
        %3996 = vmatpush.msra.mxu0 %v2950
        %3997 = vmatmul.f32.gmra.mxu0 %v2948
        %v3998 = vpop.f32.mrf.mxu0
        %v3999 = vadd.f32 %v3081, %v3998
        %4000 = vdwg.mxu0
        %4001 = vmatpush.msra.mxu0 %v3074
        %4002 = vmatpush.msra.mxu0 %v3070
        %4003 = vmatpush.msra.mxu0 %v3066
        %4004 = vmatpush.msra.mxu0 %v3062
        %4005 = vmatpush.msra.mxu0 %v3058
        %4006 = vmatpush.msra.mxu0 %v3054
        %4007 = vmatpush.msra.mxu0 %v3050
        %4008 = vmatpush.msra.mxu0 %v3046
        %4009 = vmatpush.msra.mxu0 %v3042
        %4010 = vmatpush.msra.mxu0 %v3038
        %4011 = vmatpush.msra.mxu0 %v3034
        %4012 = vmatpush.msra.mxu0 %v3030
        %4013 = vmatpush.msra.mxu0 %v3026
        %4014 = vmatpush.msra.mxu0 %v3022
        %4015 = vmatpush.msra.mxu0 %v3018
        %4016 = vmatpush.msra.mxu0 %v3014
        %4017 = vmatmul.f32.gmra.mxu0 %v3311
        %v4018 = vpop.f32.mrf.mxu0
        %v4019 = vadd.f32 %v3999, %v4018
        %4020 = vdwg.mxu0
        %4021 = vmatpush.msra.mxu0 %v3011
        %4022 = vmatpush.msra.mxu0 %v3007
        %4023 = vmatpush.msra.mxu0 %v3003
        %4024 = vmatpush.msra.mxu0 %v2999
        %4025 = vmatpush.msra.mxu0 %v2995
        %4026 = vmatpush.msra.mxu0 %v2991
        %4027 = vmatpush.msra.mxu0 %v2987
        %4028 = vmatpush.msra.mxu0 %v2983
        %4029 = vmatpush.msra.mxu0 %v2979
        %4030 = vmatpush.msra.mxu0 %v2975
        %4031 = vmatpush.msra.mxu0 %v2971
        %4032 = vmatpush.msra.mxu0 %v2967
        %4033 = vmatpush.msra.mxu0 %v2963
        %4034 = vmatpush.msra.mxu0 %v2959
        %4035 = vmatpush.msra.mxu0 %v2955
        %4036 = vmatpush.msra.mxu0 %v2951
        %4037 = vmatmul.f32.gmra.mxu0 %v2948
        %v4038 = vpop.f32.mrf.mxu0
        %v4039 = vadd.f32 %v3082, %v4038
        %4040 = vdwg.mxu0
        %4041 = vmatpush.msra.mxu0 %v3075
        %4042 = vmatpush.msra.mxu0 %v3071
        %4043 = vmatpush.msra.mxu0 %v3067
        %4044 = vmatpush.msra.mxu0 %v3063
        %4045 = vmatpush.msra.mxu0 %v3059
        %4046 = vmatpush.msra.mxu0 %v3055
        %4047 = vmatpush.msra.mxu0 %v3051
        %4048 = vmatpush.msra.mxu0 %v3047
        %4049 = vmatpush.msra.mxu0 %v3043
        %4050 = vmatpush.msra.mxu0 %v3039
        %4051 = vmatpush.msra.mxu0 %v3035
        %4052 = vmatpush.msra.mxu0 %v3031
        %4053 = vmatpush.msra.mxu0 %v3027
        %4054 = vmatpush.msra.mxu0 %v3023
        %4055 = vmatpush.msra.mxu0 %v3019
        %4056 = vmatpush.msra.mxu0 %v3015
        %4057 = vmatmul.f32.gmra.mxu0 %v3311
        %v4058 = vpop.f32.mrf.mxu0
        %v4059 = vadd.f32 %v4039, %v4058
        %4060 = vdwg.mxu0
        %4061 = vmatpush.msra.mxu0 %v3012
        %4062 = vmatpush.msra.mxu0 %v3008
        %4063 = vmatpush.msra.mxu0 %v3004
        %4064 = vmatpush.msra.mxu0 %v3000
        %4065 = vmatpush.msra.mxu0 %v2996
        %4066 = vmatpush.msra.mxu0 %v2992
        %4067 = vmatpush.msra.mxu0 %v2988
        %4068 = vmatpush.msra.mxu0 %v2984
        %4069 = vmatpush.msra.mxu0 %v2980
        %4070 = vmatpush.msra.mxu0 %v2976
        %4071 = vmatpush.msra.mxu0 %v2972
        %4072 = vmatpush.msra.mxu0 %v2968
        %4073 = vmatpush.msra.mxu0 %v2964
        %4074 = vmatpush.msra.mxu0 %v2960
        %4075 = vmatpush.msra.mxu0 %v2956
        %4076 = vmatpush.msra.mxu0 %v2952
        %4077 = vmatmul.f32.gmra.mxu0 %v2948
        %v4078 = vpop.f32.mrf.mxu0
        %v4079 = vadd.f32 %v3083, %v4078
        %4080 = vdwg.mxu0
        %4081 = vmatpush.msra.mxu0 %v3076
        %4082 = vmatpush.msra.mxu0 %v3072
        %4083 = vmatpush.msra.mxu0 %v3068
        %4084 = vmatpush.msra.mxu0 %v3064
        %4085 = vmatpush.msra.mxu0 %v3060
        %4086 = vmatpush.msra.mxu0 %v3056
        %4087 = vmatpush.msra.mxu0 %v3052
        %4088 = vmatpush.msra.mxu0 %v3048
        %4089 = vmatpush.msra.mxu0 %v3044
        %4090 = vmatpush.msra.mxu0 %v3040
        %4091 = vmatpush.msra.mxu0 %v3036
        %4092 = vmatpush.msra.mxu0 %v3032
        %4093 = vmatpush.msra.mxu0 %v3028
        %4094 = vmatpush.msra.mxu0 %v3024
        %4095 = vmatpush.msra.mxu0 %v3020
        %4096 = vmatpush.msra.mxu0 %v3016
        %4097 = vmatmul.f32.gmra.mxu0 %v3311
        %v4098 = vpop.f32.mrf.mxu0
        %v4099 = vadd.f32 %v4079, %v4098
        %4100 = vdwg.mxu0
        %4101 = vmatpush.msra.mxu0 %v3013
        %4102 = vmatpush.msra.mxu0 %v3009
        %4103 = vmatpush.msra.mxu0 %v3005
        %4104 = vmatpush.msra.mxu0 %v3001
        %4105 = vmatpush.msra.mxu0 %v2997
        %4106 = vmatpush.msra.mxu0 %v2993
        %4107 = vmatpush.msra.mxu0 %v2989
        %4108 = vmatpush.msra.mxu0 %v2985
        %4109 = vmatpush.msra.mxu0 %v2981
        %4110 = vmatpush.msra.mxu0 %v2977
        %4111 = vmatpush.msra.mxu0 %v2973
        %4112 = vmatpush.msra.mxu0 %v2969
        %4113 = vmatpush.msra.mxu0 %v2965
        %4114 = vmatpush.msra.mxu0 %v2961
        %4115 = vmatpush.msra.mxu0 %v2957
        %4116 = vmatpush.msra.mxu0 %v2953
        %4117 = vmatmul.f32.gmra.mxu0 %v2948
        %v4118 = vpop.f32.mrf.mxu0
        %v4119 = vadd.f32 %v3084, %v4118
        %4120 = vdwg.mxu0
        %4121 = vmatpush.msra.mxu0 %v3077
        %4122 = vmatpush.msra.mxu0 %v3073
        %4123 = vmatpush.msra.mxu0 %v3069
        %4124 = vmatpush.msra.mxu0 %v3065
        %4125 = vmatpush.msra.mxu0 %v3061
        %4126 = vmatpush.msra.mxu0 %v3057
        %4127 = vmatpush.msra.mxu0 %v3053
        %4128 = vmatpush.msra.mxu0 %v3049
        %4129 = vmatpush.msra.mxu0 %v3045
        %4130 = vmatpush.msra.mxu0 %v3041
        %4131 = vmatpush.msra.mxu0 %v3037
        %4132 = vmatpush.msra.mxu0 %v3033
        %4133 = vmatpush.msra.mxu0 %v3029
        %4134 = vmatpush.msra.mxu0 %v3025
        %4135 = vmatpush.msra.mxu0 %v3021
        %4136 = vmatpush.msra.mxu0 %v3017
        %4137 = vmatmul.f32.gmra.mxu0 %v3311
        %v4138 = vpop.f32.mrf.mxu0
        %v4139 = vadd.f32 %v4119, %v4138
        %4140 = vdwg.mxu0
        %v4141 = vxor.u32 %v4019, 2147483648
        %v4142 = vxor.u32 %v4059, 2147483648
        %v4143 = vxor.u32 %v4099, 2147483648
        %v4144 = vmul.f32 %v4141, 1.442695
        %v4145 = vpow.pop %v4144
        %v4146 = vmul.f32 %v4142, 1.442695
        %v4147 = vpow.pop %v4146
        %v4148 = vmul.f32 %v4143, 1.442695
        %v4149 = vpow.pop %v4148
        %v4150 = vadd.f32 %v4145, 1.0
        %v4151 = vadd.f32 %v4147, 1.0
        %v4152 = vadd.f32 %v4149, 1.0
        %v4153 = vrcp.pop %v4150
        %v4154 = vmul.f32 %v4150, %v4153
        %v4155 = vsub.f32 1.0, %v4154
        %v4156 = vmul.f32 %v4153, %v4155
        %v4157 = vadd.f32 %v4153, %v4156
        %vm4158 = vweird.f32 %v4150
        %vm4159 = vweird.f32 %v4153
        %vm4160 = vmor %vm4158, %vm4159
        %v4161 = vsel %vm4160, %v4153, %v4157
        %v4162 = vand.u32 2147483647, %v4150
        %vm4163 = vcmp.eq.f32.partialorder %v4162, 8.507059e+37
        %v4164 = vand.u32 %v4150, 2147483648
        %v4165 = vor.u32 1.1754944e-38, %v4164
        %v4166 = vsel %vm4163, %v4165, %v4161
        %v4167 = vmul.f32 1.0, %v4166
        %v4168 = vrcp.pop %v4151
        %v4169 = vmul.f32 %v4151, %v4168
        %v4170 = vsub.f32 1.0, %v4169
        %v4171 = vmul.f32 %v4168, %v4170
        %v4172 = vadd.f32 %v4168, %v4171
        %vm4173 = vweird.f32 %v4151
        %vm4174 = vweird.f32 %v4168
        %vm4175 = vmor %vm4173, %vm4174
        %v4176 = vsel %vm4175, %v4168, %v4172
        %v4177 = vand.u32 2147483647, %v4151
        %vm4178 = vcmp.eq.f32.partialorder %v4177, 8.507059e+37
        %v4179 = vand.u32 %v4151, 2147483648
        %v4180 = vor.u32 1.1754944e-38, %v4179
        %v4181 = vsel %vm4178, %v4180, %v4176
        %v4182 = vmul.f32 1.0, %v4181
        %v4183 = vrcp.pop %v4152
        %v4184 = vmul.f32 %v4152, %v4183
        %v4185 = vsub.f32 1.0, %v4184
        %v4186 = vmul.f32 %v4183, %v4185
        %v4187 = vadd.f32 %v4183, %v4186
        %vm4188 = vweird.f32 %v4152
        %vm4189 = vweird.f32 %v4183
        %vm4190 = vmor %vm4188, %vm4189
        %v4191 = vsel %vm4190, %v4183, %v4187
        %v4192 = vand.u32 2147483647, %v4152
        %vm4193 = vcmp.eq.f32.partialorder %v4192, 8.507059e+37
        %v4194 = vand.u32 %v4152, 2147483648
        %v4195 = vor.u32 1.1754944e-38, %v4194
        %v4196 = vsel %vm4193, %v4195, %v4191
        %v4197 = vmul.f32 1.0, %v4196
        %v4198 = vtanh.pop %v4139
        %v4199 = vmul.f32 %v4182, %v3309
        %v4200 = vmul.f32 %v4167, %v4198
        %v4201 = vadd.f32 %v4199, %v4200
        %v4202 = vtanh.pop %v4201
        %v4203 = vmul.f32 %v4197, %v4202
        %4204 = vmatpush.msra.mxu0 %v584
        %4205 = vmatpush.msra.mxu0 %v580
        %4206 = vmatpush.msra.mxu0 %v576
        %4207 = vmatpush.msra.mxu0 %v572
        %4208 = vmatpush.msra.mxu0 %v568
        %4209 = vmatpush.msra.mxu0 %v564
        %4210 = vmatpush.msra.mxu0 %v560
        %4211 = vmatpush.msra.mxu0 %v556
        %4212 = vmatpush.msra.mxu0 %v552
        %4213 = vmatpush.msra.mxu0 %v548
        %4214 = vmatpush.msra.mxu0 %v544
        %4215 = vmatpush.msra.mxu0 %v540
        %4216 = vmatpush.msra.mxu0 %v536
        %4217 = vmatpush.msra.mxu0 %v532
        %4218 = vmatpush.msra.mxu0 %v528
        %4219 = vmatpush.msra.mxu0 %v524
        %4220 = vmatmul.f32.gmra.mxu0 %v521
        %v4221 = vpop.f32.mrf.mxu0
        %v4222 = vadd.f32 %v654, %v4221
        %4223 = vdwg.mxu0
        %4224 = vmatpush.msra.mxu0 %v648
        %4225 = vmatpush.msra.mxu0 %v644
        %4226 = vmatpush.msra.mxu0 %v640
        %4227 = vmatpush.msra.mxu0 %v636
        %4228 = vmatpush.msra.mxu0 %v632
        %4229 = vmatpush.msra.mxu0 %v628
        %4230 = vmatpush.msra.mxu0 %v624
        %4231 = vmatpush.msra.mxu0 %v620
        %4232 = vmatpush.msra.mxu0 %v616
        %4233 = vmatpush.msra.mxu0 %v612
        %4234 = vmatpush.msra.mxu0 %v608
        %4235 = vmatpush.msra.mxu0 %v604
        %4236 = vmatpush.msra.mxu0 %v600
        %4237 = vmatpush.msra.mxu0 %v596
        %4238 = vmatpush.msra.mxu0 %v592
        %4239 = vmatpush.msra.mxu0 %v588
        %4240 = vmatmul.f32.gmra.mxu0 %v3534
        %v4241 = vpop.f32.mrf.mxu0
        %v4242 = vadd.f32 %v4222, %v4241
        %4243 = vdwg.mxu0
        %4244 = vmatpush.msra.mxu0 %v585
        %4245 = vmatpush.msra.mxu0 %v581
        %4246 = vmatpush.msra.mxu0 %v577
        %4247 = vmatpush.msra.mxu0 %v573
        %4248 = vmatpush.msra.mxu0 %v569
        %4249 = vmatpush.msra.mxu0 %v565
        %4250 = vmatpush.msra.mxu0 %v561
        %4251 = vmatpush.msra.mxu0 %v557
        %4252 = vmatpush.msra.mxu0 %v553
        %4253 = vmatpush.msra.mxu0 %v549
        %4254 = vmatpush.msra.mxu0 %v545
        %4255 = vmatpush.msra.mxu0 %v541
        %4256 = vmatpush.msra.mxu0 %v537
        %4257 = vmatpush.msra.mxu0 %v533
        %4258 = vmatpush.msra.mxu0 %v529
        %4259 = vmatpush.msra.mxu0 %v525
        %4260 = vmatmul.f32.gmra.mxu0 %v521
        %v4261 = vpop.f32.mrf.mxu0
        %v4262 = vadd.f32 %v655, %v4261
        %4263 = vdwg.mxu0
        %4264 = vmatpush.msra.mxu0 %v649
        %4265 = vmatpush.msra.mxu0 %v645
        %4266 = vmatpush.msra.mxu0 %v641
        %4267 = vmatpush.msra.mxu0 %v637
        %4268 = vmatpush.msra.mxu0 %v633
        %4269 = vmatpush.msra.mxu0 %v629
        %4270 = vmatpush.msra.mxu0 %v625
        %4271 = vmatpush.msra.mxu0 %v621
        %4272 = vmatpush.msra.mxu0 %v617
        %4273 = vmatpush.msra.mxu0 %v613
        %4274 = vmatpush.msra.mxu0 %v609
        %4275 = vmatpush.msra.mxu0 %v605
        %4276 = vmatpush.msra.mxu0 %v601
        %4277 = vmatpush.msra.mxu0 %v597
        %4278 = vmatpush.msra.mxu0 %v593
        %4279 = vmatpush.msra.mxu0 %v589
        %4280 = vmatmul.f32.gmra.mxu0 %v3534
        %v4281 = vpop.f32.mrf.mxu0
        %v4282 = vadd.f32 %v4262, %v4281
        %4283 = vdwg.mxu0
        %4284 = vmatpush.msra.mxu0 %v586
        %4285 = vmatpush.msra.mxu0 %v582
        %4286 = vmatpush.msra.mxu0 %v578
        %4287 = vmatpush.msra.mxu0 %v574
        %4288 = vmatpush.msra.mxu0 %v570
        %4289 = vmatpush.msra.mxu0 %v566
        %4290 = vmatpush.msra.mxu0 %v562
        %4291 = vmatpush.msra.mxu0 %v558
        %4292 = vmatpush.msra.mxu0 %v554
        %4293 = vmatpush.msra.mxu0 %v550
        %4294 = vmatpush.msra.mxu0 %v546
        %4295 = vmatpush.msra.mxu0 %v542
        %4296 = vmatpush.msra.mxu0 %v538
        %4297 = vmatpush.msra.mxu0 %v534
        %4298 = vmatpush.msra.mxu0 %v530
        %4299 = vmatpush.msra.mxu0 %v526
        %4300 = vmatmul.f32.gmra.mxu0 %v521
        %v4301 = vpop.f32.mrf.mxu0
        %v4302 = vadd.f32 %v656, %v4301
        %4303 = vdwg.mxu0
        %4304 = vmatpush.msra.mxu0 %v650
        %4305 = vmatpush.msra.mxu0 %v646
        %4306 = vmatpush.msra.mxu0 %v642
        %4307 = vmatpush.msra.mxu0 %v638
        %4308 = vmatpush.msra.mxu0 %v634
        %4309 = vmatpush.msra.mxu0 %v630
        %4310 = vmatpush.msra.mxu0 %v626
        %4311 = vmatpush.msra.mxu0 %v622
        %4312 = vmatpush.msra.mxu0 %v618
        %4313 = vmatpush.msra.mxu0 %v614
        %4314 = vmatpush.msra.mxu0 %v610
        %4315 = vmatpush.msra.mxu0 %v606
        %4316 = vmatpush.msra.mxu0 %v602
        %4317 = vmatpush.msra.mxu0 %v598
        %4318 = vmatpush.msra.mxu0 %v594
        %4319 = vmatpush.msra.mxu0 %v590
        %4320 = vmatmul.f32.gmra.mxu0 %v3534
        %v4321 = vpop.f32.mrf.mxu0
        %v4322 = vadd.f32 %v4302, %v4321
        %4323 = vdwg.mxu0
        %4324 = vmatpush.msra.mxu0 %v587
        %4325 = vmatpush.msra.mxu0 %v583
        %4326 = vmatpush.msra.mxu0 %v579
        %4327 = vmatpush.msra.mxu0 %v575
        %4328 = vmatpush.msra.mxu0 %v571
        %4329 = vmatpush.msra.mxu0 %v567
        %4330 = vmatpush.msra.mxu0 %v563
        %4331 = vmatpush.msra.mxu0 %v559
        %4332 = vmatpush.msra.mxu0 %v555
        %4333 = vmatpush.msra.mxu0 %v551
        %4334 = vmatpush.msra.mxu0 %v547
        %4335 = vmatpush.msra.mxu0 %v543
        %4336 = vmatpush.msra.mxu0 %v539
        %4337 = vmatpush.msra.mxu0 %v535
        %4338 = vmatpush.msra.mxu0 %v531
        %4339 = vmatpush.msra.mxu0 %v527
        %4340 = vmatmul.f32.gmra.mxu0 %v521
        %v4341 = vpop.f32.mrf.mxu0
        %v4342 = vadd.f32 %v657, %v4341
        %4343 = vdwg.mxu0
        %4344 = vmatpush.msra.mxu0 %v651
        %4345 = vmatpush.msra.mxu0 %v647
        %4346 = vmatpush.msra.mxu0 %v643
        %4347 = vmatpush.msra.mxu0 %v639
        %4348 = vmatpush.msra.mxu0 %v635
        %4349 = vmatpush.msra.mxu0 %v631
        %4350 = vmatpush.msra.mxu0 %v627
        %4351 = vmatpush.msra.mxu0 %v623
        %4352 = vmatpush.msra.mxu0 %v619
        %4353 = vmatpush.msra.mxu0 %v615
        %4354 = vmatpush.msra.mxu0 %v611
        %4355 = vmatpush.msra.mxu0 %v607
        %4356 = vmatpush.msra.mxu0 %v603
        %4357 = vmatpush.msra.mxu0 %v599
        %4358 = vmatpush.msra.mxu0 %v595
        %4359 = vmatpush.msra.mxu0 %v591
        %4360 = vmatmul.f32.gmra.mxu0 %v3534
        %v4361 = vpop.f32.mrf.mxu0
        %v4362 = vadd.f32 %v4342, %v4361
        %4363 = vdwg.mxu0
        %v4364 = vxor.u32 %v4242, 2147483648
        %v4365 = vxor.u32 %v4282, 2147483648
        %v4366 = vxor.u32 %v4322, 2147483648
        %v4367 = vmul.f32 %v4364, 1.442695
        %v4368 = vpow.pop %v4367
        %v4369 = vmul.f32 %v4365, 1.442695
        %v4370 = vpow.pop %v4369
        %v4371 = vmul.f32 %v4366, 1.442695
        %v4372 = vpow.pop %v4371
        %v4373 = vadd.f32 %v4368, 1.0
        %v4374 = vadd.f32 %v4370, 1.0
        %v4375 = vadd.f32 %v4372, 1.0
        %v4376 = vrcp.pop %v4373
        %v4377 = vmul.f32 %v4373, %v4376
        %v4378 = vsub.f32 1.0, %v4377
        %v4379 = vmul.f32 %v4376, %v4378
        %v4380 = vadd.f32 %v4376, %v4379
        %vm4381 = vweird.f32 %v4373
        %vm4382 = vweird.f32 %v4376
        %vm4383 = vmor %vm4381, %vm4382
        %v4384 = vsel %vm4383, %v4376, %v4380
        %v4385 = vand.u32 2147483647, %v4373
        %vm4386 = vcmp.eq.f32.partialorder %v4385, 8.507059e+37
        %v4387 = vand.u32 %v4373, 2147483648
        %v4388 = vor.u32 1.1754944e-38, %v4387
        %v4389 = vsel %vm4386, %v4388, %v4384
        %v4390 = vmul.f32 1.0, %v4389
        %v4391 = vrcp.pop %v4374
        %v4392 = vmul.f32 %v4374, %v4391
        %v4393 = vsub.f32 1.0, %v4392
        %v4394 = vmul.f32 %v4391, %v4393
        %v4395 = vadd.f32 %v4391, %v4394
        %vm4396 = vweird.f32 %v4374
        %vm4397 = vweird.f32 %v4391
        %vm4398 = vmor %vm4396, %vm4397
        %v4399 = vsel %vm4398, %v4391, %v4395
        %v4400 = vand.u32 2147483647, %v4374
        %vm4401 = vcmp.eq.f32.partialorder %v4400, 8.507059e+37
        %v4402 = vand.u32 %v4374, 2147483648
        %v4403 = vor.u32 1.1754944e-38, %v4402
        %v4404 = vsel %vm4401, %v4403, %v4399
        %v4405 = vmul.f32 1.0, %v4404
        %v4406 = vrcp.pop %v4375
        %v4407 = vmul.f32 %v4375, %v4406
        %v4408 = vsub.f32 1.0, %v4407
        %v4409 = vmul.f32 %v4406, %v4408
        %v4410 = vadd.f32 %v4406, %v4409
        %vm4411 = vweird.f32 %v4375
        %vm4412 = vweird.f32 %v4406
        %vm4413 = vmor %vm4411, %vm4412
        %v4414 = vsel %vm4413, %v4406, %v4410
        %v4415 = vand.u32 2147483647, %v4375
        %vm4416 = vcmp.eq.f32.partialorder %v4415, 8.507059e+37
        %v4417 = vand.u32 %v4375, 2147483648
        %v4418 = vor.u32 1.1754944e-38, %v4417
        %v4419 = vsel %vm4416, %v4418, %v4414
        %v4420 = vmul.f32 1.0, %v4419
        %v4421 = vtanh.pop %v4362
        %v4422 = vmul.f32 %v4405, %v3532
        %v4423 = vmul.f32 %v4390, %v4421
        %v4424 = vadd.f32 %v4422, %v4423
        %v4425 = vtanh.pop %v4424
        %v4426 = vmul.f32 %v4420, %v4425
        %4427 = vmatpush.msra.mxu0 %v1169
        %4428 = vmatpush.msra.mxu0 %v1165
        %4429 = vmatpush.msra.mxu0 %v1161
        %4430 = vmatpush.msra.mxu0 %v1157
        %4431 = vmatpush.msra.mxu0 %v1153
        %4432 = vmatpush.msra.mxu0 %v1149
        %4433 = vmatpush.msra.mxu0 %v1145
        %4434 = vmatpush.msra.mxu0 %v1141
        %4435 = vmatpush.msra.mxu0 %v1137
        %4436 = vmatpush.msra.mxu0 %v1133
        %4437 = vmatpush.msra.mxu0 %v1129
        %4438 = vmatpush.msra.mxu0 %v1125
        %4439 = vmatpush.msra.mxu0 %v1121
        %4440 = vmatpush.msra.mxu0 %v1117
        %4441 = vmatpush.msra.mxu0 %v1113
        %4442 = vmatpush.msra.mxu0 %v1109
        %4443 = vmatmul.f32.gmra.mxu0 %v3534
        %v4444 = vpop.f32.mrf.mxu0
        %v4445 = vadd.f32 %v1240, %v4444
        %4446 = vdwg.mxu0
        %4447 = vmatpush.msra.mxu0 %v1233
        %4448 = vmatpush.msra.mxu0 %v1229
        %4449 = vmatpush.msra.mxu0 %v1225
        %4450 = vmatpush.msra.mxu0 %v1221
        %4451 = vmatpush.msra.mxu0 %v1217
        %4452 = vmatpush.msra.mxu0 %v1213
        %4453 = vmatpush.msra.mxu0 %v1209
        %4454 = vmatpush.msra.mxu0 %v1205
        %4455 = vmatpush.msra.mxu0 %v1201
        %4456 = vmatpush.msra.mxu0 %v1197
        %4457 = vmatpush.msra.mxu0 %v1193
        %4458 = vmatpush.msra.mxu0 %v1189
        %4459 = vmatpush.msra.mxu0 %v1185
        %4460 = vmatpush.msra.mxu0 %v1181
        %4461 = vmatpush.msra.mxu0 %v1177
        %4462 = vmatpush.msra.mxu0 %v1173
        %4463 = vmatmul.f32.gmra.mxu0 %v3757
        %v4464 = vpop.f32.mrf.mxu0
        %v4465 = vadd.f32 %v4445, %v4464
        %4466 = vdwg.mxu0
        %4467 = vmatpush.msra.mxu0 %v1170
        %4468 = vmatpush.msra.mxu0 %v1166
        %4469 = vmatpush.msra.mxu0 %v1162
        %4470 = vmatpush.msra.mxu0 %v1158
        %4471 = vmatpush.msra.mxu0 %v1154
        %4472 = vmatpush.msra.mxu0 %v1150
        %4473 = vmatpush.msra.mxu0 %v1146
        %4474 = vmatpush.msra.mxu0 %v1142
        %4475 = vmatpush.msra.mxu0 %v1138
        %4476 = vmatpush.msra.mxu0 %v1134
        %4477 = vmatpush.msra.mxu0 %v1130
        %4478 = vmatpush.msra.mxu0 %v1126
        %4479 = vmatpush.msra.mxu0 %v1122
        %4480 = vmatpush.msra.mxu0 %v1118
        %4481 = vmatpush.msra.mxu0 %v1114
        %4482 = vmatpush.msra.mxu0 %v1110
        %4483 = vmatmul.f32.gmra.mxu0 %v3534
        %v4484 = vpop.f32.mrf.mxu0
        %v4485 = vadd.f32 %v1241, %v4484
        %4486 = vdwg.mxu0
        %4487 = vmatpush.msra.mxu0 %v1234
        %4488 = vmatpush.msra.mxu0 %v1230
        %4489 = vmatpush.msra.mxu0 %v1226
        %4490 = vmatpush.msra.mxu0 %v1222
        %4491 = vmatpush.msra.mxu0 %v1218
        %4492 = vmatpush.msra.mxu0 %v1214
        %4493 = vmatpush.msra.mxu0 %v1210
        %4494 = vmatpush.msra.mxu0 %v1206
        %4495 = vmatpush.msra.mxu0 %v1202
        %4496 = vmatpush.msra.mxu0 %v1198
        %4497 = vmatpush.msra.mxu0 %v1194
        %4498 = vmatpush.msra.mxu0 %v1190
        %4499 = vmatpush.msra.mxu0 %v1186
        %4500 = vmatpush.msra.mxu0 %v1182
        %4501 = vmatpush.msra.mxu0 %v1178
        %4502 = vmatpush.msra.mxu0 %v1174
        %4503 = vmatmul.f32.gmra.mxu0 %v3757
        %v4504 = vpop.f32.mrf.mxu0
        %v4505 = vadd.f32 %v4485, %v4504
        %4506 = vdwg.mxu0
        %4507 = vmatpush.msra.mxu0 %v1171
        %4508 = vmatpush.msra.mxu0 %v1167
        %4509 = vmatpush.msra.mxu0 %v1163
        %4510 = vmatpush.msra.mxu0 %v1159
        %4511 = vmatpush.msra.mxu0 %v1155
        %4512 = vmatpush.msra.mxu0 %v1151
        %4513 = vmatpush.msra.mxu0 %v1147
        %4514 = vmatpush.msra.mxu0 %v1143
        %4515 = vmatpush.msra.mxu0 %v1139
        %4516 = vmatpush.msra.mxu0 %v1135
        %4517 = vmatpush.msra.mxu0 %v1131
        %4518 = vmatpush.msra.mxu0 %v1127
        %4519 = vmatpush.msra.mxu0 %v1123
        %4520 = vmatpush.msra.mxu0 %v1119
        %4521 = vmatpush.msra.mxu0 %v1115
        %4522 = vmatpush.msra.mxu0 %v1111
        %4523 = vmatmul.f32.gmra.mxu0 %v3534
        %v4524 = vpop.f32.mrf.mxu0
        %v4525 = vadd.f32 %v1242, %v4524
        %4526 = vdwg.mxu0
        %4527 = vmatpush.msra.mxu0 %v1235
        %4528 = vmatpush.msra.mxu0 %v1231
        %4529 = vmatpush.msra.mxu0 %v1227
        %4530 = vmatpush.msra.mxu0 %v1223
        %4531 = vmatpush.msra.mxu0 %v1219
        %4532 = vmatpush.msra.mxu0 %v1215
        %4533 = vmatpush.msra.mxu0 %v1211
        %4534 = vmatpush.msra.mxu0 %v1207
        %4535 = vmatpush.msra.mxu0 %v1203
        %4536 = vmatpush.msra.mxu0 %v1199
        %4537 = vmatpush.msra.mxu0 %v1195
        %4538 = vmatpush.msra.mxu0 %v1191
        %4539 = vmatpush.msra.mxu0 %v1187
        %4540 = vmatpush.msra.mxu0 %v1183
        %4541 = vmatpush.msra.mxu0 %v1179
        %4542 = vmatpush.msra.mxu0 %v1175
        %4543 = vmatmul.f32.gmra.mxu0 %v3757
        %v4544 = vpop.f32.mrf.mxu0
        %v4545 = vadd.f32 %v4525, %v4544
        %4546 = vdwg.mxu0
        %4547 = vmatpush.msra.mxu0 %v1172
        %4548 = vmatpush.msra.mxu0 %v1168
        %4549 = vmatpush.msra.mxu0 %v1164
        %4550 = vmatpush.msra.mxu0 %v1160
        %4551 = vmatpush.msra.mxu0 %v1156
        %4552 = vmatpush.msra.mxu0 %v1152
        %4553 = vmatpush.msra.mxu0 %v1148
        %4554 = vmatpush.msra.mxu0 %v1144
        %4555 = vmatpush.msra.mxu0 %v1140
        %4556 = vmatpush.msra.mxu0 %v1136
        %4557 = vmatpush.msra.mxu0 %v1132
        %4558 = vmatpush.msra.mxu0 %v1128
        %4559 = vmatpush.msra.mxu0 %v1124
        %4560 = vmatpush.msra.mxu0 %v1120
        %4561 = vmatpush.msra.mxu0 %v1116
        %4562 = vmatpush.msra.mxu0 %v1112
        %4563 = vmatmul.f32.gmra.mxu0 %v3534
        %v4564 = vpop.f32.mrf.mxu0
        %v4565 = vadd.f32 %v1243, %v4564
        %4566 = vdwg.mxu0
        %4567 = vmatpush.msra.mxu0 %v1236
        %4568 = vmatpush.msra.mxu0 %v1232
        %4569 = vmatpush.msra.mxu0 %v1228
        %4570 = vmatpush.msra.mxu0 %v1224
        %4571 = vmatpush.msra.mxu0 %v1220
        %4572 = vmatpush.msra.mxu0 %v1216
        %4573 = vmatpush.msra.mxu0 %v1212
        %4574 = vmatpush.msra.mxu0 %v1208
        %4575 = vmatpush.msra.mxu0 %v1204
        %4576 = vmatpush.msra.mxu0 %v1200
        %4577 = vmatpush.msra.mxu0 %v1196
        %4578 = vmatpush.msra.mxu0 %v1192
        %4579 = vmatpush.msra.mxu0 %v1188
        %4580 = vmatpush.msra.mxu0 %v1184
        %4581 = vmatpush.msra.mxu0 %v1180
        %4582 = vmatpush.msra.mxu0 %v1176
        %4583 = vmatmul.f32.gmra.mxu0 %v3757
        %v4584 = vpop.f32.mrf.mxu0
        %v4585 = vadd.f32 %v4565, %v4584
        %4586 = vdwg.mxu0
        %v4587 = vxor.u32 %v4465, 2147483648
        %v4588 = vxor.u32 %v4505, 2147483648
        %v4589 = vxor.u32 %v4545, 2147483648
        %v4590 = vmul.f32 %v4587, 1.442695
        %v4591 = vpow.pop %v4590
        %v4592 = vmul.f32 %v4588, 1.442695
        %v4593 = vpow.pop %v4592
        %v4594 = vmul.f32 %v4589, 1.442695
        %v4595 = vpow.pop %v4594
        %v4596 = vadd.f32 %v4591, 1.0
        %v4597 = vadd.f32 %v4593, 1.0
        %v4598 = vadd.f32 %v4595, 1.0
        %v4599 = vrcp.pop %v4596
        %v4600 = vmul.f32 %v4596, %v4599
        %v4601 = vsub.f32 1.0, %v4600
        %v4602 = vmul.f32 %v4599, %v4601
        %v4603 = vadd.f32 %v4599, %v4602
        %vm4604 = vweird.f32 %v4596
        %vm4605 = vweird.f32 %v4599
        %vm4606 = vmor %vm4604, %vm4605
        %v4607 = vsel %vm4606, %v4599, %v4603
        %v4608 = vand.u32 2147483647, %v4596
        %vm4609 = vcmp.eq.f32.partialorder %v4608, 8.507059e+37
        %v4610 = vand.u32 %v4596, 2147483648
        %v4611 = vor.u32 1.1754944e-38, %v4610
        %v4612 = vsel %vm4609, %v4611, %v4607
        %v4613 = vmul.f32 1.0, %v4612
        %v4614 = vrcp.pop %v4597
        %v4615 = vmul.f32 %v4597, %v4614
        %v4616 = vsub.f32 1.0, %v4615
        %v4617 = vmul.f32 %v4614, %v4616
        %v4618 = vadd.f32 %v4614, %v4617
        %vm4619 = vweird.f32 %v4597
        %vm4620 = vweird.f32 %v4614
        %vm4621 = vmor %vm4619, %vm4620
        %v4622 = vsel %vm4621, %v4614, %v4618
        %v4623 = vand.u32 2147483647, %v4597
        %vm4624 = vcmp.eq.f32.partialorder %v4623, 8.507059e+37
        %v4625 = vand.u32 %v4597, 2147483648
        %v4626 = vor.u32 1.1754944e-38, %v4625
        %v4627 = vsel %vm4624, %v4626, %v4622
        %v4628 = vmul.f32 1.0, %v4627
        %v4629 = vrcp.pop %v4598
        %v4630 = vmul.f32 %v4598, %v4629
        %v4631 = vsub.f32 1.0, %v4630
        %v4632 = vmul.f32 %v4629, %v4631
        %v4633 = vadd.f32 %v4629, %v4632
        %vm4634 = vweird.f32 %v4598
        %vm4635 = vweird.f32 %v4629
        %vm4636 = vmor %vm4634, %vm4635
        %v4637 = vsel %vm4636, %v4629, %v4633
        %v4638 = vand.u32 2147483647, %v4598
        %vm4639 = vcmp.eq.f32.partialorder %v4638, 8.507059e+37
        %v4640 = vand.u32 %v4598, 2147483648
        %v4641 = vor.u32 1.1754944e-38, %v4640
        %v4642 = vsel %vm4639, %v4641, %v4637
        %v4643 = vmul.f32 1.0, %v4642
        %v4644 = vtanh.pop %v4585
        %v4645 = vmul.f32 %v4628, %v3755
        %v4646 = vmul.f32 %v4613, %v4644
        %v4647 = vadd.f32 %v4645, %v4646
        %v4648 = vtanh.pop %v4647
        %v4649 = vmul.f32 %v4643, %v4648
        %4650 = vmatpush.msra.mxu0 %v1978
        %4651 = vmatpush.msra.mxu0 %v1974
        %4652 = vmatpush.msra.mxu0 %v1970
        %4653 = vmatpush.msra.mxu0 %v1966
        %4654 = vmatpush.msra.mxu0 %v1962
        %4655 = vmatpush.msra.mxu0 %v1958
        %4656 = vmatpush.msra.mxu0 %v1954
        %4657 = vmatpush.msra.mxu0 %v1950
        %4658 = vmatpush.msra.mxu0 %v1946
        %4659 = vmatpush.msra.mxu0 %v1942
        %4660 = vmatpush.msra.mxu0 %v1938
        %4661 = vmatpush.msra.mxu0 %v1934
        %4662 = vmatpush.msra.mxu0 %v1930
        %4663 = vmatpush.msra.mxu0 %v1926
        %4664 = vmatpush.msra.mxu0 %v1922
        %4665 = vmatpush.msra.mxu0 %v1918
        %4666 = vmatmul.f32.gmra.mxu0 %v3757
        %v4667 = vpop.f32.mrf.mxu0
        %v4668 = vadd.f32 %v2049, %v4667
        %4669 = vdwg.mxu0
        %4670 = vmatpush.msra.mxu0 %v2042
        %4671 = vmatpush.msra.mxu0 %v2038
        %4672 = vmatpush.msra.mxu0 %v2034
        %4673 = vmatpush.msra.mxu0 %v2030
        %4674 = vmatpush.msra.mxu0 %v2026
        %4675 = vmatpush.msra.mxu0 %v2022
        %4676 = vmatpush.msra.mxu0 %v2018
        %4677 = vmatpush.msra.mxu0 %v2014
        %4678 = vmatpush.msra.mxu0 %v2010
        %4679 = vmatpush.msra.mxu0 %v2006
        %4680 = vmatpush.msra.mxu0 %v2002
        %4681 = vmatpush.msra.mxu0 %v1998
        %4682 = vmatpush.msra.mxu0 %v1994
        %4683 = vmatpush.msra.mxu0 %v1990
        %4684 = vmatpush.msra.mxu0 %v1986
        %4685 = vmatpush.msra.mxu0 %v1982
        %4686 = vmatmul.f32.gmra.mxu0 %v3980
        %v4687 = vpop.f32.mrf.mxu0
        %v4688 = vadd.f32 %v4668, %v4687
        %4689 = vdwg.mxu0
        %4690 = vmatpush.msra.mxu0 %v1979
        %4691 = vmatpush.msra.mxu0 %v1975
        %4692 = vmatpush.msra.mxu0 %v1971
        %4693 = vmatpush.msra.mxu0 %v1967
        %4694 = vmatpush.msra.mxu0 %v1963
        %4695 = vmatpush.msra.mxu0 %v1959
        %4696 = vmatpush.msra.mxu0 %v1955
        %4697 = vmatpush.msra.mxu0 %v1951
        %4698 = vmatpush.msra.mxu0 %v1947
        %4699 = vmatpush.msra.mxu0 %v1943
        %4700 = vmatpush.msra.mxu0 %v1939
        %4701 = vmatpush.msra.mxu0 %v1935
        %4702 = vmatpush.msra.mxu0 %v1931
        %4703 = vmatpush.msra.mxu0 %v1927
        %4704 = vmatpush.msra.mxu0 %v1923
        %4705 = vmatpush.msra.mxu0 %v1919
        %4706 = vmatmul.f32.gmra.mxu0 %v3757
        %v4707 = vpop.f32.mrf.mxu0
        %v4708 = vadd.f32 %v2050, %v4707
        %4709 = vdwg.mxu0
        %4710 = vmatpush.msra.mxu0 %v2043
        %4711 = vmatpush.msra.mxu0 %v2039
        %4712 = vmatpush.msra.mxu0 %v2035
        %4713 = vmatpush.msra.mxu0 %v2031
        %4714 = vmatpush.msra.mxu0 %v2027
        %4715 = vmatpush.msra.mxu0 %v2023
        %4716 = vmatpush.msra.mxu0 %v2019
        %4717 = vmatpush.msra.mxu0 %v2015
        %4718 = vmatpush.msra.mxu0 %v2011
        %4719 = vmatpush.msra.mxu0 %v2007
        %4720 = vmatpush.msra.mxu0 %v2003
        %4721 = vmatpush.msra.mxu0 %v1999
        %4722 = vmatpush.msra.mxu0 %v1995
        %4723 = vmatpush.msra.mxu0 %v1991
        %4724 = vmatpush.msra.mxu0 %v1987
        %4725 = vmatpush.msra.mxu0 %v1983
        %4726 = vmatmul.f32.gmra.mxu0 %v3980
        %v4727 = vpop.f32.mrf.mxu0
        %v4728 = vadd.f32 %v4708, %v4727
        %4729 = vdwg.mxu0
        %4730 = vmatpush.msra.mxu0 %v1980
        %4731 = vmatpush.msra.mxu0 %v1976
        %4732 = vmatpush.msra.mxu0 %v1972
        %4733 = vmatpush.msra.mxu0 %v1968
        %4734 = vmatpush.msra.mxu0 %v1964
        %4735 = vmatpush.msra.mxu0 %v1960
        %4736 = vmatpush.msra.mxu0 %v1956
        %4737 = vmatpush.msra.mxu0 %v1952
        %4738 = vmatpush.msra.mxu0 %v1948
        %4739 = vmatpush.msra.mxu0 %v1944
        %4740 = vmatpush.msra.mxu0 %v1940
        %4741 = vmatpush.msra.mxu0 %v1936
        %4742 = vmatpush.msra.mxu0 %v1932
        %4743 = vmatpush.msra.mxu0 %v1928
        %4744 = vmatpush.msra.mxu0 %v1924
        %4745 = vmatpush.msra.mxu0 %v1920
        %4746 = vmatmul.f32.gmra.mxu0 %v3757
        %v4747 = vpop.f32.mrf.mxu0
        %v4748 = vadd.f32 %v2051, %v4747
        %4749 = vdwg.mxu0
        %4750 = vmatpush.msra.mxu0 %v2044
        %4751 = vmatpush.msra.mxu0 %v2040
        %4752 = vmatpush.msra.mxu0 %v2036
        %4753 = vmatpush.msra.mxu0 %v2032
        %4754 = vmatpush.msra.mxu0 %v2028
        %4755 = vmatpush.msra.mxu0 %v2024
        %4756 = vmatpush.msra.mxu0 %v2020
        %4757 = vmatpush.msra.mxu0 %v2016
        %4758 = vmatpush.msra.mxu0 %v2012
        %4759 = vmatpush.msra.mxu0 %v2008
        %4760 = vmatpush.msra.mxu0 %v2004
        %4761 = vmatpush.msra.mxu0 %v2000
        %4762 = vmatpush.msra.mxu0 %v1996
        %4763 = vmatpush.msra.mxu0 %v1992
        %4764 = vmatpush.msra.mxu0 %v1988
        %4765 = vmatpush.msra.mxu0 %v1984
        %4766 = vmatmul.f32.gmra.mxu0 %v3980
        %v4767 = vpop.f32.mrf.mxu0
        %v4768 = vadd.f32 %v4748, %v4767
        %4769 = vdwg.mxu0
        %4770 = vmatpush.msra.mxu0 %v1981
        %4771 = vmatpush.msra.mxu0 %v1977
        %4772 = vmatpush.msra.mxu0 %v1973
        %4773 = vmatpush.msra.mxu0 %v1969
        %4774 = vmatpush.msra.mxu0 %v1965
        %4775 = vmatpush.msra.mxu0 %v1961
        %4776 = vmatpush.msra.mxu0 %v1957
        %4777 = vmatpush.msra.mxu0 %v1953
        %4778 = vmatpush.msra.mxu0 %v1949
        %4779 = vmatpush.msra.mxu0 %v1945
        %4780 = vmatpush.msra.mxu0 %v1941
        %4781 = vmatpush.msra.mxu0 %v1937
        %4782 = vmatpush.msra.mxu0 %v1933
        %4783 = vmatpush.msra.mxu0 %v1929
        %4784 = vmatpush.msra.mxu0 %v1925
        %4785 = vmatpush.msra.mxu0 %v1921
        %4786 = vmatmul.f32.gmra.mxu0 %v3757
        %v4787 = vpop.f32.mrf.mxu0
        %v4788 = vadd.f32 %v2052, %v4787
        %4789 = vdwg.mxu0
        %4790 = vmatpush.msra.mxu0 %v2045
        %4791 = vmatpush.msra.mxu0 %v2041
        %4792 = vmatpush.msra.mxu0 %v2037
        %4793 = vmatpush.msra.mxu0 %v2033
        %4794 = vmatpush.msra.mxu0 %v2029
        %4795 = vmatpush.msra.mxu0 %v2025
        %4796 = vmatpush.msra.mxu0 %v2021
        %4797 = vmatpush.msra.mxu0 %v2017
        %4798 = vmatpush.msra.mxu0 %v2013
        %4799 = vmatpush.msra.mxu0 %v2009
        %4800 = vmatpush.msra.mxu0 %v2005
        %4801 = vmatpush.msra.mxu0 %v2001
        %4802 = vmatpush.msra.mxu0 %v1997
        %4803 = vmatpush.msra.mxu0 %v1993
        %4804 = vmatpush.msra.mxu0 %v1989
        %4805 = vmatpush.msra.mxu0 %v1985
        %4806 = vmatmul.f32.gmra.mxu0 %v3980
        %v4807 = vpop.f32.mrf.mxu0
        %v4808 = vadd.f32 %v4788, %v4807
        %4809 = vdwg.mxu0
        %v4810 = vxor.u32 %v4688, 2147483648
        %v4811 = vxor.u32 %v4728, 2147483648
        %v4812 = vxor.u32 %v4768, 2147483648
        %v4813 = vmul.f32 %v4810, 1.442695
        %v4814 = vpow.pop %v4813
        %v4815 = vmul.f32 %v4811, 1.442695
        %v4816 = vpow.pop %v4815
        %v4817 = vmul.f32 %v4812, 1.442695
        %v4818 = vpow.pop %v4817
        %v4819 = vadd.f32 %v4814, 1.0
        %v4820 = vadd.f32 %v4816, 1.0
        %v4821 = vadd.f32 %v4818, 1.0
        %v4822 = vrcp.pop %v4819
        %v4823 = vmul.f32 %v4819, %v4822
        %v4824 = vsub.f32 1.0, %v4823
        %v4825 = vmul.f32 %v4822, %v4824
        %v4826 = vadd.f32 %v4822, %v4825
        %vm4827 = vweird.f32 %v4819
        %vm4828 = vweird.f32 %v4822
        %vm4829 = vmor %vm4827, %vm4828
        %v4830 = vsel %vm4829, %v4822, %v4826
        %v4831 = vand.u32 2147483647, %v4819
        %vm4832 = vcmp.eq.f32.partialorder %v4831, 8.507059e+37
        %v4833 = vand.u32 %v4819, 2147483648
        %v4834 = vor.u32 1.1754944e-38, %v4833
        %v4835 = vsel %vm4832, %v4834, %v4830
        %v4836 = vmul.f32 1.0, %v4835
        %v4837 = vrcp.pop %v4820
        %v4838 = vmul.f32 %v4820, %v4837
        %v4839 = vsub.f32 1.0, %v4838
        %v4840 = vmul.f32 %v4837, %v4839
        %v4841 = vadd.f32 %v4837, %v4840
        %vm4842 = vweird.f32 %v4820
        %vm4843 = vweird.f32 %v4837
        %vm4844 = vmor %vm4842, %vm4843
        %v4845 = vsel %vm4844, %v4837, %v4841
        %v4846 = vand.u32 2147483647, %v4820
        %vm4847 = vcmp.eq.f32.partialorder %v4846, 8.507059e+37
        %v4848 = vand.u32 %v4820, 2147483648
        %v4849 = vor.u32 1.1754944e-38, %v4848
        %v4850 = vsel %vm4847, %v4849, %v4845
        %v4851 = vmul.f32 1.0, %v4850
        %v4852 = vrcp.pop %v4821
        %v4853 = vmul.f32 %v4821, %v4852
        %v4854 = vsub.f32 1.0, %v4853
        %v4855 = vmul.f32 %v4852, %v4854
        %v4856 = vadd.f32 %v4852, %v4855
        %vm4857 = vweird.f32 %v4821
        %vm4858 = vweird.f32 %v4852
        %vm4859 = vmor %vm4857, %vm4858
        %v4860 = vsel %vm4859, %v4852, %v4856
        %v4861 = vand.u32 2147483647, %v4821
        %vm4862 = vcmp.eq.f32.partialorder %v4861, 8.507059e+37
        %v4863 = vand.u32 %v4821, 2147483648
        %v4864 = vor.u32 1.1754944e-38, %v4863
        %v4865 = vsel %vm4862, %v4864, %v4860
        %v4866 = vmul.f32 1.0, %v4865
        %v4867 = vtanh.pop %v4808
        %v4868 = vmul.f32 %v4851, %v3978
        %v4869 = vmul.f32 %v4836, %v4867
        %v4870 = vadd.f32 %v4868, %v4869
        %v4871 = vtanh.pop %v4870
        %v4872 = vmul.f32 %v4866, %v4871
        %4873 = vmatpush.msra.mxu0 %v3010
        %4874 = vmatpush.msra.mxu0 %v3006
        %4875 = vmatpush.msra.mxu0 %v3002
        %4876 = vmatpush.msra.mxu0 %v2998
        %4877 = vmatpush.msra.mxu0 %v2994
        %4878 = vmatpush.msra.mxu0 %v2990
        %4879 = vmatpush.msra.mxu0 %v2986
        %4880 = vmatpush.msra.mxu0 %v2982
        %4881 = vmatpush.msra.mxu0 %v2978
        %4882 = vmatpush.msra.mxu0 %v2974
        %4883 = vmatpush.msra.mxu0 %v2970
        %4884 = vmatpush.msra.mxu0 %v2966
        %4885 = vmatpush.msra.mxu0 %v2962
        %4886 = vmatpush.msra.mxu0 %v2958
        %4887 = vmatpush.msra.mxu0 %v2954
        %4888 = vmatpush.msra.mxu0 %v2950
        %4889 = vmatmul.f32.gmra.mxu0 %v3980
        %v4890 = vpop.f32.mrf.mxu0
        %v4891 = vadd.f32 %v3081, %v4890
        %4892 = vdwg.mxu0
        %4893 = vmatpush.msra.mxu0 %v3074
        %4894 = vmatpush.msra.mxu0 %v3070
        %4895 = vmatpush.msra.mxu0 %v3066
        %4896 = vmatpush.msra.mxu0 %v3062
        %4897 = vmatpush.msra.mxu0 %v3058
        %4898 = vmatpush.msra.mxu0 %v3054
        %4899 = vmatpush.msra.mxu0 %v3050
        %4900 = vmatpush.msra.mxu0 %v3046
        %4901 = vmatpush.msra.mxu0 %v3042
        %4902 = vmatpush.msra.mxu0 %v3038
        %4903 = vmatpush.msra.mxu0 %v3034
        %4904 = vmatpush.msra.mxu0 %v3030
        %4905 = vmatpush.msra.mxu0 %v3026
        %4906 = vmatpush.msra.mxu0 %v3022
        %4907 = vmatpush.msra.mxu0 %v3018
        %4908 = vmatpush.msra.mxu0 %v3014
        %4909 = vmatmul.f32.gmra.mxu0 %v4203
        %v4910 = vpop.f32.mrf.mxu0
        %v4911 = vadd.f32 %v4891, %v4910
        %4912 = vdwg.mxu0
        %4913 = vmatpush.msra.mxu0 %v3011
        %4914 = vmatpush.msra.mxu0 %v3007
        %4915 = vmatpush.msra.mxu0 %v3003
        %4916 = vmatpush.msra.mxu0 %v2999
        %4917 = vmatpush.msra.mxu0 %v2995
        %4918 = vmatpush.msra.mxu0 %v2991
        %4919 = vmatpush.msra.mxu0 %v2987
        %4920 = vmatpush.msra.mxu0 %v2983
        %4921 = vmatpush.msra.mxu0 %v2979
        %4922 = vmatpush.msra.mxu0 %v2975
        %4923 = vmatpush.msra.mxu0 %v2971
        %4924 = vmatpush.msra.mxu0 %v2967
        %4925 = vmatpush.msra.mxu0 %v2963
        %4926 = vmatpush.msra.mxu0 %v2959
        %4927 = vmatpush.msra.mxu0 %v2955
        %4928 = vmatpush.msra.mxu0 %v2951
        %4929 = vmatmul.f32.gmra.mxu0 %v3980
        %v4930 = vpop.f32.mrf.mxu0
        %v4931 = vadd.f32 %v3082, %v4930
        %4932 = vdwg.mxu0
        %4933 = vmatpush.msra.mxu0 %v3075
        %4934 = vmatpush.msra.mxu0 %v3071
        %4935 = vmatpush.msra.mxu0 %v3067
        %4936 = vmatpush.msra.mxu0 %v3063
        %4937 = vmatpush.msra.mxu0 %v3059
        %4938 = vmatpush.msra.mxu0 %v3055
        %4939 = vmatpush.msra.mxu0 %v3051
        %4940 = vmatpush.msra.mxu0 %v3047
        %4941 = vmatpush.msra.mxu0 %v3043
        %4942 = vmatpush.msra.mxu0 %v3039
        %4943 = vmatpush.msra.mxu0 %v3035
        %4944 = vmatpush.msra.mxu0 %v3031
        %4945 = vmatpush.msra.mxu0 %v3027
        %4946 = vmatpush.msra.mxu0 %v3023
        %4947 = vmatpush.msra.mxu0 %v3019
        %4948 = vmatpush.msra.mxu0 %v3015
        %4949 = vmatmul.f32.gmra.mxu0 %v4203
        %v4950 = vpop.f32.mrf.mxu0
        %v4951 = vadd.f32 %v4931, %v4950
        %4952 = vdwg.mxu0
        %4953 = vmatpush.msra.mxu0 %v3012
        %4954 = vmatpush.msra.mxu0 %v3008
        %4955 = vmatpush.msra.mxu0 %v3004
        %4956 = vmatpush.msra.mxu0 %v3000
        %4957 = vmatpush.msra.mxu0 %v2996
        %4958 = vmatpush.msra.mxu0 %v2992
        %4959 = vmatpush.msra.mxu0 %v2988
        %4960 = vmatpush.msra.mxu0 %v2984
        %4961 = vmatpush.msra.mxu0 %v2980
        %4962 = vmatpush.msra.mxu0 %v2976
        %4963 = vmatpush.msra.mxu0 %v2972
        %4964 = vmatpush.msra.mxu0 %v2968
        %4965 = vmatpush.msra.mxu0 %v2964
        %4966 = vmatpush.msra.mxu0 %v2960
        %4967 = vmatpush.msra.mxu0 %v2956
        %4968 = vmatpush.msra.mxu0 %v2952
        %4969 = vmatmul.f32.gmra.mxu0 %v3980
        %v4970 = vpop.f32.mrf.mxu0
        %v4971 = vadd.f32 %v3083, %v4970
        %4972 = vdwg.mxu0
        %4973 = vmatpush.msra.mxu0 %v3076
        %4974 = vmatpush.msra.mxu0 %v3072
        %4975 = vmatpush.msra.mxu0 %v3068
        %4976 = vmatpush.msra.mxu0 %v3064
        %4977 = vmatpush.msra.mxu0 %v3060
        %4978 = vmatpush.msra.mxu0 %v3056
        %4979 = vmatpush.msra.mxu0 %v3052
        %4980 = vmatpush.msra.mxu0 %v3048
        %4981 = vmatpush.msra.mxu0 %v3044
        %4982 = vmatpush.msra.mxu0 %v3040
        %4983 = vmatpush.msra.mxu0 %v3036
        %4984 = vmatpush.msra.mxu0 %v3032
        %4985 = vmatpush.msra.mxu0 %v3028
        %4986 = vmatpush.msra.mxu0 %v3024
        %4987 = vmatpush.msra.mxu0 %v3020
        %4988 = vmatpush.msra.mxu0 %v3016
        %4989 = vmatmul.f32.gmra.mxu0 %v4203
        %v4990 = vpop.f32.mrf.mxu0
        %v4991 = vadd.f32 %v4971, %v4990
        %4992 = vdwg.mxu0
        %4993 = vmatpush.msra.mxu0 %v3013
        %4994 = vmatpush.msra.mxu0 %v3009
        %4995 = vmatpush.msra.mxu0 %v3005
        %4996 = vmatpush.msra.mxu0 %v3001
        %4997 = vmatpush.msra.mxu0 %v2997
        %4998 = vmatpush.msra.mxu0 %v2993
        %4999 = vmatpush.msra.mxu0 %v2989
        %5000 = vmatpush.msra.mxu0 %v2985
        %5001 = vmatpush.msra.mxu0 %v2981
        %5002 = vmatpush.msra.mxu0 %v2977
        %5003 = vmatpush.msra.mxu0 %v2973
        %5004 = vmatpush.msra.mxu0 %v2969
        %5005 = vmatpush.msra.mxu0 %v2965
        %5006 = vmatpush.msra.mxu0 %v2961
        %5007 = vmatpush.msra.mxu0 %v2957
        %5008 = vmatpush.msra.mxu0 %v2953
        %5009 = vmatmul.f32.gmra.mxu0 %v3980
        %v5010 = vpop.f32.mrf.mxu0
        %v5011 = vadd.f32 %v3084, %v5010
        %5012 = vdwg.mxu0
        %5013 = vmatpush.msra.mxu0 %v3077
        %5014 = vmatpush.msra.mxu0 %v3073
        %5015 = vmatpush.msra.mxu0 %v3069
        %5016 = vmatpush.msra.mxu0 %v3065
        %5017 = vmatpush.msra.mxu0 %v3061
        %5018 = vmatpush.msra.mxu0 %v3057
        %5019 = vmatpush.msra.mxu0 %v3053
        %5020 = vmatpush.msra.mxu0 %v3049
        %5021 = vmatpush.msra.mxu0 %v3045
        %5022 = vmatpush.msra.mxu0 %v3041
        %5023 = vmatpush.msra.mxu0 %v3037
        %5024 = vmatpush.msra.mxu0 %v3033
        %5025 = vmatpush.msra.mxu0 %v3029
        %5026 = vmatpush.msra.mxu0 %v3025
        %5027 = vmatpush.msra.mxu0 %v3021
        %5028 = vmatpush.msra.mxu0 %v3017
        %5029 = vmatmul.f32.gmra.mxu0 %v4203
        %v5030 = vpop.f32.mrf.mxu0
        %v5031 = vadd.f32 %v5011, %v5030
        %5032 = vdwg.mxu0
        %v5033 = vxor.u32 %v4911, 2147483648
        %v5034 = vxor.u32 %v4951, 2147483648
        %v5035 = vxor.u32 %v4991, 2147483648
        %v5036 = vmul.f32 %v5033, 1.442695
        %v5037 = vpow.pop %v5036
        %v5038 = vmul.f32 %v5034, 1.442695
        %v5039 = vpow.pop %v5038
        %v5040 = vmul.f32 %v5035, 1.442695
        %v5041 = vpow.pop %v5040
        %v5042 = vadd.f32 %v5037, 1.0
        %v5043 = vadd.f32 %v5039, 1.0
        %v5044 = vadd.f32 %v5041, 1.0
        %v5045 = vrcp.pop %v5042
        %v5046 = vmul.f32 %v5042, %v5045
        %v5047 = vsub.f32 1.0, %v5046
        %v5048 = vmul.f32 %v5045, %v5047
        %v5049 = vadd.f32 %v5045, %v5048
        %vm5050 = vweird.f32 %v5042
        %vm5051 = vweird.f32 %v5045
        %vm5052 = vmor %vm5050, %vm5051
        %v5053 = vsel %vm5052, %v5045, %v5049
        %v5054 = vand.u32 2147483647, %v5042
        %vm5055 = vcmp.eq.f32.partialorder %v5054, 8.507059e+37
        %v5056 = vand.u32 %v5042, 2147483648
        %v5057 = vor.u32 1.1754944e-38, %v5056
        %v5058 = vsel %vm5055, %v5057, %v5053
        %v5059 = vmul.f32 1.0, %v5058
        %v5060 = vrcp.pop %v5043
        %v5061 = vmul.f32 %v5043, %v5060
        %v5062 = vsub.f32 1.0, %v5061
        %v5063 = vmul.f32 %v5060, %v5062
        %v5064 = vadd.f32 %v5060, %v5063
        %vm5065 = vweird.f32 %v5043
        %vm5066 = vweird.f32 %v5060
        %vm5067 = vmor %vm5065, %vm5066
        %v5068 = vsel %vm5067, %v5060, %v5064
        %v5069 = vand.u32 2147483647, %v5043
        %vm5070 = vcmp.eq.f32.partialorder %v5069, 8.507059e+37
        %v5071 = vand.u32 %v5043, 2147483648
        %v5072 = vor.u32 1.1754944e-38, %v5071
        %v5073 = vsel %vm5070, %v5072, %v5068
        %v5074 = vmul.f32 1.0, %v5073
        %v5075 = vrcp.pop %v5044
        %v5076 = vmul.f32 %v5044, %v5075
        %v5077 = vsub.f32 1.0, %v5076
        %v5078 = vmul.f32 %v5075, %v5077
        %v5079 = vadd.f32 %v5075, %v5078
        %vm5080 = vweird.f32 %v5044
        %vm5081 = vweird.f32 %v5075
        %vm5082 = vmor %vm5080, %vm5081
        %v5083 = vsel %vm5082, %v5075, %v5079
        %v5084 = vand.u32 2147483647, %v5044
        %vm5085 = vcmp.eq.f32.partialorder %v5084, 8.507059e+37
        %v5086 = vand.u32 %v5044, 2147483648
        %v5087 = vor.u32 1.1754944e-38, %v5086
        %v5088 = vsel %vm5085, %v5087, %v5083
        %v5089 = vmul.f32 1.0, %v5088
        %v5090 = vtanh.pop %v5031
        %v5091 = vmul.f32 %v5074, %v4201
        %v5092 = vmul.f32 %v5059, %v5090
        %v5093 = vadd.f32 %v5091, %v5092
        %v5094 = vtanh.pop %v5093
        %v5095 = vmul.f32 %v5089, %v5094
        %5096 = vmatpush.msra.mxu0 %v584
        %5097 = vmatpush.msra.mxu0 %v580
        %5098 = vmatpush.msra.mxu0 %v576
        %5099 = vmatpush.msra.mxu0 %v572
        %5100 = vmatpush.msra.mxu0 %v568
        %5101 = vmatpush.msra.mxu0 %v564
        %5102 = vmatpush.msra.mxu0 %v560
        %5103 = vmatpush.msra.mxu0 %v556
        %5104 = vmatpush.msra.mxu0 %v552
        %5105 = vmatpush.msra.mxu0 %v548
        %5106 = vmatpush.msra.mxu0 %v544
        %5107 = vmatpush.msra.mxu0 %v540
        %5108 = vmatpush.msra.mxu0 %v536
        %5109 = vmatpush.msra.mxu0 %v532
        %5110 = vmatpush.msra.mxu0 %v528
        %5111 = vmatpush.msra.mxu0 %v524
        %5112 = vmatmul.f32.gmra.mxu0 %v522
        %v5113 = vpop.f32.mrf.mxu0
        %v5114 = vadd.f32 %v654, %v5113
        %5115 = vdwg.mxu0
        %5116 = vmatpush.msra.mxu0 %v648
        %5117 = vmatpush.msra.mxu0 %v644
        %5118 = vmatpush.msra.mxu0 %v640
        %5119 = vmatpush.msra.mxu0 %v636
        %5120 = vmatpush.msra.mxu0 %v632
        %5121 = vmatpush.msra.mxu0 %v628
        %5122 = vmatpush.msra.mxu0 %v624
        %5123 = vmatpush.msra.mxu0 %v620
        %5124 = vmatpush.msra.mxu0 %v616
        %5125 = vmatpush.msra.mxu0 %v612
        %5126 = vmatpush.msra.mxu0 %v608
        %5127 = vmatpush.msra.mxu0 %v604
        %5128 = vmatpush.msra.mxu0 %v600
        %5129 = vmatpush.msra.mxu0 %v596
        %5130 = vmatpush.msra.mxu0 %v592
        %5131 = vmatpush.msra.mxu0 %v588
        %5132 = vmatmul.f32.gmra.mxu0 %v4426
        %v5133 = vpop.f32.mrf.mxu0
        %v5134 = vadd.f32 %v5114, %v5133
        %5135 = vdwg.mxu0
        %5136 = vmatpush.msra.mxu0 %v585
        %5137 = vmatpush.msra.mxu0 %v581
        %5138 = vmatpush.msra.mxu0 %v577
        %5139 = vmatpush.msra.mxu0 %v573
        %5140 = vmatpush.msra.mxu0 %v569
        %5141 = vmatpush.msra.mxu0 %v565
        %5142 = vmatpush.msra.mxu0 %v561
        %5143 = vmatpush.msra.mxu0 %v557
        %5144 = vmatpush.msra.mxu0 %v553
        %5145 = vmatpush.msra.mxu0 %v549
        %5146 = vmatpush.msra.mxu0 %v545
        %5147 = vmatpush.msra.mxu0 %v541
        %5148 = vmatpush.msra.mxu0 %v537
        %5149 = vmatpush.msra.mxu0 %v533
        %5150 = vmatpush.msra.mxu0 %v529
        %5151 = vmatpush.msra.mxu0 %v525
        %5152 = vmatmul.f32.gmra.mxu0 %v522
        %v5153 = vpop.f32.mrf.mxu0
        %v5154 = vadd.f32 %v655, %v5153
        %5155 = vdwg.mxu0
        %5156 = vmatpush.msra.mxu0 %v649
        %5157 = vmatpush.msra.mxu0 %v645
        %5158 = vmatpush.msra.mxu0 %v641
        %5159 = vmatpush.msra.mxu0 %v637
        %5160 = vmatpush.msra.mxu0 %v633
        %5161 = vmatpush.msra.mxu0 %v629
        %5162 = vmatpush.msra.mxu0 %v625
        %5163 = vmatpush.msra.mxu0 %v621
        %5164 = vmatpush.msra.mxu0 %v617
        %5165 = vmatpush.msra.mxu0 %v613
        %5166 = vmatpush.msra.mxu0 %v609
        %5167 = vmatpush.msra.mxu0 %v605
        %5168 = vmatpush.msra.mxu0 %v601
        %5169 = vmatpush.msra.mxu0 %v597
        %5170 = vmatpush.msra.mxu0 %v593
        %5171 = vmatpush.msra.mxu0 %v589
        %5172 = vmatmul.f32.gmra.mxu0 %v4426
        %v5173 = vpop.f32.mrf.mxu0
        %v5174 = vadd.f32 %v5154, %v5173
        %5175 = vdwg.mxu0
        %5176 = vmatpush.msra.mxu0 %v586
        %5177 = vmatpush.msra.mxu0 %v582
        %5178 = vmatpush.msra.mxu0 %v578
        %5179 = vmatpush.msra.mxu0 %v574
        %5180 = vmatpush.msra.mxu0 %v570
        %5181 = vmatpush.msra.mxu0 %v566
        %5182 = vmatpush.msra.mxu0 %v562
        %5183 = vmatpush.msra.mxu0 %v558
        %5184 = vmatpush.msra.mxu0 %v554
        %5185 = vmatpush.msra.mxu0 %v550
        %5186 = vmatpush.msra.mxu0 %v546
        %5187 = vmatpush.msra.mxu0 %v542
        %5188 = vmatpush.msra.mxu0 %v538
        %5189 = vmatpush.msra.mxu0 %v534
        %5190 = vmatpush.msra.mxu0 %v530
        %5191 = vmatpush.msra.mxu0 %v526
        %5192 = vmatmul.f32.gmra.mxu0 %v522
        %v5193 = vpop.f32.mrf.mxu0
        %v5194 = vadd.f32 %v656, %v5193
        %5195 = vdwg.mxu0
        %5196 = vmatpush.msra.mxu0 %v650
        %5197 = vmatpush.msra.mxu0 %v646
        %5198 = vmatpush.msra.mxu0 %v642
        %5199 = vmatpush.msra.mxu0 %v638
        %5200 = vmatpush.msra.mxu0 %v634
        %5201 = vmatpush.msra.mxu0 %v630
        %5202 = vmatpush.msra.mxu0 %v626
        %5203 = vmatpush.msra.mxu0 %v622
        %5204 = vmatpush.msra.mxu0 %v618
        %5205 = vmatpush.msra.mxu0 %v614
        %5206 = vmatpush.msra.mxu0 %v610
        %5207 = vmatpush.msra.mxu0 %v606
        %5208 = vmatpush.msra.mxu0 %v602
        %5209 = vmatpush.msra.mxu0 %v598
        %5210 = vmatpush.msra.mxu0 %v594
        %5211 = vmatpush.msra.mxu0 %v590
        %5212 = vmatmul.f32.gmra.mxu0 %v4426
        %v5213 = vpop.f32.mrf.mxu0
        %v5214 = vadd.f32 %v5194, %v5213
        %5215 = vdwg.mxu0
        %5216 = vmatpush.msra.mxu0 %v587
        %5217 = vmatpush.msra.mxu0 %v583
        %5218 = vmatpush.msra.mxu0 %v579
        %5219 = vmatpush.msra.mxu0 %v575
        %5220 = vmatpush.msra.mxu0 %v571
        %5221 = vmatpush.msra.mxu0 %v567
        %5222 = vmatpush.msra.mxu0 %v563
        %5223 = vmatpush.msra.mxu0 %v559
        %5224 = vmatpush.msra.mxu0 %v555
        %5225 = vmatpush.msra.mxu0 %v551
        %5226 = vmatpush.msra.mxu0 %v547
        %5227 = vmatpush.msra.mxu0 %v543
        %5228 = vmatpush.msra.mxu0 %v539
        %5229 = vmatpush.msra.mxu0 %v535
        %5230 = vmatpush.msra.mxu0 %v531
        %5231 = vmatpush.msra.mxu0 %v527
        %5232 = vmatmul.f32.gmra.mxu0 %v522
        %v5233 = vpop.f32.mrf.mxu0
        %v5234 = vadd.f32 %v657, %v5233
        %5235 = vdwg.mxu0
        %5236 = vmatpush.msra.mxu0 %v651
        %5237 = vmatpush.msra.mxu0 %v647
        %5238 = vmatpush.msra.mxu0 %v643
        %5239 = vmatpush.msra.mxu0 %v639
        %5240 = vmatpush.msra.mxu0 %v635
        %5241 = vmatpush.msra.mxu0 %v631
        %5242 = vmatpush.msra.mxu0 %v627
        %5243 = vmatpush.msra.mxu0 %v623
        %5244 = vmatpush.msra.mxu0 %v619
        %5245 = vmatpush.msra.mxu0 %v615
        %5246 = vmatpush.msra.mxu0 %v611
        %5247 = vmatpush.msra.mxu0 %v607
        %5248 = vmatpush.msra.mxu0 %v603
        %5249 = vmatpush.msra.mxu0 %v599
        %5250 = vmatpush.msra.mxu0 %v595
        %5251 = vmatpush.msra.mxu0 %v591
        %5252 = vmatmul.f32.gmra.mxu0 %v4426
        %v5253 = vpop.f32.mrf.mxu0
        %v5254 = vadd.f32 %v5234, %v5253
        %5255 = vdwg.mxu0
        %v5256 = vxor.u32 %v5134, 2147483648
        %v5257 = vxor.u32 %v5174, 2147483648
        %v5258 = vxor.u32 %v5214, 2147483648
        %v5259 = vmul.f32 %v5256, 1.442695
        %v5260 = vpow.pop %v5259
        %v5261 = vmul.f32 %v5257, 1.442695
        %v5262 = vpow.pop %v5261
        %v5263 = vmul.f32 %v5258, 1.442695
        %v5264 = vpow.pop %v5263
        %v5265 = vadd.f32 %v5260, 1.0
        %v5266 = vadd.f32 %v5262, 1.0
        %v5267 = vadd.f32 %v5264, 1.0
        %v5268 = vrcp.pop %v5265
        %v5269 = vmul.f32 %v5265, %v5268
        %v5270 = vsub.f32 1.0, %v5269
        %v5271 = vmul.f32 %v5268, %v5270
        %v5272 = vadd.f32 %v5268, %v5271
        %vm5273 = vweird.f32 %v5265
        %vm5274 = vweird.f32 %v5268
        %vm5275 = vmor %vm5273, %vm5274
        %v5276 = vsel %vm5275, %v5268, %v5272
        %v5277 = vand.u32 2147483647, %v5265
        %vm5278 = vcmp.eq.f32.partialorder %v5277, 8.507059e+37
        %v5279 = vand.u32 %v5265, 2147483648
        %v5280 = vor.u32 1.1754944e-38, %v5279
        %v5281 = vsel %vm5278, %v5280, %v5276
        %v5282 = vmul.f32 1.0, %v5281
        %v5283 = vrcp.pop %v5266
        %v5284 = vmul.f32 %v5266, %v5283
        %v5285 = vsub.f32 1.0, %v5284
        %v5286 = vmul.f32 %v5283, %v5285
        %v5287 = vadd.f32 %v5283, %v5286
        %vm5288 = vweird.f32 %v5266
        %vm5289 = vweird.f32 %v5283
        %vm5290 = vmor %vm5288, %vm5289
        %v5291 = vsel %vm5290, %v5283, %v5287
        %v5292 = vand.u32 2147483647, %v5266
        %vm5293 = vcmp.eq.f32.partialorder %v5292, 8.507059e+37
        %v5294 = vand.u32 %v5266, 2147483648
        %v5295 = vor.u32 1.1754944e-38, %v5294
        %v5296 = vsel %vm5293, %v5295, %v5291
        %v5297 = vmul.f32 1.0, %v5296
        %v5298 = vrcp.pop %v5267
        %v5299 = vmul.f32 %v5267, %v5298
        %v5300 = vsub.f32 1.0, %v5299
        %v5301 = vmul.f32 %v5298, %v5300
        %v5302 = vadd.f32 %v5298, %v5301
        %vm5303 = vweird.f32 %v5267
        %vm5304 = vweird.f32 %v5298
        %vm5305 = vmor %vm5303, %vm5304
        %v5306 = vsel %vm5305, %v5298, %v5302
        %v5307 = vand.u32 2147483647, %v5267
        %vm5308 = vcmp.eq.f32.partialorder %v5307, 8.507059e+37
        %v5309 = vand.u32 %v5267, 2147483648
        %v5310 = vor.u32 1.1754944e-38, %v5309
        %v5311 = vsel %vm5308, %v5310, %v5306
        %v5312 = vmul.f32 1.0, %v5311
        %v5313 = vtanh.pop %v5254
        %v5314 = vmul.f32 %v5297, %v4424
        %v5315 = vmul.f32 %v5282, %v5313
        %v5316 = vadd.f32 %v5314, %v5315
        %v5317 = vtanh.pop %v5316
        %v5318 = vmul.f32 %v5312, %v5317
        %5319 = vmatpush.msra.mxu0 %v1169
        %5320 = vmatpush.msra.mxu0 %v1165
        %5321 = vmatpush.msra.mxu0 %v1161
        %5322 = vmatpush.msra.mxu0 %v1157
        %5323 = vmatpush.msra.mxu0 %v1153
        %5324 = vmatpush.msra.mxu0 %v1149
        %5325 = vmatpush.msra.mxu0 %v1145
        %5326 = vmatpush.msra.mxu0 %v1141
        %5327 = vmatpush.msra.mxu0 %v1137
        %5328 = vmatpush.msra.mxu0 %v1133
        %5329 = vmatpush.msra.mxu0 %v1129
        %5330 = vmatpush.msra.mxu0 %v1125
        %5331 = vmatpush.msra.mxu0 %v1121
        %5332 = vmatpush.msra.mxu0 %v1117
        %5333 = vmatpush.msra.mxu0 %v1113
        %5334 = vmatpush.msra.mxu0 %v1109
        %5335 = vmatmul.f32.gmra.mxu0 %v4426
        %v5336 = vpop.f32.mrf.mxu0
        %v5337 = vadd.f32 %v1240, %v5336
        %5338 = vdwg.mxu0
        %5339 = vmatpush.msra.mxu0 %v1233
        %5340 = vmatpush.msra.mxu0 %v1229
        %5341 = vmatpush.msra.mxu0 %v1225
        %5342 = vmatpush.msra.mxu0 %v1221
        %5343 = vmatpush.msra.mxu0 %v1217
        %5344 = vmatpush.msra.mxu0 %v1213
        %5345 = vmatpush.msra.mxu0 %v1209
        %5346 = vmatpush.msra.mxu0 %v1205
        %5347 = vmatpush.msra.mxu0 %v1201
        %5348 = vmatpush.msra.mxu0 %v1197
        %5349 = vmatpush.msra.mxu0 %v1193
        %5350 = vmatpush.msra.mxu0 %v1189
        %5351 = vmatpush.msra.mxu0 %v1185
        %5352 = vmatpush.msra.mxu0 %v1181
        %5353 = vmatpush.msra.mxu0 %v1177
        %5354 = vmatpush.msra.mxu0 %v1173
        %5355 = vmatmul.f32.gmra.mxu0 %v4649
        %v5356 = vpop.f32.mrf.mxu0
        %v5357 = vadd.f32 %v5337, %v5356
        %5358 = vdwg.mxu0
        %5359 = vmatpush.msra.mxu0 %v1170
        %5360 = vmatpush.msra.mxu0 %v1166
        %5361 = vmatpush.msra.mxu0 %v1162
        %5362 = vmatpush.msra.mxu0 %v1158
        %5363 = vmatpush.msra.mxu0 %v1154
        %5364 = vmatpush.msra.mxu0 %v1150
        %5365 = vmatpush.msra.mxu0 %v1146
        %5366 = vmatpush.msra.mxu0 %v1142
        %5367 = vmatpush.msra.mxu0 %v1138
        %5368 = vmatpush.msra.mxu0 %v1134
        %5369 = vmatpush.msra.mxu0 %v1130
        %5370 = vmatpush.msra.mxu0 %v1126
        %5371 = vmatpush.msra.mxu0 %v1122
        %5372 = vmatpush.msra.mxu0 %v1118
        %5373 = vmatpush.msra.mxu0 %v1114
        %5374 = vmatpush.msra.mxu0 %v1110
        %5375 = vmatmul.f32.gmra.mxu0 %v4426
        %v5376 = vpop.f32.mrf.mxu0
        %v5377 = vadd.f32 %v1241, %v5376
        %5378 = vdwg.mxu0
        %5379 = vmatpush.msra.mxu0 %v1234
        %5380 = vmatpush.msra.mxu0 %v1230
        %5381 = vmatpush.msra.mxu0 %v1226
        %5382 = vmatpush.msra.mxu0 %v1222
        %5383 = vmatpush.msra.mxu0 %v1218
        %5384 = vmatpush.msra.mxu0 %v1214
        %5385 = vmatpush.msra.mxu0 %v1210
        %5386 = vmatpush.msra.mxu0 %v1206
        %5387 = vmatpush.msra.mxu0 %v1202
        %5388 = vmatpush.msra.mxu0 %v1198
        %5389 = vmatpush.msra.mxu0 %v1194
        %5390 = vmatpush.msra.mxu0 %v1190
        %5391 = vmatpush.msra.mxu0 %v1186
        %5392 = vmatpush.msra.mxu0 %v1182
        %5393 = vmatpush.msra.mxu0 %v1178
        %5394 = vmatpush.msra.mxu0 %v1174
        %5395 = vmatmul.f32.gmra.mxu0 %v4649
        %v5396 = vpop.f32.mrf.mxu0
        %v5397 = vadd.f32 %v5377, %v5396
        %5398 = vdwg.mxu0
        %5399 = vmatpush.msra.mxu0 %v1171
        %5400 = vmatpush.msra.mxu0 %v1167
        %5401 = vmatpush.msra.mxu0 %v1163
        %5402 = vmatpush.msra.mxu0 %v1159
        %5403 = vmatpush.msra.mxu0 %v1155
        %5404 = vmatpush.msra.mxu0 %v1151
        %5405 = vmatpush.msra.mxu0 %v1147
        %5406 = vmatpush.msra.mxu0 %v1143
        %5407 = vmatpush.msra.mxu0 %v1139
        %5408 = vmatpush.msra.mxu0 %v1135
        %5409 = vmatpush.msra.mxu0 %v1131
        %5410 = vmatpush.msra.mxu0 %v1127
        %5411 = vmatpush.msra.mxu0 %v1123
        %5412 = vmatpush.msra.mxu0 %v1119
        %5413 = vmatpush.msra.mxu0 %v1115
        %5414 = vmatpush.msra.mxu0 %v1111
        %5415 = vmatmul.f32.gmra.mxu0 %v4426
        %v5416 = vpop.f32.mrf.mxu0
        %v5417 = vadd.f32 %v1242, %v5416
        %5418 = vdwg.mxu0
        %5419 = vmatpush.msra.mxu0 %v1235
        %5420 = vmatpush.msra.mxu0 %v1231
        %5421 = vmatpush.msra.mxu0 %v1227
        %5422 = vmatpush.msra.mxu0 %v1223
        %5423 = vmatpush.msra.mxu0 %v1219
        %5424 = vmatpush.msra.mxu0 %v1215
        %5425 = vmatpush.msra.mxu0 %v1211
        %5426 = vmatpush.msra.mxu0 %v1207
        %5427 = vmatpush.msra.mxu0 %v1203
        %5428 = vmatpush.msra.mxu0 %v1199
        %5429 = vmatpush.msra.mxu0 %v1195
        %5430 = vmatpush.msra.mxu0 %v1191
        %5431 = vmatpush.msra.mxu0 %v1187
        %5432 = vmatpush.msra.mxu0 %v1183
        %5433 = vmatpush.msra.mxu0 %v1179
        %5434 = vmatpush.msra.mxu0 %v1175
        %5435 = vmatmul.f32.gmra.mxu0 %v4649
        %v5436 = vpop.f32.mrf.mxu0
        %v5437 = vadd.f32 %v5417, %v5436
        %5438 = vdwg.mxu0
        %5439 = vmatpush.msra.mxu0 %v1172
        %5440 = vmatpush.msra.mxu0 %v1168
        %5441 = vmatpush.msra.mxu0 %v1164
        %5442 = vmatpush.msra.mxu0 %v1160
        %5443 = vmatpush.msra.mxu0 %v1156
        %5444 = vmatpush.msra.mxu0 %v1152
        %5445 = vmatpush.msra.mxu0 %v1148
        %5446 = vmatpush.msra.mxu0 %v1144
        %5447 = vmatpush.msra.mxu0 %v1140
        %5448 = vmatpush.msra.mxu0 %v1136
        %5449 = vmatpush.msra.mxu0 %v1132
        %5450 = vmatpush.msra.mxu0 %v1128
        %5451 = vmatpush.msra.mxu0 %v1124
        %5452 = vmatpush.msra.mxu0 %v1120
        %5453 = vmatpush.msra.mxu0 %v1116
        %5454 = vmatpush.msra.mxu0 %v1112
        %5455 = vmatmul.f32.gmra.mxu0 %v4426
        %v5456 = vpop.f32.mrf.mxu0
        %v5457 = vadd.f32 %v1243, %v5456
        %5458 = vdwg.mxu0
        %5459 = vmatpush.msra.mxu0 %v1236
        %5460 = vmatpush.msra.mxu0 %v1232
        %5461 = vmatpush.msra.mxu0 %v1228
        %5462 = vmatpush.msra.mxu0 %v1224
        %5463 = vmatpush.msra.mxu0 %v1220
        %5464 = vmatpush.msra.mxu0 %v1216
        %5465 = vmatpush.msra.mxu0 %v1212
        %5466 = vmatpush.msra.mxu0 %v1208
        %5467 = vmatpush.msra.mxu0 %v1204
        %5468 = vmatpush.msra.mxu0 %v1200
        %5469 = vmatpush.msra.mxu0 %v1196
        %5470 = vmatpush.msra.mxu0 %v1192
        %5471 = vmatpush.msra.mxu0 %v1188
        %5472 = vmatpush.msra.mxu0 %v1184
        %5473 = vmatpush.msra.mxu0 %v1180
        %5474 = vmatpush.msra.mxu0 %v1176
        %5475 = vmatmul.f32.gmra.mxu0 %v4649
        %v5476 = vpop.f32.mrf.mxu0
        %v5477 = vadd.f32 %v5457, %v5476
        %5478 = vdwg.mxu0
        %v5479 = vxor.u32 %v5357, 2147483648
        %v5480 = vxor.u32 %v5397, 2147483648
        %v5481 = vxor.u32 %v5437, 2147483648
        %v5482 = vmul.f32 %v5479, 1.442695
        %v5483 = vpow.pop %v5482
        %v5484 = vmul.f32 %v5480, 1.442695
        %v5485 = vpow.pop %v5484
        %v5486 = vmul.f32 %v5481, 1.442695
        %v5487 = vpow.pop %v5486
        %v5488 = vadd.f32 %v5483, 1.0
        %v5489 = vadd.f32 %v5485, 1.0
        %v5490 = vadd.f32 %v5487, 1.0
        %v5491 = vrcp.pop %v5488
        %v5492 = vmul.f32 %v5488, %v5491
        %v5493 = vsub.f32 1.0, %v5492
        %v5494 = vmul.f32 %v5491, %v5493
        %v5495 = vadd.f32 %v5491, %v5494
        %vm5496 = vweird.f32 %v5488
        %vm5497 = vweird.f32 %v5491
        %vm5498 = vmor %vm5496, %vm5497
        %v5499 = vsel %vm5498, %v5491, %v5495
        %v5500 = vand.u32 2147483647, %v5488
        %vm5501 = vcmp.eq.f32.partialorder %v5500, 8.507059e+37
        %v5502 = vand.u32 %v5488, 2147483648
        %v5503 = vor.u32 1.1754944e-38, %v5502
        %v5504 = vsel %vm5501, %v5503, %v5499
        %v5505 = vmul.f32 1.0, %v5504
        %v5506 = vrcp.pop %v5489
        %v5507 = vmul.f32 %v5489, %v5506
        %v5508 = vsub.f32 1.0, %v5507
        %v5509 = vmul.f32 %v5506, %v5508
        %v5510 = vadd.f32 %v5506, %v5509
        %vm5511 = vweird.f32 %v5489
        %vm5512 = vweird.f32 %v5506
        %vm5513 = vmor %vm5511, %vm5512
        %v5514 = vsel %vm5513, %v5506, %v5510
        %v5515 = vand.u32 2147483647, %v5489
        %vm5516 = vcmp.eq.f32.partialorder %v5515, 8.507059e+37
        %v5517 = vand.u32 %v5489, 2147483648
        %v5518 = vor.u32 1.1754944e-38, %v5517
        %v5519 = vsel %vm5516, %v5518, %v5514
        %v5520 = vmul.f32 1.0, %v5519
        %v5521 = vrcp.pop %v5490
        %v5522 = vmul.f32 %v5490, %v5521
        %v5523 = vsub.f32 1.0, %v5522
        %v5524 = vmul.f32 %v5521, %v5523
        %v5525 = vadd.f32 %v5521, %v5524
        %vm5526 = vweird.f32 %v5490
        %vm5527 = vweird.f32 %v5521
        %vm5528 = vmor %vm5526, %vm5527
        %v5529 = vsel %vm5528, %v5521, %v5525
        %v5530 = vand.u32 2147483647, %v5490
        %vm5531 = vcmp.eq.f32.partialorder %v5530, 8.507059e+37
        %v5532 = vand.u32 %v5490, 2147483648
        %v5533 = vor.u32 1.1754944e-38, %v5532
        %v5534 = vsel %vm5531, %v5533, %v5529
        %v5535 = vmul.f32 1.0, %v5534
        %v5536 = vtanh.pop %v5477
        %v5537 = vmul.f32 %v5520, %v4647
        %v5538 = vmul.f32 %v5505, %v5536
        %v5539 = vadd.f32 %v5537, %v5538
        %v5540 = vtanh.pop %v5539
        %v5541 = vmul.f32 %v5535, %v5540
        %5542 = vmatpush.msra.mxu0 %v1978
        %5543 = vmatpush.msra.mxu0 %v1974
        %5544 = vmatpush.msra.mxu0 %v1970
        %5545 = vmatpush.msra.mxu0 %v1966
        %5546 = vmatpush.msra.mxu0 %v1962
        %5547 = vmatpush.msra.mxu0 %v1958
        %5548 = vmatpush.msra.mxu0 %v1954
        %5549 = vmatpush.msra.mxu0 %v1950
        %5550 = vmatpush.msra.mxu0 %v1946
        %5551 = vmatpush.msra.mxu0 %v1942
        %5552 = vmatpush.msra.mxu0 %v1938
        %5553 = vmatpush.msra.mxu0 %v1934
        %5554 = vmatpush.msra.mxu0 %v1930
        %5555 = vmatpush.msra.mxu0 %v1926
        %5556 = vmatpush.msra.mxu0 %v1922
        %5557 = vmatpush.msra.mxu0 %v1918
        %5558 = vmatmul.f32.gmra.mxu0 %v4649
        %v5559 = vpop.f32.mrf.mxu0
        %v5560 = vadd.f32 %v2049, %v5559
        %5561 = vdwg.mxu0
        %5562 = vmatpush.msra.mxu0 %v2042
        %5563 = vmatpush.msra.mxu0 %v2038
        %5564 = vmatpush.msra.mxu0 %v2034
        %5565 = vmatpush.msra.mxu0 %v2030
        %5566 = vmatpush.msra.mxu0 %v2026
        %5567 = vmatpush.msra.mxu0 %v2022
        %5568 = vmatpush.msra.mxu0 %v2018
        %5569 = vmatpush.msra.mxu0 %v2014
        %5570 = vmatpush.msra.mxu0 %v2010
        %5571 = vmatpush.msra.mxu0 %v2006
        %5572 = vmatpush.msra.mxu0 %v2002
        %5573 = vmatpush.msra.mxu0 %v1998
        %5574 = vmatpush.msra.mxu0 %v1994
        %5575 = vmatpush.msra.mxu0 %v1990
        %5576 = vmatpush.msra.mxu0 %v1986
        %5577 = vmatpush.msra.mxu0 %v1982
        %5578 = vmatmul.f32.gmra.mxu0 %v4872
        %v5579 = vpop.f32.mrf.mxu0
        %v5580 = vadd.f32 %v5560, %v5579
        %5581 = vdwg.mxu0
        %5582 = vmatpush.msra.mxu0 %v1979
        %5583 = vmatpush.msra.mxu0 %v1975
        %5584 = vmatpush.msra.mxu0 %v1971
        %5585 = vmatpush.msra.mxu0 %v1967
        %5586 = vmatpush.msra.mxu0 %v1963
        %5587 = vmatpush.msra.mxu0 %v1959
        %5588 = vmatpush.msra.mxu0 %v1955
        %5589 = vmatpush.msra.mxu0 %v1951
        %5590 = vmatpush.msra.mxu0 %v1947
        %5591 = vmatpush.msra.mxu0 %v1943
        %5592 = vmatpush.msra.mxu0 %v1939
        %5593 = vmatpush.msra.mxu0 %v1935
        %5594 = vmatpush.msra.mxu0 %v1931
        %5595 = vmatpush.msra.mxu0 %v1927
        %5596 = vmatpush.msra.mxu0 %v1923
        %5597 = vmatpush.msra.mxu0 %v1919
        %5598 = vmatmul.f32.gmra.mxu0 %v4649
        %v5599 = vpop.f32.mrf.mxu0
        %v5600 = vadd.f32 %v2050, %v5599
        %5601 = vdwg.mxu0
        %5602 = vmatpush.msra.mxu0 %v2043
        %5603 = vmatpush.msra.mxu0 %v2039
        %5604 = vmatpush.msra.mxu0 %v2035
        %5605 = vmatpush.msra.mxu0 %v2031
        %5606 = vmatpush.msra.mxu0 %v2027
        %5607 = vmatpush.msra.mxu0 %v2023
        %5608 = vmatpush.msra.mxu0 %v2019
        %5609 = vmatpush.msra.mxu0 %v2015
        %5610 = vmatpush.msra.mxu0 %v2011
        %5611 = vmatpush.msra.mxu0 %v2007
        %5612 = vmatpush.msra.mxu0 %v2003
        %5613 = vmatpush.msra.mxu0 %v1999
        %5614 = vmatpush.msra.mxu0 %v1995
        %5615 = vmatpush.msra.mxu0 %v1991
        %5616 = vmatpush.msra.mxu0 %v1987
        %5617 = vmatpush.msra.mxu0 %v1983
        %5618 = vmatmul.f32.gmra.mxu0 %v4872
        %v5619 = vpop.f32.mrf.mxu0
        %v5620 = vadd.f32 %v5600, %v5619
        %5621 = vdwg.mxu0
        %5622 = vmatpush.msra.mxu0 %v1980
        %5623 = vmatpush.msra.mxu0 %v1976
        %5624 = vmatpush.msra.mxu0 %v1972
        %5625 = vmatpush.msra.mxu0 %v1968
        %5626 = vmatpush.msra.mxu0 %v1964
        %5627 = vmatpush.msra.mxu0 %v1960
        %5628 = vmatpush.msra.mxu0 %v1956
        %5629 = vmatpush.msra.mxu0 %v1952
        %5630 = vmatpush.msra.mxu0 %v1948
        %5631 = vmatpush.msra.mxu0 %v1944
        %5632 = vmatpush.msra.mxu0 %v1940
        %5633 = vmatpush.msra.mxu0 %v1936
        %5634 = vmatpush.msra.mxu0 %v1932
        %5635 = vmatpush.msra.mxu0 %v1928
        %5636 = vmatpush.msra.mxu0 %v1924
        %5637 = vmatpush.msra.mxu0 %v1920
        %5638 = vmatmul.f32.gmra.mxu0 %v4649
        %v5639 = vpop.f32.mrf.mxu0
        %v5640 = vadd.f32 %v2051, %v5639
        %5641 = vdwg.mxu0
        %5642 = vmatpush.msra.mxu0 %v2044
        %5643 = vmatpush.msra.mxu0 %v2040
        %5644 = vmatpush.msra.mxu0 %v2036
        %5645 = vmatpush.msra.mxu0 %v2032
        %5646 = vmatpush.msra.mxu0 %v2028
        %5647 = vmatpush.msra.mxu0 %v2024
        %5648 = vmatpush.msra.mxu0 %v2020
        %5649 = vmatpush.msra.mxu0 %v2016
        %5650 = vmatpush.msra.mxu0 %v2012
        %5651 = vmatpush.msra.mxu0 %v2008
        %5652 = vmatpush.msra.mxu0 %v2004
        %5653 = vmatpush.msra.mxu0 %v2000
        %5654 = vmatpush.msra.mxu0 %v1996
        %5655 = vmatpush.msra.mxu0 %v1992
        %5656 = vmatpush.msra.mxu0 %v1988
        %5657 = vmatpush.msra.mxu0 %v1984
        %5658 = vmatmul.f32.gmra.mxu0 %v4872
        %v5659 = vpop.f32.mrf.mxu0
        %v5660 = vadd.f32 %v5640, %v5659
        %5661 = vdwg.mxu0
        %5662 = vmatpush.msra.mxu0 %v1981
        %5663 = vmatpush.msra.mxu0 %v1977
        %5664 = vmatpush.msra.mxu0 %v1973
        %5665 = vmatpush.msra.mxu0 %v1969
        %5666 = vmatpush.msra.mxu0 %v1965
        %5667 = vmatpush.msra.mxu0 %v1961
        %5668 = vmatpush.msra.mxu0 %v1957
        %5669 = vmatpush.msra.mxu0 %v1953
        %5670 = vmatpush.msra.mxu0 %v1949
        %5671 = vmatpush.msra.mxu0 %v1945
        %5672 = vmatpush.msra.mxu0 %v1941
        %5673 = vmatpush.msra.mxu0 %v1937
        %5674 = vmatpush.msra.mxu0 %v1933
        %5675 = vmatpush.msra.mxu0 %v1929
        %5676 = vmatpush.msra.mxu0 %v1925
        %5677 = vmatpush.msra.mxu0 %v1921
        %5678 = vmatmul.f32.gmra.mxu0 %v4649
        %v5679 = vpop.f32.mrf.mxu0
        %v5680 = vadd.f32 %v2052, %v5679
        %5681 = vdwg.mxu0
        %5682 = vmatpush.msra.mxu0 %v2045
        %5683 = vmatpush.msra.mxu0 %v2041
        %5684 = vmatpush.msra.mxu0 %v2037
        %5685 = vmatpush.msra.mxu0 %v2033
        %5686 = vmatpush.msra.mxu0 %v2029
        %5687 = vmatpush.msra.mxu0 %v2025
        %5688 = vmatpush.msra.mxu0 %v2021
        %5689 = vmatpush.msra.mxu0 %v2017
        %5690 = vmatpush.msra.mxu0 %v2013
        %5691 = vmatpush.msra.mxu0 %v2009
        %5692 = vmatpush.msra.mxu0 %v2005
        %5693 = vmatpush.msra.mxu0 %v2001
        %5694 = vmatpush.msra.mxu0 %v1997
        %5695 = vmatpush.msra.mxu0 %v1993
        %5696 = vmatpush.msra.mxu0 %v1989
        %5697 = vmatpush.msra.mxu0 %v1985
        %5698 = vmatmul.f32.gmra.mxu0 %v4872
        %v5699 = vpop.f32.mrf.mxu0
        %v5700 = vadd.f32 %v5680, %v5699
        %5701 = vdwg.mxu0
        %v5702 = vxor.u32 %v5580, 2147483648
        %v5703 = vxor.u32 %v5620, 2147483648
        %v5704 = vxor.u32 %v5660, 2147483648
        %v5705 = vmul.f32 %v5702, 1.442695
        %v5706 = vpow.pop %v5705
        %v5707 = vmul.f32 %v5703, 1.442695
        %v5708 = vpow.pop %v5707
        %v5709 = vmul.f32 %v5704, 1.442695
        %v5710 = vpow.pop %v5709
        %v5711 = vadd.f32 %v5706, 1.0
        %v5712 = vadd.f32 %v5708, 1.0
        %v5713 = vadd.f32 %v5710, 1.0
        %v5714 = vrcp.pop %v5711
        %v5715 = vmul.f32 %v5711, %v5714
        %v5716 = vsub.f32 1.0, %v5715
        %v5717 = vmul.f32 %v5714, %v5716
        %v5718 = vadd.f32 %v5714, %v5717
        %vm5719 = vweird.f32 %v5711
        %vm5720 = vweird.f32 %v5714
        %vm5721 = vmor %vm5719, %vm5720
        %v5722 = vsel %vm5721, %v5714, %v5718
        %v5723 = vand.u32 2147483647, %v5711
        %vm5724 = vcmp.eq.f32.partialorder %v5723, 8.507059e+37
        %v5725 = vand.u32 %v5711, 2147483648
        %v5726 = vor.u32 1.1754944e-38, %v5725
        %v5727 = vsel %vm5724, %v5726, %v5722
        %v5728 = vmul.f32 1.0, %v5727
        %v5729 = vrcp.pop %v5712
        %v5730 = vmul.f32 %v5712, %v5729
        %v5731 = vsub.f32 1.0, %v5730
        %v5732 = vmul.f32 %v5729, %v5731
        %v5733 = vadd.f32 %v5729, %v5732
        %vm5734 = vweird.f32 %v5712
        %vm5735 = vweird.f32 %v5729
        %vm5736 = vmor %vm5734, %vm5735
        %v5737 = vsel %vm5736, %v5729, %v5733
        %v5738 = vand.u32 2147483647, %v5712
        %vm5739 = vcmp.eq.f32.partialorder %v5738, 8.507059e+37
        %v5740 = vand.u32 %v5712, 2147483648
        %v5741 = vor.u32 1.1754944e-38, %v5740
        %v5742 = vsel %vm5739, %v5741, %v5737
        %v5743 = vmul.f32 1.0, %v5742
        %v5744 = vrcp.pop %v5713
        %v5745 = vmul.f32 %v5713, %v5744
        %v5746 = vsub.f32 1.0, %v5745
        %v5747 = vmul.f32 %v5744, %v5746
        %v5748 = vadd.f32 %v5744, %v5747
        %vm5749 = vweird.f32 %v5713
        %vm5750 = vweird.f32 %v5744
        %vm5751 = vmor %vm5749, %vm5750
        %v5752 = vsel %vm5751, %v5744, %v5748
        %v5753 = vand.u32 2147483647, %v5713
        %vm5754 = vcmp.eq.f32.partialorder %v5753, 8.507059e+37
        %v5755 = vand.u32 %v5713, 2147483648
        %v5756 = vor.u32 1.1754944e-38, %v5755
        %v5757 = vsel %vm5754, %v5756, %v5752
        %v5758 = vmul.f32 1.0, %v5757
        %v5759 = vtanh.pop %v5700
        %v5760 = vmul.f32 %v5743, %v4870
        %v5761 = vmul.f32 %v5728, %v5759
        %v5762 = vadd.f32 %v5760, %v5761
        %v5763 = vtanh.pop %v5762
        %v5764 = vmul.f32 %v5758, %v5763
        %5765 = vmatpush.msra.mxu0 %v3010
        %5766 = vmatpush.msra.mxu0 %v3006
        %5767 = vmatpush.msra.mxu0 %v3002
        %5768 = vmatpush.msra.mxu0 %v2998
        %5769 = vmatpush.msra.mxu0 %v2994
        %5770 = vmatpush.msra.mxu0 %v2990
        %5771 = vmatpush.msra.mxu0 %v2986
        %5772 = vmatpush.msra.mxu0 %v2982
        %5773 = vmatpush.msra.mxu0 %v2978
        %5774 = vmatpush.msra.mxu0 %v2974
        %5775 = vmatpush.msra.mxu0 %v2970
        %5776 = vmatpush.msra.mxu0 %v2966
        %5777 = vmatpush.msra.mxu0 %v2962
        %5778 = vmatpush.msra.mxu0 %v2958
        %5779 = vmatpush.msra.mxu0 %v2954
        %5780 = vmatpush.msra.mxu0 %v2950
        %5781 = vmatmul.f32.gmra.mxu0 %v4872
        %v5782 = vpop.f32.mrf.mxu0
        %v5783 = vadd.f32 %v3081, %v5782
        %5784 = vdwg.mxu0
        %5785 = vmatpush.msra.mxu0 %v3074
        %5786 = vmatpush.msra.mxu0 %v3070
        %5787 = vmatpush.msra.mxu0 %v3066
        %5788 = vmatpush.msra.mxu0 %v3062
        %5789 = vmatpush.msra.mxu0 %v3058
        %5790 = vmatpush.msra.mxu0 %v3054
        %5791 = vmatpush.msra.mxu0 %v3050
        %5792 = vmatpush.msra.mxu0 %v3046
        %5793 = vmatpush.msra.mxu0 %v3042
        %5794 = vmatpush.msra.mxu0 %v3038
        %5795 = vmatpush.msra.mxu0 %v3034
        %5796 = vmatpush.msra.mxu0 %v3030
        %5797 = vmatpush.msra.mxu0 %v3026
        %5798 = vmatpush.msra.mxu0 %v3022
        %5799 = vmatpush.msra.mxu0 %v3018
        %5800 = vmatpush.msra.mxu0 %v3014
        %5801 = vmatmul.f32.gmra.mxu0 %v5095
        %v5802 = vpop.f32.mrf.mxu0
        %v5803 = vadd.f32 %v5783, %v5802
        %5804 = vdwg.mxu0
        %5805 = vmatpush.msra.mxu0 %v3011
        %5806 = vmatpush.msra.mxu0 %v3007
        %5807 = vmatpush.msra.mxu0 %v3003
        %5808 = vmatpush.msra.mxu0 %v2999
        %5809 = vmatpush.msra.mxu0 %v2995
        %5810 = vmatpush.msra.mxu0 %v2991
        %5811 = vmatpush.msra.mxu0 %v2987
        %5812 = vmatpush.msra.mxu0 %v2983
        %5813 = vmatpush.msra.mxu0 %v2979
        %5814 = vmatpush.msra.mxu0 %v2975
        %5815 = vmatpush.msra.mxu0 %v2971
        %5816 = vmatpush.msra.mxu0 %v2967
        %5817 = vmatpush.msra.mxu0 %v2963
        %5818 = vmatpush.msra.mxu0 %v2959
        %5819 = vmatpush.msra.mxu0 %v2955
        %5820 = vmatpush.msra.mxu0 %v2951
        %5821 = vmatmul.f32.gmra.mxu0 %v4872
        %v5822 = vpop.f32.mrf.mxu0
        %v5823 = vadd.f32 %v3082, %v5822
        %5824 = vdwg.mxu0
        %5825 = vmatpush.msra.mxu0 %v3075
        %5826 = vmatpush.msra.mxu0 %v3071
        %5827 = vmatpush.msra.mxu0 %v3067
        %5828 = vmatpush.msra.mxu0 %v3063
        %5829 = vmatpush.msra.mxu0 %v3059
        %5830 = vmatpush.msra.mxu0 %v3055
        %5831 = vmatpush.msra.mxu0 %v3051
        %5832 = vmatpush.msra.mxu0 %v3047
        %5833 = vmatpush.msra.mxu0 %v3043
        %5834 = vmatpush.msra.mxu0 %v3039
        %5835 = vmatpush.msra.mxu0 %v3035
        %5836 = vmatpush.msra.mxu0 %v3031
        %5837 = vmatpush.msra.mxu0 %v3027
        %5838 = vmatpush.msra.mxu0 %v3023
        %5839 = vmatpush.msra.mxu0 %v3019
        %5840 = vmatpush.msra.mxu0 %v3015
        %5841 = vmatmul.f32.gmra.mxu0 %v5095
        %v5842 = vpop.f32.mrf.mxu0
        %v5843 = vadd.f32 %v5823, %v5842
        %5844 = vdwg.mxu0
        %5845 = vmatpush.msra.mxu0 %v3012
        %5846 = vmatpush.msra.mxu0 %v3008
        %5847 = vmatpush.msra.mxu0 %v3004
        %5848 = vmatpush.msra.mxu0 %v3000
        %5849 = vmatpush.msra.mxu0 %v2996
        %5850 = vmatpush.msra.mxu0 %v2992
        %5851 = vmatpush.msra.mxu0 %v2988
        %5852 = vmatpush.msra.mxu0 %v2984
        %5853 = vmatpush.msra.mxu0 %v2980
        %5854 = vmatpush.msra.mxu0 %v2976
        %5855 = vmatpush.msra.mxu0 %v2972
        %5856 = vmatpush.msra.mxu0 %v2968
        %5857 = vmatpush.msra.mxu0 %v2964
        %5858 = vmatpush.msra.mxu0 %v2960
        %5859 = vmatpush.msra.mxu0 %v2956
        %5860 = vmatpush.msra.mxu0 %v2952
        %5861 = vmatmul.f32.gmra.mxu0 %v4872
        %v5862 = vpop.f32.mrf.mxu0
        %v5863 = vadd.f32 %v3083, %v5862
        %5864 = vdwg.mxu0
        %5865 = vmatpush.msra.mxu0 %v3076
        %5866 = vmatpush.msra.mxu0 %v3072
        %5867 = vmatpush.msra.mxu0 %v3068
        %5868 = vmatpush.msra.mxu0 %v3064
        %5869 = vmatpush.msra.mxu0 %v3060
        %5870 = vmatpush.msra.mxu0 %v3056
        %5871 = vmatpush.msra.mxu0 %v3052
        %5872 = vmatpush.msra.mxu0 %v3048
        %5873 = vmatpush.msra.mxu0 %v3044
        %5874 = vmatpush.msra.mxu0 %v3040
        %5875 = vmatpush.msra.mxu0 %v3036
        %5876 = vmatpush.msra.mxu0 %v3032
        %5877 = vmatpush.msra.mxu0 %v3028
        %5878 = vmatpush.msra.mxu0 %v3024
        %5879 = vmatpush.msra.mxu0 %v3020
        %5880 = vmatpush.msra.mxu0 %v3016
        %5881 = vmatmul.f32.gmra.mxu0 %v5095
        %v5882 = vpop.f32.mrf.mxu0
        %v5883 = vadd.f32 %v5863, %v5882
        %5884 = vdwg.mxu0
        %5885 = vmatpush.msra.mxu0 %v3013
        %5886 = vmatpush.msra.mxu0 %v3009
        %5887 = vmatpush.msra.mxu0 %v3005
        %5888 = vmatpush.msra.mxu0 %v3001
        %5889 = vmatpush.msra.mxu0 %v2997
        %5890 = vmatpush.msra.mxu0 %v2993
        %5891 = vmatpush.msra.mxu0 %v2989
        %5892 = vmatpush.msra.mxu0 %v2985
        %5893 = vmatpush.msra.mxu0 %v2981
        %5894 = vmatpush.msra.mxu0 %v2977
        %5895 = vmatpush.msra.mxu0 %v2973
        %5896 = vmatpush.msra.mxu0 %v2969
        %5897 = vmatpush.msra.mxu0 %v2965
        %5898 = vmatpush.msra.mxu0 %v2961
        %5899 = vmatpush.msra.mxu0 %v2957
        %5900 = vmatpush.msra.mxu0 %v2953
        %5901 = vmatmul.f32.gmra.mxu0 %v4872
        %v5902 = vpop.f32.mrf.mxu0
        %v5903 = vadd.f32 %v3084, %v5902
        %5904 = vdwg.mxu0
        %5905 = vmatpush.msra.mxu0 %v3077
        %5906 = vmatpush.msra.mxu0 %v3073
        %5907 = vmatpush.msra.mxu0 %v3069
        %5908 = vmatpush.msra.mxu0 %v3065
        %5909 = vmatpush.msra.mxu0 %v3061
        %5910 = vmatpush.msra.mxu0 %v3057
        %5911 = vmatpush.msra.mxu0 %v3053
        %5912 = vmatpush.msra.mxu0 %v3049
        %5913 = vmatpush.msra.mxu0 %v3045
        %5914 = vmatpush.msra.mxu0 %v3041
        %5915 = vmatpush.msra.mxu0 %v3037
        %5916 = vmatpush.msra.mxu0 %v3033
        %5917 = vmatpush.msra.mxu0 %v3029
        %5918 = vmatpush.msra.mxu0 %v3025
        %5919 = vmatpush.msra.mxu0 %v3021
        %5920 = vmatpush.msra.mxu0 %v3017
        %5921 = vmatmul.f32.gmra.mxu0 %v5095
        %v5922 = vpop.f32.mrf.mxu0
        %v5923 = vadd.f32 %v5903, %v5922
        %5924 = vdwg.mxu0
        %v5925 = vxor.u32 %v5803, 2147483648
        %v5926 = vxor.u32 %v5843, 2147483648
        %v5927 = vxor.u32 %v5883, 2147483648
        %v5928 = vmul.f32 %v5925, 1.442695
        %v5929 = vpow.pop %v5928
        %v5930 = vmul.f32 %v5926, 1.442695
        %v5931 = vpow.pop %v5930
        %v5932 = vmul.f32 %v5927, 1.442695
        %v5933 = vpow.pop %v5932
        %v5934 = vadd.f32 %v5929, 1.0
        %v5935 = vadd.f32 %v5931, 1.0
        %v5936 = vadd.f32 %v5933, 1.0
        %v5937 = vrcp.pop %v5934
        %v5938 = vmul.f32 %v5934, %v5937
        %v5939 = vsub.f32 1.0, %v5938
        %v5940 = vmul.f32 %v5937, %v5939
        %v5941 = vadd.f32 %v5937, %v5940
        %vm5942 = vweird.f32 %v5934
        %vm5943 = vweird.f32 %v5937
        %vm5944 = vmor %vm5942, %vm5943
        %v5945 = vsel %vm5944, %v5937, %v5941
        %v5946 = vand.u32 2147483647, %v5934
        %vm5947 = vcmp.eq.f32.partialorder %v5946, 8.507059e+37
        %v5948 = vand.u32 %v5934, 2147483648
        %v5949 = vor.u32 1.1754944e-38, %v5948
        %v5950 = vsel %vm5947, %v5949, %v5945
        %v5951 = vmul.f32 1.0, %v5950
        %v5952 = vrcp.pop %v5935
        %v5953 = vmul.f32 %v5935, %v5952
        %v5954 = vsub.f32 1.0, %v5953
        %v5955 = vmul.f32 %v5952, %v5954
        %v5956 = vadd.f32 %v5952, %v5955
        %vm5957 = vweird.f32 %v5935
        %vm5958 = vweird.f32 %v5952
        %vm5959 = vmor %vm5957, %vm5958
        %v5960 = vsel %vm5959, %v5952, %v5956
        %v5961 = vand.u32 2147483647, %v5935
        %vm5962 = vcmp.eq.f32.partialorder %v5961, 8.507059e+37
        %v5963 = vand.u32 %v5935, 2147483648
        %v5964 = vor.u32 1.1754944e-38, %v5963
        %v5965 = vsel %vm5962, %v5964, %v5960
        %v5966 = vmul.f32 1.0, %v5965
        %v5967 = vrcp.pop %v5936
        %v5968 = vmul.f32 %v5936, %v5967
        %v5969 = vsub.f32 1.0, %v5968
        %v5970 = vmul.f32 %v5967, %v5969
        %v5971 = vadd.f32 %v5967, %v5970
        %vm5972 = vweird.f32 %v5936
        %vm5973 = vweird.f32 %v5967
        %vm5974 = vmor %vm5972, %vm5973
        %v5975 = vsel %vm5974, %v5967, %v5971
        %v5976 = vand.u32 2147483647, %v5936
        %vm5977 = vcmp.eq.f32.partialorder %v5976, 8.507059e+37
        %v5978 = vand.u32 %v5936, 2147483648
        %v5979 = vor.u32 1.1754944e-38, %v5978
        %v5980 = vsel %vm5977, %v5979, %v5975
        %v5981 = vmul.f32 1.0, %v5980
        %v5982 = vtanh.pop %v5923
        %v5983 = vmul.f32 %v5966, %v5093
        %v5984 = vmul.f32 %v5951, %v5982
        %v5985 = vadd.f32 %v5983, %v5984
        %v5986 = vtanh.pop %v5985
        %v5987 = vmul.f32 %v5981, %v5986
        %5988 = vmatpush.msra.mxu0 %v584
        %5989 = vmatpush.msra.mxu0 %v580
        %5990 = vmatpush.msra.mxu0 %v576
        %5991 = vmatpush.msra.mxu0 %v572
        %5992 = vmatpush.msra.mxu0 %v568
        %5993 = vmatpush.msra.mxu0 %v564
        %5994 = vmatpush.msra.mxu0 %v560
        %5995 = vmatpush.msra.mxu0 %v556
        %5996 = vmatpush.msra.mxu0 %v552
        %5997 = vmatpush.msra.mxu0 %v548
        %5998 = vmatpush.msra.mxu0 %v544
        %5999 = vmatpush.msra.mxu0 %v540
        %6000 = vmatpush.msra.mxu0 %v536
        %6001 = vmatpush.msra.mxu0 %v532
        %6002 = vmatpush.msra.mxu0 %v528
        %6003 = vmatpush.msra.mxu0 %v524
        %6004 = vmatmul.f32.gmra.mxu0 %v523
        %v6005 = vpop.f32.mrf.mxu0
        %v6006 = vadd.f32 %v654, %v6005
        %6007 = vdwg.mxu0
        %6008 = vmatpush.msra.mxu0 %v648
        %6009 = vmatpush.msra.mxu0 %v644
        %6010 = vmatpush.msra.mxu0 %v640
        %6011 = vmatpush.msra.mxu0 %v636
        %6012 = vmatpush.msra.mxu0 %v632
        %6013 = vmatpush.msra.mxu0 %v628
        %6014 = vmatpush.msra.mxu0 %v624
        %6015 = vmatpush.msra.mxu0 %v620
        %6016 = vmatpush.msra.mxu0 %v616
        %6017 = vmatpush.msra.mxu0 %v612
        %6018 = vmatpush.msra.mxu0 %v608
        %6019 = vmatpush.msra.mxu0 %v604
        %6020 = vmatpush.msra.mxu0 %v600
        %6021 = vmatpush.msra.mxu0 %v596
        %6022 = vmatpush.msra.mxu0 %v592
        %6023 = vmatpush.msra.mxu0 %v588
        %6024 = vmatmul.f32.gmra.mxu0 %v5318
        %v6025 = vpop.f32.mrf.mxu0
        %v6026 = vadd.f32 %v6006, %v6025
        %6027 = vdwg.mxu0
        %6028 = vmatpush.msra.mxu0 %v585
        %6029 = vmatpush.msra.mxu0 %v581
        %6030 = vmatpush.msra.mxu0 %v577
        %6031 = vmatpush.msra.mxu0 %v573
        %6032 = vmatpush.msra.mxu0 %v569
        %6033 = vmatpush.msra.mxu0 %v565
        %6034 = vmatpush.msra.mxu0 %v561
        %6035 = vmatpush.msra.mxu0 %v557
        %6036 = vmatpush.msra.mxu0 %v553
        %6037 = vmatpush.msra.mxu0 %v549
        %6038 = vmatpush.msra.mxu0 %v545
        %6039 = vmatpush.msra.mxu0 %v541
        %6040 = vmatpush.msra.mxu0 %v537
        %6041 = vmatpush.msra.mxu0 %v533
        %6042 = vmatpush.msra.mxu0 %v529
        %6043 = vmatpush.msra.mxu0 %v525
        %6044 = vmatmul.f32.gmra.mxu0 %v523
        %v6045 = vpop.f32.mrf.mxu0
        %v6046 = vadd.f32 %v655, %v6045
        %6047 = vdwg.mxu0
        %6048 = vmatpush.msra.mxu0 %v649
        %6049 = vmatpush.msra.mxu0 %v645
        %6050 = vmatpush.msra.mxu0 %v641
        %6051 = vmatpush.msra.mxu0 %v637
        %6052 = vmatpush.msra.mxu0 %v633
        %6053 = vmatpush.msra.mxu0 %v629
        %6054 = vmatpush.msra.mxu0 %v625
        %6055 = vmatpush.msra.mxu0 %v621
        %6056 = vmatpush.msra.mxu0 %v617
        %6057 = vmatpush.msra.mxu0 %v613
        %6058 = vmatpush.msra.mxu0 %v609
        %6059 = vmatpush.msra.mxu0 %v605
        %6060 = vmatpush.msra.mxu0 %v601
        %6061 = vmatpush.msra.mxu0 %v597
        %6062 = vmatpush.msra.mxu0 %v593
        %6063 = vmatpush.msra.mxu0 %v589
        %6064 = vmatmul.f32.gmra.mxu0 %v5318
        %v6065 = vpop.f32.mrf.mxu0
        %v6066 = vadd.f32 %v6046, %v6065
        %6067 = vdwg.mxu0
        %6068 = vmatpush.msra.mxu0 %v586
        %6069 = vmatpush.msra.mxu0 %v582
        %6070 = vmatpush.msra.mxu0 %v578
        %6071 = vmatpush.msra.mxu0 %v574
        %6072 = vmatpush.msra.mxu0 %v570
        %6073 = vmatpush.msra.mxu0 %v566
        %6074 = vmatpush.msra.mxu0 %v562
        %6075 = vmatpush.msra.mxu0 %v558
        %6076 = vmatpush.msra.mxu0 %v554
        %6077 = vmatpush.msra.mxu0 %v550
        %6078 = vmatpush.msra.mxu0 %v546
        %6079 = vmatpush.msra.mxu0 %v542
        %6080 = vmatpush.msra.mxu0 %v538
        %6081 = vmatpush.msra.mxu0 %v534
        %6082 = vmatpush.msra.mxu0 %v530
        %6083 = vmatpush.msra.mxu0 %v526
        %6084 = vmatmul.f32.gmra.mxu0 %v523
        %v6085 = vpop.f32.mrf.mxu0
        %v6086 = vadd.f32 %v656, %v6085
        %6087 = vdwg.mxu0
        %6088 = vmatpush.msra.mxu0 %v650
        %6089 = vmatpush.msra.mxu0 %v646
        %6090 = vmatpush.msra.mxu0 %v642
        %6091 = vmatpush.msra.mxu0 %v638
        %6092 = vmatpush.msra.mxu0 %v634
        %6093 = vmatpush.msra.mxu0 %v630
        %6094 = vmatpush.msra.mxu0 %v626
        %6095 = vmatpush.msra.mxu0 %v622
        %6096 = vmatpush.msra.mxu0 %v618
        %6097 = vmatpush.msra.mxu0 %v614
        %6098 = vmatpush.msra.mxu0 %v610
        %6099 = vmatpush.msra.mxu0 %v606
        %6100 = vmatpush.msra.mxu0 %v602
        %6101 = vmatpush.msra.mxu0 %v598
        %6102 = vmatpush.msra.mxu0 %v594
        %6103 = vmatpush.msra.mxu0 %v590
        %6104 = vmatmul.f32.gmra.mxu0 %v5318
        %v6105 = vpop.f32.mrf.mxu0
        %v6106 = vadd.f32 %v6086, %v6105
        %6107 = vdwg.mxu0
        %6108 = vmatpush.msra.mxu0 %v587
        %6109 = vmatpush.msra.mxu0 %v583
        %6110 = vmatpush.msra.mxu0 %v579
        %6111 = vmatpush.msra.mxu0 %v575
        %6112 = vmatpush.msra.mxu0 %v571
        %6113 = vmatpush.msra.mxu0 %v567
        %6114 = vmatpush.msra.mxu0 %v563
        %6115 = vmatpush.msra.mxu0 %v559
        %6116 = vmatpush.msra.mxu0 %v555
        %6117 = vmatpush.msra.mxu0 %v551
        %6118 = vmatpush.msra.mxu0 %v547
        %6119 = vmatpush.msra.mxu0 %v543
        %6120 = vmatpush.msra.mxu0 %v539
        %6121 = vmatpush.msra.mxu0 %v535
        %6122 = vmatpush.msra.mxu0 %v531
        %6123 = vmatpush.msra.mxu0 %v527
        %6124 = vmatmul.f32.gmra.mxu0 %v523
        %v6125 = vpop.f32.mrf.mxu0
        %v6126 = vadd.f32 %v657, %v6125
        %6127 = vdwg.mxu0
        %6128 = vmatpush.msra.mxu0 %v651
        %6129 = vmatpush.msra.mxu0 %v647
        %6130 = vmatpush.msra.mxu0 %v643
        %6131 = vmatpush.msra.mxu0 %v639
        %6132 = vmatpush.msra.mxu0 %v635
        %6133 = vmatpush.msra.mxu0 %v631
        %6134 = vmatpush.msra.mxu0 %v627
        %6135 = vmatpush.msra.mxu0 %v623
        %6136 = vmatpush.msra.mxu0 %v619
        %6137 = vmatpush.msra.mxu0 %v615
        %6138 = vmatpush.msra.mxu0 %v611
        %6139 = vmatpush.msra.mxu0 %v607
        %6140 = vmatpush.msra.mxu0 %v603
        %6141 = vmatpush.msra.mxu0 %v599
        %6142 = vmatpush.msra.mxu0 %v595
        %6143 = vmatpush.msra.mxu0 %v591
        %6144 = vmatmul.f32.gmra.mxu0 %v5318
        %v6145 = vpop.f32.mrf.mxu0
        %v6146 = vadd.f32 %v6126, %v6145
        %6147 = vdwg.mxu0
        %v6148 = vxor.u32 %v6026, 2147483648
        %v6149 = vxor.u32 %v6066, 2147483648
        %v6150 = vxor.u32 %v6106, 2147483648
        %v6151 = vmul.f32 %v6148, 1.442695
        %v6152 = vpow.pop %v6151
        %v6153 = vmul.f32 %v6149, 1.442695
        %v6154 = vpow.pop %v6153
        %v6155 = vmul.f32 %v6150, 1.442695
        %v6156 = vpow.pop %v6155
        %v6157 = vadd.f32 %v6152, 1.0
        %v6158 = vadd.f32 %v6154, 1.0
        %v6159 = vadd.f32 %v6156, 1.0
        %v6160 = vrcp.pop %v6157
        %v6161 = vmul.f32 %v6157, %v6160
        %v6162 = vsub.f32 1.0, %v6161
        %v6163 = vmul.f32 %v6160, %v6162
        %v6164 = vadd.f32 %v6160, %v6163
        %vm6165 = vweird.f32 %v6157
        %vm6166 = vweird.f32 %v6160
        %vm6167 = vmor %vm6165, %vm6166
        %v6168 = vsel %vm6167, %v6160, %v6164
        %v6169 = vand.u32 2147483647, %v6157
        %vm6170 = vcmp.eq.f32.partialorder %v6169, 8.507059e+37
        %v6171 = vand.u32 %v6157, 2147483648
        %v6172 = vor.u32 1.1754944e-38, %v6171
        %v6173 = vsel %vm6170, %v6172, %v6168
        %v6174 = vmul.f32 1.0, %v6173
        %v6175 = vrcp.pop %v6158
        %v6176 = vmul.f32 %v6158, %v6175
        %v6177 = vsub.f32 1.0, %v6176
        %v6178 = vmul.f32 %v6175, %v6177
        %v6179 = vadd.f32 %v6175, %v6178
        %vm6180 = vweird.f32 %v6158
        %vm6181 = vweird.f32 %v6175
        %vm6182 = vmor %vm6180, %vm6181
        %v6183 = vsel %vm6182, %v6175, %v6179
        %v6184 = vand.u32 2147483647, %v6158
        %vm6185 = vcmp.eq.f32.partialorder %v6184, 8.507059e+37
        %v6186 = vand.u32 %v6158, 2147483648
        %v6187 = vor.u32 1.1754944e-38, %v6186
        %v6188 = vsel %vm6185, %v6187, %v6183
        %v6189 = vmul.f32 1.0, %v6188
        %v6190 = vrcp.pop %v6159
        %v6191 = vmul.f32 %v6159, %v6190
        %v6192 = vsub.f32 1.0, %v6191
        %v6193 = vmul.f32 %v6190, %v6192
        %v6194 = vadd.f32 %v6190, %v6193
        %vm6195 = vweird.f32 %v6159
        %vm6196 = vweird.f32 %v6190
        %vm6197 = vmor %vm6195, %vm6196
        %v6198 = vsel %vm6197, %v6190, %v6194
        %v6199 = vand.u32 2147483647, %v6159
        %vm6200 = vcmp.eq.f32.partialorder %v6199, 8.507059e+37
        %v6201 = vand.u32 %v6159, 2147483648
        %v6202 = vor.u32 1.1754944e-38, %v6201
        %v6203 = vsel %vm6200, %v6202, %v6198
        %v6204 = vmul.f32 1.0, %v6203
        %v6205 = vtanh.pop %v6146
        %v6206 = vmul.f32 %v6189, %v5316
        %v6207 = vmul.f32 %v6174, %v6205
        %v6208 = vadd.f32 %v6206, %v6207
        %v6209 = vtanh.pop %v6208
        %v6210 = vmul.f32 %v6204, %v6209
        %6211 = vmatpush.msra.mxu0 %v1169
        %6212 = vmatpush.msra.mxu0 %v1165
        %6213 = vmatpush.msra.mxu0 %v1161
        %6214 = vmatpush.msra.mxu0 %v1157
        %6215 = vmatpush.msra.mxu0 %v1153
        %6216 = vmatpush.msra.mxu0 %v1149
        %6217 = vmatpush.msra.mxu0 %v1145
        %6218 = vmatpush.msra.mxu0 %v1141
        %6219 = vmatpush.msra.mxu0 %v1137
        %6220 = vmatpush.msra.mxu0 %v1133
        %6221 = vmatpush.msra.mxu0 %v1129
        %6222 = vmatpush.msra.mxu0 %v1125
        %6223 = vmatpush.msra.mxu0 %v1121
        %6224 = vmatpush.msra.mxu0 %v1117
        %6225 = vmatpush.msra.mxu0 %v1113
        %6226 = vmatpush.msra.mxu0 %v1109
        %6227 = vmatmul.f32.gmra.mxu0 %v5318
        %v6228 = vpop.f32.mrf.mxu0
        %v6229 = vadd.f32 %v1240, %v6228
        %6230 = vdwg.mxu0
        %6231 = vmatpush.msra.mxu0 %v1233
        %6232 = vmatpush.msra.mxu0 %v1229
        %6233 = vmatpush.msra.mxu0 %v1225
        %6234 = vmatpush.msra.mxu0 %v1221
        %6235 = vmatpush.msra.mxu0 %v1217
        %6236 = vmatpush.msra.mxu0 %v1213
        %6237 = vmatpush.msra.mxu0 %v1209
        %6238 = vmatpush.msra.mxu0 %v1205
        %6239 = vmatpush.msra.mxu0 %v1201
        %6240 = vmatpush.msra.mxu0 %v1197
        %6241 = vmatpush.msra.mxu0 %v1193
        %6242 = vmatpush.msra.mxu0 %v1189
        %6243 = vmatpush.msra.mxu0 %v1185
        %6244 = vmatpush.msra.mxu0 %v1181
        %6245 = vmatpush.msra.mxu0 %v1177
        %6246 = vmatpush.msra.mxu0 %v1173
        %6247 = vmatmul.f32.gmra.mxu0 %v5541
        %v6248 = vpop.f32.mrf.mxu0
        %v6249 = vadd.f32 %v6229, %v6248
        %6250 = vdwg.mxu0
        %6251 = vmatpush.msra.mxu0 %v1170
        %6252 = vmatpush.msra.mxu0 %v1166
        %6253 = vmatpush.msra.mxu0 %v1162
        %6254 = vmatpush.msra.mxu0 %v1158
        %6255 = vmatpush.msra.mxu0 %v1154
        %6256 = vmatpush.msra.mxu0 %v1150
        %6257 = vmatpush.msra.mxu0 %v1146
        %6258 = vmatpush.msra.mxu0 %v1142
        %6259 = vmatpush.msra.mxu0 %v1138
        %6260 = vmatpush.msra.mxu0 %v1134
        %6261 = vmatpush.msra.mxu0 %v1130
        %6262 = vmatpush.msra.mxu0 %v1126
        %6263 = vmatpush.msra.mxu0 %v1122
        %6264 = vmatpush.msra.mxu0 %v1118
        %6265 = vmatpush.msra.mxu0 %v1114
        %6266 = vmatpush.msra.mxu0 %v1110
        %6267 = vmatmul.f32.gmra.mxu0 %v5318
        %v6268 = vpop.f32.mrf.mxu0
        %v6269 = vadd.f32 %v1241, %v6268
        %6270 = vdwg.mxu0
        %6271 = vmatpush.msra.mxu0 %v1234
        %6272 = vmatpush.msra.mxu0 %v1230
        %6273 = vmatpush.msra.mxu0 %v1226
        %6274 = vmatpush.msra.mxu0 %v1222
        %6275 = vmatpush.msra.mxu0 %v1218
        %6276 = vmatpush.msra.mxu0 %v1214
        %6277 = vmatpush.msra.mxu0 %v1210
        %6278 = vmatpush.msra.mxu0 %v1206
        %6279 = vmatpush.msra.mxu0 %v1202
        %6280 = vmatpush.msra.mxu0 %v1198
        %6281 = vmatpush.msra.mxu0 %v1194
        %6282 = vmatpush.msra.mxu0 %v1190
        %6283 = vmatpush.msra.mxu0 %v1186
        %6284 = vmatpush.msra.mxu0 %v1182
        %6285 = vmatpush.msra.mxu0 %v1178
        %6286 = vmatpush.msra.mxu0 %v1174
        %6287 = vmatmul.f32.gmra.mxu0 %v5541
        %v6288 = vpop.f32.mrf.mxu0
        %v6289 = vadd.f32 %v6269, %v6288
        %6290 = vdwg.mxu0
        %6291 = vmatpush.msra.mxu0 %v1171
        %6292 = vmatpush.msra.mxu0 %v1167
        %6293 = vmatpush.msra.mxu0 %v1163
        %6294 = vmatpush.msra.mxu0 %v1159
        %6295 = vmatpush.msra.mxu0 %v1155
        %6296 = vmatpush.msra.mxu0 %v1151
        %6297 = vmatpush.msra.mxu0 %v1147
        %6298 = vmatpush.msra.mxu0 %v1143
        %6299 = vmatpush.msra.mxu0 %v1139
        %6300 = vmatpush.msra.mxu0 %v1135
        %6301 = vmatpush.msra.mxu0 %v1131
        %6302 = vmatpush.msra.mxu0 %v1127
        %6303 = vmatpush.msra.mxu0 %v1123
        %6304 = vmatpush.msra.mxu0 %v1119
        %6305 = vmatpush.msra.mxu0 %v1115
        %6306 = vmatpush.msra.mxu0 %v1111
        %6307 = vmatmul.f32.gmra.mxu0 %v5318
        %v6308 = vpop.f32.mrf.mxu0
        %v6309 = vadd.f32 %v1242, %v6308
        %6310 = vdwg.mxu0
        %6311 = vmatpush.msra.mxu0 %v1235
        %6312 = vmatpush.msra.mxu0 %v1231
        %6313 = vmatpush.msra.mxu0 %v1227
        %6314 = vmatpush.msra.mxu0 %v1223
        %6315 = vmatpush.msra.mxu0 %v1219
        %6316 = vmatpush.msra.mxu0 %v1215
        %6317 = vmatpush.msra.mxu0 %v1211
        %6318 = vmatpush.msra.mxu0 %v1207
        %6319 = vmatpush.msra.mxu0 %v1203
        %6320 = vmatpush.msra.mxu0 %v1199
        %6321 = vmatpush.msra.mxu0 %v1195
        %6322 = vmatpush.msra.mxu0 %v1191
        %6323 = vmatpush.msra.mxu0 %v1187
        %6324 = vmatpush.msra.mxu0 %v1183
        %6325 = vmatpush.msra.mxu0 %v1179
        %6326 = vmatpush.msra.mxu0 %v1175
        %6327 = vmatmul.f32.gmra.mxu0 %v5541
        %v6328 = vpop.f32.mrf.mxu0
        %v6329 = vadd.f32 %v6309, %v6328
        %6330 = vdwg.mxu0
        %6331 = vmatpush.msra.mxu0 %v1172
        %6332 = vmatpush.msra.mxu0 %v1168
        %6333 = vmatpush.msra.mxu0 %v1164
        %6334 = vmatpush.msra.mxu0 %v1160
        %6335 = vmatpush.msra.mxu0 %v1156
        %6336 = vmatpush.msra.mxu0 %v1152
        %6337 = vmatpush.msra.mxu0 %v1148
        %6338 = vmatpush.msra.mxu0 %v1144
        %6339 = vmatpush.msra.mxu0 %v1140
        %6340 = vmatpush.msra.mxu0 %v1136
        %6341 = vmatpush.msra.mxu0 %v1132
        %6342 = vmatpush.msra.mxu0 %v1128
        %6343 = vmatpush.msra.mxu0 %v1124
        %6344 = vmatpush.msra.mxu0 %v1120
        %6345 = vmatpush.msra.mxu0 %v1116
        %6346 = vmatpush.msra.mxu0 %v1112
        %6347 = vmatmul.f32.gmra.mxu0 %v5318
        %v6348 = vpop.f32.mrf.mxu0
        %v6349 = vadd.f32 %v1243, %v6348
        %6350 = vdwg.mxu0
        %6351 = vmatpush.msra.mxu0 %v1236
        %6352 = vmatpush.msra.mxu0 %v1232
        %6353 = vmatpush.msra.mxu0 %v1228
        %6354 = vmatpush.msra.mxu0 %v1224
        %6355 = vmatpush.msra.mxu0 %v1220
        %6356 = vmatpush.msra.mxu0 %v1216
        %6357 = vmatpush.msra.mxu0 %v1212
        %6358 = vmatpush.msra.mxu0 %v1208
        %6359 = vmatpush.msra.mxu0 %v1204
        %6360 = vmatpush.msra.mxu0 %v1200
        %6361 = vmatpush.msra.mxu0 %v1196
        %6362 = vmatpush.msra.mxu0 %v1192
        %6363 = vmatpush.msra.mxu0 %v1188
        %6364 = vmatpush.msra.mxu0 %v1184
        %6365 = vmatpush.msra.mxu0 %v1180
        %6366 = vmatpush.msra.mxu0 %v1176
        %6367 = vmatmul.f32.gmra.mxu0 %v5541
        %v6368 = vpop.f32.mrf.mxu0
        %v6369 = vadd.f32 %v6349, %v6368
        %6370 = vdwg.mxu0
        %v6371 = vxor.u32 %v6249, 2147483648
        %v6372 = vxor.u32 %v6289, 2147483648
        %v6373 = vxor.u32 %v6329, 2147483648
        %v6374 = vmul.f32 %v6371, 1.442695
        %v6375 = vpow.pop %v6374
        %v6376 = vmul.f32 %v6372, 1.442695
        %v6377 = vpow.pop %v6376
        %v6378 = vmul.f32 %v6373, 1.442695
        %v6379 = vpow.pop %v6378
        %v6380 = vadd.f32 %v6375, 1.0
        %v6381 = vadd.f32 %v6377, 1.0
        %v6382 = vadd.f32 %v6379, 1.0
        %v6383 = vrcp.pop %v6380
        %v6384 = vmul.f32 %v6380, %v6383
        %v6385 = vsub.f32 1.0, %v6384
        %v6386 = vmul.f32 %v6383, %v6385
        %v6387 = vadd.f32 %v6383, %v6386
        %vm6388 = vweird.f32 %v6380
        %vm6389 = vweird.f32 %v6383
        %vm6390 = vmor %vm6388, %vm6389
        %v6391 = vsel %vm6390, %v6383, %v6387
        %v6392 = vand.u32 2147483647, %v6380
        %vm6393 = vcmp.eq.f32.partialorder %v6392, 8.507059e+37
        %v6394 = vand.u32 %v6380, 2147483648
        %v6395 = vor.u32 1.1754944e-38, %v6394
        %v6396 = vsel %vm6393, %v6395, %v6391
        %v6397 = vmul.f32 1.0, %v6396
        %v6398 = vrcp.pop %v6381
        %v6399 = vmul.f32 %v6381, %v6398
        %v6400 = vsub.f32 1.0, %v6399
        %v6401 = vmul.f32 %v6398, %v6400
        %v6402 = vadd.f32 %v6398, %v6401
        %vm6403 = vweird.f32 %v6381
        %vm6404 = vweird.f32 %v6398
        %vm6405 = vmor %vm6403, %vm6404
        %v6406 = vsel %vm6405, %v6398, %v6402
        %v6407 = vand.u32 2147483647, %v6381
        %vm6408 = vcmp.eq.f32.partialorder %v6407, 8.507059e+37
        %v6409 = vand.u32 %v6381, 2147483648
        %v6410 = vor.u32 1.1754944e-38, %v6409
        %v6411 = vsel %vm6408, %v6410, %v6406
        %v6412 = vmul.f32 1.0, %v6411
        %v6413 = vrcp.pop %v6382
        %v6414 = vmul.f32 %v6382, %v6413
        %v6415 = vsub.f32 1.0, %v6414
        %v6416 = vmul.f32 %v6413, %v6415
        %v6417 = vadd.f32 %v6413, %v6416
        %vm6418 = vweird.f32 %v6382
        %vm6419 = vweird.f32 %v6413
        %vm6420 = vmor %vm6418, %vm6419
        %v6421 = vsel %vm6420, %v6413, %v6417
        %v6422 = vand.u32 2147483647, %v6382
        %vm6423 = vcmp.eq.f32.partialorder %v6422, 8.507059e+37
        %v6424 = vand.u32 %v6382, 2147483648
        %v6425 = vor.u32 1.1754944e-38, %v6424
        %v6426 = vsel %vm6423, %v6425, %v6421
        %v6427 = vmul.f32 1.0, %v6426
        %v6428 = vtanh.pop %v6369
        %v6429 = vmul.f32 %v6412, %v5539
        %v6430 = vmul.f32 %v6397, %v6428
        %v6431 = vadd.f32 %v6429, %v6430
        %v6432 = vtanh.pop %v6431
        %v6433 = vmul.f32 %v6427, %v6432
        %6434 = vmatpush.msra.mxu0 %v1978
        %6435 = vmatpush.msra.mxu0 %v1974
        %6436 = vmatpush.msra.mxu0 %v1970
        %6437 = vmatpush.msra.mxu0 %v1966
        %6438 = vmatpush.msra.mxu0 %v1962
        %6439 = vmatpush.msra.mxu0 %v1958
        %6440 = vmatpush.msra.mxu0 %v1954
        %6441 = vmatpush.msra.mxu0 %v1950
        %6442 = vmatpush.msra.mxu0 %v1946
        %6443 = vmatpush.msra.mxu0 %v1942
        %6444 = vmatpush.msra.mxu0 %v1938
        %6445 = vmatpush.msra.mxu0 %v1934
        %6446 = vmatpush.msra.mxu0 %v1930
        %6447 = vmatpush.msra.mxu0 %v1926
        %6448 = vmatpush.msra.mxu0 %v1922
        %6449 = vmatpush.msra.mxu0 %v1918
        %6450 = vmatmul.f32.gmra.mxu0 %v5541
        %v6451 = vpop.f32.mrf.mxu0
        %v6452 = vadd.f32 %v2049, %v6451
        %6453 = vdwg.mxu0
        %6454 = vmatpush.msra.mxu0 %v2042
        %6455 = vmatpush.msra.mxu0 %v2038
        %6456 = vmatpush.msra.mxu0 %v2034
        %6457 = vmatpush.msra.mxu0 %v2030
        %6458 = vmatpush.msra.mxu0 %v2026
        %6459 = vmatpush.msra.mxu0 %v2022
        %6460 = vmatpush.msra.mxu0 %v2018
        %6461 = vmatpush.msra.mxu0 %v2014
        %6462 = vmatpush.msra.mxu0 %v2010
        %6463 = vmatpush.msra.mxu0 %v2006
        %6464 = vmatpush.msra.mxu0 %v2002
        %6465 = vmatpush.msra.mxu0 %v1998
        %6466 = vmatpush.msra.mxu0 %v1994
        %6467 = vmatpush.msra.mxu0 %v1990
        %6468 = vmatpush.msra.mxu0 %v1986
        %6469 = vmatpush.msra.mxu0 %v1982
        %6470 = vmatmul.f32.gmra.mxu0 %v5764
        %v6471 = vpop.f32.mrf.mxu0
        %v6472 = vadd.f32 %v6452, %v6471
        %6473 = vdwg.mxu0
        %6474 = vmatpush.msra.mxu0 %v1979
        %6475 = vmatpush.msra.mxu0 %v1975
        %6476 = vmatpush.msra.mxu0 %v1971
        %6477 = vmatpush.msra.mxu0 %v1967
        %6478 = vmatpush.msra.mxu0 %v1963
        %6479 = vmatpush.msra.mxu0 %v1959
        %6480 = vmatpush.msra.mxu0 %v1955
        %6481 = vmatpush.msra.mxu0 %v1951
        %6482 = vmatpush.msra.mxu0 %v1947
        %6483 = vmatpush.msra.mxu0 %v1943
        %6484 = vmatpush.msra.mxu0 %v1939
        %6485 = vmatpush.msra.mxu0 %v1935
        %6486 = vmatpush.msra.mxu0 %v1931
        %6487 = vmatpush.msra.mxu0 %v1927
        %6488 = vmatpush.msra.mxu0 %v1923
        %6489 = vmatpush.msra.mxu0 %v1919
        %6490 = vmatmul.f32.gmra.mxu0 %v5541
        %v6491 = vpop.f32.mrf.mxu0
        %v6492 = vadd.f32 %v2050, %v6491
        %6493 = vdwg.mxu0
        %6494 = vmatpush.msra.mxu0 %v2043
        %6495 = vmatpush.msra.mxu0 %v2039
        %6496 = vmatpush.msra.mxu0 %v2035
        %6497 = vmatpush.msra.mxu0 %v2031
        %6498 = vmatpush.msra.mxu0 %v2027
        %6499 = vmatpush.msra.mxu0 %v2023
        %6500 = vmatpush.msra.mxu0 %v2019
        %6501 = vmatpush.msra.mxu0 %v2015
        %6502 = vmatpush.msra.mxu0 %v2011
        %6503 = vmatpush.msra.mxu0 %v2007
        %6504 = vmatpush.msra.mxu0 %v2003
        %6505 = vmatpush.msra.mxu0 %v1999
        %6506 = vmatpush.msra.mxu0 %v1995
        %6507 = vmatpush.msra.mxu0 %v1991
        %6508 = vmatpush.msra.mxu0 %v1987
        %6509 = vmatpush.msra.mxu0 %v1983
        %6510 = vmatmul.f32.gmra.mxu0 %v5764
        %v6511 = vpop.f32.mrf.mxu0
        %v6512 = vadd.f32 %v6492, %v6511
        %6513 = vdwg.mxu0
        %6514 = vmatpush.msra.mxu0 %v1980
        %6515 = vmatpush.msra.mxu0 %v1976
        %6516 = vmatpush.msra.mxu0 %v1972
        %6517 = vmatpush.msra.mxu0 %v1968
        %6518 = vmatpush.msra.mxu0 %v1964
        %6519 = vmatpush.msra.mxu0 %v1960
        %6520 = vmatpush.msra.mxu0 %v1956
        %6521 = vmatpush.msra.mxu0 %v1952
        %6522 = vmatpush.msra.mxu0 %v1948
        %6523 = vmatpush.msra.mxu0 %v1944
        %6524 = vmatpush.msra.mxu0 %v1940
        %6525 = vmatpush.msra.mxu0 %v1936
        %6526 = vmatpush.msra.mxu0 %v1932
        %6527 = vmatpush.msra.mxu0 %v1928
        %6528 = vmatpush.msra.mxu0 %v1924
        %6529 = vmatpush.msra.mxu0 %v1920
        %6530 = vmatmul.f32.gmra.mxu0 %v5541
        %v6531 = vpop.f32.mrf.mxu0
        %v6532 = vadd.f32 %v2051, %v6531
        %6533 = vdwg.mxu0
        %6534 = vmatpush.msra.mxu0 %v2044
        %6535 = vmatpush.msra.mxu0 %v2040
        %6536 = vmatpush.msra.mxu0 %v2036
        %6537 = vmatpush.msra.mxu0 %v2032
        %6538 = vmatpush.msra.mxu0 %v2028
        %6539 = vmatpush.msra.mxu0 %v2024
        %6540 = vmatpush.msra.mxu0 %v2020
        %6541 = vmatpush.msra.mxu0 %v2016
        %6542 = vmatpush.msra.mxu0 %v2012
        %6543 = vmatpush.msra.mxu0 %v2008
        %6544 = vmatpush.msra.mxu0 %v2004
        %6545 = vmatpush.msra.mxu0 %v2000
        %6546 = vmatpush.msra.mxu0 %v1996
        %6547 = vmatpush.msra.mxu0 %v1992
        %6548 = vmatpush.msra.mxu0 %v1988
        %6549 = vmatpush.msra.mxu0 %v1984
        %6550 = vmatmul.f32.gmra.mxu0 %v5764
        %v6551 = vpop.f32.mrf.mxu0
        %v6552 = vadd.f32 %v6532, %v6551
        %6553 = vdwg.mxu0
        %6554 = vmatpush.msra.mxu0 %v1981
        %6555 = vmatpush.msra.mxu0 %v1977
        %6556 = vmatpush.msra.mxu0 %v1973
        %6557 = vmatpush.msra.mxu0 %v1969
        %6558 = vmatpush.msra.mxu0 %v1965
        %6559 = vmatpush.msra.mxu0 %v1961
        %6560 = vmatpush.msra.mxu0 %v1957
        %6561 = vmatpush.msra.mxu0 %v1953
        %6562 = vmatpush.msra.mxu0 %v1949
        %6563 = vmatpush.msra.mxu0 %v1945
        %6564 = vmatpush.msra.mxu0 %v1941
        %6565 = vmatpush.msra.mxu0 %v1937
        %6566 = vmatpush.msra.mxu0 %v1933
        %6567 = vmatpush.msra.mxu0 %v1929
        %6568 = vmatpush.msra.mxu0 %v1925
        %6569 = vmatpush.msra.mxu0 %v1921
        %6570 = vmatmul.f32.gmra.mxu0 %v5541
        %v6571 = vpop.f32.mrf.mxu0
        %v6572 = vadd.f32 %v2052, %v6571
        %6573 = vdwg.mxu0
        %6574 = vmatpush.msra.mxu0 %v2045
        %6575 = vmatpush.msra.mxu0 %v2041
        %6576 = vmatpush.msra.mxu0 %v2037
        %6577 = vmatpush.msra.mxu0 %v2033
        %6578 = vmatpush.msra.mxu0 %v2029
        %6579 = vmatpush.msra.mxu0 %v2025
        %6580 = vmatpush.msra.mxu0 %v2021
        %6581 = vmatpush.msra.mxu0 %v2017
        %6582 = vmatpush.msra.mxu0 %v2013
        %6583 = vmatpush.msra.mxu0 %v2009
        %6584 = vmatpush.msra.mxu0 %v2005
        %6585 = vmatpush.msra.mxu0 %v2001
        %6586 = vmatpush.msra.mxu0 %v1997
        %6587 = vmatpush.msra.mxu0 %v1993
        %6588 = vmatpush.msra.mxu0 %v1989
        %6589 = vmatpush.msra.mxu0 %v1985
        %6590 = vmatmul.f32.gmra.mxu0 %v5764
        %v6591 = vpop.f32.mrf.mxu0
        %v6592 = vadd.f32 %v6572, %v6591
        %6593 = vdwg.mxu0
        %v6594 = vxor.u32 %v6472, 2147483648
        %v6595 = vxor.u32 %v6512, 2147483648
        %v6596 = vxor.u32 %v6552, 2147483648
        %v6597 = vmul.f32 %v6594, 1.442695
        %v6598 = vpow.pop %v6597
        %v6599 = vmul.f32 %v6595, 1.442695
        %v6600 = vpow.pop %v6599
        %v6601 = vmul.f32 %v6596, 1.442695
        %v6602 = vpow.pop %v6601
        %v6603 = vadd.f32 %v6598, 1.0
        %v6604 = vadd.f32 %v6600, 1.0
        %v6605 = vadd.f32 %v6602, 1.0
        %v6606 = vrcp.pop %v6603
        %v6607 = vmul.f32 %v6603, %v6606
        %v6608 = vsub.f32 1.0, %v6607
        %v6609 = vmul.f32 %v6606, %v6608
        %v6610 = vadd.f32 %v6606, %v6609
        %vm6611 = vweird.f32 %v6603
        %vm6612 = vweird.f32 %v6606
        %vm6613 = vmor %vm6611, %vm6612
        %v6614 = vsel %vm6613, %v6606, %v6610
        %v6615 = vand.u32 2147483647, %v6603
        %vm6616 = vcmp.eq.f32.partialorder %v6615, 8.507059e+37
        %v6617 = vand.u32 %v6603, 2147483648
        %v6618 = vor.u32 1.1754944e-38, %v6617
        %v6619 = vsel %vm6616, %v6618, %v6614
        %v6620 = vmul.f32 1.0, %v6619
        %v6621 = vrcp.pop %v6604
        %v6622 = vmul.f32 %v6604, %v6621
        %v6623 = vsub.f32 1.0, %v6622
        %v6624 = vmul.f32 %v6621, %v6623
        %v6625 = vadd.f32 %v6621, %v6624
        %vm6626 = vweird.f32 %v6604
        %vm6627 = vweird.f32 %v6621
        %vm6628 = vmor %vm6626, %vm6627
        %v6629 = vsel %vm6628, %v6621, %v6625
        %v6630 = vand.u32 2147483647, %v6604
        %vm6631 = vcmp.eq.f32.partialorder %v6630, 8.507059e+37
        %v6632 = vand.u32 %v6604, 2147483648
        %v6633 = vor.u32 1.1754944e-38, %v6632
        %v6634 = vsel %vm6631, %v6633, %v6629
        %v6635 = vmul.f32 1.0, %v6634
        %v6636 = vrcp.pop %v6605
        %v6637 = vmul.f32 %v6605, %v6636
        %v6638 = vsub.f32 1.0, %v6637
        %v6639 = vmul.f32 %v6636, %v6638
        %v6640 = vadd.f32 %v6636, %v6639
        %vm6641 = vweird.f32 %v6605
        %vm6642 = vweird.f32 %v6636
        %vm6643 = vmor %vm6641, %vm6642
        %v6644 = vsel %vm6643, %v6636, %v6640
        %v6645 = vand.u32 2147483647, %v6605
        %vm6646 = vcmp.eq.f32.partialorder %v6645, 8.507059e+37
        %v6647 = vand.u32 %v6605, 2147483648
        %v6648 = vor.u32 1.1754944e-38, %v6647
        %v6649 = vsel %vm6646, %v6648, %v6644
        %v6650 = vmul.f32 1.0, %v6649
        %v6651 = vtanh.pop %v6592
        %v6652 = vmul.f32 %v6635, %v5762
        %v6653 = vmul.f32 %v6620, %v6651
        %v6654 = vadd.f32 %v6652, %v6653
        %v6655 = vtanh.pop %v6654
        %v6656 = vmul.f32 %v6650, %v6655
        %6657 = vmatpush.msra.mxu0 %v3010
        %6658 = vmatpush.msra.mxu0 %v3006
        %6659 = vmatpush.msra.mxu0 %v3002
        %6660 = vmatpush.msra.mxu0 %v2998
        %6661 = vmatpush.msra.mxu0 %v2994
        %6662 = vmatpush.msra.mxu0 %v2990
        %6663 = vmatpush.msra.mxu0 %v2986
        %6664 = vmatpush.msra.mxu0 %v2982
        %6665 = vmatpush.msra.mxu0 %v2978
        %6666 = vmatpush.msra.mxu0 %v2974
        %6667 = vmatpush.msra.mxu0 %v2970
        %6668 = vmatpush.msra.mxu0 %v2966
        %6669 = vmatpush.msra.mxu0 %v2962
        %6670 = vmatpush.msra.mxu0 %v2958
        %6671 = vmatpush.msra.mxu0 %v2954
        %6672 = vmatpush.msra.mxu0 %v2950
        %6673 = vmatmul.f32.gmra.mxu0 %v5764
        %v6674 = vpop.f32.mrf.mxu0
        %v6675 = vadd.f32 %v3081, %v6674
        %6676 = vdwg.mxu0
        %6677 = vmatpush.msra.mxu0 %v3074
        %6678 = vmatpush.msra.mxu0 %v3070
        %6679 = vmatpush.msra.mxu0 %v3066
        %6680 = vmatpush.msra.mxu0 %v3062
        %6681 = vmatpush.msra.mxu0 %v3058
        %6682 = vmatpush.msra.mxu0 %v3054
        %6683 = vmatpush.msra.mxu0 %v3050
        %6684 = vmatpush.msra.mxu0 %v3046
        %6685 = vmatpush.msra.mxu0 %v3042
        %6686 = vmatpush.msra.mxu0 %v3038
        %6687 = vmatpush.msra.mxu0 %v3034
        %6688 = vmatpush.msra.mxu0 %v3030
        %6689 = vmatpush.msra.mxu0 %v3026
        %6690 = vmatpush.msra.mxu0 %v3022
        %6691 = vmatpush.msra.mxu0 %v3018
        %6692 = vmatpush.msra.mxu0 %v3014
        %6693 = vmatmul.f32.gmra.mxu0 %v5987
        %v6694 = vpop.f32.mrf.mxu0
        %v6695 = vadd.f32 %v6675, %v6694
        %6696 = vdwg.mxu0
        %6697 = vmatpush.msra.mxu0 %v3011
        %6698 = vmatpush.msra.mxu0 %v3007
        %6699 = vmatpush.msra.mxu0 %v3003
        %6700 = vmatpush.msra.mxu0 %v2999
        %6701 = vmatpush.msra.mxu0 %v2995
        %6702 = vmatpush.msra.mxu0 %v2991
        %6703 = vmatpush.msra.mxu0 %v2987
        %6704 = vmatpush.msra.mxu0 %v2983
        %6705 = vmatpush.msra.mxu0 %v2979
        %6706 = vmatpush.msra.mxu0 %v2975
        %6707 = vmatpush.msra.mxu0 %v2971
        %6708 = vmatpush.msra.mxu0 %v2967
        %6709 = vmatpush.msra.mxu0 %v2963
        %6710 = vmatpush.msra.mxu0 %v2959
        %6711 = vmatpush.msra.mxu0 %v2955
        %6712 = vmatpush.msra.mxu0 %v2951
        %6713 = vmatmul.f32.gmra.mxu0 %v5764
        %v6714 = vpop.f32.mrf.mxu0
        %v6715 = vadd.f32 %v3082, %v6714
        %6716 = vdwg.mxu0
        %6717 = vmatpush.msra.mxu0 %v3075
        %6718 = vmatpush.msra.mxu0 %v3071
        %6719 = vmatpush.msra.mxu0 %v3067
        %6720 = vmatpush.msra.mxu0 %v3063
        %6721 = vmatpush.msra.mxu0 %v3059
        %6722 = vmatpush.msra.mxu0 %v3055
        %6723 = vmatpush.msra.mxu0 %v3051
        %6724 = vmatpush.msra.mxu0 %v3047
        %6725 = vmatpush.msra.mxu0 %v3043
        %6726 = vmatpush.msra.mxu0 %v3039
        %6727 = vmatpush.msra.mxu0 %v3035
        %6728 = vmatpush.msra.mxu0 %v3031
        %6729 = vmatpush.msra.mxu0 %v3027
        %6730 = vmatpush.msra.mxu0 %v3023
        %6731 = vmatpush.msra.mxu0 %v3019
        %6732 = vmatpush.msra.mxu0 %v3015
        %6733 = vmatmul.f32.gmra.mxu0 %v5987
        %v6734 = vpop.f32.mrf.mxu0
        %v6735 = vadd.f32 %v6715, %v6734
        %6736 = vdwg.mxu0
        %6737 = vmatpush.msra.mxu0 %v3012
        %6738 = vmatpush.msra.mxu0 %v3008
        %6739 = vmatpush.msra.mxu0 %v3004
        %6740 = vmatpush.msra.mxu0 %v3000
        %6741 = vmatpush.msra.mxu0 %v2996
        %6742 = vmatpush.msra.mxu0 %v2992
        %6743 = vmatpush.msra.mxu0 %v2988
        %6744 = vmatpush.msra.mxu0 %v2984
        %6745 = vmatpush.msra.mxu0 %v2980
        %6746 = vmatpush.msra.mxu0 %v2976
        %6747 = vmatpush.msra.mxu0 %v2972
        %6748 = vmatpush.msra.mxu0 %v2968
        %6749 = vmatpush.msra.mxu0 %v2964
        %6750 = vmatpush.msra.mxu0 %v2960
        %6751 = vmatpush.msra.mxu0 %v2956
        %6752 = vmatpush.msra.mxu0 %v2952
        %6753 = vmatmul.f32.gmra.mxu0 %v5764
        %v6754 = vpop.f32.mrf.mxu0
        %v6755 = vadd.f32 %v3083, %v6754
        %6756 = vdwg.mxu0
        %6757 = vmatpush.msra.mxu0 %v3076
        %6758 = vmatpush.msra.mxu0 %v3072
        %6759 = vmatpush.msra.mxu0 %v3068
        %6760 = vmatpush.msra.mxu0 %v3064
        %6761 = vmatpush.msra.mxu0 %v3060
        %6762 = vmatpush.msra.mxu0 %v3056
        %6763 = vmatpush.msra.mxu0 %v3052
        %6764 = vmatpush.msra.mxu0 %v3048
        %6765 = vmatpush.msra.mxu0 %v3044
        %6766 = vmatpush.msra.mxu0 %v3040
        %6767 = vmatpush.msra.mxu0 %v3036
        %6768 = vmatpush.msra.mxu0 %v3032
        %6769 = vmatpush.msra.mxu0 %v3028
        %6770 = vmatpush.msra.mxu0 %v3024
        %6771 = vmatpush.msra.mxu0 %v3020
        %6772 = vmatpush.msra.mxu0 %v3016
        %6773 = vmatmul.f32.gmra.mxu0 %v5987
        %v6774 = vpop.f32.mrf.mxu0
        %v6775 = vadd.f32 %v6755, %v6774
        %6776 = vdwg.mxu0
        %6777 = vmatpush.msra.mxu0 %v3013
        %6778 = vmatpush.msra.mxu0 %v3009
        %6779 = vmatpush.msra.mxu0 %v3005
        %6780 = vmatpush.msra.mxu0 %v3001
        %6781 = vmatpush.msra.mxu0 %v2997
        %6782 = vmatpush.msra.mxu0 %v2993
        %6783 = vmatpush.msra.mxu0 %v2989
        %6784 = vmatpush.msra.mxu0 %v2985
        %6785 = vmatpush.msra.mxu0 %v2981
        %6786 = vmatpush.msra.mxu0 %v2977
        %6787 = vmatpush.msra.mxu0 %v2973
        %6788 = vmatpush.msra.mxu0 %v2969
        %6789 = vmatpush.msra.mxu0 %v2965
        %6790 = vmatpush.msra.mxu0 %v2961
        %6791 = vmatpush.msra.mxu0 %v2957
        %6792 = vmatpush.msra.mxu0 %v2953
        %6793 = vmatmul.f32.gmra.mxu0 %v5764
        %v6794 = vpop.f32.mrf.mxu0
        %v6795 = vadd.f32 %v3084, %v6794
        %6796 = vdwg.mxu0
        %6797 = vmatpush.msra.mxu0 %v3077
        %6798 = vmatpush.msra.mxu0 %v3073
        %6799 = vmatpush.msra.mxu0 %v3069
        %6800 = vmatpush.msra.mxu0 %v3065
        %6801 = vmatpush.msra.mxu0 %v3061
        %6802 = vmatpush.msra.mxu0 %v3057
        %6803 = vmatpush.msra.mxu0 %v3053
        %6804 = vmatpush.msra.mxu0 %v3049
        %6805 = vmatpush.msra.mxu0 %v3045
        %6806 = vmatpush.msra.mxu0 %v3041
        %6807 = vmatpush.msra.mxu0 %v3037
        %6808 = vmatpush.msra.mxu0 %v3033
        %6809 = vmatpush.msra.mxu0 %v3029
        %6810 = vmatpush.msra.mxu0 %v3025
        %6811 = vmatpush.msra.mxu0 %v3021
        %6812 = vmatpush.msra.mxu0 %v3017
        %6813 = vmatmul.f32.gmra.mxu0 %v5987
        %v6814 = vpop.f32.mrf.mxu0
        %v6815 = vadd.f32 %v6795, %v6814
        %6816 = vdwg.mxu0
        %v6817 = vxor.u32 %v6695, 2147483648
        %v6818 = vxor.u32 %v6735, 2147483648
        %v6819 = vxor.u32 %v6775, 2147483648
        %v6820 = vmul.f32 %v6817, 1.442695
        %v6821 = vpow.pop %v6820
        %v6822 = vmul.f32 %v6818, 1.442695
        %v6823 = vpow.pop %v6822
        %v6824 = vmul.f32 %v6819, 1.442695
        %v6825 = vpow.pop %v6824
        %v6826 = vadd.f32 %v6821, 1.0
        %v6827 = vadd.f32 %v6823, 1.0
        %v6828 = vadd.f32 %v6825, 1.0
        %v6829 = vrcp.pop %v6826
        %v6830 = vmul.f32 %v6826, %v6829
        %v6831 = vsub.f32 1.0, %v6830
        %v6832 = vmul.f32 %v6829, %v6831
        %v6833 = vadd.f32 %v6829, %v6832
        %vm6834 = vweird.f32 %v6826
        %vm6835 = vweird.f32 %v6829
        %vm6836 = vmor %vm6834, %vm6835
        %v6837 = vsel %vm6836, %v6829, %v6833
        %v6838 = vand.u32 2147483647, %v6826
        %vm6839 = vcmp.eq.f32.partialorder %v6838, 8.507059e+37
        %v6840 = vand.u32 %v6826, 2147483648
        %v6841 = vor.u32 1.1754944e-38, %v6840
        %v6842 = vsel %vm6839, %v6841, %v6837
        %v6843 = vmul.f32 1.0, %v6842
        %v6844 = vrcp.pop %v6827
        %v6845 = vmul.f32 %v6827, %v6844
        %v6846 = vsub.f32 1.0, %v6845
        %v6847 = vmul.f32 %v6844, %v6846
        %v6848 = vadd.f32 %v6844, %v6847
        %vm6849 = vweird.f32 %v6827
        %vm6850 = vweird.f32 %v6844
        %vm6851 = vmor %vm6849, %vm6850
        %v6852 = vsel %vm6851, %v6844, %v6848
        %v6853 = vand.u32 2147483647, %v6827
        %vm6854 = vcmp.eq.f32.partialorder %v6853, 8.507059e+37
        %v6855 = vand.u32 %v6827, 2147483648
        %v6856 = vor.u32 1.1754944e-38, %v6855
        %v6857 = vsel %vm6854, %v6856, %v6852
        %v6858 = vmul.f32 1.0, %v6857
        %v6859 = vrcp.pop %v6828
        %v6860 = vmul.f32 %v6828, %v6859
        %v6861 = vsub.f32 1.0, %v6860
        %v6862 = vmul.f32 %v6859, %v6861
        %v6863 = vadd.f32 %v6859, %v6862
        %vm6864 = vweird.f32 %v6828
        %vm6865 = vweird.f32 %v6859
        %vm6866 = vmor %vm6864, %vm6865
        %v6867 = vsel %vm6866, %v6859, %v6863
        %v6868 = vand.u32 2147483647, %v6828
        %vm6869 = vcmp.eq.f32.partialorder %v6868, 8.507059e+37
        %v6870 = vand.u32 %v6828, 2147483648
        %v6871 = vor.u32 1.1754944e-38, %v6870
        %v6872 = vsel %vm6869, %v6871, %v6867
        %v6873 = vmul.f32 1.0, %v6872
        %v6874 = vtanh.pop %v6815
        %v6875 = vmul.f32 %v6858, %v5985
        %v6876 = vmul.f32 %v6843, %v6874
        %v6877 = vadd.f32 %v6875, %v6876
        %v6878 = vtanh.pop %v6877
        %v6879 = vmul.f32 %v6873, %v6878
        %6880 = vmatpush.msra.mxu0 %v1169
        %6881 = vmatpush.msra.mxu0 %v1165
        %6882 = vmatpush.msra.mxu0 %v1161
        %6883 = vmatpush.msra.mxu0 %v1157
        %6884 = vmatpush.msra.mxu0 %v1153
        %6885 = vmatpush.msra.mxu0 %v1149
        %6886 = vmatpush.msra.mxu0 %v1145
        %6887 = vmatpush.msra.mxu0 %v1141
        %6888 = vmatpush.msra.mxu0 %v1137
        %6889 = vmatpush.msra.mxu0 %v1133
        %6890 = vmatpush.msra.mxu0 %v1129
        %6891 = vmatpush.msra.mxu0 %v1125
        %6892 = vmatpush.msra.mxu0 %v1121
        %6893 = vmatpush.msra.mxu0 %v1117
        %6894 = vmatpush.msra.mxu0 %v1113
        %6895 = vmatpush.msra.mxu0 %v1109
        %6896 = vmatmul.f32.gmra.mxu0 %v6210
        %v6897 = vpop.f32.mrf.mxu0
        %v6898 = vadd.f32 %v1240, %v6897
        %6899 = vdwg.mxu0
        %6900 = vmatpush.msra.mxu0 %v1233
        %6901 = vmatpush.msra.mxu0 %v1229
        %6902 = vmatpush.msra.mxu0 %v1225
        %6903 = vmatpush.msra.mxu0 %v1221
        %6904 = vmatpush.msra.mxu0 %v1217
        %6905 = vmatpush.msra.mxu0 %v1213
        %6906 = vmatpush.msra.mxu0 %v1209
        %6907 = vmatpush.msra.mxu0 %v1205
        %6908 = vmatpush.msra.mxu0 %v1201
        %6909 = vmatpush.msra.mxu0 %v1197
        %6910 = vmatpush.msra.mxu0 %v1193
        %6911 = vmatpush.msra.mxu0 %v1189
        %6912 = vmatpush.msra.mxu0 %v1185
        %6913 = vmatpush.msra.mxu0 %v1181
        %6914 = vmatpush.msra.mxu0 %v1177
        %6915 = vmatpush.msra.mxu0 %v1173
        %6916 = vmatmul.f32.gmra.mxu0 %v6433
        %v6917 = vpop.f32.mrf.mxu0
        %v6918 = vadd.f32 %v6898, %v6917
        %6919 = vdwg.mxu0
        %6920 = vmatpush.msra.mxu0 %v1170
        %6921 = vmatpush.msra.mxu0 %v1166
        %6922 = vmatpush.msra.mxu0 %v1162
        %6923 = vmatpush.msra.mxu0 %v1158
        %6924 = vmatpush.msra.mxu0 %v1154
        %6925 = vmatpush.msra.mxu0 %v1150
        %6926 = vmatpush.msra.mxu0 %v1146
        %6927 = vmatpush.msra.mxu0 %v1142
        %6928 = vmatpush.msra.mxu0 %v1138
        %6929 = vmatpush.msra.mxu0 %v1134
        %6930 = vmatpush.msra.mxu0 %v1130
        %6931 = vmatpush.msra.mxu0 %v1126
        %6932 = vmatpush.msra.mxu0 %v1122
        %6933 = vmatpush.msra.mxu0 %v1118
        %6934 = vmatpush.msra.mxu0 %v1114
        %6935 = vmatpush.msra.mxu0 %v1110
        %6936 = vmatmul.f32.gmra.mxu0 %v6210
        %v6937 = vpop.f32.mrf.mxu0
        %v6938 = vadd.f32 %v1241, %v6937
        %6939 = vdwg.mxu0
        %6940 = vmatpush.msra.mxu0 %v1234
        %6941 = vmatpush.msra.mxu0 %v1230
        %6942 = vmatpush.msra.mxu0 %v1226
        %6943 = vmatpush.msra.mxu0 %v1222
        %6944 = vmatpush.msra.mxu0 %v1218
        %6945 = vmatpush.msra.mxu0 %v1214
        %6946 = vmatpush.msra.mxu0 %v1210
        %6947 = vmatpush.msra.mxu0 %v1206
        %6948 = vmatpush.msra.mxu0 %v1202
        %6949 = vmatpush.msra.mxu0 %v1198
        %6950 = vmatpush.msra.mxu0 %v1194
        %6951 = vmatpush.msra.mxu0 %v1190
        %6952 = vmatpush.msra.mxu0 %v1186
        %6953 = vmatpush.msra.mxu0 %v1182
        %6954 = vmatpush.msra.mxu0 %v1178
        %6955 = vmatpush.msra.mxu0 %v1174
        %6956 = vmatmul.f32.gmra.mxu0 %v6433
        %v6957 = vpop.f32.mrf.mxu0
        %v6958 = vadd.f32 %v6938, %v6957
        %6959 = vdwg.mxu0
        %6960 = vmatpush.msra.mxu0 %v1171
        %6961 = vmatpush.msra.mxu0 %v1167
        %6962 = vmatpush.msra.mxu0 %v1163
        %6963 = vmatpush.msra.mxu0 %v1159
        %6964 = vmatpush.msra.mxu0 %v1155
        %6965 = vmatpush.msra.mxu0 %v1151
        %6966 = vmatpush.msra.mxu0 %v1147
        %6967 = vmatpush.msra.mxu0 %v1143
        %6968 = vmatpush.msra.mxu0 %v1139
        %6969 = vmatpush.msra.mxu0 %v1135
        %6970 = vmatpush.msra.mxu0 %v1131
        %6971 = vmatpush.msra.mxu0 %v1127
        %6972 = vmatpush.msra.mxu0 %v1123
        %6973 = vmatpush.msra.mxu0 %v1119
        %6974 = vmatpush.msra.mxu0 %v1115
        %6975 = vmatpush.msra.mxu0 %v1111
        %6976 = vmatmul.f32.gmra.mxu0 %v6210
        %v6977 = vpop.f32.mrf.mxu0
        %v6978 = vadd.f32 %v1242, %v6977
        %6979 = vdwg.mxu0
        %6980 = vmatpush.msra.mxu0 %v1235
        %6981 = vmatpush.msra.mxu0 %v1231
        %6982 = vmatpush.msra.mxu0 %v1227
        %6983 = vmatpush.msra.mxu0 %v1223
        %6984 = vmatpush.msra.mxu0 %v1219
        %6985 = vmatpush.msra.mxu0 %v1215
        %6986 = vmatpush.msra.mxu0 %v1211
        %6987 = vmatpush.msra.mxu0 %v1207
        %6988 = vmatpush.msra.mxu0 %v1203
        %6989 = vmatpush.msra.mxu0 %v1199
        %6990 = vmatpush.msra.mxu0 %v1195
        %6991 = vmatpush.msra.mxu0 %v1191
        %6992 = vmatpush.msra.mxu0 %v1187
        %6993 = vmatpush.msra.mxu0 %v1183
        %6994 = vmatpush.msra.mxu0 %v1179
        %6995 = vmatpush.msra.mxu0 %v1175
        %6996 = vmatmul.f32.gmra.mxu0 %v6433
        %v6997 = vpop.f32.mrf.mxu0
        %v6998 = vadd.f32 %v6978, %v6997
        %6999 = vdwg.mxu0
        %7000 = vmatpush.msra.mxu0 %v1172
        %7001 = vmatpush.msra.mxu0 %v1168
        %7002 = vmatpush.msra.mxu0 %v1164
        %7003 = vmatpush.msra.mxu0 %v1160
        %7004 = vmatpush.msra.mxu0 %v1156
        %7005 = vmatpush.msra.mxu0 %v1152
        %7006 = vmatpush.msra.mxu0 %v1148
        %7007 = vmatpush.msra.mxu0 %v1144
        %7008 = vmatpush.msra.mxu0 %v1140
        %7009 = vmatpush.msra.mxu0 %v1136
        %7010 = vmatpush.msra.mxu0 %v1132
        %7011 = vmatpush.msra.mxu0 %v1128
        %7012 = vmatpush.msra.mxu0 %v1124
        %7013 = vmatpush.msra.mxu0 %v1120
        %7014 = vmatpush.msra.mxu0 %v1116
        %7015 = vmatpush.msra.mxu0 %v1112
        %7016 = vmatmul.f32.gmra.mxu0 %v6210
        %v7017 = vpop.f32.mrf.mxu0
        %v7018 = vadd.f32 %v1243, %v7017
        %7019 = vdwg.mxu0
        %7020 = vmatpush.msra.mxu0 %v1236
        %7021 = vmatpush.msra.mxu0 %v1232
        %7022 = vmatpush.msra.mxu0 %v1228
        %7023 = vmatpush.msra.mxu0 %v1224
        %7024 = vmatpush.msra.mxu0 %v1220
        %7025 = vmatpush.msra.mxu0 %v1216
        %7026 = vmatpush.msra.mxu0 %v1212
        %7027 = vmatpush.msra.mxu0 %v1208
        %7028 = vmatpush.msra.mxu0 %v1204
        %7029 = vmatpush.msra.mxu0 %v1200
        %7030 = vmatpush.msra.mxu0 %v1196
        %7031 = vmatpush.msra.mxu0 %v1192
        %7032 = vmatpush.msra.mxu0 %v1188
        %7033 = vmatpush.msra.mxu0 %v1184
        %7034 = vmatpush.msra.mxu0 %v1180
        %7035 = vmatpush.msra.mxu0 %v1176
        %7036 = vmatmul.f32.gmra.mxu0 %v6433
        %v7037 = vpop.f32.mrf.mxu0
        %v7038 = vadd.f32 %v7018, %v7037
        %7039 = vdwg.mxu0
        %v7040 = vxor.u32 %v6918, 2147483648
        %v7041 = vxor.u32 %v6958, 2147483648
        %v7042 = vxor.u32 %v6998, 2147483648
        %v7043 = vmul.f32 %v7040, 1.442695
        %v7044 = vpow.pop %v7043
        %v7045 = vmul.f32 %v7041, 1.442695
        %v7046 = vpow.pop %v7045
        %v7047 = vmul.f32 %v7042, 1.442695
        %v7048 = vpow.pop %v7047
        %v7049 = vadd.f32 %v7044, 1.0
        %v7050 = vadd.f32 %v7046, 1.0
        %v7051 = vadd.f32 %v7048, 1.0
        %v7052 = vrcp.pop %v7049
        %v7053 = vmul.f32 %v7049, %v7052
        %v7054 = vsub.f32 1.0, %v7053
        %v7055 = vmul.f32 %v7052, %v7054
        %v7056 = vadd.f32 %v7052, %v7055
        %vm7057 = vweird.f32 %v7049
        %vm7058 = vweird.f32 %v7052
        %vm7059 = vmor %vm7057, %vm7058
        %v7060 = vsel %vm7059, %v7052, %v7056
        %v7061 = vand.u32 2147483647, %v7049
        %vm7062 = vcmp.eq.f32.partialorder %v7061, 8.507059e+37
        %v7063 = vand.u32 %v7049, 2147483648
        %v7064 = vor.u32 1.1754944e-38, %v7063
        %v7065 = vsel %vm7062, %v7064, %v7060
        %v7066 = vmul.f32 1.0, %v7065
        %v7067 = vrcp.pop %v7050
        %v7068 = vmul.f32 %v7050, %v7067
        %v7069 = vsub.f32 1.0, %v7068
        %v7070 = vmul.f32 %v7067, %v7069
        %v7071 = vadd.f32 %v7067, %v7070
        %vm7072 = vweird.f32 %v7050
        %vm7073 = vweird.f32 %v7067
        %vm7074 = vmor %vm7072, %vm7073
        %v7075 = vsel %vm7074, %v7067, %v7071
        %v7076 = vand.u32 2147483647, %v7050
        %vm7077 = vcmp.eq.f32.partialorder %v7076, 8.507059e+37
        %v7078 = vand.u32 %v7050, 2147483648
        %v7079 = vor.u32 1.1754944e-38, %v7078
        %v7080 = vsel %vm7077, %v7079, %v7075
        %v7081 = vmul.f32 1.0, %v7080
        %v7082 = vrcp.pop %v7051
        %v7083 = vmul.f32 %v7051, %v7082
        %v7084 = vsub.f32 1.0, %v7083
        %v7085 = vmul.f32 %v7082, %v7084
        %v7086 = vadd.f32 %v7082, %v7085
        %vm7087 = vweird.f32 %v7051
        %vm7088 = vweird.f32 %v7082
        %vm7089 = vmor %vm7087, %vm7088
        %v7090 = vsel %vm7089, %v7082, %v7086
        %v7091 = vand.u32 2147483647, %v7051
        %vm7092 = vcmp.eq.f32.partialorder %v7091, 8.507059e+37
        %v7093 = vand.u32 %v7051, 2147483648
        %v7094 = vor.u32 1.1754944e-38, %v7093
        %v7095 = vsel %vm7092, %v7094, %v7090
        %v7096 = vmul.f32 1.0, %v7095
        %v7097 = vtanh.pop %v7038
        %v7098 = vmul.f32 %v7081, %v6431
        %v7099 = vmul.f32 %v7066, %v7097
        %v7100 = vadd.f32 %v7098, %v7099
        %v7101 = vtanh.pop %v7100
        %v7102 = vmul.f32 %v7096, %v7101
        %7103 = vmatpush.msra.mxu0 %v1978
        %7104 = vmatpush.msra.mxu0 %v1974
        %7105 = vmatpush.msra.mxu0 %v1970
        %7106 = vmatpush.msra.mxu0 %v1966
        %7107 = vmatpush.msra.mxu0 %v1962
        %7108 = vmatpush.msra.mxu0 %v1958
        %7109 = vmatpush.msra.mxu0 %v1954
        %7110 = vmatpush.msra.mxu0 %v1950
        %7111 = vmatpush.msra.mxu0 %v1946
        %7112 = vmatpush.msra.mxu0 %v1942
        %7113 = vmatpush.msra.mxu0 %v1938
        %7114 = vmatpush.msra.mxu0 %v1934
        %7115 = vmatpush.msra.mxu0 %v1930
        %7116 = vmatpush.msra.mxu0 %v1926
        %7117 = vmatpush.msra.mxu0 %v1922
        %7118 = vmatpush.msra.mxu0 %v1918
        %7119 = vmatmul.f32.gmra.mxu0 %v6433
        %v7120 = vpop.f32.mrf.mxu0
        %v7121 = vadd.f32 %v2049, %v7120
        %7122 = vdwg.mxu0
        %7123 = vmatpush.msra.mxu0 %v2042
        %7124 = vmatpush.msra.mxu0 %v2038
        %7125 = vmatpush.msra.mxu0 %v2034
        %7126 = vmatpush.msra.mxu0 %v2030
        %7127 = vmatpush.msra.mxu0 %v2026
        %7128 = vmatpush.msra.mxu0 %v2022
        %7129 = vmatpush.msra.mxu0 %v2018
        %7130 = vmatpush.msra.mxu0 %v2014
        %7131 = vmatpush.msra.mxu0 %v2010
        %7132 = vmatpush.msra.mxu0 %v2006
        %7133 = vmatpush.msra.mxu0 %v2002
        %7134 = vmatpush.msra.mxu0 %v1998
        %7135 = vmatpush.msra.mxu0 %v1994
        %7136 = vmatpush.msra.mxu0 %v1990
        %7137 = vmatpush.msra.mxu0 %v1986
        %7138 = vmatpush.msra.mxu0 %v1982
        %7139 = vmatmul.f32.gmra.mxu0 %v6656
        %v7140 = vpop.f32.mrf.mxu0
        %v7141 = vadd.f32 %v7121, %v7140
        %7142 = vdwg.mxu0
        %7143 = vmatpush.msra.mxu0 %v1979
        %7144 = vmatpush.msra.mxu0 %v1975
        %7145 = vmatpush.msra.mxu0 %v1971
        %7146 = vmatpush.msra.mxu0 %v1967
        %7147 = vmatpush.msra.mxu0 %v1963
        %7148 = vmatpush.msra.mxu0 %v1959
        %7149 = vmatpush.msra.mxu0 %v1955
        %7150 = vmatpush.msra.mxu0 %v1951
        %7151 = vmatpush.msra.mxu0 %v1947
        %7152 = vmatpush.msra.mxu0 %v1943
        %7153 = vmatpush.msra.mxu0 %v1939
        %7154 = vmatpush.msra.mxu0 %v1935
        %7155 = vmatpush.msra.mxu0 %v1931
        %7156 = vmatpush.msra.mxu0 %v1927
        %7157 = vmatpush.msra.mxu0 %v1923
        %7158 = vmatpush.msra.mxu0 %v1919
        %7159 = vmatmul.f32.gmra.mxu0 %v6433
        %v7160 = vpop.f32.mrf.mxu0
        %v7161 = vadd.f32 %v2050, %v7160
        %7162 = vdwg.mxu0
        %7163 = vmatpush.msra.mxu0 %v2043
        %7164 = vmatpush.msra.mxu0 %v2039
        %7165 = vmatpush.msra.mxu0 %v2035
        %7166 = vmatpush.msra.mxu0 %v2031
        %7167 = vmatpush.msra.mxu0 %v2027
        %7168 = vmatpush.msra.mxu0 %v2023
        %7169 = vmatpush.msra.mxu0 %v2019
        %7170 = vmatpush.msra.mxu0 %v2015
        %7171 = vmatpush.msra.mxu0 %v2011
        %7172 = vmatpush.msra.mxu0 %v2007
        %7173 = vmatpush.msra.mxu0 %v2003
        %7174 = vmatpush.msra.mxu0 %v1999
        %7175 = vmatpush.msra.mxu0 %v1995
        %7176 = vmatpush.msra.mxu0 %v1991
        %7177 = vmatpush.msra.mxu0 %v1987
        %7178 = vmatpush.msra.mxu0 %v1983
        %7179 = vmatmul.f32.gmra.mxu0 %v6656
        %v7180 = vpop.f32.mrf.mxu0
        %v7181 = vadd.f32 %v7161, %v7180
        %7182 = vdwg.mxu0
        %7183 = vmatpush.msra.mxu0 %v1980
        %7184 = vmatpush.msra.mxu0 %v1976
        %7185 = vmatpush.msra.mxu0 %v1972
        %7186 = vmatpush.msra.mxu0 %v1968
        %7187 = vmatpush.msra.mxu0 %v1964
        %7188 = vmatpush.msra.mxu0 %v1960
        %7189 = vmatpush.msra.mxu0 %v1956
        %7190 = vmatpush.msra.mxu0 %v1952
        %7191 = vmatpush.msra.mxu0 %v1948
        %7192 = vmatpush.msra.mxu0 %v1944
        %7193 = vmatpush.msra.mxu0 %v1940
        %7194 = vmatpush.msra.mxu0 %v1936
        %7195 = vmatpush.msra.mxu0 %v1932
        %7196 = vmatpush.msra.mxu0 %v1928
        %7197 = vmatpush.msra.mxu0 %v1924
        %7198 = vmatpush.msra.mxu0 %v1920
        %7199 = vmatmul.f32.gmra.mxu0 %v6433
        %v7200 = vpop.f32.mrf.mxu0
        %v7201 = vadd.f32 %v2051, %v7200
        %7202 = vdwg.mxu0
        %7203 = vmatpush.msra.mxu0 %v2044
        %7204 = vmatpush.msra.mxu0 %v2040
        %7205 = vmatpush.msra.mxu0 %v2036
        %7206 = vmatpush.msra.mxu0 %v2032
        %7207 = vmatpush.msra.mxu0 %v2028
        %7208 = vmatpush.msra.mxu0 %v2024
        %7209 = vmatpush.msra.mxu0 %v2020
        %7210 = vmatpush.msra.mxu0 %v2016
        %7211 = vmatpush.msra.mxu0 %v2012
        %7212 = vmatpush.msra.mxu0 %v2008
        %7213 = vmatpush.msra.mxu0 %v2004
        %7214 = vmatpush.msra.mxu0 %v2000
        %7215 = vmatpush.msra.mxu0 %v1996
        %7216 = vmatpush.msra.mxu0 %v1992
        %7217 = vmatpush.msra.mxu0 %v1988
        %7218 = vmatpush.msra.mxu0 %v1984
        %7219 = vmatmul.f32.gmra.mxu0 %v6656
        %v7220 = vpop.f32.mrf.mxu0
        %v7221 = vadd.f32 %v7201, %v7220
        %7222 = vdwg.mxu0
        %7223 = vmatpush.msra.mxu0 %v1981
        %7224 = vmatpush.msra.mxu0 %v1977
        %7225 = vmatpush.msra.mxu0 %v1973
        %7226 = vmatpush.msra.mxu0 %v1969
        %7227 = vmatpush.msra.mxu0 %v1965
        %7228 = vmatpush.msra.mxu0 %v1961
        %7229 = vmatpush.msra.mxu0 %v1957
        %7230 = vmatpush.msra.mxu0 %v1953
        %7231 = vmatpush.msra.mxu0 %v1949
        %7232 = vmatpush.msra.mxu0 %v1945
        %7233 = vmatpush.msra.mxu0 %v1941
        %7234 = vmatpush.msra.mxu0 %v1937
        %7235 = vmatpush.msra.mxu0 %v1933
        %7236 = vmatpush.msra.mxu0 %v1929
        %7237 = vmatpush.msra.mxu0 %v1925
        %7238 = vmatpush.msra.mxu0 %v1921
        %7239 = vmatmul.f32.gmra.mxu0 %v6433
        %v7240 = vpop.f32.mrf.mxu0
        %v7241 = vadd.f32 %v2052, %v7240
        %7242 = vdwg.mxu0
        %7243 = vmatpush.msra.mxu0 %v2045
        %7244 = vmatpush.msra.mxu0 %v2041
        %7245 = vmatpush.msra.mxu0 %v2037
        %7246 = vmatpush.msra.mxu0 %v2033
        %7247 = vmatpush.msra.mxu0 %v2029
        %7248 = vmatpush.msra.mxu0 %v2025
        %7249 = vmatpush.msra.mxu0 %v2021
        %7250 = vmatpush.msra.mxu0 %v2017
        %7251 = vmatpush.msra.mxu0 %v2013
        %7252 = vmatpush.msra.mxu0 %v2009
        %7253 = vmatpush.msra.mxu0 %v2005
        %7254 = vmatpush.msra.mxu0 %v2001
        %7255 = vmatpush.msra.mxu0 %v1997
        %7256 = vmatpush.msra.mxu0 %v1993
        %7257 = vmatpush.msra.mxu0 %v1989
        %7258 = vmatpush.msra.mxu0 %v1985
        %7259 = vmatmul.f32.gmra.mxu0 %v6656
        %v7260 = vpop.f32.mrf.mxu0
        %v7261 = vadd.f32 %v7241, %v7260
        %7262 = vdwg.mxu0
        %v7263 = vxor.u32 %v7141, 2147483648
        %v7264 = vxor.u32 %v7181, 2147483648
        %v7265 = vxor.u32 %v7221, 2147483648
        %v7266 = vmul.f32 %v7263, 1.442695
        %v7267 = vpow.pop %v7266
        %v7268 = vmul.f32 %v7264, 1.442695
        %v7269 = vpow.pop %v7268
        %v7270 = vmul.f32 %v7265, 1.442695
        %v7271 = vpow.pop %v7270
        %v7272 = vadd.f32 %v7267, 1.0
        %v7273 = vadd.f32 %v7269, 1.0
        %v7274 = vadd.f32 %v7271, 1.0
        %v7275 = vrcp.pop %v7272
        %v7276 = vmul.f32 %v7272, %v7275
        %v7277 = vsub.f32 1.0, %v7276
        %v7278 = vmul.f32 %v7275, %v7277
        %v7279 = vadd.f32 %v7275, %v7278
        %vm7280 = vweird.f32 %v7272
        %vm7281 = vweird.f32 %v7275
        %vm7282 = vmor %vm7280, %vm7281
        %v7283 = vsel %vm7282, %v7275, %v7279
        %v7284 = vand.u32 2147483647, %v7272
        %vm7285 = vcmp.eq.f32.partialorder %v7284, 8.507059e+37
        %v7286 = vand.u32 %v7272, 2147483648
        %v7287 = vor.u32 1.1754944e-38, %v7286
        %v7288 = vsel %vm7285, %v7287, %v7283
        %v7289 = vmul.f32 1.0, %v7288
        %v7290 = vrcp.pop %v7273
        %v7291 = vmul.f32 %v7273, %v7290
        %v7292 = vsub.f32 1.0, %v7291
        %v7293 = vmul.f32 %v7290, %v7292
        %v7294 = vadd.f32 %v7290, %v7293
        %vm7295 = vweird.f32 %v7273
        %vm7296 = vweird.f32 %v7290
        %vm7297 = vmor %vm7295, %vm7296
        %v7298 = vsel %vm7297, %v7290, %v7294
        %v7299 = vand.u32 2147483647, %v7273
        %vm7300 = vcmp.eq.f32.partialorder %v7299, 8.507059e+37
        %v7301 = vand.u32 %v7273, 2147483648
        %v7302 = vor.u32 1.1754944e-38, %v7301
        %v7303 = vsel %vm7300, %v7302, %v7298
        %v7304 = vmul.f32 1.0, %v7303
        %v7305 = vrcp.pop %v7274
        %v7306 = vmul.f32 %v7274, %v7305
        %v7307 = vsub.f32 1.0, %v7306
        %v7308 = vmul.f32 %v7305, %v7307
        %v7309 = vadd.f32 %v7305, %v7308
        %vm7310 = vweird.f32 %v7274
        %vm7311 = vweird.f32 %v7305
        %vm7312 = vmor %vm7310, %vm7311
        %v7313 = vsel %vm7312, %v7305, %v7309
        %v7314 = vand.u32 2147483647, %v7274
        %vm7315 = vcmp.eq.f32.partialorder %v7314, 8.507059e+37
        %v7316 = vand.u32 %v7274, 2147483648
        %v7317 = vor.u32 1.1754944e-38, %v7316
        %v7318 = vsel %vm7315, %v7317, %v7313
        %v7319 = vmul.f32 1.0, %v7318
        %v7320 = vtanh.pop %v7261
        %v7321 = vmul.f32 %v7304, %v6654
        %v7322 = vmul.f32 %v7289, %v7320
        %v7323 = vadd.f32 %v7321, %v7322
        %v7324 = vtanh.pop %v7323
        %v7325 = vmul.f32 %v7319, %v7324
        %7326 = vmatpush.msra.mxu0 %v3010
        %7327 = vmatpush.msra.mxu0 %v3006
        %7328 = vmatpush.msra.mxu0 %v3002
        %7329 = vmatpush.msra.mxu0 %v2998
        %7330 = vmatpush.msra.mxu0 %v2994
        %7331 = vmatpush.msra.mxu0 %v2990
        %7332 = vmatpush.msra.mxu0 %v2986
        %7333 = vmatpush.msra.mxu0 %v2982
        %7334 = vmatpush.msra.mxu0 %v2978
        %7335 = vmatpush.msra.mxu0 %v2974
        %7336 = vmatpush.msra.mxu0 %v2970
        %7337 = vmatpush.msra.mxu0 %v2966
        %7338 = vmatpush.msra.mxu0 %v2962
        %7339 = vmatpush.msra.mxu0 %v2958
        %7340 = vmatpush.msra.mxu0 %v2954
        %7341 = vmatpush.msra.mxu0 %v2950
        %7342 = vmatmul.f32.gmra.mxu0 %v6656
        %v7343 = vpop.f32.mrf.mxu0
        %v7344 = vadd.f32 %v3081, %v7343
        %7345 = vdwg.mxu0
        %7346 = vmatpush.msra.mxu0 %v3074
        %7347 = vmatpush.msra.mxu0 %v3070
        %7348 = vmatpush.msra.mxu0 %v3066
        %7349 = vmatpush.msra.mxu0 %v3062
        %7350 = vmatpush.msra.mxu0 %v3058
        %7351 = vmatpush.msra.mxu0 %v3054
        %7352 = vmatpush.msra.mxu0 %v3050
        %7353 = vmatpush.msra.mxu0 %v3046
        %7354 = vmatpush.msra.mxu0 %v3042
        %7355 = vmatpush.msra.mxu0 %v3038
        %7356 = vmatpush.msra.mxu0 %v3034
        %7357 = vmatpush.msra.mxu0 %v3030
        %7358 = vmatpush.msra.mxu0 %v3026
        %7359 = vmatpush.msra.mxu0 %v3022
        %7360 = vmatpush.msra.mxu0 %v3018
        %7361 = vmatpush.msra.mxu0 %v3014
        %7362 = vmatmul.f32.gmra.mxu0 %v6879
        %v7363 = vpop.f32.mrf.mxu0
        %v7364 = vadd.f32 %v7344, %v7363
        %7365 = vdwg.mxu0
        %7366 = vmatpush.msra.mxu0 %v3011
        %7367 = vmatpush.msra.mxu0 %v3007
        %7368 = vmatpush.msra.mxu0 %v3003
        %7369 = vmatpush.msra.mxu0 %v2999
        %7370 = vmatpush.msra.mxu0 %v2995
        %7371 = vmatpush.msra.mxu0 %v2991
        %7372 = vmatpush.msra.mxu0 %v2987
        %7373 = vmatpush.msra.mxu0 %v2983
        %7374 = vmatpush.msra.mxu0 %v2979
        %7375 = vmatpush.msra.mxu0 %v2975
        %7376 = vmatpush.msra.mxu0 %v2971
        %7377 = vmatpush.msra.mxu0 %v2967
        %7378 = vmatpush.msra.mxu0 %v2963
        %7379 = vmatpush.msra.mxu0 %v2959
        %7380 = vmatpush.msra.mxu0 %v2955
        %7381 = vmatpush.msra.mxu0 %v2951
        %7382 = vmatmul.f32.gmra.mxu0 %v6656
        %v7383 = vpop.f32.mrf.mxu0
        %v7384 = vadd.f32 %v3082, %v7383
        %7385 = vdwg.mxu0
        %7386 = vmatpush.msra.mxu0 %v3075
        %7387 = vmatpush.msra.mxu0 %v3071
        %7388 = vmatpush.msra.mxu0 %v3067
        %7389 = vmatpush.msra.mxu0 %v3063
        %7390 = vmatpush.msra.mxu0 %v3059
        %7391 = vmatpush.msra.mxu0 %v3055
        %7392 = vmatpush.msra.mxu0 %v3051
        %7393 = vmatpush.msra.mxu0 %v3047
        %7394 = vmatpush.msra.mxu0 %v3043
        %7395 = vmatpush.msra.mxu0 %v3039
        %7396 = vmatpush.msra.mxu0 %v3035
        %7397 = vmatpush.msra.mxu0 %v3031
        %7398 = vmatpush.msra.mxu0 %v3027
        %7399 = vmatpush.msra.mxu0 %v3023
        %7400 = vmatpush.msra.mxu0 %v3019
        %7401 = vmatpush.msra.mxu0 %v3015
        %7402 = vmatmul.f32.gmra.mxu0 %v6879
        %v7403 = vpop.f32.mrf.mxu0
        %v7404 = vadd.f32 %v7384, %v7403
        %7405 = vdwg.mxu0
        %7406 = vmatpush.msra.mxu0 %v3012
        %7407 = vmatpush.msra.mxu0 %v3008
        %7408 = vmatpush.msra.mxu0 %v3004
        %7409 = vmatpush.msra.mxu0 %v3000
        %7410 = vmatpush.msra.mxu0 %v2996
        %7411 = vmatpush.msra.mxu0 %v2992
        %7412 = vmatpush.msra.mxu0 %v2988
        %7413 = vmatpush.msra.mxu0 %v2984
        %7414 = vmatpush.msra.mxu0 %v2980
        %7415 = vmatpush.msra.mxu0 %v2976
        %7416 = vmatpush.msra.mxu0 %v2972
        %7417 = vmatpush.msra.mxu0 %v2968
        %7418 = vmatpush.msra.mxu0 %v2964
        %7419 = vmatpush.msra.mxu0 %v2960
        %7420 = vmatpush.msra.mxu0 %v2956
        %7421 = vmatpush.msra.mxu0 %v2952
        %7422 = vmatmul.f32.gmra.mxu0 %v6656
        %v7423 = vpop.f32.mrf.mxu0
        %v7424 = vadd.f32 %v3083, %v7423
        %7425 = vdwg.mxu0
        %7426 = vmatpush.msra.mxu0 %v3076
        %7427 = vmatpush.msra.mxu0 %v3072
        %7428 = vmatpush.msra.mxu0 %v3068
        %7429 = vmatpush.msra.mxu0 %v3064
        %7430 = vmatpush.msra.mxu0 %v3060
        %7431 = vmatpush.msra.mxu0 %v3056
        %7432 = vmatpush.msra.mxu0 %v3052
        %7433 = vmatpush.msra.mxu0 %v3048
        %7434 = vmatpush.msra.mxu0 %v3044
        %7435 = vmatpush.msra.mxu0 %v3040
        %7436 = vmatpush.msra.mxu0 %v3036
        %7437 = vmatpush.msra.mxu0 %v3032
        %7438 = vmatpush.msra.mxu0 %v3028
        %7439 = vmatpush.msra.mxu0 %v3024
        %7440 = vmatpush.msra.mxu0 %v3020
        %7441 = vmatpush.msra.mxu0 %v3016
        %7442 = vmatmul.f32.gmra.mxu0 %v6879
        %v7443 = vpop.f32.mrf.mxu0
        %v7444 = vadd.f32 %v7424, %v7443
        %7445 = vdwg.mxu0
        %7446 = vmatpush.msra.mxu0 %v3013
        %7447 = vmatpush.msra.mxu0 %v3009
        %7448 = vmatpush.msra.mxu0 %v3005
        %7449 = vmatpush.msra.mxu0 %v3001
        %7450 = vmatpush.msra.mxu0 %v2997
        %7451 = vmatpush.msra.mxu0 %v2993
        %7452 = vmatpush.msra.mxu0 %v2989
        %7453 = vmatpush.msra.mxu0 %v2985
        %7454 = vmatpush.msra.mxu0 %v2981
        %7455 = vmatpush.msra.mxu0 %v2977
        %7456 = vmatpush.msra.mxu0 %v2973
        %7457 = vmatpush.msra.mxu0 %v2969
        %7458 = vmatpush.msra.mxu0 %v2965
        %7459 = vmatpush.msra.mxu0 %v2961
        %7460 = vmatpush.msra.mxu0 %v2957
        %7461 = vmatpush.msra.mxu0 %v2953
        %7462 = vmatmul.f32.gmra.mxu0 %v6656
        %v7463 = vpop.f32.mrf.mxu0
        %v7464 = vadd.f32 %v3084, %v7463
        %7465 = vdwg.mxu0
        %7466 = vmatpush.msra.mxu0 %v3077
        %7467 = vmatpush.msra.mxu0 %v3073
        %7468 = vmatpush.msra.mxu0 %v3069
        %7469 = vmatpush.msra.mxu0 %v3065
        %7470 = vmatpush.msra.mxu0 %v3061
        %7471 = vmatpush.msra.mxu0 %v3057
        %7472 = vmatpush.msra.mxu0 %v3053
        %7473 = vmatpush.msra.mxu0 %v3049
        %7474 = vmatpush.msra.mxu0 %v3045
        %7475 = vmatpush.msra.mxu0 %v3041
        %7476 = vmatpush.msra.mxu0 %v3037
        %7477 = vmatpush.msra.mxu0 %v3033
        %7478 = vmatpush.msra.mxu0 %v3029
        %7479 = vmatpush.msra.mxu0 %v3025
        %7480 = vmatpush.msra.mxu0 %v3021
        %7481 = vmatpush.msra.mxu0 %v3017
        %7482 = vmatmul.f32.gmra.mxu0 %v6879
        %v7483 = vpop.f32.mrf.mxu0
        %v7484 = vadd.f32 %v7464, %v7483
        %7485 = vdwg.mxu0
        %v7486 = vxor.u32 %v7364, 2147483648
        %v7487 = vxor.u32 %v7404, 2147483648
        %v7488 = vxor.u32 %v7444, 2147483648
        %v7489 = vmul.f32 %v7486, 1.442695
        %v7490 = vpow.pop %v7489
        %v7491 = vmul.f32 %v7487, 1.442695
        %v7492 = vpow.pop %v7491
        %v7493 = vmul.f32 %v7488, 1.442695
        %v7494 = vpow.pop %v7493
        %v7495 = vadd.f32 %v7490, 1.0
        %v7496 = vadd.f32 %v7492, 1.0
        %v7497 = vadd.f32 %v7494, 1.0
        %v7498 = vrcp.pop %v7495
        %v7499 = vmul.f32 %v7495, %v7498
        %v7500 = vsub.f32 1.0, %v7499
        %v7501 = vmul.f32 %v7498, %v7500
        %v7502 = vadd.f32 %v7498, %v7501
        %vm7503 = vweird.f32 %v7495
        %vm7504 = vweird.f32 %v7498
        %vm7505 = vmor %vm7503, %vm7504
        %v7506 = vsel %vm7505, %v7498, %v7502
        %v7507 = vand.u32 2147483647, %v7495
        %vm7508 = vcmp.eq.f32.partialorder %v7507, 8.507059e+37
        %v7509 = vand.u32 %v7495, 2147483648
        %v7510 = vor.u32 1.1754944e-38, %v7509
        %v7511 = vsel %vm7508, %v7510, %v7506
        %v7512 = vmul.f32 1.0, %v7511
        %v7513 = vrcp.pop %v7496
        %v7514 = vmul.f32 %v7496, %v7513
        %v7515 = vsub.f32 1.0, %v7514
        %v7516 = vmul.f32 %v7513, %v7515
        %v7517 = vadd.f32 %v7513, %v7516
        %vm7518 = vweird.f32 %v7496
        %vm7519 = vweird.f32 %v7513
        %vm7520 = vmor %vm7518, %vm7519
        %v7521 = vsel %vm7520, %v7513, %v7517
        %v7522 = vand.u32 2147483647, %v7496
        %vm7523 = vcmp.eq.f32.partialorder %v7522, 8.507059e+37
        %v7524 = vand.u32 %v7496, 2147483648
        %v7525 = vor.u32 1.1754944e-38, %v7524
        %v7526 = vsel %vm7523, %v7525, %v7521
        %v7527 = vmul.f32 1.0, %v7526
        %v7528 = vrcp.pop %v7497
        %v7529 = vmul.f32 %v7497, %v7528
        %v7530 = vsub.f32 1.0, %v7529
        %v7531 = vmul.f32 %v7528, %v7530
        %v7532 = vadd.f32 %v7528, %v7531
        %vm7533 = vweird.f32 %v7497
        %vm7534 = vweird.f32 %v7528
        %vm7535 = vmor %vm7533, %vm7534
        %v7536 = vsel %vm7535, %v7528, %v7532
        %v7537 = vand.u32 2147483647, %v7497
        %vm7538 = vcmp.eq.f32.partialorder %v7537, 8.507059e+37
        %v7539 = vand.u32 %v7497, 2147483648
        %v7540 = vor.u32 1.1754944e-38, %v7539
        %v7541 = vsel %vm7538, %v7540, %v7536
        %v7542 = vmul.f32 1.0, %v7541
        %v7543 = vtanh.pop %v7484
        %v7544 = vmul.f32 %v7527, %v6877
        %v7545 = vmul.f32 %v7512, %v7543
        %v7546 = vadd.f32 %v7544, %v7545
        %v7547 = vtanh.pop %v7546
        %v7548 = vmul.f32 %v7542, %v7547
        %7549 = vmatpush.msra.mxu0 %v1978
        %7550 = vmatpush.msra.mxu0 %v1974
        %7551 = vmatpush.msra.mxu0 %v1970
        %7552 = vmatpush.msra.mxu0 %v1966
        %7553 = vmatpush.msra.mxu0 %v1962
        %7554 = vmatpush.msra.mxu0 %v1958
        %7555 = vmatpush.msra.mxu0 %v1954
        %7556 = vmatpush.msra.mxu0 %v1950
        %7557 = vmatpush.msra.mxu0 %v1946
        %7558 = vmatpush.msra.mxu0 %v1942
        %7559 = vmatpush.msra.mxu0 %v1938
        %7560 = vmatpush.msra.mxu0 %v1934
        %7561 = vmatpush.msra.mxu0 %v1930
        %7562 = vmatpush.msra.mxu0 %v1926
        %7563 = vmatpush.msra.mxu0 %v1922
        %7564 = vmatpush.msra.mxu0 %v1918
        %7565 = vmatmul.f32.gmra.mxu0 %v7102
        %v7566 = vpop.f32.mrf.mxu0
        %v7567 = vadd.f32 %v2049, %v7566
        %7568 = vdwg.mxu0
        %7569 = vmatpush.msra.mxu0 %v2042
        %7570 = vmatpush.msra.mxu0 %v2038
        %7571 = vmatpush.msra.mxu0 %v2034
        %7572 = vmatpush.msra.mxu0 %v2030
        %7573 = vmatpush.msra.mxu0 %v2026
        %7574 = vmatpush.msra.mxu0 %v2022
        %7575 = vmatpush.msra.mxu0 %v2018
        %7576 = vmatpush.msra.mxu0 %v2014
        %7577 = vmatpush.msra.mxu0 %v2010
        %7578 = vmatpush.msra.mxu0 %v2006
        %7579 = vmatpush.msra.mxu0 %v2002
        %7580 = vmatpush.msra.mxu0 %v1998
        %7581 = vmatpush.msra.mxu0 %v1994
        %7582 = vmatpush.msra.mxu0 %v1990
        %7583 = vmatpush.msra.mxu0 %v1986
        %7584 = vmatpush.msra.mxu0 %v1982
        %7585 = vmatmul.f32.gmra.mxu0 %v7325
        %v7586 = vpop.f32.mrf.mxu0
        %v7587 = vadd.f32 %v7567, %v7586
        %7588 = vdwg.mxu0
        %7589 = vmatpush.msra.mxu0 %v1979
        %7590 = vmatpush.msra.mxu0 %v1975
        %7591 = vmatpush.msra.mxu0 %v1971
        %7592 = vmatpush.msra.mxu0 %v1967
        %7593 = vmatpush.msra.mxu0 %v1963
        %7594 = vmatpush.msra.mxu0 %v1959
        %7595 = vmatpush.msra.mxu0 %v1955
        %7596 = vmatpush.msra.mxu0 %v1951
        %7597 = vmatpush.msra.mxu0 %v1947
        %7598 = vmatpush.msra.mxu0 %v1943
        %7599 = vmatpush.msra.mxu0 %v1939
        %7600 = vmatpush.msra.mxu0 %v1935
        %7601 = vmatpush.msra.mxu0 %v1931
        %7602 = vmatpush.msra.mxu0 %v1927
        %7603 = vmatpush.msra.mxu0 %v1923
        %7604 = vmatpush.msra.mxu0 %v1919
        %7605 = vmatmul.f32.gmra.mxu0 %v7102
        %v7606 = vpop.f32.mrf.mxu0
        %v7607 = vadd.f32 %v2050, %v7606
        %7608 = vdwg.mxu0
        %7609 = vmatpush.msra.mxu0 %v2043
        %7610 = vmatpush.msra.mxu0 %v2039
        %7611 = vmatpush.msra.mxu0 %v2035
        %7612 = vmatpush.msra.mxu0 %v2031
        %7613 = vmatpush.msra.mxu0 %v2027
        %7614 = vmatpush.msra.mxu0 %v2023
        %7615 = vmatpush.msra.mxu0 %v2019
        %7616 = vmatpush.msra.mxu0 %v2015
        %7617 = vmatpush.msra.mxu0 %v2011
        %7618 = vmatpush.msra.mxu0 %v2007
        %7619 = vmatpush.msra.mxu0 %v2003
        %7620 = vmatpush.msra.mxu0 %v1999
        %7621 = vmatpush.msra.mxu0 %v1995
        %7622 = vmatpush.msra.mxu0 %v1991
        %7623 = vmatpush.msra.mxu0 %v1987
        %7624 = vmatpush.msra.mxu0 %v1983
        %7625 = vmatmul.f32.gmra.mxu0 %v7325
        %v7626 = vpop.f32.mrf.mxu0
        %v7627 = vadd.f32 %v7607, %v7626
        %7628 = vdwg.mxu0
        %7629 = vmatpush.msra.mxu0 %v1980
        %7630 = vmatpush.msra.mxu0 %v1976
        %7631 = vmatpush.msra.mxu0 %v1972
        %7632 = vmatpush.msra.mxu0 %v1968
        %7633 = vmatpush.msra.mxu0 %v1964
        %7634 = vmatpush.msra.mxu0 %v1960
        %7635 = vmatpush.msra.mxu0 %v1956
        %7636 = vmatpush.msra.mxu0 %v1952
        %7637 = vmatpush.msra.mxu0 %v1948
        %7638 = vmatpush.msra.mxu0 %v1944
        %7639 = vmatpush.msra.mxu0 %v1940
        %7640 = vmatpush.msra.mxu0 %v1936
        %7641 = vmatpush.msra.mxu0 %v1932
        %7642 = vmatpush.msra.mxu0 %v1928
        %7643 = vmatpush.msra.mxu0 %v1924
        %7644 = vmatpush.msra.mxu0 %v1920
        %7645 = vmatmul.f32.gmra.mxu0 %v7102
        %v7646 = vpop.f32.mrf.mxu0
        %v7647 = vadd.f32 %v2051, %v7646
        %7648 = vdwg.mxu0
        %7649 = vmatpush.msra.mxu0 %v2044
        %7650 = vmatpush.msra.mxu0 %v2040
        %7651 = vmatpush.msra.mxu0 %v2036
        %7652 = vmatpush.msra.mxu0 %v2032
        %7653 = vmatpush.msra.mxu0 %v2028
        %7654 = vmatpush.msra.mxu0 %v2024
        %7655 = vmatpush.msra.mxu0 %v2020
        %7656 = vmatpush.msra.mxu0 %v2016
        %7657 = vmatpush.msra.mxu0 %v2012
        %7658 = vmatpush.msra.mxu0 %v2008
        %7659 = vmatpush.msra.mxu0 %v2004
        %7660 = vmatpush.msra.mxu0 %v2000
        %7661 = vmatpush.msra.mxu0 %v1996
        %7662 = vmatpush.msra.mxu0 %v1992
        %7663 = vmatpush.msra.mxu0 %v1988
        %7664 = vmatpush.msra.mxu0 %v1984
        %7665 = vmatmul.f32.gmra.mxu0 %v7325
        %v7666 = vpop.f32.mrf.mxu0
        %v7667 = vadd.f32 %v7647, %v7666
        %7668 = vdwg.mxu0
        %7669 = vmatpush.msra.mxu0 %v1981
        %7670 = vmatpush.msra.mxu0 %v1977
        %7671 = vmatpush.msra.mxu0 %v1973
        %7672 = vmatpush.msra.mxu0 %v1969
        %7673 = vmatpush.msra.mxu0 %v1965
        %7674 = vmatpush.msra.mxu0 %v1961
        %7675 = vmatpush.msra.mxu0 %v1957
        %7676 = vmatpush.msra.mxu0 %v1953
        %7677 = vmatpush.msra.mxu0 %v1949
        %7678 = vmatpush.msra.mxu0 %v1945
        %7679 = vmatpush.msra.mxu0 %v1941
        %7680 = vmatpush.msra.mxu0 %v1937
        %7681 = vmatpush.msra.mxu0 %v1933
        %7682 = vmatpush.msra.mxu0 %v1929
        %7683 = vmatpush.msra.mxu0 %v1925
        %7684 = vmatpush.msra.mxu0 %v1921
        %7685 = vmatmul.f32.gmra.mxu0 %v7102
        %v7686 = vpop.f32.mrf.mxu0
        %v7687 = vadd.f32 %v2052, %v7686
        %7688 = vdwg.mxu0
        %7689 = vmatpush.msra.mxu0 %v2045
        %7690 = vmatpush.msra.mxu0 %v2041
        %7691 = vmatpush.msra.mxu0 %v2037
        %7692 = vmatpush.msra.mxu0 %v2033
        %7693 = vmatpush.msra.mxu0 %v2029
        %7694 = vmatpush.msra.mxu0 %v2025
        %7695 = vmatpush.msra.mxu0 %v2021
        %7696 = vmatpush.msra.mxu0 %v2017
        %7697 = vmatpush.msra.mxu0 %v2013
        %7698 = vmatpush.msra.mxu0 %v2009
        %7699 = vmatpush.msra.mxu0 %v2005
        %7700 = vmatpush.msra.mxu0 %v2001
        %7701 = vmatpush.msra.mxu0 %v1997
        %7702 = vmatpush.msra.mxu0 %v1993
        %7703 = vmatpush.msra.mxu0 %v1989
        %7704 = vmatpush.msra.mxu0 %v1985
        %7705 = vmatmul.f32.gmra.mxu0 %v7325
        %v7706 = vpop.f32.mrf.mxu0
        %v7707 = vadd.f32 %v7687, %v7706
        %7708 = vdwg.mxu0
        %v7709 = vxor.u32 %v7587, 2147483648
        %v7710 = vxor.u32 %v7627, 2147483648
        %v7711 = vxor.u32 %v7667, 2147483648
        %v7712 = vmul.f32 %v7709, 1.442695
        %v7713 = vpow.pop %v7712
        %v7714 = vmul.f32 %v7710, 1.442695
        %v7715 = vpow.pop %v7714
        %v7716 = vmul.f32 %v7711, 1.442695
        %v7717 = vpow.pop %v7716
        %v7718 = vadd.f32 %v7713, 1.0
        %v7719 = vadd.f32 %v7715, 1.0
        %v7720 = vadd.f32 %v7717, 1.0
        %v7721 = vrcp.pop %v7718
        %v7722 = vmul.f32 %v7718, %v7721
        %v7723 = vsub.f32 1.0, %v7722
        %v7724 = vmul.f32 %v7721, %v7723
        %v7725 = vadd.f32 %v7721, %v7724
        %vm7726 = vweird.f32 %v7718
        %vm7727 = vweird.f32 %v7721
        %vm7728 = vmor %vm7726, %vm7727
        %v7729 = vsel %vm7728, %v7721, %v7725
        %v7730 = vand.u32 2147483647, %v7718
        %vm7731 = vcmp.eq.f32.partialorder %v7730, 8.507059e+37
        %v7732 = vand.u32 %v7718, 2147483648
        %v7733 = vor.u32 1.1754944e-38, %v7732
        %v7734 = vsel %vm7731, %v7733, %v7729
        %v7735 = vmul.f32 1.0, %v7734
        %v7736 = vrcp.pop %v7719
        %v7737 = vmul.f32 %v7719, %v7736
        %v7738 = vsub.f32 1.0, %v7737
        %v7739 = vmul.f32 %v7736, %v7738
        %v7740 = vadd.f32 %v7736, %v7739
        %vm7741 = vweird.f32 %v7719
        %vm7742 = vweird.f32 %v7736
        %vm7743 = vmor %vm7741, %vm7742
        %v7744 = vsel %vm7743, %v7736, %v7740
        %v7745 = vand.u32 2147483647, %v7719
        %vm7746 = vcmp.eq.f32.partialorder %v7745, 8.507059e+37
        %v7747 = vand.u32 %v7719, 2147483648
        %v7748 = vor.u32 1.1754944e-38, %v7747
        %v7749 = vsel %vm7746, %v7748, %v7744
        %v7750 = vmul.f32 1.0, %v7749
        %v7751 = vrcp.pop %v7720
        %v7752 = vmul.f32 %v7720, %v7751
        %v7753 = vsub.f32 1.0, %v7752
        %v7754 = vmul.f32 %v7751, %v7753
        %v7755 = vadd.f32 %v7751, %v7754
        %vm7756 = vweird.f32 %v7720
        %vm7757 = vweird.f32 %v7751
        %vm7758 = vmor %vm7756, %vm7757
        %v7759 = vsel %vm7758, %v7751, %v7755
        %v7760 = vand.u32 2147483647, %v7720
        %vm7761 = vcmp.eq.f32.partialorder %v7760, 8.507059e+37
        %v7762 = vand.u32 %v7720, 2147483648
        %v7763 = vor.u32 1.1754944e-38, %v7762
        %v7764 = vsel %vm7761, %v7763, %v7759
        %v7765 = vmul.f32 1.0, %v7764
        %v7766 = vtanh.pop %v7707
        %v7767 = vmul.f32 %v7750, %v7323
        %v7768 = vmul.f32 %v7735, %v7766
        %v7769 = vadd.f32 %v7767, %v7768
        %v7770 = vtanh.pop %v7769
        %v7771 = vmul.f32 %v7765, %v7770
        %7772 = vmatpush.msra.mxu0 %v3010
        %7773 = vmatpush.msra.mxu0 %v3006
        %7774 = vmatpush.msra.mxu0 %v3002
        %7775 = vmatpush.msra.mxu0 %v2998
        %7776 = vmatpush.msra.mxu0 %v2994
        %7777 = vmatpush.msra.mxu0 %v2990
        %7778 = vmatpush.msra.mxu0 %v2986
        %7779 = vmatpush.msra.mxu0 %v2982
        %7780 = vmatpush.msra.mxu0 %v2978
        %7781 = vmatpush.msra.mxu0 %v2974
        %7782 = vmatpush.msra.mxu0 %v2970
        %7783 = vmatpush.msra.mxu0 %v2966
        %7784 = vmatpush.msra.mxu0 %v2962
        %7785 = vmatpush.msra.mxu0 %v2958
        %7786 = vmatpush.msra.mxu0 %v2954
        %7787 = vmatpush.msra.mxu0 %v2950
        %7788 = vmatmul.f32.gmra.mxu0 %v7325
        %v7789 = vpop.f32.mrf.mxu0
        %v7790 = vadd.f32 %v3081, %v7789
        %7791 = vdwg.mxu0
        %7792 = vmatpush.msra.mxu0 %v3074
        %7793 = vmatpush.msra.mxu0 %v3070
        %7794 = vmatpush.msra.mxu0 %v3066
        %7795 = vmatpush.msra.mxu0 %v3062
        %7796 = vmatpush.msra.mxu0 %v3058
        %7797 = vmatpush.msra.mxu0 %v3054
        %7798 = vmatpush.msra.mxu0 %v3050
        %7799 = vmatpush.msra.mxu0 %v3046
        %7800 = vmatpush.msra.mxu0 %v3042
        %7801 = vmatpush.msra.mxu0 %v3038
        %7802 = vmatpush.msra.mxu0 %v3034
        %7803 = vmatpush.msra.mxu0 %v3030
        %7804 = vmatpush.msra.mxu0 %v3026
        %7805 = vmatpush.msra.mxu0 %v3022
        %7806 = vmatpush.msra.mxu0 %v3018
        %7807 = vmatpush.msra.mxu0 %v3014
        %7808 = vmatmul.f32.gmra.mxu0 %v7548
        %v7809 = vpop.f32.mrf.mxu0
        %v7810 = vadd.f32 %v7790, %v7809
        %7811 = vdwg.mxu0
        %7812 = vmatpush.msra.mxu0 %v3011
        %7813 = vmatpush.msra.mxu0 %v3007
        %7814 = vmatpush.msra.mxu0 %v3003
        %7815 = vmatpush.msra.mxu0 %v2999
        %7816 = vmatpush.msra.mxu0 %v2995
        %7817 = vmatpush.msra.mxu0 %v2991
        %7818 = vmatpush.msra.mxu0 %v2987
        %7819 = vmatpush.msra.mxu0 %v2983
        %7820 = vmatpush.msra.mxu0 %v2979
        %7821 = vmatpush.msra.mxu0 %v2975
        %7822 = vmatpush.msra.mxu0 %v2971
        %7823 = vmatpush.msra.mxu0 %v2967
        %7824 = vmatpush.msra.mxu0 %v2963
        %7825 = vmatpush.msra.mxu0 %v2959
        %7826 = vmatpush.msra.mxu0 %v2955
        %7827 = vmatpush.msra.mxu0 %v2951
        %7828 = vmatmul.f32.gmra.mxu0 %v7325
        %v7829 = vpop.f32.mrf.mxu0
        %v7830 = vadd.f32 %v3082, %v7829
        %7831 = vdwg.mxu0
        %7832 = vmatpush.msra.mxu0 %v3075
        %7833 = vmatpush.msra.mxu0 %v3071
        %7834 = vmatpush.msra.mxu0 %v3067
        %7835 = vmatpush.msra.mxu0 %v3063
        %7836 = vmatpush.msra.mxu0 %v3059
        %7837 = vmatpush.msra.mxu0 %v3055
        %7838 = vmatpush.msra.mxu0 %v3051
        %7839 = vmatpush.msra.mxu0 %v3047
        %7840 = vmatpush.msra.mxu0 %v3043
        %7841 = vmatpush.msra.mxu0 %v3039
        %7842 = vmatpush.msra.mxu0 %v3035
        %7843 = vmatpush.msra.mxu0 %v3031
        %7844 = vmatpush.msra.mxu0 %v3027
        %7845 = vmatpush.msra.mxu0 %v3023
        %7846 = vmatpush.msra.mxu0 %v3019
        %7847 = vmatpush.msra.mxu0 %v3015
        %7848 = vmatmul.f32.gmra.mxu0 %v7548
        %v7849 = vpop.f32.mrf.mxu0
        %v7850 = vadd.f32 %v7830, %v7849
        %7851 = vdwg.mxu0
        %7852 = vmatpush.msra.mxu0 %v3012
        %7853 = vmatpush.msra.mxu0 %v3008
        %7854 = vmatpush.msra.mxu0 %v3004
        %7855 = vmatpush.msra.mxu0 %v3000
        %7856 = vmatpush.msra.mxu0 %v2996
        %7857 = vmatpush.msra.mxu0 %v2992
        %7858 = vmatpush.msra.mxu0 %v2988
        %7859 = vmatpush.msra.mxu0 %v2984
        %7860 = vmatpush.msra.mxu0 %v2980
        %7861 = vmatpush.msra.mxu0 %v2976
        %7862 = vmatpush.msra.mxu0 %v2972
        %7863 = vmatpush.msra.mxu0 %v2968
        %7864 = vmatpush.msra.mxu0 %v2964
        %7865 = vmatpush.msra.mxu0 %v2960
        %7866 = vmatpush.msra.mxu0 %v2956
        %7867 = vmatpush.msra.mxu0 %v2952
        %7868 = vmatmul.f32.gmra.mxu0 %v7325
        %v7869 = vpop.f32.mrf.mxu0
        %v7870 = vadd.f32 %v3083, %v7869
        %7871 = vdwg.mxu0
        %7872 = vmatpush.msra.mxu0 %v3076
        %7873 = vmatpush.msra.mxu0 %v3072
        %7874 = vmatpush.msra.mxu0 %v3068
        %7875 = vmatpush.msra.mxu0 %v3064
        %7876 = vmatpush.msra.mxu0 %v3060
        %7877 = vmatpush.msra.mxu0 %v3056
        %7878 = vmatpush.msra.mxu0 %v3052
        %7879 = vmatpush.msra.mxu0 %v3048
        %7880 = vmatpush.msra.mxu0 %v3044
        %7881 = vmatpush.msra.mxu0 %v3040
        %7882 = vmatpush.msra.mxu0 %v3036
        %7883 = vmatpush.msra.mxu0 %v3032
        %7884 = vmatpush.msra.mxu0 %v3028
        %7885 = vmatpush.msra.mxu0 %v3024
        %7886 = vmatpush.msra.mxu0 %v3020
        %7887 = vmatpush.msra.mxu0 %v3016
        %7888 = vmatmul.f32.gmra.mxu0 %v7548
        %v7889 = vpop.f32.mrf.mxu0
        %v7890 = vadd.f32 %v7870, %v7889
        %7891 = vdwg.mxu0
        %7892 = vmatpush.msra.mxu0 %v3013
        %7893 = vmatpush.msra.mxu0 %v3009
        %7894 = vmatpush.msra.mxu0 %v3005
        %7895 = vmatpush.msra.mxu0 %v3001
        %7896 = vmatpush.msra.mxu0 %v2997
        %7897 = vmatpush.msra.mxu0 %v2993
        %7898 = vmatpush.msra.mxu0 %v2989
        %7899 = vmatpush.msra.mxu0 %v2985
        %7900 = vmatpush.msra.mxu0 %v2981
        %7901 = vmatpush.msra.mxu0 %v2977
        %7902 = vmatpush.msra.mxu0 %v2973
        %7903 = vmatpush.msra.mxu0 %v2969
        %7904 = vmatpush.msra.mxu0 %v2965
        %7905 = vmatpush.msra.mxu0 %v2961
        %7906 = vmatpush.msra.mxu0 %v2957
        %7907 = vmatpush.msra.mxu0 %v2953
        %7908 = vmatmul.f32.gmra.mxu0 %v7325
        %v7909 = vpop.f32.mrf.mxu0
        %v7910 = vadd.f32 %v3084, %v7909
        %7911 = vdwg.mxu0
        %7912 = vmatpush.msra.mxu0 %v3077
        %7913 = vmatpush.msra.mxu0 %v3073
        %7914 = vmatpush.msra.mxu0 %v3069
        %7915 = vmatpush.msra.mxu0 %v3065
        %7916 = vmatpush.msra.mxu0 %v3061
        %7917 = vmatpush.msra.mxu0 %v3057
        %7918 = vmatpush.msra.mxu0 %v3053
        %7919 = vmatpush.msra.mxu0 %v3049
        %7920 = vmatpush.msra.mxu0 %v3045
        %7921 = vmatpush.msra.mxu0 %v3041
        %7922 = vmatpush.msra.mxu0 %v3037
        %7923 = vmatpush.msra.mxu0 %v3033
        %7924 = vmatpush.msra.mxu0 %v3029
        %7925 = vmatpush.msra.mxu0 %v3025
        %7926 = vmatpush.msra.mxu0 %v3021
        %7927 = vmatpush.msra.mxu0 %v3017
        %7928 = vmatmul.f32.gmra.mxu0 %v7548
        %v7929 = vpop.f32.mrf.mxu0
        %v7930 = vadd.f32 %v7910, %v7929
        %7931 = vdwg.mxu0
        %v7932 = vxor.u32 %v7810, 2147483648
        %v7933 = vxor.u32 %v7850, 2147483648
        %v7934 = vxor.u32 %v7890, 2147483648
        %v7935 = vmul.f32 %v7932, 1.442695
        %v7936 = vpow.pop %v7935
        %v7937 = vmul.f32 %v7933, 1.442695
        %v7938 = vpow.pop %v7937
        %v7939 = vmul.f32 %v7934, 1.442695
        %v7940 = vpow.pop %v7939
        %v7941 = vadd.f32 %v7936, 1.0
        %v7942 = vadd.f32 %v7938, 1.0
        %v7943 = vadd.f32 %v7940, 1.0
        %v7944 = vrcp.pop %v7941
        %v7945 = vmul.f32 %v7941, %v7944
        %v7946 = vsub.f32 1.0, %v7945
        %v7947 = vmul.f32 %v7944, %v7946
        %v7948 = vadd.f32 %v7944, %v7947
        %vm7949 = vweird.f32 %v7941
        %vm7950 = vweird.f32 %v7944
        %vm7951 = vmor %vm7949, %vm7950
        %v7952 = vsel %vm7951, %v7944, %v7948
        %v7953 = vand.u32 2147483647, %v7941
        %vm7954 = vcmp.eq.f32.partialorder %v7953, 8.507059e+37
        %v7955 = vand.u32 %v7941, 2147483648
        %v7956 = vor.u32 1.1754944e-38, %v7955
        %v7957 = vsel %vm7954, %v7956, %v7952
        %v7958 = vmul.f32 1.0, %v7957
        %v7959 = vrcp.pop %v7942
        %v7960 = vmul.f32 %v7942, %v7959
        %v7961 = vsub.f32 1.0, %v7960
        %v7962 = vmul.f32 %v7959, %v7961
        %v7963 = vadd.f32 %v7959, %v7962
        %vm7964 = vweird.f32 %v7942
        %vm7965 = vweird.f32 %v7959
        %vm7966 = vmor %vm7964, %vm7965
        %v7967 = vsel %vm7966, %v7959, %v7963
        %v7968 = vand.u32 2147483647, %v7942
        %vm7969 = vcmp.eq.f32.partialorder %v7968, 8.507059e+37
        %v7970 = vand.u32 %v7942, 2147483648
        %v7971 = vor.u32 1.1754944e-38, %v7970
        %v7972 = vsel %vm7969, %v7971, %v7967
        %v7973 = vmul.f32 1.0, %v7972
        %v7974 = vrcp.pop %v7943
        %v7975 = vmul.f32 %v7943, %v7974
        %v7976 = vsub.f32 1.0, %v7975
        %v7977 = vmul.f32 %v7974, %v7976
        %v7978 = vadd.f32 %v7974, %v7977
        %vm7979 = vweird.f32 %v7943
        %vm7980 = vweird.f32 %v7974
        %vm7981 = vmor %vm7979, %vm7980
        %v7982 = vsel %vm7981, %v7974, %v7978
        %v7983 = vand.u32 2147483647, %v7943
        %vm7984 = vcmp.eq.f32.partialorder %v7983, 8.507059e+37
        %v7985 = vand.u32 %v7943, 2147483648
        %v7986 = vor.u32 1.1754944e-38, %v7985
        %v7987 = vsel %vm7984, %v7986, %v7982
        %v7988 = vmul.f32 1.0, %v7987
        %v7989 = vtanh.pop %v7930
        %v7990 = vmul.f32 %v7973, %v7546
        %v7991 = vmul.f32 %v7958, %v7989
        %v7992 = vadd.f32 %v7990, %v7991
        %v7993 = vtanh.pop %v7992
        %v7994 = vmul.f32 %v7988, %v7993
        %7995 = vmatpush.msra.mxu0 %v3010
        %7996 = vmatpush.msra.mxu0 %v3006
        %7997 = vmatpush.msra.mxu0 %v3002
        %7998 = vmatpush.msra.mxu0 %v2998
        %7999 = vmatpush.msra.mxu0 %v2994
        %8000 = vmatpush.msra.mxu0 %v2990
        %8001 = vmatpush.msra.mxu0 %v2986
        %8002 = vmatpush.msra.mxu0 %v2982
        %8003 = vmatpush.msra.mxu0 %v2978
        %8004 = vmatpush.msra.mxu0 %v2974
        %8005 = vmatpush.msra.mxu0 %v2970
        %8006 = vmatpush.msra.mxu0 %v2966
        %8007 = vmatpush.msra.mxu0 %v2962
        %8008 = vmatpush.msra.mxu0 %v2958
        %8009 = vmatpush.msra.mxu0 %v2954
        %8010 = vmatpush.msra.mxu0 %v2950
        %8011 = vmatmul.f32.gmra.mxu0 %v7771
        %v8012 = vpop.f32.mrf.mxu0
        %v8013 = vadd.f32 %v3081, %v8012
        %8014 = vdwg.mxu0
        %8015 = vmatpush.msra.mxu0 %v3074
        %8016 = vmatpush.msra.mxu0 %v3070
        %8017 = vmatpush.msra.mxu0 %v3066
        %8018 = vmatpush.msra.mxu0 %v3062
        %8019 = vmatpush.msra.mxu0 %v3058
        %8020 = vmatpush.msra.mxu0 %v3054
        %8021 = vmatpush.msra.mxu0 %v3050
        %8022 = vmatpush.msra.mxu0 %v3046
        %8023 = vmatpush.msra.mxu0 %v3042
        %8024 = vmatpush.msra.mxu0 %v3038
        %8025 = vmatpush.msra.mxu0 %v3034
        %8026 = vmatpush.msra.mxu0 %v3030
        %8027 = vmatpush.msra.mxu0 %v3026
        %8028 = vmatpush.msra.mxu0 %v3022
        %8029 = vmatpush.msra.mxu0 %v3018
        %8030 = vmatpush.msra.mxu0 %v3014
        %8031 = vmatmul.f32.gmra.mxu0 %v7994
        %v8032 = vpop.f32.mrf.mxu0
        %v8033 = vadd.f32 %v8013, %v8032
        %8034 = vdwg.mxu0
        %8035 = vmatpush.msra.mxu0 %v3011
        %8036 = vmatpush.msra.mxu0 %v3007
        %8037 = vmatpush.msra.mxu0 %v3003
        %8038 = vmatpush.msra.mxu0 %v2999
        %8039 = vmatpush.msra.mxu0 %v2995
        %8040 = vmatpush.msra.mxu0 %v2991
        %8041 = vmatpush.msra.mxu0 %v2987
        %8042 = vmatpush.msra.mxu0 %v2983
        %8043 = vmatpush.msra.mxu0 %v2979
        %8044 = vmatpush.msra.mxu0 %v2975
        %8045 = vmatpush.msra.mxu0 %v2971
        %8046 = vmatpush.msra.mxu0 %v2967
        %8047 = vmatpush.msra.mxu0 %v2963
        %8048 = vmatpush.msra.mxu0 %v2959
        %8049 = vmatpush.msra.mxu0 %v2955
        %8050 = vmatpush.msra.mxu0 %v2951
        %8051 = vmatmul.f32.gmra.mxu0 %v7771
        %v8052 = vpop.f32.mrf.mxu0
        %v8053 = vadd.f32 %v3082, %v8052
        %8054 = vdwg.mxu0
        %8055 = vmatpush.msra.mxu0 %v3075
        %8056 = vmatpush.msra.mxu0 %v3071
        %8057 = vmatpush.msra.mxu0 %v3067
        %8058 = vmatpush.msra.mxu0 %v3063
        %8059 = vmatpush.msra.mxu0 %v3059
        %8060 = vmatpush.msra.mxu0 %v3055
        %8061 = vmatpush.msra.mxu0 %v3051
        %8062 = vmatpush.msra.mxu0 %v3047
        %8063 = vmatpush.msra.mxu0 %v3043
        %8064 = vmatpush.msra.mxu0 %v3039
        %8065 = vmatpush.msra.mxu0 %v3035
        %8066 = vmatpush.msra.mxu0 %v3031
        %8067 = vmatpush.msra.mxu0 %v3027
        %8068 = vmatpush.msra.mxu0 %v3023
        %8069 = vmatpush.msra.mxu0 %v3019
        %8070 = vmatpush.msra.mxu0 %v3015
        %8071 = vmatmul.f32.gmra.mxu0 %v7994
        %v8072 = vpop.f32.mrf.mxu0
        %v8073 = vadd.f32 %v8053, %v8072
        %8074 = vdwg.mxu0
        %8075 = vmatpush.msra.mxu0 %v3012
        %8076 = vmatpush.msra.mxu0 %v3008
        %8077 = vmatpush.msra.mxu0 %v3004
        %8078 = vmatpush.msra.mxu0 %v3000
        %8079 = vmatpush.msra.mxu0 %v2996
        %8080 = vmatpush.msra.mxu0 %v2992
        %8081 = vmatpush.msra.mxu0 %v2988
        %8082 = vmatpush.msra.mxu0 %v2984
        %8083 = vmatpush.msra.mxu0 %v2980
        %8084 = vmatpush.msra.mxu0 %v2976
        %8085 = vmatpush.msra.mxu0 %v2972
        %8086 = vmatpush.msra.mxu0 %v2968
        %8087 = vmatpush.msra.mxu0 %v2964
        %8088 = vmatpush.msra.mxu0 %v2960
        %8089 = vmatpush.msra.mxu0 %v2956
        %8090 = vmatpush.msra.mxu0 %v2952
        %8091 = vmatmul.f32.gmra.mxu0 %v7771
        %v8092 = vpop.f32.mrf.mxu0
        %v8093 = vadd.f32 %v3083, %v8092
        %8094 = vdwg.mxu0
        %8095 = vmatpush.msra.mxu0 %v3076
        %8096 = vmatpush.msra.mxu0 %v3072
        %8097 = vmatpush.msra.mxu0 %v3068
        %8098 = vmatpush.msra.mxu0 %v3064
        %8099 = vmatpush.msra.mxu0 %v3060
        %8100 = vmatpush.msra.mxu0 %v3056
        %8101 = vmatpush.msra.mxu0 %v3052
        %8102 = vmatpush.msra.mxu0 %v3048
        %8103 = vmatpush.msra.mxu0 %v3044
        %8104 = vmatpush.msra.mxu0 %v3040
        %8105 = vmatpush.msra.mxu0 %v3036
        %8106 = vmatpush.msra.mxu0 %v3032
        %8107 = vmatpush.msra.mxu0 %v3028
        %8108 = vmatpush.msra.mxu0 %v3024
        %8109 = vmatpush.msra.mxu0 %v3020
        %8110 = vmatpush.msra.mxu0 %v3016
        %8111 = vmatmul.f32.gmra.mxu0 %v7994
        %v8112 = vpop.f32.mrf.mxu0
        %v8113 = vadd.f32 %v8093, %v8112
        %8114 = vdwg.mxu0
        %8115 = vmatpush.msra.mxu0 %v3013
        %8116 = vmatpush.msra.mxu0 %v3009
        %8117 = vmatpush.msra.mxu0 %v3005
        %8118 = vmatpush.msra.mxu0 %v3001
        %8119 = vmatpush.msra.mxu0 %v2997
        %8120 = vmatpush.msra.mxu0 %v2993
        %8121 = vmatpush.msra.mxu0 %v2989
        %8122 = vmatpush.msra.mxu0 %v2985
        %8123 = vmatpush.msra.mxu0 %v2981
        %8124 = vmatpush.msra.mxu0 %v2977
        %8125 = vmatpush.msra.mxu0 %v2973
        %8126 = vmatpush.msra.mxu0 %v2969
        %8127 = vmatpush.msra.mxu0 %v2965
        %8128 = vmatpush.msra.mxu0 %v2961
        %8129 = vmatpush.msra.mxu0 %v2957
        %8130 = vmatpush.msra.mxu0 %v2953
        %8131 = vmatmul.f32.gmra.mxu0 %v7771
        %v8132 = vpop.f32.mrf.mxu0
        %v8133 = vadd.f32 %v3084, %v8132
        %8134 = vdwg.mxu0
        %8135 = vmatpush.msra.mxu0 %v3077
        %8136 = vmatpush.msra.mxu0 %v3073
        %8137 = vmatpush.msra.mxu0 %v3069
        %8138 = vmatpush.msra.mxu0 %v3065
        %8139 = vmatpush.msra.mxu0 %v3061
        %8140 = vmatpush.msra.mxu0 %v3057
        %8141 = vmatpush.msra.mxu0 %v3053
        %8142 = vmatpush.msra.mxu0 %v3049
        %8143 = vmatpush.msra.mxu0 %v3045
        %8144 = vmatpush.msra.mxu0 %v3041
        %8145 = vmatpush.msra.mxu0 %v3037
        %8146 = vmatpush.msra.mxu0 %v3033
        %8147 = vmatpush.msra.mxu0 %v3029
        %8148 = vmatpush.msra.mxu0 %v3025
        %8149 = vmatpush.msra.mxu0 %v3021
        %8150 = vmatpush.msra.mxu0 %v3017
        %8151 = vmatmul.f32.gmra.mxu0 %v7994
        %v8152 = vpop.f32.mrf.mxu0
        %v8153 = vadd.f32 %v8133, %v8152
        %8154 = vdwg.mxu0
        %v8155 = vxor.u32 %v8033, 2147483648
        %v8156 = vxor.u32 %v8073, 2147483648
        %v8157 = vxor.u32 %v8113, 2147483648
        %v8158 = vmul.f32 %v8155, 1.442695
        %v8159 = vpow.pop %v8158
        %v8160 = vmul.f32 %v8156, 1.442695
        %v8161 = vpow.pop %v8160
        %v8162 = vmul.f32 %v8157, 1.442695
        %v8163 = vpow.pop %v8162
        %v8164 = vadd.f32 %v8159, 1.0
        %v8165 = vadd.f32 %v8161, 1.0
        %v8166 = vadd.f32 %v8163, 1.0
        %v8167 = vrcp.pop %v8164
        %v8168 = vmul.f32 %v8164, %v8167
        %v8169 = vsub.f32 1.0, %v8168
        %v8170 = vmul.f32 %v8167, %v8169
        %v8171 = vadd.f32 %v8167, %v8170
        %vm8172 = vweird.f32 %v8164
        %vm8173 = vweird.f32 %v8167
        %vm8174 = vmor %vm8172, %vm8173
        %v8175 = vsel %vm8174, %v8167, %v8171
        %v8176 = vand.u32 2147483647, %v8164
        %vm8177 = vcmp.eq.f32.partialorder %v8176, 8.507059e+37
        %v8178 = vand.u32 %v8164, 2147483648
        %v8179 = vor.u32 1.1754944e-38, %v8178
        %v8180 = vsel %vm8177, %v8179, %v8175
        %v8181 = vmul.f32 1.0, %v8180
        %v8182 = vrcp.pop %v8165
        %v8183 = vmul.f32 %v8165, %v8182
        %v8184 = vsub.f32 1.0, %v8183
        %v8185 = vmul.f32 %v8182, %v8184
        %v8186 = vadd.f32 %v8182, %v8185
        %vm8187 = vweird.f32 %v8165
        %vm8188 = vweird.f32 %v8182
        %vm8189 = vmor %vm8187, %vm8188
        %v8190 = vsel %vm8189, %v8182, %v8186
        %v8191 = vand.u32 2147483647, %v8165
        %vm8192 = vcmp.eq.f32.partialorder %v8191, 8.507059e+37
        %v8193 = vand.u32 %v8165, 2147483648
        %v8194 = vor.u32 1.1754944e-38, %v8193
        %v8195 = vsel %vm8192, %v8194, %v8190
        %v8196 = vmul.f32 1.0, %v8195
        %v8197 = vrcp.pop %v8166
        %v8198 = vmul.f32 %v8166, %v8197
        %v8199 = vsub.f32 1.0, %v8198
        %v8200 = vmul.f32 %v8197, %v8199
        %v8201 = vadd.f32 %v8197, %v8200
        %vm8202 = vweird.f32 %v8166
        %vm8203 = vweird.f32 %v8197
        %vm8204 = vmor %vm8202, %vm8203
        %v8205 = vsel %vm8204, %v8197, %v8201
        %v8206 = vand.u32 2147483647, %v8166
        %vm8207 = vcmp.eq.f32.partialorder %v8206, 8.507059e+37
        %v8208 = vand.u32 %v8166, 2147483648
        %v8209 = vor.u32 1.1754944e-38, %v8208
        %v8210 = vsel %vm8207, %v8209, %v8205
        %v8211 = vmul.f32 1.0, %v8210
        %v8212 = vtanh.pop %v8153
        %v8213 = vmul.f32 %v8196, %v7992
        %v8214 = vmul.f32 %v8181, %v8212
        %v8215 = vadd.f32 %v8213, %v8214
        %v8216 = vtanh.pop %v8215
        %v8217 = vmul.f32 %v8211, %v8216
        %v8218 = vld [vmem:[%s4] sm:$0xff]
        %v8219 = vld [vmem:[%s4 + $0x8] sm:$0xff]
        %v8220 = vld [vmem:[%s4 + $0x10] sm:$0xff]
        %v8221 = vld [vmem:[%s4 + $0x18] sm:$0xff]
        %v8222 = vld [vmem:[%s4 + $0x20] sm:$0xff]
        %v8223 = vld [vmem:[%s4 + $0x28] sm:$0xff]
        %v8224 = vld [vmem:[%s4 + $0x30] sm:$0xff]
        %v8225 = vld [vmem:[%s4 + $0x38] sm:$0xff]
        %v8226 = vld [vmem:[%s4 + $0x40] sm:$0xff]
        %v8227 = vld [vmem:[%s4 + $0x48] sm:$0xff]
        %v8228 = vld [vmem:[%s4 + $0x50] sm:$0xff]
        %v8229 = vld [vmem:[%s4 + $0x58] sm:$0xff]
        %v8230 = vld [vmem:[%s4 + $0x60] sm:$0xff]
        %v8231 = vld [vmem:[%s4 + $0x68] sm:$0xff]
        %v8232 = vld [vmem:[%s4 + $0x70] sm:$0xff]
        %v8233 = vld [vmem:[%s4 + $0x78] sm:$0xff]
        %v8234 = vld [vmem:[#allocation8] sm:$0x1]
        %v8236 = vperm.slane %v8234, 0
        %8238 = vmatpush.msra.mxu0 %v8233
        %8239 = vmatpush.msra.mxu0 %v8232
        %8240 = vmatpush.msra.mxu0 %v8231
        %8241 = vmatpush.msra.mxu0 %v8230
        %8242 = vmatpush.msra.mxu0 %v8229
        %8243 = vmatpush.msra.mxu0 %v8228
        %8244 = vmatpush.msra.mxu0 %v8227
        %8245 = vmatpush.msra.mxu0 %v8226
        %8246 = vmatpush.msra.mxu0 %v8225
        %8247 = vmatpush.msra.mxu0 %v8224
        %8248 = vmatpush.msra.mxu0 %v8223
        %8249 = vmatpush.msra.mxu0 %v8222
        %8250 = vmatpush.msra.mxu0 %v8221
        %8251 = vmatpush.msra.mxu0 %v8220
        %8252 = vmatpush.msra.mxu0 %v8219
        %8253 = vmatpush.msra.mxu0 %v8218
        %8254 = vmatmul.f32.gmra.mxu0 %v3311
        %v8255 = vpop.f32.mrf.mxu0
        %v8256 = vadd.f32 %v8236, %v8255
        %8257 = vmatmul.f32.gmra.mxu0 %v4203
        %v8258 = vpop.f32.mrf.mxu0
        %v8259 = vadd.f32 %v8236, %v8258
        %8260 = vmatmul.f32.gmra.mxu0 %v5095
        %v8261 = vpop.f32.mrf.mxu0
        %v8262 = vadd.f32 %v8236, %v8261
        %8263 = vmatmul.f32.gmra.mxu0 %v5987
        %v8264 = vpop.f32.mrf.mxu0
        %v8265 = vadd.f32 %v8236, %v8264
        %8266 = vmatmul.f32.gmra.mxu0 %v6879
        %v8267 = vpop.f32.mrf.mxu0
        %v8268 = vadd.f32 %v8236, %v8267
        %8269 = vmatmul.f32.gmra.mxu0 %v7548
        %v8270 = vpop.f32.mrf.mxu0
        %v8271 = vadd.f32 %v8236, %v8270
        %8272 = vmatmul.f32.gmra.mxu0 %v7994
        %v8273 = vpop.f32.mrf.mxu0
        %v8274 = vadd.f32 %v8236, %v8273
        %8275 = vmatmul.f32.gmra.mxu0 %v8217
        %v8276 = vpop.f32.mrf.mxu0
        %v8277 = vadd.f32 %v8236, %v8276
        %8278 = vdwg.mxu0
        %v8279 = vmax.f32 %v8256, 0.0
        %v8280 = vmax.f32 %v8259, 0.0
        %v8281 = vmax.f32 %v8262, 0.0
        %v8282 = vmax.f32 %v8265, 0.0
        %v8283 = vmax.f32 %v8268, 0.0
        %v8284 = vmax.f32 %v8271, 0.0
        %v8285 = vmax.f32 %v8274, 0.0
        %v8286 = vmax.f32 %v8277, 0.0
        %v8287 = vld [vmem:[%s6] sm:$0xff]
        %v8288 = vld [vmem:[%s6 + $0x8] sm:$0xff]
        %v8289 = vld [vmem:[%s6 + $0x10] sm:$0xff]
        %v8290 = vld [vmem:[%s6 + $0x18] sm:$0xff]
        %v8291 = vld [vmem:[%s6 + $0x20] sm:$0xff]
        %v8292 = vld [vmem:[%s6 + $0x28] sm:$0xff]
        %v8293 = vld [vmem:[%s6 + $0x30] sm:$0xff]
        %v8294 = vld [vmem:[%s6 + $0x38] sm:$0xff]
        %v8295 = vld [vmem:[#allocation2] sm:$0x1]
        %v8297 = vperm.slane %v8295, 0
        %vm8299 = vcmask 523264
        %v8301 = vsel %vm8299, %v8279, 0
        %v8304 = vsel %vm8299, %v8280, 0
        %v8307 = vsel %vm8299, %v8281, 0
        %v8310 = vsel %vm8299, %v8282, 0
        %v8313 = vsel %vm8299, %v8283, 0
        %v8316 = vsel %vm8299, %v8284, 0
        %v8319 = vsel %vm8299, %v8285, 0
        %v8322 = vsel %vm8299, %v8286, 0
        %8324 = vmatpush.msra.mxu0 0.0
        %8325 = vmatpush.msra.mxu0 0.0
        %8326 = vmatpush.msra.mxu0 0.0
        %8327 = vmatpush.msra.mxu0 0.0
        %8328 = vmatpush.msra.mxu0 0.0
        %8329 = vmatpush.msra.mxu0 0.0
        %8330 = vmatpush.msra.mxu0 0.0
        %8331 = vmatpush.msra.mxu0 0.0
        %8332 = vmatpush.msra.mxu0 %v8294
        %8333 = vmatpush.msra.mxu0 %v8293
        %8334 = vmatpush.msra.mxu0 %v8292
        %8335 = vmatpush.msra.mxu0 %v8291
        %8336 = vmatpush.msra.mxu0 %v8290
        %8337 = vmatpush.msra.mxu0 %v8289
        %8338 = vmatpush.msra.mxu0 %v8288
        %8339 = vmatpush.msra.mxu0 %v8287
        %8340 = vmatmul.f32.gmra.mxu0 %v8301
        %v8341 = vpop.f32.mrf.mxu0
        %v8342 = vadd.f32 %v8297, %v8341
        %8343 = vmatmul.f32.gmra.mxu0 %v8304
        %v8344 = vpop.f32.mrf.mxu0
        %v8345 = vadd.f32 %v8297, %v8344
        %8346 = vmatmul.f32.gmra.mxu0 %v8307
        %v8347 = vpop.f32.mrf.mxu0
        %v8348 = vadd.f32 %v8297, %v8347
        %8349 = vmatmul.f32.gmra.mxu0 %v8310
        %v8350 = vpop.f32.mrf.mxu0
        %v8351 = vadd.f32 %v8297, %v8350
        %8352 = vmatmul.f32.gmra.mxu0 %v8313
        %v8353 = vpop.f32.mrf.mxu0
        %v8354 = vadd.f32 %v8297, %v8353
        %8355 = vmatmul.f32.gmra.mxu0 %v8316
        %v8356 = vpop.f32.mrf.mxu0
        %v8357 = vadd.f32 %v8297, %v8356
        %8358 = vmatmul.f32.gmra.mxu0 %v8319
        %v8359 = vpop.f32.mrf.mxu0
        %v8360 = vadd.f32 %v8297, %v8359
        %8361 = vmatmul.f32.gmra.mxu0 %v8322
        %v8362 = vpop.f32.mrf.mxu0
        %v8363 = vadd.f32 %v8297, %v8362
        %8364 = vdwg.mxu0
        %v8365 = vmax.f32 %v8342, %v8345
        %v8366 = vmax.f32 %v8365, %v8348
        %v8367 = vmax.f32 %v8366, %v8351
        %v8368 = vmax.f32 %v8367, %v8354
        %v8369 = vmax.f32 %v8368, %v8357
        %v8370 = vmax.f32 %v8369, %v8360
        %v8371 = vmax.f32 %v8370, %v8363
        %v8372 = vsub.f32 %v8342, %v8371
        %v8373 = vmul.f32 %v8372, 1.442695
        %v8374 = vpow.pop %v8373
        %v8375 = vsub.f32 %v8345, %v8371
        %v8376 = vmul.f32 %v8375, 1.442695
        %v8377 = vpow.pop %v8376
        %v8378 = vsub.f32 %v8348, %v8371
        %v8379 = vmul.f32 %v8378, 1.442695
        %v8380 = vpow.pop %v8379
        %v8381 = vsub.f32 %v8351, %v8371
        %v8382 = vmul.f32 %v8381, 1.442695
        %v8383 = vpow.pop %v8382
        %v8384 = vsub.f32 %v8354, %v8371
        %v8385 = vmul.f32 %v8384, 1.442695
        %v8386 = vpow.pop %v8385
        %v8387 = vsub.f32 %v8357, %v8371
        %v8388 = vmul.f32 %v8387, 1.442695
        %v8389 = vpow.pop %v8388
        %v8390 = vsub.f32 %v8360, %v8371
        %v8391 = vmul.f32 %v8390, 1.442695
        %v8392 = vpow.pop %v8391
        %v8393 = vsub.f32 %v8363, %v8371
        %v8394 = vmul.f32 %v8393, 1.442695
        %v8395 = vpow.pop %v8394
        %v8396 = vadd.f32 %v8374, %v8377
        %v8397 = vadd.f32 %v8396, %v8380
        %v8398 = vadd.f32 %v8397, %v8383
        %v8399 = vadd.f32 %v8398, %v8386
        %v8400 = vadd.f32 %v8399, %v8389
        %v8401 = vadd.f32 %v8400, %v8392
        %v8402 = vadd.f32 %v8401, %v8395
        %v8403 = vrcp.pop %v8402
        %v8404 = vmul.f32 %v8374, %v8403
        %8406 = vset.pattern.permute.xlu0 0
        %8407 = vperm.xlu0 %8406, %v8404
        %v8408 = vpop.permute.xlu0 %8407
        %v8410 = vmul.f32 %v3311, %v8408
        %v8411 = vmul.f32 %v8377, %v8403
        %8413 = vset.pattern.permute.xlu0 0
        %8414 = vperm.xlu0 %8413, %v8411
        %v8415 = vpop.permute.xlu0 %8414
        %v8417 = vmul.f32 %v4203, %v8415
        %v8418 = vadd.f32 %v8410, %v8417
        %v8419 = vmul.f32 %v8380, %v8403
        %8421 = vset.pattern.permute.xlu0 0
        %8422 = vperm.xlu0 %8421, %v8419
        %v8423 = vpop.permute.xlu0 %8422
        %v8425 = vmul.f32 %v5095, %v8423
        %v8426 = vadd.f32 %v8418, %v8425
        %v8427 = vmul.f32 %v8383, %v8403
        %8429 = vset.pattern.permute.xlu0 0
        %8430 = vperm.xlu0 %8429, %v8427
        %v8431 = vpop.permute.xlu0 %8430
        %v8433 = vmul.f32 %v5987, %v8431
        %v8434 = vadd.f32 %v8426, %v8433
        %v8435 = vmul.f32 %v8386, %v8403
        %8437 = vset.pattern.permute.xlu0 0
        %8438 = vperm.xlu0 %8437, %v8435
        %v8439 = vpop.permute.xlu0 %8438
        %v8441 = vmul.f32 %v6879, %v8439
        %v8442 = vadd.f32 %v8434, %v8441
        %v8443 = vmul.f32 %v8389, %v8403
        %8445 = vset.pattern.permute.xlu0 0
        %8446 = vperm.xlu0 %8445, %v8443
        %v8447 = vpop.permute.xlu0 %8446
        %v8449 = vmul.f32 %v7548, %v8447
        %v8450 = vadd.f32 %v8442, %v8449
        %v8451 = vmul.f32 %v8392, %v8403
        %8453 = vset.pattern.permute.xlu0 0
        %8454 = vperm.xlu0 %8453, %v8451
        %v8455 = vpop.permute.xlu0 %8454
        %v8457 = vmul.f32 %v7994, %v8455
        %v8458 = vadd.f32 %v8450, %v8457
        %v8459 = vmul.f32 %v8395, %v8403
        %8461 = vset.pattern.permute.xlu0 0
        %8462 = vperm.xlu0 %8461, %v8459
        %v8463 = vpop.permute.xlu0 %8462
        %v8465 = vmul.f32 %v8217, %v8463
        %v8466 = vadd.f32 %v8458, %v8465
        %v8467 = vld [vmem:[%s8] sm:$0xff]
        %v8468 = vld [vmem:[%s8 + $0x8] sm:$0xff]
        %v8469 = vld [vmem:[%s8 + $0x10] sm:$0xff]
        %v8470 = vld [vmem:[%s8 + $0x18] sm:$0xff]
        %v8471 = vld [vmem:[%s8 + $0x20] sm:$0xff]
        %v8472 = vld [vmem:[%s8 + $0x28] sm:$0xff]
        %v8473 = vld [vmem:[%s8 + $0x30] sm:$0xff]
        %v8474 = vld [vmem:[%s8 + $0x38] sm:$0xff]
        %v8475 = vld [vmem:[%s8 + $0x40] sm:$0xff]
        %v8476 = vld [vmem:[%s8 + $0x48] sm:$0xff]
        %v8477 = vld [vmem:[%s8 + $0x50] sm:$0xff]
        %v8478 = vld [vmem:[%s8 + $0x58] sm:$0xff]
        %v8479 = vld [vmem:[%s8 + $0x60] sm:$0xff]
        %v8480 = vld [vmem:[%s8 + $0x68] sm:$0xff]
        %v8481 = vld [vmem:[%s8 + $0x70] sm:$0xff]
        %v8482 = vld [vmem:[%s8 + $0x78] sm:$0xff]
        %v8483 = vld [vmem:[#allocation10] sm:$0x1]
        %v8485 = vperm.slane %v8483, 0
        %8487 = vmatpush.msra.mxu0 %v8482
        %8488 = vmatpush.msra.mxu0 %v8481
        %8489 = vmatpush.msra.mxu0 %v8480
        %8490 = vmatpush.msra.mxu0 %v8479
        %8491 = vmatpush.msra.mxu0 %v8478
        %8492 = vmatpush.msra.mxu0 %v8477
        %8493 = vmatpush.msra.mxu0 %v8476
        %8494 = vmatpush.msra.mxu0 %v8475
        %8495 = vmatpush.msra.mxu0 %v8474
        %8496 = vmatpush.msra.mxu0 %v8473
        %8497 = vmatpush.msra.mxu0 %v8472
        %8498 = vmatpush.msra.mxu0 %v8471
        %8499 = vmatpush.msra.mxu0 %v8470
        %8500 = vmatpush.msra.mxu0 %v8469
        %8501 = vmatpush.msra.mxu0 %v8468
        %8502 = vmatpush.msra.mxu0 %v8467
        %8503 = vmatmul.f32.gmra.mxu0 %v8466
        %v8504 = vpop.f32.mrf.mxu0
        %v8505 = vadd.f32 %v8485, %v8504
        %8506 = vdwg.mxu0
        %vm8507 = vcmask 23552
        %v8508 = vsel %vm8507, %v8505, -inf
        %8509 = vmax.xlane.f32.xlu0 %v8508
        %v8510 = vpop.xlane.xlu0 %8509
        %v8511 = vsub.f32 %v8505, %v8510
        %v8512 = vmul.f32 %v8511, 1.442695
        %v8513 = vpow.pop %v8512
        %v8514 = vsel %vm8507, %v8513, 0.0
        %8515 = vadd.xlane.f32.xlu0 %v8514
        %v8516 = vpop.xlane.xlu0 %8515
        %v8517 = vrcp.pop %v8516
        %v8518 = vmul.f32 %v8516, %v8517
        %v8519 = vsub.f32 1.0, %v8518
        %v8520 = vmul.f32 %v8517, %v8519
        %v8521 = vadd.f32 %v8517, %v8520
        %vm8522 = vweird.f32 %v8516
        %vm8523 = vweird.f32 %v8517
        %vm8524 = vmor %vm8522, %vm8523
        %v8525 = vsel %vm8524, %v8517, %v8521
        %v8526 = vand.u32 2147483647, %v8516
        %vm8527 = vcmp.eq.f32.partialorder %v8526, 8.507059e+37
        %v8528 = vand.u32 %v8516, 2147483648
        %v8529 = vor.u32 1.1754944e-38, %v8528
        %v8530 = vsel %vm8527, %v8529, %v8525
        %v8531 = vmul.f32 %v8513, %v8530
        %8532 = vst.msk [vmem:[%s436] sm:$0xff] %vm8507, %v8531
        %p8533 = scmp.lt.s32.totalorder %s26, 1
        %s8534 = scalar_select %p8533, %s26, 1
        %s8535 = smul.addr %s8534, 8
        %s8536 = scalar_lea.vmem %s10, %s8535
        // Predicated region
        $region81: #{tpu_custom_call.1} parent=59 // pred_check
          %p8537 = pneg %p259
        $region82: #{tpu_custom_call.1} parent=59 // pred_check_branch
          %8539 = sbr.rel (%p8537) target = $region84
        $region83: #{tpu_custom_call.1} parent=59 // pred_region
          _
        $region84: #{tpu_custom_call.1} parent=59 // pred_fallthru
          _
      $region60: #{tpu_custom_call.1} parent=5 // pred_fallthru
        _
      %p8540 = scmp.le.s32.totalorder 2, %s21
      // Predicated region
      $region85: #{tpu_custom_call.1} parent=5 // pred_check
        %p8541 = pneg %p8540
      $region86: #{tpu_custom_call.1} parent=5 // pred_check_branch
        %8543 = sbr.rel (%p8541) target = $region88
      $region87: #{tpu_custom_call.1} parent=5 // pred_region
        %s8544 = ssub.s32 %s21, 2
        // Predicated region
        $region89: #{tpu_custom_call.1} parent=87 // pred_check
          %p8545 = pneg %p265
        $region90: #{tpu_custom_call.1} parent=87 // pred_check_branch
          %8547 = sbr.rel (%p8545) target = $region92
        $region91: #{tpu_custom_call.1} parent=87 // pred_region
          %p8548 = scmp.lt.s32.totalorder %s27, 1
          %s8549 = scalar_select %p8548, %s27, 1
          %s8550 = smul.addr %s8549, 8
          %s8551 = scalar_lea.vmem %s10, %s8550
        $region92: #{tpu_custom_call.1} parent=87 // pred_fallthru
          _
      $region88: #{tpu_custom_call.1} parent=5 // pred_fallthru
        _
    $region6: #{tpu_custom_call.1} parent=1 // loop_footer
      %s25 = sadd.s32 1, %s21
    $region7: #{tpu_custom_call.1} parent=1 // loop_footer_branch
      %20 = sbr.rel target = $region3
    $region8: #{tpu_custom_call.1} parent=1 // loop_exit
      _
    %8552 = vsyncpa [#allocation4], 1
    %s8553 = scalar_lea.sflag [#allocation4], 1
    %8554 = vsyncpa %s8553, 1
    %8555 = vsyncpa [#allocation6], 1
    %8556 = vsyncpa [#allocation9], 1

</llo_original>
